<compile_context>
chip_gen: v7x
topology: tpu7x:2x2x1
jax: 0.10.0
libtpu: 0.0.40
codegen_flags: <defaults>
</compile_context>

<pallas_src>
import math
from functools import partial

import jax
import jax.numpy as jnp
from jax import lax
from jax.experimental import pallas as pl
from jax.experimental.pallas import tpu as pltpu

NEG_SLOPE = 0.01   # F.leaky_relu default
LN_EPS = 1e-5      # nn.LayerNorm default


def _gelu_exact(x):
    # exact (erf) GELU — used by the pure-JAX reference (torch.nn.GELU default)
    return 0.5 * x * (1.0 + lax.erf(x / jnp.sqrt(2.0).astype(x.dtype)))


def _gelu_tanh(x):
    # tanh approximation — single EUP tanh instead of an erf polynomial on the VPU
    c = jnp.float32(0.7978845608028654)  # sqrt(2/pi)
    return 0.5 * x * (1.0 + jnp.tanh(c * (x + 0.044715 * x * x * x)))


def _layernorm(x, gamma, beta):
    mu = jnp.mean(x, axis=-1, keepdims=True)
    var = jnp.mean((x - mu) ** 2, axis=-1, keepdims=True)
    return (x - mu) * lax.rsqrt(var + LN_EPS) * gamma + beta


def gat_kernel(scale, sum_correction,
               srcc_ref, dstc_ref, srcr_ref, hE_ref,
               hV_ref, gathW_ref, attn_ref, w1b_ref, ab_ref, b1_ref,
               w2_ref, b2_ref, w3_ref, b3_ref,
               g1_ref, be1_ref,
               win_ref, bin_ref, wout_ref, bout_ref,
               g2_ref, be2_ref,
               out_ref,
               dh_acc, s_acc):
    t = pl.program_id(0)
    Te = hE_ref.shape[0]
    N, H = hV_ref.shape

    @pl.when(t == 0)
    def _init():
        dh_acc[...] = jnp.zeros_like(dh_acc)
        s_acc[...] = jnp.zeros_like(s_acc)

    src_col = srcc_ref[...]             # [Te, 1] int32 (padded rows hold sentinel N)
    dst_col = dstc_ref[...]             # [Te, 1] int32
    src_row = srcr_ref[...]             # [1, Te] int32
    hE_bf = hE_ref[...]                 # [Te, H] bf16 tile

    # --- fused src+dst gather one-hot [Te, 2N]: cols [0,N) pick src, cols [N,2N) pick dst ---
    iota2 = lax.broadcasted_iota(jnp.int32, (Te, 2 * N), 1)
    sel = jnp.where(iota2 < N, src_col, dst_col + N)
    hit = iota2 == sel                                        # padded rows: all False
    oh2 = hit.astype(jnp.bfloat16)                            # 0/1 exact in bf16

    # --- edge MLP: W3(gelu(W2(gelu( h_src@W1a + h_E@W1b + h_dst@W1c + b1 )))) ---
    # src/dst projections are pre-folded onto h_V (gathW = [[hV@W1a],[hV@W1c]]) so the
    # per-tile work is one fused gather matmul + one h_E matmul (bf16 MXU, f32 accum).
    pre = (jnp.dot(oh2, gathW_ref[...], preferred_element_type=jnp.float32)
           + jnp.dot(hE_bf, w1b_ref[...], preferred_element_type=jnp.float32)
           + b1_ref[...])
    m = _gelu_tanh(pre)
    m = _gelu_tanh(jnp.dot(m.astype(jnp.bfloat16), w2_ref[...],
                           preferred_element_type=jnp.float32) + b2_ref[...])
    m = jnp.dot(m.astype(jnp.bfloat16), w3_ref[...],
                preferred_element_type=jnp.float32) + b3_ref[...]          # [Te, H] f32

    # --- attention logit: (hV@Aa)[src] + rowsum(hE*Ab) + (hV@Ac)[dst]  (VPU select + XLU sum) ---
    logit = (jnp.sum(jnp.where(hit, attn_ref[...], 0.0), axis=-1, keepdims=True)
             + jnp.sum(hE_bf.astype(jnp.float32) * ab_ref[...], axis=-1, keepdims=True))
    lrelu = jnp.where(logit >= 0, logit, NEG_SLOPE * logit)
    # padded rows: hE==0, no one-hot hit -> logit==0 exactly -> e==exp(0.5); corrected once below
    e = jnp.exp(jax.nn.sigmoid(lrelu))                                     # [Te, 1] f32

    s_acc[...] += jnp.sum(e, keepdims=True)                                # global sum(e) carry
    me = (m * e).astype(jnp.bfloat16)                                      # [Te, H]

    # --- scatter_sum over src: [N, Te] one-hot; sentinel src==N gives an all-zero column ---
    scat_oh = (lax.broadcasted_iota(jnp.int32, (N, Te), 0) == src_row).astype(jnp.bfloat16)
    dh_acc[...] += jnp.dot(scat_oh, me, preferred_element_type=jnp.float32)   # [N, H]

    # --- finalize on the last edge tile: normalize, residual+LN, FFN, residual+LN ---
    @pl.when(t == pl.num_programs(0) - 1)
    def _finalize():
        hV = hV_ref[...]                                                   # f32 [N, H]
        s_total = s_acc[...] - sum_correction          # remove exp(0.5) of each padded edge
        dh = dh_acc[...] * (1.0 / (s_total * scale))   # exact reciprocal (runs exactly once)
        h1 = _layernorm(hV + dh, g1_ref[...], be1_ref[...])
        ff = _gelu_tanh(jnp.dot(h1.astype(jnp.bfloat16), win_ref[...],
                                preferred_element_type=jnp.float32) + bin_ref[...])
        ff = jnp.dot(ff.astype(jnp.bfloat16), wout_ref[...],
                     preferred_element_type=jnp.float32) + bout_ref[...]
        out_ref[...] = _layernorm(h1 + ff, g2_ref[...], be2_ref[...])


def gat_forward(params, h_V, h_E, src_idx, dst_idx, scale=30.0, edge_tile=512):
    N, H = h_V.shape
    E = h_E.shape[0]
    Te = edge_tile
    E_pad = ((E + Te - 1) // Te) * Te
    pad = E_pad - E

    bf16 = jnp.bfloat16
    f32 = jnp.float32
    hV = h_V.astype(f32)

    # Edge streams.  Padded edges use node id N (out of range) as a sentinel: they hit no
    # one-hot column (gather = 0, never scattered) and contribute exactly exp(sigmoid(0)) to
    # sum(e), subtracted once at finalize.
    hE_p = jnp.pad(h_E.astype(bf16), ((0, pad), (0, 0)))
    src = jnp.pad(src_idx.astype(jnp.int32), (0, pad), constant_values=N)
    dst = jnp.pad(dst_idx.astype(jnp.int32), (0, pad), constant_values=N)
    src_col = src.reshape(E_pad, 1)
    dst_col = dst.reshape(E_pad, 1)
    src_row = src.reshape(1, E_pad)

    # Algebraic hoist (exact reassociation): h_V[src] @ W1a == src_onehot @ (h_V @ W1a), etc.
    gathW = jnp.concatenate([hV @ params["w1a"], hV @ params["w1c"]], axis=0).astype(bf16)   # [2N, H]
    attn_row = jnp.concatenate([hV @ params["aa"].T, hV @ params["ac"].T],
                               axis=0).reshape(1, 2 * N).astype(f32)                         # [1, 2N]

    sum_correction = float(pad) * math.exp(0.5)

    inputs = (
        src_col, dst_col, src_row, hE_p,                 # streamed per edge tile
        hV, gathW, attn_row,                             # VMEM-resident
        params["w1b"].astype(bf16), params["ab"], params["b1"],
        params["w2"].astype(bf16), params["b2"],
        params["w3"].astype(bf16), params["b3"],
        params["g1"], params["be1"],
        params["w_in"].astype(bf16), params["b_in"],
        params["w_out"].astype(bf16), params["b_out"],
        params["g2"], params["be2"],
    )

    in_specs = [
        pl.BlockSpec((Te, 1), lambda i: (i, 0)),         # src_col
        pl.BlockSpec((Te, 1), lambda i: (i, 0)),         # dst_col
        pl.BlockSpec((1, Te), lambda i: (0, i)),         # src_row
        pl.BlockSpec((Te, H), lambda i: (i, 0)),         # h_E tile
    ] + [pl.BlockSpec(a.shape, lambda i: (0, 0)) for a in inputs[4:]]   # resident weights

    grid = (E_pad // Te,)

    return pl.pallas_call(
        partial(gat_kernel, float(scale), sum_correction),
        out_shape=jax.ShapeDtypeStruct((N, H), f32),
        grid_spec=pltpu.PrefetchScalarGridSpec(
            num_scalar_prefetch=0,
            grid=grid,
            in_specs=in_specs,
            out_specs=pl.BlockSpec((N, H), lambda i: (0, 0)),
            scratch_shapes=[pltpu.VMEM((N, H), jnp.float32),   # dh accumulator
                            pltpu.VMEM((1, 1), jnp.float32)],  # sum(e) accumulator
        ),
        compiler_params=pltpu.CompilerParams(
            dimension_semantics=("arbitrary",),                # edge axis is a serial reduction
            vmem_limit_bytes=16 * 1024 * 1024,                 # footprint ~1.5 MiB; safe on v7x
        ),
    )(*inputs)


def init_params(key, H):
    keys = jax.random.split(key, 6)

    def lin(k, fan_in, fan_out):
        kw, kb = jax.random.split(k)
        bound = 1.0 / math.sqrt(fan_in)
        w = jax.random.uniform(kw, (fan_in, fan_out), jnp.float32, -bound, bound)
        b = jax.random.uniform(kb, (1, fan_out), jnp.float32, -bound, bound)
        return w, b

    w1, b1 = lin(keys[0], 3 * H, H)
    w2, b2 = lin(keys[1], H, H)
    w3, b3 = lin(keys[2], H, H)
    w_in, b_in = lin(keys[3], H, 4 * H)
    w_out, b_out = lin(keys[4], 4 * H, H)
    a = jax.random.normal(keys[5], (1, 3 * H), jnp.float32) * 0.1   # A as three [1,H] rows
    return dict(
        w1a=w1[:H], w1b=w1[H:2 * H], w1c=w1[2 * H:], b1=b1,
        w2=w2, b2=b2, w3=w3, b3=b3,
        aa=a[:, :H], ab=a[:, H:2 * H], ac=a[:, 2 * H:],
        g1=jnp.ones((1, H), jnp.float32), be1=jnp.zeros((1, H), jnp.float32),
        w_in=w_in, b_in=b_in, w_out=w_out, b_out=b_out,
        g2=jnp.ones((1, H), jnp.float32), be2=jnp.zeros((1, H), jnp.float32),
    )


def gat_reference(params, h_V, h_E, src_idx, dst_idx, scale=30.0):
    """Pure-JAX f32 reference mirroring the PyTorch forward (dropout = identity)."""
    h_src = h_V[src_idx]
    h_dst = h_V[dst_idx]
    h_EV = jnp.concatenate([h_src, h_E, h_dst], axis=-1)
    W1 = jnp.concatenate([params["w1a"], params["w1b"], params["w1c"]], axis=0)
    A = jnp.concatenate([params["aa"], params["ab"], params["ac"]], axis=1).T   # [3H, 1]
    m = _gelu_exact(h_EV @ W1 + params["b1"])
    m = _gelu_exact(m @ params["w2"] + params["b2"])
    m = m @ params["w3"] + params["b3"]
    logit = h_EV @ A
    lrelu = jnp.where(logit >= 0, logit, NEG_SLOPE * logit)
    e = jnp.exp(jax.nn.sigmoid(lrelu))[:, 0]
    e = e / e.sum()
    m = m * e[:, None]
    dh = jax.ops.segment_sum(m, src_idx, num_segments=h_V.shape[0]) / scale

    def ln(x, g, b):
        mu = x.mean(-1, keepdims=True)
        var = ((x - mu) ** 2).mean(-1, keepdims=True)
        return (x - mu) / jnp.sqrt(var + LN_EPS) * g + b

    h1 = ln(h_V + dh, params["g1"], params["be1"])
    ff = _gelu_exact(h1 @ params["w_in"] + params["b_in"]) @ params["w_out"] + params["b_out"]
    return ln(h1 + ff, params["g2"], params["be2"])


if __name__ == "__main__":
    H = 32     # num_hidden (= num_in)
    N = 16     # nodes
    E = 1200   # edges: 3 tiles at Te=512, last one padded -> exercises accumulation + sentinel

    key = jax.random.PRNGKey(0)
    k1, k2, k3, k4, kp = jax.random.split(key, 5)
    h_V = jax.random.normal(k1, (N, H), jnp.float32)
    h_E = jax.random.normal(k2, (E, H), jnp.float32)
    src_idx = jax.random.randint(k3, (E,), 0, N, jnp.int32)
    dst_idx = jax.random.randint(k4, (E,), 0, N, jnp.int32)
    batch_id = jnp.zeros((E,), jnp.int32)  # unused by forward (kept for signature parity)

    params = init_params(kp, H)

    out = gat_forward(params, h_V, h_E, src_idx, dst_idx, scale=30.0)
    out = jax.block_until_ready(out)

    ref = gat_reference(params, h_V, h_E, src_idx, dst_idx, scale=30.0)
    assert out.shape == (N, H)
    max_err = float(jnp.max(jnp.abs(out - ref)))
    # bf16 MXU inputs + tanh-GELU vs exact f32 reference
    assert jnp.allclose(out, ref, atol=5e-2, rtol=5e-2), max_err
    print("KERNEL_OK")
</pallas_src>

<mosaic_0001>
module attributes {stable_mosaic.version = 11 : i64} {
  func.func @gat_kernel(%arg0: i32, %arg1: memref<512x1xi32, #tpu.memory_space<vmem>>, %arg2: memref<512x1xi32, #tpu.memory_space<vmem>>, %arg3: memref<1x512xi32, #tpu.memory_space<vmem>>, %arg4: memref<512x32xbf16, #tpu.memory_space<vmem>>, %arg5: memref<16x32xf32, #tpu.memory_space<vmem>>, %arg6: memref<32x32xbf16, #tpu.memory_space<vmem>>, %arg7: memref<1x32xf32, #tpu.memory_space<vmem>>, %arg8: memref<32x32xbf16, #tpu.memory_space<vmem>>, %arg9: memref<1x32xf32, #tpu.memory_space<vmem>>, %arg10: memref<1x32xf32, #tpu.memory_space<vmem>>, %arg11: memref<32x32xbf16, #tpu.memory_space<vmem>>, %arg12: memref<1x32xf32, #tpu.memory_space<vmem>>, %arg13: memref<32x32xbf16, #tpu.memory_space<vmem>>, %arg14: memref<1x32xf32, #tpu.memory_space<vmem>>, %arg15: memref<1x32xf32, #tpu.memory_space<vmem>>, %arg16: memref<1x32xf32, #tpu.memory_space<vmem>>, %arg17: memref<32x128xbf16, #tpu.memory_space<vmem>>, %arg18: memref<1x128xf32, #tpu.memory_space<vmem>>, %arg19: memref<128x32xbf16, #tpu.memory_space<vmem>>, %arg20: memref<1x32xf32, #tpu.memory_space<vmem>>, %arg21: memref<1x32xf32, #tpu.memory_space<vmem>>, %arg22: memref<1x32xf32, #tpu.memory_space<vmem>>, %arg23: memref<16x32xf32, #tpu.memory_space<vmem>>, %arg24: memref<16x32xf32, #tpu.memory_space<vmem>>, %arg25: memref<1x1xf32, #tpu.memory_space<vmem>>) attributes {dimension_semantics = [#tpu.dimension_semantics<arbitrary>], iteration_bounds = array<i64: 3>, scalar_prefetch = 0 : i64, scratch_operands = 2 : i64, tpu.core_type = #tpu.core_type<tc>, window_params = [{transform_indices = @transform_0, window_bounds = array<i64: 512, 1>}, {transform_indices = @transform_1, window_bounds = array<i64: 512, 1>}, {transform_indices = @transform_2, window_bounds = array<i64: 1, 512>}, {transform_indices = @transform_3, window_bounds = array<i64: 512, 32>}, {pipeline_mode = #tpu.pipeline_mode<synchronous>, transform_indices = @transform_4, window_bounds = array<i64: 16, 32>}, {pipeline_mode = #tpu.pipeline_mode<synchronous>, transform_indices = @transform_5, window_bounds = array<i64: 32, 32>}, {pipeline_mode = #tpu.pipeline_mode<synchronous>, transform_indices = @transform_6, window_bounds = array<i64: 1, 32>}, {pipeline_mode = #tpu.pipeline_mode<synchronous>, transform_indices = @transform_7, window_bounds = array<i64: 32, 32>}, {pipeline_mode = #tpu.pipeline_mode<synchronous>, transform_indices = @transform_8, window_bounds = array<i64: 1, 32>}, {pipeline_mode = #tpu.pipeline_mode<synchronous>, transform_indices = @transform_9, window_bounds = array<i64: 1, 32>}, {pipeline_mode = #tpu.pipeline_mode<synchronous>, transform_indices = @transform_10, window_bounds = array<i64: 32, 32>}, {pipeline_mode = #tpu.pipeline_mode<synchronous>, transform_indices = @transform_11, window_bounds = array<i64: 1, 32>}, {pipeline_mode = #tpu.pipeline_mode<synchronous>, transform_indices = @transform_12, window_bounds = array<i64: 32, 32>}, {pipeline_mode = #tpu.pipeline_mode<synchronous>, transform_indices = @transform_13, window_bounds = array<i64: 1, 32>}, {pipeline_mode = #tpu.pipeline_mode<synchronous>, transform_indices = @transform_14, window_bounds = array<i64: 1, 32>}, {pipeline_mode = #tpu.pipeline_mode<synchronous>, transform_indices = @transform_15, window_bounds = array<i64: 1, 32>}, {pipeline_mode = #tpu.pipeline_mode<synchronous>, transform_indices = @transform_16, window_bounds = array<i64: 32, 128>}, {pipeline_mode = #tpu.pipeline_mode<synchronous>, transform_indices = @transform_17, window_bounds = array<i64: 1, 128>}, {pipeline_mode = #tpu.pipeline_mode<synchronous>, transform_indices = @transform_18, window_bounds = array<i64: 128, 32>}, {pipeline_mode = #tpu.pipeline_mode<synchronous>, transform_indices = @transform_19, window_bounds = array<i64: 1, 32>}, {pipeline_mode = #tpu.pipeline_mode<synchronous>, transform_indices = @transform_20, window_bounds = array<i64: 1, 32>}, {pipeline_mode = #tpu.pipeline_mode<synchronous>, transform_indices = @transform_21, window_bounds = array<i64: 1, 32>}, {pipeline_mode = #tpu.pipeline_mode<synchronous>, transform_indices = @transform_22, window_bounds = array<i64: 16, 32>}]} {
    %c0_i32 = arith.constant 0 : i32
    %0 = arith.cmpi eq, %arg0, %c0_i32 : i32
    %1 = arith.extui %0 : i1 to i32
    %c0_i32_0 = arith.constant 0 : i32
    %2 = arith.cmpi ne, %1, %c0_i32_0 : i32
    scf.if %2 {
      %cst_55 = arith.constant 0.000000e+00 : f32
      %116 = vector.broadcast %cst_55 : f32 to vector<16x32xf32>
      %c0_56 = arith.constant 0 : index
      %c0_57 = arith.constant 0 : index
      %117 = vector.load %arg24[%c0_56, %c0_57] : memref<16x32xf32, #tpu.memory_space<vmem>>, vector<16x32xf32>
      tpu.vector_store %arg24[%c0_56, %c0_57], %116 {strides = array<i32>} : memref<16x32xf32, #tpu.memory_space<vmem>>, vector<16x32xf32>,
      %cst_58 = arith.constant 0.000000e+00 : f32
      %118 = vector.broadcast %cst_58 : f32 to vector<1x1xf32>
      %c0_59 = arith.constant 0 : index
      %c0_60 = arith.constant 0 : index
      %119 = vector.load %arg25[%c0_59, %c0_60] : memref<1x1xf32, #tpu.memory_space<vmem>>, vector<1x1xf32>
      tpu.vector_store %arg25[%c0_59, %c0_60], %118 {strides = array<i32>} : memref<1x1xf32, #tpu.memory_space<vmem>>, vector<1x1xf32>,
    } else {
    }
    %c0 = arith.constant 0 : index
    %c0_1 = arith.constant 0 : index
    %3 = vector.load %arg1[%c0, %c0_1] : memref<512x1xi32, #tpu.memory_space<vmem>>, vector<512x1xi32>
    %c0_2 = arith.constant 0 : index
    %c0_3 = arith.constant 0 : index
    %4 = vector.load %arg2[%c0_2, %c0_3] : memref<512x1xi32, #tpu.memory_space<vmem>>, vector<512x1xi32>
    %c0_4 = arith.constant 0 : index
    %c0_5 = arith.constant 0 : index
    %5 = vector.load %arg3[%c0_4, %c0_5] : memref<1x512xi32, #tpu.memory_space<vmem>>, vector<1x512xi32>
    %c0_6 = arith.constant 0 : index
    %c0_7 = arith.constant 0 : index
    %6 = vector.load %arg4[%c0_6, %c0_7] : memref<512x32xbf16, #tpu.memory_space<vmem>>, vector<512x32xbf16>
    %7 = tpu.iota {dimensions = array<i32: 1>} : vector<512x32xi32>
    %c16_i32 = arith.constant 16 : i32
    %8 = vector.broadcast %c16_i32 : i32 to vector<512x32xi32>
    %9 = arith.cmpi slt, %7, %8 : vector<512x32xi32>
    %c16_i32_8 = arith.constant 16 : i32
    %10 = vector.broadcast %c16_i32_8 : i32 to vector<512x1xi32>
    %11 = arith.addi %4, %10 : vector<512x1xi32>
    %12 = vector.shape_cast %3 : vector<512x1xi32> to vector<512x1xi32>
    %13 = vector.broadcast %12 : vector<512x1xi32> to vector<512x32xi32>
    %14 = vector.shape_cast %11 : vector<512x1xi32> to vector<512x1xi32>
    %15 = vector.broadcast %14 : vector<512x1xi32> to vector<512x32xi32>
    %16 = arith.select %9, %13, %15 : vector<512x32xi1>, vector<512x32xi32>
    %17 = arith.cmpi eq, %7, %16 : vector<512x32xi32>
    %18 = arith.extui %17 : vector<512x32xi1> to vector<512x32xi32>
    %19 = arith.sitofp %18 : vector<512x32xi32> to vector<512x32xf32>
    %20 = arith.truncf %19 : vector<512x32xf32> to vector<512x32xbf16>
    %c0_9 = arith.constant 0 : index
    %c0_10 = arith.constant 0 : index
    %21 = vector.load %arg6[%c0_9, %c0_10] : memref<32x32xbf16, #tpu.memory_space<vmem>>, vector<32x32xbf16>
    %cst = arith.constant dense<0.000000e+00> : vector<512x32xf32>
    %22 = tpu.matmul %20, %21, %cst {dimension_numbers = #tpu.dot_dimension_numbers<[1], [0], [0], [1], [0, 0, 1, 1], [], []>} : vector<512x32xbf16>, vector<32x32xbf16>, vector<512x32xf32> -> vector<512x32xf32>
    %c0_11 = arith.constant 0 : index
    %c0_12 = arith.constant 0 : index
    %23 = vector.load %arg8[%c0_11, %c0_12] : memref<32x32xbf16, #tpu.memory_space<vmem>>, vector<32x32xbf16>
    %cst_13 = arith.constant dense<0.000000e+00> : vector<512x32xf32>
    %24 = tpu.matmul %6, %23, %cst_13 {dimension_numbers = #tpu.dot_dimension_numbers<[1], [0], [0], [1], [0, 0, 1, 1], [], []>} : vector<512x32xbf16>, vector<32x32xbf16>, vector<512x32xf32> -> vector<512x32xf32>
    %25 = arith.addf %22, %24 : vector<512x32xf32>
    %c0_14 = arith.constant 0 : index
    %c0_15 = arith.constant 0 : index
    %26 = vector.load %arg10[%c0_14, %c0_15] : memref<1x32xf32, #tpu.memory_space<vmem>>, vector<1x32xf32>
    %27 = vector.broadcast %26 : vector<1x32xf32> to vector<512x32xf32>
    %28 = arith.addf %25, %27 : vector<512x32xf32>
    %cst_16 = arith.constant 5.000000e-01 : f32
    %29 = vector.broadcast %cst_16 : f32 to vector<512x32xf32>
    %30 = arith.mulf %29, %28 : vector<512x32xf32>
    %cst_17 = arith.constant 4.471500e-02 : f32
    %31 = vector.broadcast %cst_17 : f32 to vector<512x32xf32>
    %32 = arith.mulf %31, %28 : vector<512x32xf32>
    %33 = arith.mulf %32, %28 : vector<512x32xf32>
    %34 = arith.mulf %33, %28 : vector<512x32xf32>
    %35 = arith.addf %28, %34 : vector<512x32xf32>
    %cst_18 = arith.constant 0.797884583 : f32
    %36 = vector.broadcast %cst_18 : f32 to vector<512x32xf32>
    %37 = arith.mulf %36, %35 : vector<512x32xf32>
    %38 = math.tanh %37 : vector<512x32xf32>
    %cst_19 = arith.constant 1.000000e+00 : f32
    %39 = vector.broadcast %cst_19 : f32 to vector<512x32xf32>
    %40 = arith.addf %39, %38 : vector<512x32xf32>
    %41 = arith.mulf %30, %40 : vector<512x32xf32>
    %42 = arith.truncf %41 : vector<512x32xf32> to vector<512x32xbf16>
    %c0_20 = arith.constant 0 : index
    %c0_21 = arith.constant 0 : index
    %43 = vector.load %arg11[%c0_20, %c0_21] : memref<32x32xbf16, #tpu.memory_space<vmem>>, vector<32x32xbf16>
    %cst_22 = arith.constant dense<0.000000e+00> : vector<512x32xf32>
    %44 = tpu.matmul %42, %43, %cst_22 {dimension_numbers = #tpu.dot_dimension_numbers<[1], [0], [0], [1], [0, 0, 1, 1], [], []>} : vector<512x32xbf16>, vector<32x32xbf16>, vector<512x32xf32> -> vector<512x32xf32>
    %c0_23 = arith.constant 0 : index
    %c0_24 = arith.constant 0 : index
    %45 = vector.load %arg12[%c0_23, %c0_24] : memref<1x32xf32, #tpu.memory_space<vmem>>, vector<1x32xf32>
    %46 = vector.broadcast %45 : vector<1x32xf32> to vector<512x32xf32>
    %47 = arith.addf %44, %46 : vector<512x32xf32>
    %cst_25 = arith.constant 5.000000e-01 : f32
    %48 = vector.broadcast %cst_25 : f32 to vector<512x32xf32>
    %49 = arith.mulf %48, %47 : vector<512x32xf32>
    %cst_26 = arith.constant 4.471500e-02 : f32
    %50 = vector.broadcast %cst_26 : f32 to vector<512x32xf32>
    %51 = arith.mulf %50, %47 : vector<512x32xf32>
    %52 = arith.mulf %51, %47 : vector<512x32xf32>
    %53 = arith.mulf %52, %47 : vector<512x32xf32>
    %54 = arith.addf %47, %53 : vector<512x32xf32>
    %cst_27 = arith.constant 0.797884583 : f32
    %55 = vector.broadcast %cst_27 : f32 to vector<512x32xf32>
    %56 = arith.mulf %55, %54 : vector<512x32xf32>
    %57 = math.tanh %56 : vector<512x32xf32>
    %cst_28 = arith.constant 1.000000e+00 : f32
    %58 = vector.broadcast %cst_28 : f32 to vector<512x32xf32>
    %59 = arith.addf %58, %57 : vector<512x32xf32>
    %60 = arith.mulf %49, %59 : vector<512x32xf32>
    %61 = arith.truncf %60 : vector<512x32xf32> to vector<512x32xbf16>
    %c0_29 = arith.constant 0 : index
    %c0_30 = arith.constant 0 : index
    %62 = vector.load %arg13[%c0_29, %c0_30] : memref<32x32xbf16, #tpu.memory_space<vmem>>, vector<32x32xbf16>
    %cst_31 = arith.constant dense<0.000000e+00> : vector<512x32xf32>
    %63 = tpu.matmul %61, %62, %cst_31 {dimension_numbers = #tpu.dot_dimension_numbers<[1], [0], [0], [1], [0, 0, 1, 1], [], []>} : vector<512x32xbf16>, vector<32x32xbf16>, vector<512x32xf32> -> vector<512x32xf32>
    %c0_32 = arith.constant 0 : index
    %c0_33 = arith.constant 0 : index
    %64 = vector.load %arg14[%c0_32, %c0_33] : memref<1x32xf32, #tpu.memory_space<vmem>>, vector<1x32xf32>
    %65 = vector.broadcast %64 : vector<1x32xf32> to vector<512x32xf32>
    %66 = arith.addf %63, %65 : vector<512x32xf32>
    %c0_34 = arith.constant 0 : index
    %c0_35 = arith.constant 0 : index
    %67 = vector.load %arg7[%c0_34, %c0_35] : memref<1x32xf32, #tpu.memory_space<vmem>>, vector<1x32xf32>
    %cst_36 = arith.constant 0.000000e+00 : f32
    %68 = vector.shape_cast %67 : vector<1x32xf32> to vector<1x32xf32>
    %69 = vector.broadcast %68 : vector<1x32xf32> to vector<512x32xf32>
    %70 = vector.broadcast %cst_36 : f32 to vector<512x32xf32>
    %71 = arith.select %17, %69, %70 : vector<512x32xi1>, vector<512x32xf32>
    %cst_37 = arith.constant dense<0.000000e+00> : vector<512xf32>
    %72 = vector.multi_reduction <add>, %71, %cst_37 [1] : vector<512x32xf32> to vector<512xf32>
    %73 = vector.shape_cast %72 : vector<512xf32> to vector<512x1xf32>
    %74 = arith.extf %6 : vector<512x32xbf16> to vector<512x32xf32>
    %c0_38 = arith.constant 0 : index
    %c0_39 = arith.constant 0 : index
    %75 = vector.load %arg9[%c0_38, %c0_39] : memref<1x32xf32, #tpu.memory_space<vmem>>, vector<1x32xf32>
    %76 = vector.broadcast %75 : vector<1x32xf32> to vector<512x32xf32>
    %77 = arith.mulf %74, %76 : vector<512x32xf32>
    %cst_40 = arith.constant dense<0.000000e+00> : vector<512xf32>
    %78 = vector.multi_reduction <add>, %77, %cst_40 [1] : vector<512x32xf32> to vector<512xf32>
    %79 = vector.shape_cast %78 : vector<512xf32> to vector<512x1xf32>
    %80 = arith.addf %73, %79 : vector<512x1xf32>
    %cst_41 = arith.constant 0.000000e+00 : f32
    %81 = vector.broadcast %cst_41 : f32 to vector<512x1xf32>
    %82 = arith.cmpf oge, %80, %81 : vector<512x1xf32>
    %cst_42 = arith.constant 0.00999999977 : f32
    %83 = vector.broadcast %cst_42 : f32 to vector<512x1xf32>
    %84 = arith.mulf %83, %80 : vector<512x1xf32>
    %85 = arith.select %82, %80, %84 : vector<512x1xi1>, vector<512x1xf32>
    %86 = arith.negf %85 : vector<512x1xf32>
    %87 = math.exp %86 : vector<512x1xf32>
    %cst_43 = arith.constant 1.000000e+00 : f32
    %88 = vector.broadcast %cst_43 : f32 to vector<512x1xf32>
    %89 = arith.addf %88, %87 : vector<512x1xf32>
    %90 = arith.divf %88, %89 : vector<512x1xf32>
    %91 = math.exp %90 : vector<512x1xf32>
    %c0_44 = arith.constant 0 : index
    %c0_45 = arith.constant 0 : index
    %92 = vector.load %arg25[%c0_44, %c0_45] : memref<1x1xf32, #tpu.memory_space<vmem>>, vector<1x1xf32>
    %93 = vector.shape_cast %91 : vector<512x1xf32> to vector<1x512x1xf32>
    %cst_46 = arith.constant dense<0.000000e+00> : vector<1xf32>
    %94 = vector.multi_reduction <add>, %93, %cst_46 [1, 2] : vector<1x512x1xf32> to vector<1xf32>
    %95 = vector.shape_cast %94 : vector<1xf32> to vector<1x1x1xf32>
    %96 = vector.extract %95[0, 0, 0] : f32 from vector<1x1x1xf32>
    %97 = vector.broadcast %96 : f32 to vector<1x1xf32>
    %98 = arith.addf %92, %97 : vector<1x1xf32>
    %c0_47 = arith.constant 0 : index
    %c0_48 = arith.constant 0 : index
    %99 = vector.load %arg25[%c0_47, %c0_48] : memref<1x1xf32, #tpu.memory_space<vmem>>, vector<1x1xf32>
    tpu.vector_store %arg25[%c0_47, %c0_48], %98 {strides = array<i32>} : memref<1x1xf32, #tpu.memory_space<vmem>>, vector<1x1xf32>,
    %100 = vector.broadcast %91 : vector<512x1xf32> to vector<512x32xf32>
    %101 = arith.mulf %66, %100 : vector<512x32xf32>
    %102 = arith.truncf %101 : vector<512x32xf32> to vector<512x32xbf16>
    %103 = tpu.iota {dimensions = array<i32: 0>} : vector<16x512xi32>
    %104 = vector.broadcast %5 : vector<1x512xi32> to vector<16x512xi32>
    %105 = arith.cmpi eq, %103, %104 : vector<16x512xi32>
    %106 = arith.extui %105 : vector<16x512xi1> to vector<16x512xi32>
    %107 = arith.sitofp %106 : vector<16x512xi32> to vector<16x512xf32>
    %108 = arith.truncf %107 : vector<16x512xf32> to vector<16x512xbf16>
    %c0_49 = arith.constant 0 : index
    %c0_50 = arith.constant 0 : index
    %109 = vector.load %arg24[%c0_49, %c0_50] : memref<16x32xf32, #tpu.memory_space<vmem>>, vector<16x32xf32>
    %cst_51 = arith.constant dense<0.000000e+00> : vector<16x32xf32>
    %110 = tpu.matmul %108, %102, %cst_51 {dimension_numbers = #tpu.dot_dimension_numbers<[1], [0], [0], [1], [0, 0, 1, 1], [], []>} : vector<16x512xbf16>, vector<512x32xbf16>, vector<16x32xf32> -> vector<16x32xf32>
    %111 = arith.addf %109, %110 : vector<16x32xf32>
    %c0_52 = arith.constant 0 : index
    %c0_53 = arith.constant 0 : index
    %112 = vector.load %arg24[%c0_52, %c0_53] : memref<16x32xf32, #tpu.memory_space<vmem>>, vector<16x32xf32>
    tpu.vector_store %arg24[%c0_52, %c0_53], %111 {strides = array<i32>} : memref<16x32xf32, #tpu.memory_space<vmem>>, vector<16x32xf32>,
    %c2_i32 = arith.constant 2 : i32
    %113 = arith.cmpi eq, %arg0, %c2_i32 : i32
    %114 = arith.extui %113 : i1 to i32
    %c0_i32_54 = arith.constant 0 : i32
    %115 = arith.cmpi ne, %114, %c0_i32_54 : i32
    scf.if %115 {
      %c0_55 = arith.constant 0 : index
      %c0_56 = arith.constant 0 : index
      %116 = vector.load %arg5[%c0_55, %c0_56] : memref<16x32xf32, #tpu.memory_space<vmem>>, vector<16x32xf32>
      %c0_57 = arith.constant 0 : index
      %c0_58 = arith.constant 0 : index
      %117 = vector.load %arg25[%c0_57, %c0_58] : memref<1x1xf32, #tpu.memory_space<vmem>>, vector<1x1xf32>
      %cst_59 = arith.constant 553.970337 : f32
      %118 = vector.broadcast %cst_59 : f32 to vector<1x1xf32>
      %119 = arith.subf %117, %118 : vector<1x1xf32>
      %c0_60 = arith.constant 0 : index
      %c0_61 = arith.constant 0 : index
      %120 = vector.load %arg24[%c0_60, %c0_61] : memref<16x32xf32, #tpu.memory_space<vmem>>, vector<16x32xf32>
      %cst_62 = arith.constant 3.000000e+01 : f32
      %121 = vector.broadcast %cst_62 : f32 to vector<1x1xf32>
      %122 = arith.mulf %119, %121 : vector<1x1xf32>
      %cst_63 = arith.constant 1.000000e+00 : f32
      %123 = vector.broadcast %cst_63 : f32 to vector<1x1xf32>
      %124 = arith.divf %123, %122 : vector<1x1xf32>
      %125 = vector.broadcast %124 : vector<1x1xf32> to vector<16x32xf32>
      %126 = arith.mulf %120, %125 : vector<16x32xf32>
      %127 = arith.addf %116, %126 : vector<16x32xf32>
      %c0_64 = arith.constant 0 : index
      %c0_65 = arith.constant 0 : index
      %128 = vector.load %arg15[%c0_64, %c0_65] : memref<1x32xf32, #tpu.memory_space<vmem>>, vector<1x32xf32>
      %c0_66 = arith.constant 0 : index
      %c0_67 = arith.constant 0 : index
      %129 = vector.load %arg16[%c0_66, %c0_67] : memref<1x32xf32, #tpu.memory_space<vmem>>, vector<1x32xf32>
      %cst_68 = arith.constant dense<0.000000e+00> : vector<16xf32>
      %130 = vector.multi_reduction <add>, %127, %cst_68 [1] : vector<16x32xf32> to vector<16xf32>
      %131 = vector.shape_cast %130 : vector<16xf32> to vector<16x1xf32>
      %cst_69 = arith.constant 3.200000e+01 : f32
      %132 = vector.broadcast %cst_69 : f32 to vector<16x1xf32>
      %133 = arith.divf %131, %132 : vector<16x1xf32>
      %134 = vector.broadcast %133 : vector<16x1xf32> to vector<16x32xf32>
      %135 = arith.subf %127, %134 : vector<16x32xf32>
      %136 = arith.mulf %135, %135 : vector<16x32xf32>
      %cst_70 = arith.constant dense<0.000000e+00> : vector<16xf32>
      %137 = vector.multi_reduction <add>, %136, %cst_70 [1] : vector<16x32xf32> to vector<16xf32>
      %138 = vector.shape_cast %137 : vector<16xf32> to vector<16x1xf32>
      %cst_71 = arith.constant 3.200000e+01 : f32
      %139 = vector.broadcast %cst_71 : f32 to vector<16x1xf32>
      %140 = arith.divf %138, %139 : vector<16x1xf32>
      %141 = vector.broadcast %133 : vector<16x1xf32> to vector<16x32xf32>
      %142 = arith.subf %127, %141 : vector<16x32xf32>
      %cst_72 = arith.constant 9.99999974E-6 : f32
      %143 = vector.broadcast %cst_72 : f32 to vector<16x1xf32>
      %144 = arith.addf %140, %143 : vector<16x1xf32>
      %145 = math.rsqrt %144 : vector<16x1xf32>
      %146 = vector.broadcast %145 : vector<16x1xf32> to vector<16x32xf32>
      %147 = arith.mulf %142, %146 : vector<16x32xf32>
      %148 = vector.broadcast %128 : vector<1x32xf32> to vector<16x32xf32>
      %149 = arith.mulf %147, %148 : vector<16x32xf32>
      %150 = vector.broadcast %129 : vector<1x32xf32> to vector<16x32xf32>
      %151 = arith.addf %149, %150 : vector<16x32xf32>
      %152 = arith.truncf %151 : vector<16x32xf32> to vector<16x32xbf16>
      %c0_73 = arith.constant 0 : index
      %c0_74 = arith.constant 0 : index
      %153 = vector.load %arg17[%c0_73, %c0_74] : memref<32x128xbf16, #tpu.memory_space<vmem>>, vector<32x128xbf16>
      %cst_75 = arith.constant dense<0.000000e+00> : vector<16x128xf32>
      %154 = tpu.matmul %152, %153, %cst_75 {dimension_numbers = #tpu.dot_dimension_numbers<[1], [0], [0], [1], [0, 0, 1, 1], [], []>} : vector<16x32xbf16>, vector<32x128xbf16>, vector<16x128xf32> -> vector<16x128xf32>
      %c0_76 = arith.constant 0 : index
      %c0_77 = arith.constant 0 : index
      %155 = vector.load %arg18[%c0_76, %c0_77] : memref<1x128xf32, #tpu.memory_space<vmem>>, vector<1x128xf32>
      %156 = vector.broadcast %155 : vector<1x128xf32> to vector<16x128xf32>
      %157 = arith.addf %154, %156 : vector<16x128xf32>
      %cst_78 = arith.constant 5.000000e-01 : f32
      %158 = vector.broadcast %cst_78 : f32 to vector<16x128xf32>
      %159 = arith.mulf %158, %157 : vector<16x128xf32>
      %cst_79 = arith.constant 4.471500e-02 : f32
      %160 = vector.broadcast %cst_79 : f32 to vector<16x128xf32>
      %161 = arith.mulf %160, %157 : vector<16x128xf32>
      %162 = arith.mulf %161, %157 : vector<16x128xf32>
      %163 = arith.mulf %162, %157 : vector<16x128xf32>
      %164 = arith.addf %157, %163 : vector<16x128xf32>
      %cst_80 = arith.constant 0.797884583 : f32
      %165 = vector.broadcast %cst_80 : f32 to vector<16x128xf32>
      %166 = arith.mulf %165, %164 : vector<16x128xf32>
      %167 = math.tanh %166 : vector<16x128xf32>
      %cst_81 = arith.constant 1.000000e+00 : f32
      %168 = vector.broadcast %cst_81 : f32 to vector<16x128xf32>
      %169 = arith.addf %168, %167 : vector<16x128xf32>
      %170 = arith.mulf %159, %169 : vector<16x128xf32>
      %171 = arith.truncf %170 : vector<16x128xf32> to vector<16x128xbf16>
      %c0_82 = arith.constant 0 : index
      %c0_83 = arith.constant 0 : index
      %172 = vector.load %arg19[%c0_82, %c0_83] : memref<128x32xbf16, #tpu.memory_space<vmem>>, vector<128x32xbf16>
      %cst_84 = arith.constant dense<0.000000e+00> : vector<16x32xf32>
      %173 = tpu.matmul %171, %172, %cst_84 {dimension_numbers = #tpu.dot_dimension_numbers<[1], [0], [0], [1], [0, 0, 1, 1], [], []>} : vector<16x128xbf16>, vector<128x32xbf16>, vector<16x32xf32> -> vector<16x32xf32>
      %c0_85 = arith.constant 0 : index
      %c0_86 = arith.constant 0 : index
      %174 = vector.load %arg20[%c0_85, %c0_86] : memref<1x32xf32, #tpu.memory_space<vmem>>, vector<1x32xf32>
      %175 = vector.broadcast %174 : vector<1x32xf32> to vector<16x32xf32>
      %176 = arith.addf %173, %175 : vector<16x32xf32>
      %177 = arith.addf %151, %176 : vector<16x32xf32>
      %c0_87 = arith.constant 0 : index
      %c0_88 = arith.constant 0 : index
      %178 = vector.load %arg21[%c0_87, %c0_88] : memref<1x32xf32, #tpu.memory_space<vmem>>, vector<1x32xf32>
      %c0_89 = arith.constant 0 : index
      %c0_90 = arith.constant 0 : index
      %179 = vector.load %arg22[%c0_89, %c0_90] : memref<1x32xf32, #tpu.memory_space<vmem>>, vector<1x32xf32>
      %cst_91 = arith.constant dense<0.000000e+00> : vector<16xf32>
      %180 = vector.multi_reduction <add>, %177, %cst_91 [1] : vector<16x32xf32> to vector<16xf32>
      %181 = vector.shape_cast %180 : vector<16xf32> to vector<16x1xf32>
      %cst_92 = arith.constant 3.200000e+01 : f32
      %182 = vector.broadcast %cst_92 : f32 to vector<16x1xf32>
      %183 = arith.divf %181, %182 : vector<16x1xf32>
      %184 = vector.broadcast %183 : vector<16x1xf32> to vector<16x32xf32>
      %185 = arith.subf %177, %184 : vector<16x32xf32>
      %186 = arith.mulf %185, %185 : vector<16x32xf32>
      %cst_93 = arith.constant dense<0.000000e+00> : vector<16xf32>
      %187 = vector.multi_reduction <add>, %186, %cst_93 [1] : vector<16x32xf32> to vector<16xf32>
      %188 = vector.shape_cast %187 : vector<16xf32> to vector<16x1xf32>
      %cst_94 = arith.constant 3.200000e+01 : f32
      %189 = vector.broadcast %cst_94 : f32 to vector<16x1xf32>
      %190 = arith.divf %188, %189 : vector<16x1xf32>
      %191 = vector.broadcast %183 : vector<16x1xf32> to vector<16x32xf32>
      %192 = arith.subf %177, %191 : vector<16x32xf32>
      %cst_95 = arith.constant 9.99999974E-6 : f32
      %193 = vector.broadcast %cst_95 : f32 to vector<16x1xf32>
      %194 = arith.addf %190, %193 : vector<16x1xf32>
      %195 = math.rsqrt %194 : vector<16x1xf32>
      %196 = vector.broadcast %195 : vector<16x1xf32> to vector<16x32xf32>
      %197 = arith.mulf %192, %196 : vector<16x32xf32>
      %198 = vector.broadcast %178 : vector<1x32xf32> to vector<16x32xf32>
      %199 = arith.mulf %197, %198 : vector<16x32xf32>
      %200 = vector.broadcast %179 : vector<1x32xf32> to vector<16x32xf32>
      %201 = arith.addf %199, %200 : vector<16x32xf32>
      %c0_96 = arith.constant 0 : index
      %c0_97 = arith.constant 0 : index
      %202 = vector.load %arg23[%c0_96, %c0_97] : memref<16x32xf32, #tpu.memory_space<vmem>>, vector<16x32xf32>
      tpu.vector_store %arg23[%c0_96, %c0_97], %201 {strides = array<i32>} : memref<16x32xf32, #tpu.memory_space<vmem>>, vector<16x32xf32>,
    } else {
    }
    return
  }
  func.func @transform_0(%arg0: i32) -> (i32, i32) {
    %c0_i32 = arith.constant 0 : i32
    %c0_i32_0 = arith.constant 0 : i32
    return %arg0, %c0_i32 : i32, i32
  }
  func.func @transform_1(%arg0: i32) -> (i32, i32) {
    %c0_i32 = arith.constant 0 : i32
    %c0_i32_0 = arith.constant 0 : i32
    return %arg0, %c0_i32 : i32, i32
  }
  func.func @transform_2(%arg0: i32) -> (i32, i32) {
    %c0_i32 = arith.constant 0 : i32
    %c0_i32_0 = arith.constant 0 : i32
    return %c0_i32, %arg0 : i32, i32
  }
  func.func @transform_3(%arg0: i32) -> (i32, i32) {
    %c0_i32 = arith.constant 0 : i32
    %c0_i32_0 = arith.constant 0 : i32
    return %arg0, %c0_i32 : i32, i32
  }
  func.func @transform_4(%arg0: i32) -> (i32, i32) {
    %c0_i32 = arith.constant 0 : i32
    %c0_i32_0 = arith.constant 0 : i32
    %c0_i32_1 = arith.constant 0 : i32
    return %c0_i32, %c0_i32_0 : i32, i32
  }
  func.func @transform_5(%arg0: i32) -> (i32, i32) {
    %c0_i32 = arith.constant 0 : i32
    %c0_i32_0 = arith.constant 0 : i32
    %c0_i32_1 = arith.constant 0 : i32
    return %c0_i32, %c0_i32_0 : i32, i32
  }
  func.func @transform_6(%arg0: i32) -> (i32, i32) {
    %c0_i32 = arith.constant 0 : i32
    %c0_i32_0 = arith.constant 0 : i32
    %c0_i32_1 = arith.constant 0 : i32
    return %c0_i32, %c0_i32_0 : i32, i32
  }
  func.func @transform_7(%arg0: i32) -> (i32, i32) {
    %c0_i32 = arith.constant 0 : i32
    %c0_i32_0 = arith.constant 0 : i32
    %c0_i32_1 = arith.constant 0 : i32
    return %c0_i32, %c0_i32_0 : i32, i32
  }
  func.func @transform_8(%arg0: i32) -> (i32, i32) {
    %c0_i32 = arith.constant 0 : i32
    %c0_i32_0 = arith.constant 0 : i32
    %c0_i32_1 = arith.constant 0 : i32
    return %c0_i32, %c0_i32_0 : i32, i32
  }
  func.func @transform_9(%arg0: i32) -> (i32, i32) {
    %c0_i32 = arith.constant 0 : i32
    %c0_i32_0 = arith.constant 0 : i32
    %c0_i32_1 = arith.constant 0 : i32
    return %c0_i32, %c0_i32_0 : i32, i32
  }
  func.func @transform_10(%arg0: i32) -> (i32, i32) {
    %c0_i32 = arith.constant 0 : i32
    %c0_i32_0 = arith.constant 0 : i32
    %c0_i32_1 = arith.constant 0 : i32
    return %c0_i32, %c0_i32_0 : i32, i32
  }
  func.func @transform_11(%arg0: i32) -> (i32, i32) {
    %c0_i32 = arith.constant 0 : i32
    %c0_i32_0 = arith.constant 0 : i32
    %c0_i32_1 = arith.constant 0 : i32
    return %c0_i32, %c0_i32_0 : i32, i32
  }
  func.func @transform_12(%arg0: i32) -> (i32, i32) {
    %c0_i32 = arith.constant 0 : i32
    %c0_i32_0 = arith.constant 0 : i32
    %c0_i32_1 = arith.constant 0 : i32
    return %c0_i32, %c0_i32_0 : i32, i32
  }
  func.func @transform_13(%arg0: i32) -> (i32, i32) {
    %c0_i32 = arith.constant 0 : i32
    %c0_i32_0 = arith.constant 0 : i32
    %c0_i32_1 = arith.constant 0 : i32
    return %c0_i32, %c0_i32_0 : i32, i32
  }
  func.func @transform_14(%arg0: i32) -> (i32, i32) {
    %c0_i32 = arith.constant 0 : i32
    %c0_i32_0 = arith.constant 0 : i32
    %c0_i32_1 = arith.constant 0 : i32
    return %c0_i32, %c0_i32_0 : i32, i32
  }
  func.func @transform_15(%arg0: i32) -> (i32, i32) {
    %c0_i32 = arith.constant 0 : i32
    %c0_i32_0 = arith.constant 0 : i32
    %c0_i32_1 = arith.constant 0 : i32
    return %c0_i32, %c0_i32_0 : i32, i32
  }
  func.func @transform_16(%arg0: i32) -> (i32, i32) {
    %c0_i32 = arith.constant 0 : i32
    %c0_i32_0 = arith.constant 0 : i32
    %c0_i32_1 = arith.constant 0 : i32
    return %c0_i32, %c0_i32_0 : i32, i32
  }
  func.func @transform_17(%arg0: i32) -> (i32, i32) {
    %c0_i32 = arith.constant 0 : i32
    %c0_i32_0 = arith.constant 0 : i32
    %c0_i32_1 = arith.constant 0 : i32
    return %c0_i32, %c0_i32_0 : i32, i32
  }
  func.func @transform_18(%arg0: i32) -> (i32, i32) {
    %c0_i32 = arith.constant 0 : i32
    %c0_i32_0 = arith.constant 0 : i32
    %c0_i32_1 = arith.constant 0 : i32
    return %c0_i32, %c0_i32_0 : i32, i32
  }
  func.func @transform_19(%arg0: i32) -> (i32, i32) {
    %c0_i32 = arith.constant 0 : i32
    %c0_i32_0 = arith.constant 0 : i32
    %c0_i32_1 = arith.constant 0 : i32
    return %c0_i32, %c0_i32_0 : i32, i32
  }
  func.func @transform_20(%arg0: i32) -> (i32, i32) {
    %c0_i32 = arith.constant 0 : i32
    %c0_i32_0 = arith.constant 0 : i32
    %c0_i32_1 = arith.constant 0 : i32
    return %c0_i32, %c0_i32_0 : i32, i32
  }
  func.func @transform_21(%arg0: i32) -> (i32, i32) {
    %c0_i32 = arith.constant 0 : i32
    %c0_i32_0 = arith.constant 0 : i32
    %c0_i32_1 = arith.constant 0 : i32
    return %c0_i32, %c0_i32_0 : i32, i32
  }
  func.func @transform_22(%arg0: i32) -> (i32, i32) {
    %c0_i32 = arith.constant 0 : i32
    %c0_i32_0 = arith.constant 0 : i32
    %c0_i32_1 = arith.constant 0 : i32
    return %c0_i32, %c0_i32_0 : i32, i32
  }
}

</mosaic_0001>

<llo_original>
// kernel: tpu_custom_call.1
$region0: #{tpu_custom_call.1}
  #allocation0 [shape = 'u32[]', space=smem, size = 0x4, offset = 0x4, fixed_abs, tag = 'smem constant byte address 0x4 - core index']
  #allocation1 [shape = 'u32[144,128]{1,0:T(1,128)}', space=vmem, size = 0x12000, scoped, tag = 'internal scratch']
  #allocation2 [shape = 'f32[16,32]{1,0:T(8,128)}', space=vmem, size = 0x2000, scoped, tag = 'scratch operand']
  #allocation3 [shape = 'f32[1,1]{1,0:T(1,128)}', space=vmem, size = 0x200, scoped, tag = 'scratch operand']
  %s0 = inlined_call_operand.vmem [shape: s32[1536,1], index: 0, kind: input, shape index: {}]
  %s1 = inlined_call_operand.vmem [shape: s32[1536,1], index: 1, kind: input, shape index: {}]
  %s2 = inlined_call_operand.vmem [shape: s32[1,1536], index: 2, kind: input, shape index: {}]
  %s3 = inlined_call_operand.vmem [shape: bf16[1536,32], index: 3, kind: input, shape index: {}]
  %s4 = inlined_call_operand.vmem [shape: f32[16,32], index: 4, kind: input, shape index: {}]
  %s5 = inlined_call_operand.vmem [shape: bf16[32,32], index: 5, kind: input, shape index: {}]
  %s6 = inlined_call_operand.vmem [shape: f32[1,32], index: 6, kind: input, shape index: {}]
  %s7 = inlined_call_operand.vmem [shape: bf16[32,32], index: 7, kind: input, shape index: {}]
  %s8 = inlined_call_operand.vmem [shape: f32[1,32], index: 8, kind: input, shape index: {}]
  %s9 = inlined_call_operand.vmem [shape: f32[1,32], index: 9, kind: input, shape index: {}]
  %s10 = inlined_call_operand.vmem [shape: bf16[32,32], index: 10, kind: input, shape index: {}]
  %s11 = inlined_call_operand.vmem [shape: f32[1,32], index: 11, kind: input, shape index: {}]
  %s12 = inlined_call_operand.vmem [shape: bf16[32,32], index: 12, kind: input, shape index: {}]
  %s13 = inlined_call_operand.vmem [shape: f32[1,32], index: 13, kind: input, shape index: {}]
  %s14 = inlined_call_operand.vmem [shape: f32[1,32], index: 14, kind: input, shape index: {}]
  %s15 = inlined_call_operand.vmem [shape: f32[1,32], index: 15, kind: input, shape index: {}]
  %s16 = inlined_call_operand.vmem [shape: bf16[32,128], index: 16, kind: input, shape index: {}]
  %s17 = inlined_call_operand.vmem [shape: f32[1,128], index: 17, kind: input, shape index: {}]
  %s18 = inlined_call_operand.vmem [shape: bf16[128,32], index: 18, kind: input, shape index: {}]
  %s19 = inlined_call_operand.vmem [shape: f32[1,32], index: 19, kind: input, shape index: {}]
  %s20 = inlined_call_operand.vmem [shape: f32[1,32], index: 20, kind: input, shape index: {}]
  %s21 = inlined_call_operand.vmem [shape: f32[1,32], index: 21, kind: input, shape index: {}]
  %s22 = inlined_call_operand.hbm [shape: f32[16,32], index: 22, kind: output, shape index: {}]
  %s23 = sld [smem:[#allocation0]]
  $region129: #{tpu_custom_call.1} parent=0
    _
  %s25 = ssub.s32 1, %s23
  %s26 = scalar_select 0, %s25, %s23
  $region1: #{tpu_custom_call.1} parent=0
    #allocation4 [shape = 'u8[8192]{0}', space=vmem, size = 0x2000, scoped, tag = 'output window, operand 0, single buffered']
    #allocation5 [shape = 's32[2]{0}', space=sflag, size = 0x8, scoped, tag = 'scoped memory for tpu_custom_call.1']
    %27 = vsyncpa [#allocation5], 0
    loop: start=0, step=1, limit=5
    $region2: #{tpu_custom_call.1} parent=1 // loop_pre_header
      _
    $region3: #{tpu_custom_call.1} parent=1 // loop_header
      %s29 = sphi 0, %s33
      %p30 = scmp.ge.s32.totalorder %s29, 5
      %s39 = sphi 0, %s41
      %s42 = sphi 0, %s39
      %s43 = sphi 0, %s42
      %s59 = sphi 0, %s43
      %s65 = sphi 0, %s67
      %s68 = sphi 0, %s65
      %s69 = sphi 0, %s68
      %s85 = sphi 0, %s69
      %s91 = sphi 0, %s93
      %s94 = sphi 0, %s91
      %s95 = sphi 0, %s94
      %s111 = sphi 0, %s95
      %s117 = sphi 0, %s119
      %s120 = sphi 0, %s117
      %s121 = sphi 0, %s120
      %s137 = sphi 0, %s121
      %s141 = sphi 0, %s141
      %s143 = sphi 0, %s141
      %s144 = sphi 0, %s143
      %s158 = sphi 0, %s144
      %s162 = sphi 0, %s162
      %s164 = sphi 0, %s162
      %s165 = sphi 0, %s164
      %s179 = sphi 0, %s165
      %s183 = sphi 0, %s183
      %s185 = sphi 0, %s183
      %s186 = sphi 0, %s185
      %s200 = sphi 0, %s186
      %s204 = sphi 0, %s204
      %s206 = sphi 0, %s204
      %s207 = sphi 0, %s206
      %s221 = sphi 0, %s207
      %s225 = sphi 0, %s225
      %s227 = sphi 0, %s225
      %s228 = sphi 0, %s227
      %s242 = sphi 0, %s228
      %s246 = sphi 0, %s246
      %s248 = sphi 0, %s246
      %s249 = sphi 0, %s248
      %s263 = sphi 0, %s249
      %s267 = sphi 0, %s267
      %s269 = sphi 0, %s267
      %s270 = sphi 0, %s269
      %s284 = sphi 0, %s270
      %s288 = sphi 0, %s288
      %s290 = sphi 0, %s288
      %s291 = sphi 0, %s290
      %s305 = sphi 0, %s291
      %s309 = sphi 0, %s309
      %s311 = sphi 0, %s309
      %s312 = sphi 0, %s311
      %s326 = sphi 0, %s312
      %s330 = sphi 0, %s330
      %s332 = sphi 0, %s330
      %s333 = sphi 0, %s332
      %s347 = sphi 0, %s333
      %s351 = sphi 0, %s351
      %s353 = sphi 0, %s351
      %s354 = sphi 0, %s353
      %s368 = sphi 0, %s354
      %s372 = sphi 0, %s372
      %s374 = sphi 0, %s372
      %s375 = sphi 0, %s374
      %s389 = sphi 0, %s375
      %s393 = sphi 0, %s393
      %s395 = sphi 0, %s393
      %s396 = sphi 0, %s395
      %s410 = sphi 0, %s396
      %s414 = sphi 0, %s414
      %s416 = sphi 0, %s414
      %s417 = sphi 0, %s416
      %s431 = sphi 0, %s417
      %s435 = sphi 0, %s435
      %s437 = sphi 0, %s435
      %s438 = sphi 0, %s437
      %s452 = sphi 0, %s438
      %s456 = sphi 0, %s456
      %s458 = sphi 0, %s456
      %s459 = sphi 0, %s458
      %s473 = sphi 0, %s459
      %s477 = sphi 0, %s477
      %s479 = sphi 0, %s477
      %s480 = sphi 0, %s479
      %s494 = sphi 0, %s480
      %s498 = sphi 0, %s498
      %s500 = sphi 0, %s498
      %s501 = sphi 0, %s500
      %s515 = sphi 0, %s501
      %s519 = sphi 0, %s519
      %s521 = sphi 0, %s519
      %s522 = sphi 0, %s521
      %s536 = sphi 0, %s522
    $region4: #{tpu_custom_call.1} parent=1 // loop_header_branch
      %32 = sbr.rel (%p30) target = $region8
    $region5: #{tpu_custom_call.1} parent=1 // loop_body
      %s34 = ssub.s32 %s29, 1
      %s35 = ssub.s32 %s29, 2
      %s36 = sadd.s32 %s29, 1
      %s37 = ssub.s32 %s29, %s36
      %p38 = scmp.eq.s32.totalorder %s37, 0
      %s40 = sadd.s32 %s39, 1
      %s41 = scalar_select %p38, %s39, %s40
      %p44 = pneg %p38
      %p45 = scmp.eq.s32.totalorder %s29, 2
      %p46 = por %p44, %p45
      %p47 = scmp.ne.s32.totalorder %s39, %s42
      %p48 = scmp.eq.s32.totalorder %s29, 0
      %p49 = por %p47, %p48
      %p50 = scmp.ne.s32.totalorder %s39, %s42
      %p51 = scmp.eq.s32.totalorder %s34, 2
      %p52 = por %p50, %p51
      %p53 = scmp.ne.s32.totalorder %s42, %s43
      %p54 = scmp.eq.s32.totalorder %s34, 0
      %p55 = por %p53, %p54
      %p56 = scmp.ne.s32.totalorder %s42, %s43
      %p57 = scmp.eq.s32.totalorder %s35, 2
      %p58 = por %p56, %p57
      %p60 = scmp.ne.s32.totalorder %s43, %s59
      %p61 = scmp.eq.s32.totalorder %s35, 0
      %p62 = por %p60, %p61
      %s63 = ssub.s32 %s29, %s36
      %p64 = scmp.eq.s32.totalorder %s63, 0
      %s66 = sadd.s32 %s65, 1
      %s67 = scalar_select %p64, %s65, %s66
      %p70 = pneg %p64
      %p71 = scmp.eq.s32.totalorder %s29, 2
      %p72 = por %p70, %p71
      %p73 = scmp.ne.s32.totalorder %s65, %s68
      %p74 = scmp.eq.s32.totalorder %s29, 0
      %p75 = por %p73, %p74
      %p76 = scmp.ne.s32.totalorder %s65, %s68
      %p77 = scmp.eq.s32.totalorder %s34, 2
      %p78 = por %p76, %p77
      %p79 = scmp.ne.s32.totalorder %s68, %s69
      %p80 = scmp.eq.s32.totalorder %s34, 0
      %p81 = por %p79, %p80
      %p82 = scmp.ne.s32.totalorder %s68, %s69
      %p83 = scmp.eq.s32.totalorder %s35, 2
      %p84 = por %p82, %p83
      %p86 = scmp.ne.s32.totalorder %s69, %s85
      %p87 = scmp.eq.s32.totalorder %s35, 0
      %p88 = por %p86, %p87
      %s89 = ssub.s32 %s29, %s36
      %p90 = scmp.eq.s32.totalorder %s89, 0
      %s92 = sadd.s32 %s91, 1
      %s93 = scalar_select %p90, %s91, %s92
      %p96 = pneg %p90
      %p97 = scmp.eq.s32.totalorder %s29, 2
      %p98 = por %p96, %p97
      %p99 = scmp.ne.s32.totalorder %s91, %s94
      %p100 = scmp.eq.s32.totalorder %s29, 0
      %p101 = por %p99, %p100
      %p102 = scmp.ne.s32.totalorder %s91, %s94
      %p103 = scmp.eq.s32.totalorder %s34, 2
      %p104 = por %p102, %p103
      %p105 = scmp.ne.s32.totalorder %s94, %s95
      %p106 = scmp.eq.s32.totalorder %s34, 0
      %p107 = por %p105, %p106
      %p108 = scmp.ne.s32.totalorder %s94, %s95
      %p109 = scmp.eq.s32.totalorder %s35, 2
      %p110 = por %p108, %p109
      %p112 = scmp.ne.s32.totalorder %s95, %s111
      %p113 = scmp.eq.s32.totalorder %s35, 0
      %p114 = por %p112, %p113
      %s115 = ssub.s32 %s29, %s36
      %p116 = scmp.eq.s32.totalorder %s115, 0
      %s118 = sadd.s32 %s117, 1
      %s119 = scalar_select %p116, %s117, %s118
      %p122 = pneg %p116
      %p123 = scmp.eq.s32.totalorder %s29, 2
      %p124 = por %p122, %p123
      %p125 = scmp.ne.s32.totalorder %s117, %s120
      %p126 = scmp.eq.s32.totalorder %s29, 0
      %p127 = por %p125, %p126
      %p128 = scmp.ne.s32.totalorder %s117, %s120
      %p129 = scmp.eq.s32.totalorder %s34, 2
      %p130 = por %p128, %p129
      %p131 = scmp.ne.s32.totalorder %s120, %s121
      %p132 = scmp.eq.s32.totalorder %s34, 0
      %p133 = por %p131, %p132
      %p134 = scmp.ne.s32.totalorder %s120, %s121
      %p135 = scmp.eq.s32.totalorder %s35, 2
      %p136 = por %p134, %p135
      %p138 = scmp.ne.s32.totalorder %s121, %s137
      %p139 = scmp.eq.s32.totalorder %s35, 0
      %p140 = por %p138, %p139
      %s142 = sadd.s32 %s141, 1
      %p145 = scmp.eq.s32.totalorder %s29, 2
      %p146 = scmp.ne.s32.totalorder %s141, %s143
      %p147 = scmp.eq.s32.totalorder %s29, 0
      %p148 = por %p146, %p147
      %p149 = scmp.ne.s32.totalorder %s141, %s143
      %p150 = scmp.eq.s32.totalorder %s34, 2
      %p151 = por %p149, %p150
      %p152 = scmp.ne.s32.totalorder %s143, %s144
      %p153 = scmp.eq.s32.totalorder %s34, 0
      %p154 = por %p152, %p153
      %p155 = scmp.ne.s32.totalorder %s143, %s144
      %p156 = scmp.eq.s32.totalorder %s35, 2
      %p157 = por %p155, %p156
      %p159 = scmp.ne.s32.totalorder %s144, %s158
      %p160 = scmp.eq.s32.totalorder %s35, 0
      %p161 = por %p159, %p160
      %s163 = sadd.s32 %s162, 1
      %p166 = scmp.eq.s32.totalorder %s29, 2
      %p167 = scmp.ne.s32.totalorder %s162, %s164
      %p168 = scmp.eq.s32.totalorder %s29, 0
      %p169 = por %p167, %p168
      %p170 = scmp.ne.s32.totalorder %s162, %s164
      %p171 = scmp.eq.s32.totalorder %s34, 2
      %p172 = por %p170, %p171
      %p173 = scmp.ne.s32.totalorder %s164, %s165
      %p174 = scmp.eq.s32.totalorder %s34, 0
      %p175 = por %p173, %p174
      %p176 = scmp.ne.s32.totalorder %s164, %s165
      %p177 = scmp.eq.s32.totalorder %s35, 2
      %p178 = por %p176, %p177
      %p180 = scmp.ne.s32.totalorder %s165, %s179
      %p181 = scmp.eq.s32.totalorder %s35, 0
      %p182 = por %p180, %p181
      %s184 = sadd.s32 %s183, 1
      %p187 = scmp.eq.s32.totalorder %s29, 2
      %p188 = scmp.ne.s32.totalorder %s183, %s185
      %p189 = scmp.eq.s32.totalorder %s29, 0
      %p190 = por %p188, %p189
      %p191 = scmp.ne.s32.totalorder %s183, %s185
      %p192 = scmp.eq.s32.totalorder %s34, 2
      %p193 = por %p191, %p192
      %p194 = scmp.ne.s32.totalorder %s185, %s186
      %p195 = scmp.eq.s32.totalorder %s34, 0
      %p196 = por %p194, %p195
      %p197 = scmp.ne.s32.totalorder %s185, %s186
      %p198 = scmp.eq.s32.totalorder %s35, 2
      %p199 = por %p197, %p198
      %p201 = scmp.ne.s32.totalorder %s186, %s200
      %p202 = scmp.eq.s32.totalorder %s35, 0
      %p203 = por %p201, %p202
      %s205 = sadd.s32 %s204, 1
      %p208 = scmp.eq.s32.totalorder %s29, 2
      %p209 = scmp.ne.s32.totalorder %s204, %s206
      %p210 = scmp.eq.s32.totalorder %s29, 0
      %p211 = por %p209, %p210
      %p212 = scmp.ne.s32.totalorder %s204, %s206
      %p213 = scmp.eq.s32.totalorder %s34, 2
      %p214 = por %p212, %p213
      %p215 = scmp.ne.s32.totalorder %s206, %s207
      %p216 = scmp.eq.s32.totalorder %s34, 0
      %p217 = por %p215, %p216
      %p218 = scmp.ne.s32.totalorder %s206, %s207
      %p219 = scmp.eq.s32.totalorder %s35, 2
      %p220 = por %p218, %p219
      %p222 = scmp.ne.s32.totalorder %s207, %s221
      %p223 = scmp.eq.s32.totalorder %s35, 0
      %p224 = por %p222, %p223
      %s226 = sadd.s32 %s225, 1
      %p229 = scmp.eq.s32.totalorder %s29, 2
      %p230 = scmp.ne.s32.totalorder %s225, %s227
      %p231 = scmp.eq.s32.totalorder %s29, 0
      %p232 = por %p230, %p231
      %p233 = scmp.ne.s32.totalorder %s225, %s227
      %p234 = scmp.eq.s32.totalorder %s34, 2
      %p235 = por %p233, %p234
      %p236 = scmp.ne.s32.totalorder %s227, %s228
      %p237 = scmp.eq.s32.totalorder %s34, 0
      %p238 = por %p236, %p237
      %p239 = scmp.ne.s32.totalorder %s227, %s228
      %p240 = scmp.eq.s32.totalorder %s35, 2
      %p241 = por %p239, %p240
      %p243 = scmp.ne.s32.totalorder %s228, %s242
      %p244 = scmp.eq.s32.totalorder %s35, 0
      %p245 = por %p243, %p244
      %s247 = sadd.s32 %s246, 1
      %p250 = scmp.eq.s32.totalorder %s29, 2
      %p251 = scmp.ne.s32.totalorder %s246, %s248
      %p252 = scmp.eq.s32.totalorder %s29, 0
      %p253 = por %p251, %p252
      %p254 = scmp.ne.s32.totalorder %s246, %s248
      %p255 = scmp.eq.s32.totalorder %s34, 2
      %p256 = por %p254, %p255
      %p257 = scmp.ne.s32.totalorder %s248, %s249
      %p258 = scmp.eq.s32.totalorder %s34, 0
      %p259 = por %p257, %p258
      %p260 = scmp.ne.s32.totalorder %s248, %s249
      %p261 = scmp.eq.s32.totalorder %s35, 2
      %p262 = por %p260, %p261
      %p264 = scmp.ne.s32.totalorder %s249, %s263
      %p265 = scmp.eq.s32.totalorder %s35, 0
      %p266 = por %p264, %p265
      %s268 = sadd.s32 %s267, 1
      %p271 = scmp.eq.s32.totalorder %s29, 2
      %p272 = scmp.ne.s32.totalorder %s267, %s269
      %p273 = scmp.eq.s32.totalorder %s29, 0
      %p274 = por %p272, %p273
      %p275 = scmp.ne.s32.totalorder %s267, %s269
      %p276 = scmp.eq.s32.totalorder %s34, 2
      %p277 = por %p275, %p276
      %p278 = scmp.ne.s32.totalorder %s269, %s270
      %p279 = scmp.eq.s32.totalorder %s34, 0
      %p280 = por %p278, %p279
      %p281 = scmp.ne.s32.totalorder %s269, %s270
      %p282 = scmp.eq.s32.totalorder %s35, 2
      %p283 = por %p281, %p282
      %p285 = scmp.ne.s32.totalorder %s270, %s284
      %p286 = scmp.eq.s32.totalorder %s35, 0
      %p287 = por %p285, %p286
      %s289 = sadd.s32 %s288, 1
      %p292 = scmp.eq.s32.totalorder %s29, 2
      %p293 = scmp.ne.s32.totalorder %s288, %s290
      %p294 = scmp.eq.s32.totalorder %s29, 0
      %p295 = por %p293, %p294
      %p296 = scmp.ne.s32.totalorder %s288, %s290
      %p297 = scmp.eq.s32.totalorder %s34, 2
      %p298 = por %p296, %p297
      %p299 = scmp.ne.s32.totalorder %s290, %s291
      %p300 = scmp.eq.s32.totalorder %s34, 0
      %p301 = por %p299, %p300
      %p302 = scmp.ne.s32.totalorder %s290, %s291
      %p303 = scmp.eq.s32.totalorder %s35, 2
      %p304 = por %p302, %p303
      %p306 = scmp.ne.s32.totalorder %s291, %s305
      %p307 = scmp.eq.s32.totalorder %s35, 0
      %p308 = por %p306, %p307
      %s310 = sadd.s32 %s309, 1
      %p313 = scmp.eq.s32.totalorder %s29, 2
      %p314 = scmp.ne.s32.totalorder %s309, %s311
      %p315 = scmp.eq.s32.totalorder %s29, 0
      %p316 = por %p314, %p315
      %p317 = scmp.ne.s32.totalorder %s309, %s311
      %p318 = scmp.eq.s32.totalorder %s34, 2
      %p319 = por %p317, %p318
      %p320 = scmp.ne.s32.totalorder %s311, %s312
      %p321 = scmp.eq.s32.totalorder %s34, 0
      %p322 = por %p320, %p321
      %p323 = scmp.ne.s32.totalorder %s311, %s312
      %p324 = scmp.eq.s32.totalorder %s35, 2
      %p325 = por %p323, %p324
      %p327 = scmp.ne.s32.totalorder %s312, %s326
      %p328 = scmp.eq.s32.totalorder %s35, 0
      %p329 = por %p327, %p328
      %s331 = sadd.s32 %s330, 1
      %p334 = scmp.eq.s32.totalorder %s29, 2
      %p335 = scmp.ne.s32.totalorder %s330, %s332
      %p336 = scmp.eq.s32.totalorder %s29, 0
      %p337 = por %p335, %p336
      %p338 = scmp.ne.s32.totalorder %s330, %s332
      %p339 = scmp.eq.s32.totalorder %s34, 2
      %p340 = por %p338, %p339
      %p341 = scmp.ne.s32.totalorder %s332, %s333
      %p342 = scmp.eq.s32.totalorder %s34, 0
      %p343 = por %p341, %p342
      %p344 = scmp.ne.s32.totalorder %s332, %s333
      %p345 = scmp.eq.s32.totalorder %s35, 2
      %p346 = por %p344, %p345
      %p348 = scmp.ne.s32.totalorder %s333, %s347
      %p349 = scmp.eq.s32.totalorder %s35, 0
      %p350 = por %p348, %p349
      %s352 = sadd.s32 %s351, 1
      %p355 = scmp.eq.s32.totalorder %s29, 2
      %p356 = scmp.ne.s32.totalorder %s351, %s353
      %p357 = scmp.eq.s32.totalorder %s29, 0
      %p358 = por %p356, %p357
      %p359 = scmp.ne.s32.totalorder %s351, %s353
      %p360 = scmp.eq.s32.totalorder %s34, 2
      %p361 = por %p359, %p360
      %p362 = scmp.ne.s32.totalorder %s353, %s354
      %p363 = scmp.eq.s32.totalorder %s34, 0
      %p364 = por %p362, %p363
      %p365 = scmp.ne.s32.totalorder %s353, %s354
      %p366 = scmp.eq.s32.totalorder %s35, 2
      %p367 = por %p365, %p366
      %p369 = scmp.ne.s32.totalorder %s354, %s368
      %p370 = scmp.eq.s32.totalorder %s35, 0
      %p371 = por %p369, %p370
      %s373 = sadd.s32 %s372, 1
      %p376 = scmp.eq.s32.totalorder %s29, 2
      %p377 = scmp.ne.s32.totalorder %s372, %s374
      %p378 = scmp.eq.s32.totalorder %s29, 0
      %p379 = por %p377, %p378
      %p380 = scmp.ne.s32.totalorder %s372, %s374
      %p381 = scmp.eq.s32.totalorder %s34, 2
      %p382 = por %p380, %p381
      %p383 = scmp.ne.s32.totalorder %s374, %s375
      %p384 = scmp.eq.s32.totalorder %s34, 0
      %p385 = por %p383, %p384
      %p386 = scmp.ne.s32.totalorder %s374, %s375
      %p387 = scmp.eq.s32.totalorder %s35, 2
      %p388 = por %p386, %p387
      %p390 = scmp.ne.s32.totalorder %s375, %s389
      %p391 = scmp.eq.s32.totalorder %s35, 0
      %p392 = por %p390, %p391
      %s394 = sadd.s32 %s393, 1
      %p397 = scmp.eq.s32.totalorder %s29, 2
      %p398 = scmp.ne.s32.totalorder %s393, %s395
      %p399 = scmp.eq.s32.totalorder %s29, 0
      %p400 = por %p398, %p399
      %p401 = scmp.ne.s32.totalorder %s393, %s395
      %p402 = scmp.eq.s32.totalorder %s34, 2
      %p403 = por %p401, %p402
      %p404 = scmp.ne.s32.totalorder %s395, %s396
      %p405 = scmp.eq.s32.totalorder %s34, 0
      %p406 = por %p404, %p405
      %p407 = scmp.ne.s32.totalorder %s395, %s396
      %p408 = scmp.eq.s32.totalorder %s35, 2
      %p409 = por %p407, %p408
      %p411 = scmp.ne.s32.totalorder %s396, %s410
      %p412 = scmp.eq.s32.totalorder %s35, 0
      %p413 = por %p411, %p412
      %s415 = sadd.s32 %s414, 1
      %p418 = scmp.eq.s32.totalorder %s29, 2
      %p419 = scmp.ne.s32.totalorder %s414, %s416
      %p420 = scmp.eq.s32.totalorder %s29, 0
      %p421 = por %p419, %p420
      %p422 = scmp.ne.s32.totalorder %s414, %s416
      %p423 = scmp.eq.s32.totalorder %s34, 2
      %p424 = por %p422, %p423
      %p425 = scmp.ne.s32.totalorder %s416, %s417
      %p426 = scmp.eq.s32.totalorder %s34, 0
      %p427 = por %p425, %p426
      %p428 = scmp.ne.s32.totalorder %s416, %s417
      %p429 = scmp.eq.s32.totalorder %s35, 2
      %p430 = por %p428, %p429
      %p432 = scmp.ne.s32.totalorder %s417, %s431
      %p433 = scmp.eq.s32.totalorder %s35, 0
      %p434 = por %p432, %p433
      %s436 = sadd.s32 %s435, 1
      %p439 = scmp.eq.s32.totalorder %s29, 2
      %p440 = scmp.ne.s32.totalorder %s435, %s437
      %p441 = scmp.eq.s32.totalorder %s29, 0
      %p442 = por %p440, %p441
      %p443 = scmp.ne.s32.totalorder %s435, %s437
      %p444 = scmp.eq.s32.totalorder %s34, 2
      %p445 = por %p443, %p444
      %p446 = scmp.ne.s32.totalorder %s437, %s438
      %p447 = scmp.eq.s32.totalorder %s34, 0
      %p448 = por %p446, %p447
      %p449 = scmp.ne.s32.totalorder %s437, %s438
      %p450 = scmp.eq.s32.totalorder %s35, 2
      %p451 = por %p449, %p450
      %p453 = scmp.ne.s32.totalorder %s438, %s452
      %p454 = scmp.eq.s32.totalorder %s35, 0
      %p455 = por %p453, %p454
      %s457 = sadd.s32 %s456, 1
      %p460 = scmp.eq.s32.totalorder %s29, 2
      %p461 = scmp.ne.s32.totalorder %s456, %s458
      %p462 = scmp.eq.s32.totalorder %s29, 0
      %p463 = por %p461, %p462
      %p464 = scmp.ne.s32.totalorder %s456, %s458
      %p465 = scmp.eq.s32.totalorder %s34, 2
      %p466 = por %p464, %p465
      %p467 = scmp.ne.s32.totalorder %s458, %s459
      %p468 = scmp.eq.s32.totalorder %s34, 0
      %p469 = por %p467, %p468
      %p470 = scmp.ne.s32.totalorder %s458, %s459
      %p471 = scmp.eq.s32.totalorder %s35, 2
      %p472 = por %p470, %p471
      %p474 = scmp.ne.s32.totalorder %s459, %s473
      %p475 = scmp.eq.s32.totalorder %s35, 0
      %p476 = por %p474, %p475
      %s478 = sadd.s32 %s477, 1
      %p481 = scmp.eq.s32.totalorder %s29, 2
      %p482 = scmp.ne.s32.totalorder %s477, %s479
      %p483 = scmp.eq.s32.totalorder %s29, 0
      %p484 = por %p482, %p483
      %p485 = scmp.ne.s32.totalorder %s477, %s479
      %p486 = scmp.eq.s32.totalorder %s34, 2
      %p487 = por %p485, %p486
      %p488 = scmp.ne.s32.totalorder %s479, %s480
      %p489 = scmp.eq.s32.totalorder %s34, 0
      %p490 = por %p488, %p489
      %p491 = scmp.ne.s32.totalorder %s479, %s480
      %p492 = scmp.eq.s32.totalorder %s35, 2
      %p493 = por %p491, %p492
      %p495 = scmp.ne.s32.totalorder %s480, %s494
      %p496 = scmp.eq.s32.totalorder %s35, 0
      %p497 = por %p495, %p496
      %s499 = sadd.s32 %s498, 1
      %p502 = scmp.eq.s32.totalorder %s29, 2
      %p503 = scmp.ne.s32.totalorder %s498, %s500
      %p504 = scmp.eq.s32.totalorder %s29, 0
      %p505 = por %p503, %p504
      %p506 = scmp.ne.s32.totalorder %s498, %s500
      %p507 = scmp.eq.s32.totalorder %s34, 2
      %p508 = por %p506, %p507
      %p509 = scmp.ne.s32.totalorder %s500, %s501
      %p510 = scmp.eq.s32.totalorder %s34, 0
      %p511 = por %p509, %p510
      %p512 = scmp.ne.s32.totalorder %s500, %s501
      %p513 = scmp.eq.s32.totalorder %s35, 2
      %p514 = por %p512, %p513
      %p516 = scmp.ne.s32.totalorder %s501, %s515
      %p517 = scmp.eq.s32.totalorder %s35, 0
      %p518 = por %p516, %p517
      %s520 = sadd.s32 %s519, 1
      %p523 = scmp.eq.s32.totalorder %s29, 2
      %p524 = scmp.ne.s32.totalorder %s519, %s521
      %p525 = scmp.eq.s32.totalorder %s29, 0
      %p526 = por %p524, %p525
      %p527 = scmp.ne.s32.totalorder %s519, %s521
      %p528 = scmp.eq.s32.totalorder %s34, 2
      %p529 = por %p527, %p528
      %p530 = scmp.ne.s32.totalorder %s521, %s522
      %p531 = scmp.eq.s32.totalorder %s34, 0
      %p532 = por %p530, %p531
      %p533 = scmp.ne.s32.totalorder %s521, %s522
      %p534 = scmp.eq.s32.totalorder %s35, 2
      %p535 = por %p533, %p534
      %p537 = scmp.ne.s32.totalorder %s522, %s536
      %p538 = scmp.eq.s32.totalorder %s35, 0
      %p539 = por %p537, %p538
      %p540 = scmp.le.s32.totalorder 1, %s29
      %p541 = scmp.lt.s32.totalorder %s29, 4
      %p542 = pnand %p540, %p541
      %p543 = pneg %p542
      // Predicated region
      $region9: #{tpu_custom_call.1} parent=5 // pred_check
        _
      $region10: #{tpu_custom_call.1} parent=5 // pred_check_branch
        %545 = sbr.rel (%p542) target = $region12
      $region11: #{tpu_custom_call.1} parent=5 // pred_region
        %s546 = ssub.s32 %s29, 1
        // Predicated region
        $region13: #{tpu_custom_call.1} parent=11 // pred_check
          %p547 = pneg %p154
        $region14: #{tpu_custom_call.1} parent=11 // pred_check_branch
          %549 = sbr.rel (%p547) target = $region16
        $region15: #{tpu_custom_call.1} parent=11 // pred_region
          _
        $region16: #{tpu_custom_call.1} parent=11 // pred_fallthru
          _
        // Predicated region
        $region17: #{tpu_custom_call.1} parent=11 // pred_check
          %p550 = pneg %p175
        $region18: #{tpu_custom_call.1} parent=11 // pred_check_branch
          %552 = sbr.rel (%p550) target = $region20
        $region19: #{tpu_custom_call.1} parent=11 // pred_region
          _
        $region20: #{tpu_custom_call.1} parent=11 // pred_fallthru
          _
        // Predicated region
        $region21: #{tpu_custom_call.1} parent=11 // pred_check
          %p553 = pneg %p196
        $region22: #{tpu_custom_call.1} parent=11 // pred_check_branch
          %555 = sbr.rel (%p553) target = $region24
        $region23: #{tpu_custom_call.1} parent=11 // pred_region
          _
        $region24: #{tpu_custom_call.1} parent=11 // pred_fallthru
          _
        // Predicated region
        $region25: #{tpu_custom_call.1} parent=11 // pred_check
          %p556 = pneg %p217
        $region26: #{tpu_custom_call.1} parent=11 // pred_check_branch
          %558 = sbr.rel (%p556) target = $region28
        $region27: #{tpu_custom_call.1} parent=11 // pred_region
          _
        $region28: #{tpu_custom_call.1} parent=11 // pred_fallthru
          _
        // Predicated region
        $region29: #{tpu_custom_call.1} parent=11 // pred_check
          %p559 = pneg %p238
        $region30: #{tpu_custom_call.1} parent=11 // pred_check_branch
          %561 = sbr.rel (%p559) target = $region32
        $region31: #{tpu_custom_call.1} parent=11 // pred_region
          _
        $region32: #{tpu_custom_call.1} parent=11 // pred_fallthru
          _
        // Predicated region
        $region33: #{tpu_custom_call.1} parent=11 // pred_check
          %p562 = pneg %p259
        $region34: #{tpu_custom_call.1} parent=11 // pred_check_branch
          %564 = sbr.rel (%p562) target = $region36
        $region35: #{tpu_custom_call.1} parent=11 // pred_region
          _
        $region36: #{tpu_custom_call.1} parent=11 // pred_fallthru
          _
        // Predicated region
        $region37: #{tpu_custom_call.1} parent=11 // pred_check
          %p565 = pneg %p280
        $region38: #{tpu_custom_call.1} parent=11 // pred_check_branch
          %567 = sbr.rel (%p565) target = $region40
        $region39: #{tpu_custom_call.1} parent=11 // pred_region
          _
        $region40: #{tpu_custom_call.1} parent=11 // pred_fallthru
          _
        // Predicated region
        $region41: #{tpu_custom_call.1} parent=11 // pred_check
          %p568 = pneg %p301
        $region42: #{tpu_custom_call.1} parent=11 // pred_check_branch
          %570 = sbr.rel (%p568) target = $region44
        $region43: #{tpu_custom_call.1} parent=11 // pred_region
          _
        $region44: #{tpu_custom_call.1} parent=11 // pred_fallthru
          _
        // Predicated region
        $region45: #{tpu_custom_call.1} parent=11 // pred_check
          %p571 = pneg %p322
        $region46: #{tpu_custom_call.1} parent=11 // pred_check_branch
          %573 = sbr.rel (%p571) target = $region48
        $region47: #{tpu_custom_call.1} parent=11 // pred_region
          _
        $region48: #{tpu_custom_call.1} parent=11 // pred_fallthru
          _
        // Predicated region
        $region49: #{tpu_custom_call.1} parent=11 // pred_check
          %p574 = pneg %p343
        $region50: #{tpu_custom_call.1} parent=11 // pred_check_branch
          %576 = sbr.rel (%p574) target = $region52
        $region51: #{tpu_custom_call.1} parent=11 // pred_region
          _
        $region52: #{tpu_custom_call.1} parent=11 // pred_fallthru
          _
        // Predicated region
        $region53: #{tpu_custom_call.1} parent=11 // pred_check
          %p577 = pneg %p364
        $region54: #{tpu_custom_call.1} parent=11 // pred_check_branch
          %579 = sbr.rel (%p577) target = $region56
        $region55: #{tpu_custom_call.1} parent=11 // pred_region
          _
        $region56: #{tpu_custom_call.1} parent=11 // pred_fallthru
          _
        // Predicated region
        $region57: #{tpu_custom_call.1} parent=11 // pred_check
          %p580 = pneg %p385
        $region58: #{tpu_custom_call.1} parent=11 // pred_check_branch
          %582 = sbr.rel (%p580) target = $region60
        $region59: #{tpu_custom_call.1} parent=11 // pred_region
          _
        $region60: #{tpu_custom_call.1} parent=11 // pred_fallthru
          _
        // Predicated region
        $region61: #{tpu_custom_call.1} parent=11 // pred_check
          %p583 = pneg %p406
        $region62: #{tpu_custom_call.1} parent=11 // pred_check_branch
          %585 = sbr.rel (%p583) target = $region64
        $region63: #{tpu_custom_call.1} parent=11 // pred_region
          _
        $region64: #{tpu_custom_call.1} parent=11 // pred_fallthru
          _
        // Predicated region
        $region65: #{tpu_custom_call.1} parent=11 // pred_check
          %p586 = pneg %p427
        $region66: #{tpu_custom_call.1} parent=11 // pred_check_branch
          %588 = sbr.rel (%p586) target = $region68
        $region67: #{tpu_custom_call.1} parent=11 // pred_region
          _
        $region68: #{tpu_custom_call.1} parent=11 // pred_fallthru
          _
        // Predicated region
        $region69: #{tpu_custom_call.1} parent=11 // pred_check
          %p589 = pneg %p448
        $region70: #{tpu_custom_call.1} parent=11 // pred_check_branch
          %591 = sbr.rel (%p589) target = $region72
        $region71: #{tpu_custom_call.1} parent=11 // pred_region
          _
        $region72: #{tpu_custom_call.1} parent=11 // pred_fallthru
          _
        // Predicated region
        $region73: #{tpu_custom_call.1} parent=11 // pred_check
          %p592 = pneg %p469
        $region74: #{tpu_custom_call.1} parent=11 // pred_check_branch
          %594 = sbr.rel (%p592) target = $region76
        $region75: #{tpu_custom_call.1} parent=11 // pred_region
          _
        $region76: #{tpu_custom_call.1} parent=11 // pred_fallthru
          _
        // Predicated region
        $region77: #{tpu_custom_call.1} parent=11 // pred_check
          %p595 = pneg %p490
        $region78: #{tpu_custom_call.1} parent=11 // pred_check_branch
          %597 = sbr.rel (%p595) target = $region80
        $region79: #{tpu_custom_call.1} parent=11 // pred_region
          _
        $region80: #{tpu_custom_call.1} parent=11 // pred_fallthru
          _
        // Predicated region
        $region81: #{tpu_custom_call.1} parent=11 // pred_check
          %p598 = pneg %p511
        $region82: #{tpu_custom_call.1} parent=11 // pred_check_branch
          %600 = sbr.rel (%p598) target = $region84
        $region83: #{tpu_custom_call.1} parent=11 // pred_region
          _
        $region84: #{tpu_custom_call.1} parent=11 // pred_fallthru
          _
      $region12: #{tpu_custom_call.1} parent=5 // pred_fallthru
        _
      %p601 = scmp.lt.s32.totalorder %s29, 3
      // Predicated region
      $region85: #{tpu_custom_call.1} parent=5 // pred_check
        %p602 = pneg %p601
      $region86: #{tpu_custom_call.1} parent=5 // pred_check_branch
        %604 = sbr.rel (%p602) target = $region88
      $region87: #{tpu_custom_call.1} parent=5 // pred_region
        // Predicated region
        $region89: #{tpu_custom_call.1} parent=87 // pred_check
          %p605 = pneg %p49
        $region90: #{tpu_custom_call.1} parent=87 // pred_check_branch
          %607 = sbr.rel (%p605) target = $region92
        $region91: #{tpu_custom_call.1} parent=87 // pred_region
          %s608 = smul.u32 64, %s29
          %p609 = scmp.lt.s32.totalorder %s608, 191
          %s610 = scalar_select %p609, %s608, 191
          %s611 = smul.addr %s610, 8
          %s612 = scalar_lea.vmem %s0, %s611
          %s613 = smul.u32 64, %s29
        $region92: #{tpu_custom_call.1} parent=87 // pred_fallthru
          _
        // Predicated region
        $region93: #{tpu_custom_call.1} parent=87 // pred_check
          %p614 = pneg %p75
        $region94: #{tpu_custom_call.1} parent=87 // pred_check_branch
          %616 = sbr.rel (%p614) target = $region96
        $region95: #{tpu_custom_call.1} parent=87 // pred_region
          %s617 = smul.u32 64, %s29
          %p618 = scmp.lt.s32.totalorder %s617, 191
          %s619 = scalar_select %p618, %s617, 191
          %s620 = smul.addr %s619, 8
          %s621 = scalar_lea.vmem %s1, %s620
          %s622 = smul.u32 64, %s29
        $region96: #{tpu_custom_call.1} parent=87 // pred_fallthru
          _
        // Predicated region
        $region97: #{tpu_custom_call.1} parent=87 // pred_check
          %p623 = pneg %p101
        $region98: #{tpu_custom_call.1} parent=87 // pred_check_branch
          %625 = sbr.rel (%p623) target = $region100
        $region99: #{tpu_custom_call.1} parent=87 // pred_region
          %s626 = smul.u32 4, %s29
          %p627 = scmp.lt.s32.totalorder %s626, 11
          %s628 = scalar_select %p627, %s626, 11
          %s629 = scalar_lea.vmem %s2, %s628
          %s630 = smul.u32 4, %s29
        $region100: #{tpu_custom_call.1} parent=87 // pred_fallthru
          _
        // Predicated region
        $region101: #{tpu_custom_call.1} parent=87 // pred_check
          %p631 = pneg %p127
        $region102: #{tpu_custom_call.1} parent=87 // pred_check_branch
          %633 = sbr.rel (%p631) target = $region104
        $region103: #{tpu_custom_call.1} parent=87 // pred_region
          %s634 = smul.u32 64, %s29
          %p635 = scmp.lt.s32.totalorder %s634, 191
          %s636 = scalar_select %p635, %s634, 191
          %s637 = smul.addr %s636, 4
          %s638 = scalar_lea.vmem %s3, %s637
          %s639 = smul.u32 64, %s29
        $region104: #{tpu_custom_call.1} parent=87 // pred_fallthru
          _
      $region88: #{tpu_custom_call.1} parent=5 // pred_fallthru
        _
      %p640 = scmp.le.s32.totalorder 1, %s29
      %p641 = scmp.lt.s32.totalorder %s29, 4
      %p642 = pnand %p640, %p641
      %p643 = pneg %p642
      // Predicated region
      $region105: #{tpu_custom_call.1} parent=5 // pred_check
        _
      $region106: #{tpu_custom_call.1} parent=5 // pred_check_branch
        %645 = sbr.rel (%p642) target = $region108
      $region107: #{tpu_custom_call.1} parent=5 // pred_region
        %s646 = ssub.s32 %s29, 1
        %s647 = smul.u32 64, %s34
        %p648 = scmp.lt.s32.totalorder %s647, 191
        %s649 = scalar_select %p648, %s647, 191
        %s650 = smul.addr %s649, 8
        %s651 = scalar_lea.vmem %s0, %s650
        %p652 = pneg %p55
        %p653 = pneg %p52
        %s654 = smul.u32 64, %s34
        %p655 = scmp.lt.s32.totalorder %s654, 191
        %s656 = scalar_select %p655, %s654, 191
        %s657 = smul.addr %s656, 8
        %s658 = scalar_lea.vmem %s1, %s657
        %p659 = pneg %p81
        %p660 = pneg %p78
        %s661 = smul.u32 4, %s34
        %p662 = scmp.lt.s32.totalorder %s661, 11
        %s663 = scalar_select %p662, %s661, 11
        %s664 = scalar_lea.vmem %s2, %s663
        %p665 = pneg %p107
        %p666 = pneg %p104
        %s667 = smul.u32 64, %s34
        %p668 = scmp.lt.s32.totalorder %s667, 191
        %s669 = scalar_select %p668, %s667, 191
        %s670 = smul.addr %s669, 4
        %s671 = scalar_lea.vmem %s3, %s670
        %p672 = pneg %p133
        %p673 = pneg %p130
        %p674 = pneg %p154
        %p675 = pneg %p151
        %p676 = pneg %p175
        %p677 = pneg %p172
        %p678 = pneg %p196
        %p679 = pneg %p193
        %p680 = pneg %p217
        %p681 = pneg %p214
        %p682 = pneg %p238
        %p683 = pneg %p235
        %p684 = pneg %p259
        %p685 = pneg %p256
        %p686 = pneg %p280
        %p687 = pneg %p277
        %p688 = pneg %p301
        %p689 = pneg %p298
        %p690 = pneg %p322
        %p691 = pneg %p319
        %p692 = pneg %p343
        %p693 = pneg %p340
        %p694 = pneg %p364
        %p695 = pneg %p361
        %p696 = pneg %p385
        %p697 = pneg %p382
        %p698 = pneg %p406
        %p699 = pneg %p403
        %p700 = pneg %p427
        %p701 = pneg %p424
        %p702 = pneg %p448
        %p703 = pneg %p445
        %p704 = pneg %p469
        %p705 = pneg %p466
        %p706 = pneg %p490
        %p707 = pneg %p487
        %p708 = pneg %p511
        %p709 = pneg %p508
        %p710 = pneg %p532
        %p711 = pneg %p529
        %s712 = smul.u32 64, %s34
        %p713 = scmp.lt.s32.totalorder %s712, 191
        %s714 = scalar_select %p713, %s712, 191
        %s715 = smul.addr %s714, 8
        %s716 = scalar_lea.vmem %s0, %s715
        %s717 = smul.u32 64, %s34
        %s718 = smul.u32 64, %s34
        %p719 = scmp.lt.s32.totalorder %s718, 191
        %s720 = scalar_select %p719, %s718, 191
        %s721 = smul.addr %s720, 8
        %s722 = scalar_lea.vmem %s1, %s721
        %s723 = smul.u32 64, %s34
        %s724 = smul.u32 4, %s34
        %p725 = scmp.lt.s32.totalorder %s724, 11
        %s726 = scalar_select %p725, %s724, 11
        %s727 = scalar_lea.vmem %s2, %s726
        %s728 = smul.u32 4, %s34
        %s729 = smul.u32 64, %s34
        %p730 = scmp.lt.s32.totalorder %s729, 191
        %s731 = scalar_select %p730, %s729, 191
        %s732 = smul.addr %s731, 4
        %s733 = scalar_lea.vmem %s3, %s732
        %s734 = smul.u32 64, %s34
        %p736 = scmp.eq.s32.totalorder %s34, 0
        // Predicated region
        $region109: #{tpu_custom_call.1} parent=107 // pred_check
          %p737 = pneg %p736
        $region110: #{tpu_custom_call.1} parent=107 // pred_check_branch
          %739 = sbr.rel (%p737) target = $region112
        $region111: #{tpu_custom_call.1} parent=107 // pred_region
          %vm740 = vcmask 261120
          %741 = vst.msk [vmem:[#allocation2] sm:$0xff] %vm740, 0.0
          %742 = vst.msk [vmem:[#allocation2 + $0x8] sm:$0xff] %vm740, 0.0
          %vm743 = vcmask 0
          %744 = vst.msk [vmem:[#allocation3] sm:$0x1] %vm743, 0.0
        $region112: #{tpu_custom_call.1} parent=107 // pred_fallthru
          _
        %v745 = vld [vmem:[%s716] sm:$0xff]
        %v746 = vld [vmem:[%s716 + $0x8] sm:$0xff]
        %v747 = vld [vmem:[%s716 + $0x10] sm:$0xff]
        %v748 = vld [vmem:[%s716 + $0x18] sm:$0xff]
        %v749 = vld [vmem:[%s716 + $0x20] sm:$0xff]
        %v750 = vld [vmem:[%s716 + $0x28] sm:$0xff]
        %v751 = vld [vmem:[%s716 + $0x30] sm:$0xff]
        %v752 = vld [vmem:[%s716 + $0x38] sm:$0xff]
        %v753 = vld [vmem:[%s716 + $0x40] sm:$0xff]
        %v754 = vld [vmem:[%s716 + $0x48] sm:$0xff]
        %v755 = vld [vmem:[%s716 + $0x50] sm:$0xff]
        %v756 = vld [vmem:[%s716 + $0x58] sm:$0xff]
        %v757 = vld [vmem:[%s716 + $0x60] sm:$0xff]
        %v758 = vld [vmem:[%s716 + $0x68] sm:$0xff]
        %v759 = vld [vmem:[%s716 + $0x70] sm:$0xff]
        %v760 = vld [vmem:[%s716 + $0x78] sm:$0xff]
        %v761 = vld [vmem:[%s716 + $0x80] sm:$0xff]
        %v762 = vld [vmem:[%s716 + $0x88] sm:$0xff]
        %v763 = vld [vmem:[%s716 + $0x90] sm:$0xff]
        %v764 = vld [vmem:[%s716 + $0x98] sm:$0xff]
        %v765 = vld [vmem:[%s716 + $0xa0] sm:$0xff]
        %v766 = vld [vmem:[%s716 + $0xa8] sm:$0xff]
        %v767 = vld [vmem:[%s716 + $0xb0] sm:$0xff]
        %v768 = vld [vmem:[%s716 + $0xb8] sm:$0xff]
        %v769 = vld [vmem:[%s716 + $0xc0] sm:$0xff]
        %v770 = vld [vmem:[%s716 + $0xc8] sm:$0xff]
        %v771 = vld [vmem:[%s716 + $0xd0] sm:$0xff]
        %v772 = vld [vmem:[%s716 + $0xd8] sm:$0xff]
        %v773 = vld [vmem:[%s716 + $0xe0] sm:$0xff]
        %v774 = vld [vmem:[%s716 + $0xe8] sm:$0xff]
        %v775 = vld [vmem:[%s716 + $0xf0] sm:$0xff]
        %v776 = vld [vmem:[%s716 + $0xf8] sm:$0xff]
        %v777 = vld [vmem:[%s716 + $0x100] sm:$0xff]
        %v778 = vld [vmem:[%s716 + $0x108] sm:$0xff]
        %v779 = vld [vmem:[%s716 + $0x110] sm:$0xff]
        %v780 = vld [vmem:[%s716 + $0x118] sm:$0xff]
        %v781 = vld [vmem:[%s716 + $0x120] sm:$0xff]
        %v782 = vld [vmem:[%s716 + $0x128] sm:$0xff]
        %v783 = vld [vmem:[%s716 + $0x130] sm:$0xff]
        %v784 = vld [vmem:[%s716 + $0x138] sm:$0xff]
        %v785 = vld [vmem:[%s716 + $0x140] sm:$0xff]
        %v786 = vld [vmem:[%s716 + $0x148] sm:$0xff]
        %v787 = vld [vmem:[%s716 + $0x150] sm:$0xff]
        %v788 = vld [vmem:[%s716 + $0x158] sm:$0xff]
        %v789 = vld [vmem:[%s716 + $0x160] sm:$0xff]
        %v790 = vld [vmem:[%s716 + $0x168] sm:$0xff]
        %v791 = vld [vmem:[%s716 + $0x170] sm:$0xff]
        %v792 = vld [vmem:[%s716 + $0x178] sm:$0xff]
        %v793 = vld [vmem:[%s716 + $0x180] sm:$0xff]
        %v794 = vld [vmem:[%s716 + $0x188] sm:$0xff]
        %v795 = vld [vmem:[%s716 + $0x190] sm:$0xff]
        %v796 = vld [vmem:[%s716 + $0x198] sm:$0xff]
        %v797 = vld [vmem:[%s716 + $0x1a0] sm:$0xff]
        %v798 = vld [vmem:[%s716 + $0x1a8] sm:$0xff]
        %v799 = vld [vmem:[%s716 + $0x1b0] sm:$0xff]
        %v800 = vld [vmem:[%s716 + $0x1b8] sm:$0xff]
        %v801 = vld [vmem:[%s716 + $0x1c0] sm:$0xff]
        %v802 = vld [vmem:[%s716 + $0x1c8] sm:$0xff]
        %v803 = vld [vmem:[%s716 + $0x1d0] sm:$0xff]
        %v804 = vld [vmem:[%s716 + $0x1d8] sm:$0xff]
        %v805 = vld [vmem:[%s716 + $0x1e0] sm:$0xff]
        %v806 = vld [vmem:[%s716 + $0x1e8] sm:$0xff]
        %v807 = vld [vmem:[%s716 + $0x1f0] sm:$0xff]
        %v808 = vld [vmem:[%s716 + $0x1f8] sm:$0xff]
        %v809 = vld [vmem:[%s722] sm:$0xff]
        %v810 = vld [vmem:[%s722 + $0x8] sm:$0xff]
        %v811 = vld [vmem:[%s722 + $0x10] sm:$0xff]
        %v812 = vld [vmem:[%s722 + $0x18] sm:$0xff]
        %v813 = vld [vmem:[%s722 + $0x20] sm:$0xff]
        %v814 = vld [vmem:[%s722 + $0x28] sm:$0xff]
        %v815 = vld [vmem:[%s722 + $0x30] sm:$0xff]
        %v816 = vld [vmem:[%s722 + $0x38] sm:$0xff]
        %v817 = vld [vmem:[%s722 + $0x40] sm:$0xff]
        %v818 = vld [vmem:[%s722 + $0x48] sm:$0xff]
        %v819 = vld [vmem:[%s722 + $0x50] sm:$0xff]
        %v820 = vld [vmem:[%s722 + $0x58] sm:$0xff]
        %v821 = vld [vmem:[%s722 + $0x60] sm:$0xff]
        %v822 = vld [vmem:[%s722 + $0x68] sm:$0xff]
        %v823 = vld [vmem:[%s722 + $0x70] sm:$0xff]
        %v824 = vld [vmem:[%s722 + $0x78] sm:$0xff]
        %v825 = vld [vmem:[%s722 + $0x80] sm:$0xff]
        %v826 = vld [vmem:[%s722 + $0x88] sm:$0xff]
        %v827 = vld [vmem:[%s722 + $0x90] sm:$0xff]
        %v828 = vld [vmem:[%s722 + $0x98] sm:$0xff]
        %v829 = vld [vmem:[%s722 + $0xa0] sm:$0xff]
        %v830 = vld [vmem:[%s722 + $0xa8] sm:$0xff]
        %v831 = vld [vmem:[%s722 + $0xb0] sm:$0xff]
        %v832 = vld [vmem:[%s722 + $0xb8] sm:$0xff]
        %v833 = vld [vmem:[%s722 + $0xc0] sm:$0xff]
        %v834 = vld [vmem:[%s722 + $0xc8] sm:$0xff]
        %v835 = vld [vmem:[%s722 + $0xd0] sm:$0xff]
        %v836 = vld [vmem:[%s722 + $0xd8] sm:$0xff]
        %v837 = vld [vmem:[%s722 + $0xe0] sm:$0xff]
        %v838 = vld [vmem:[%s722 + $0xe8] sm:$0xff]
        %v839 = vld [vmem:[%s722 + $0xf0] sm:$0xff]
        %v840 = vld [vmem:[%s722 + $0xf8] sm:$0xff]
        %v841 = vld [vmem:[%s722 + $0x100] sm:$0xff]
        %v842 = vld [vmem:[%s722 + $0x108] sm:$0xff]
        %v843 = vld [vmem:[%s722 + $0x110] sm:$0xff]
        %v844 = vld [vmem:[%s722 + $0x118] sm:$0xff]
        %v845 = vld [vmem:[%s722 + $0x120] sm:$0xff]
        %v846 = vld [vmem:[%s722 + $0x128] sm:$0xff]
        %v847 = vld [vmem:[%s722 + $0x130] sm:$0xff]
        %v848 = vld [vmem:[%s722 + $0x138] sm:$0xff]
        %v849 = vld [vmem:[%s722 + $0x140] sm:$0xff]
        %v850 = vld [vmem:[%s722 + $0x148] sm:$0xff]
        %v851 = vld [vmem:[%s722 + $0x150] sm:$0xff]
        %v852 = vld [vmem:[%s722 + $0x158] sm:$0xff]
        %v853 = vld [vmem:[%s722 + $0x160] sm:$0xff]
        %v854 = vld [vmem:[%s722 + $0x168] sm:$0xff]
        %v855 = vld [vmem:[%s722 + $0x170] sm:$0xff]
        %v856 = vld [vmem:[%s722 + $0x178] sm:$0xff]
        %v857 = vld [vmem:[%s722 + $0x180] sm:$0xff]
        %v858 = vld [vmem:[%s722 + $0x188] sm:$0xff]
        %v859 = vld [vmem:[%s722 + $0x190] sm:$0xff]
        %v860 = vld [vmem:[%s722 + $0x198] sm:$0xff]
        %v861 = vld [vmem:[%s722 + $0x1a0] sm:$0xff]
        %v862 = vld [vmem:[%s722 + $0x1a8] sm:$0xff]
        %v863 = vld [vmem:[%s722 + $0x1b0] sm:$0xff]
        %v864 = vld [vmem:[%s722 + $0x1b8] sm:$0xff]
        %v865 = vld [vmem:[%s722 + $0x1c0] sm:$0xff]
        %v866 = vld [vmem:[%s722 + $0x1c8] sm:$0xff]
        %v867 = vld [vmem:[%s722 + $0x1d0] sm:$0xff]
        %v868 = vld [vmem:[%s722 + $0x1d8] sm:$0xff]
        %v869 = vld [vmem:[%s722 + $0x1e0] sm:$0xff]
        %v870 = vld [vmem:[%s722 + $0x1e8] sm:$0xff]
        %v871 = vld [vmem:[%s722 + $0x1f0] sm:$0xff]
        %v872 = vld [vmem:[%s722 + $0x1f8] sm:$0xff]
        %v873 = vld [vmem:[%s727] sm:$0xf]
        %v874 = vld [vmem:[%s733] sm:$0xf]
        %v875 = vld [vmem:[%s733 + $0x4] sm:$0xf]
        %v876 = vld [vmem:[%s733 + $0x8] sm:$0xf]
        %v877 = vld [vmem:[%s733 + $0xc] sm:$0xf]
        %v878 = vld [vmem:[%s733 + $0x10] sm:$0xf]
        %v879 = vld [vmem:[%s733 + $0x14] sm:$0xf]
        %v880 = vld [vmem:[%s733 + $0x18] sm:$0xf]
        %v881 = vld [vmem:[%s733 + $0x1c] sm:$0xf]
        %v882 = vld [vmem:[%s733 + $0x20] sm:$0xf]
        %v883 = vld [vmem:[%s733 + $0x24] sm:$0xf]
        %v884 = vld [vmem:[%s733 + $0x28] sm:$0xf]
        %v885 = vld [vmem:[%s733 + $0x2c] sm:$0xf]
        %v886 = vld [vmem:[%s733 + $0x30] sm:$0xf]
        %v887 = vld [vmem:[%s733 + $0x34] sm:$0xf]
        %v888 = vld [vmem:[%s733 + $0x38] sm:$0xf]
        %v889 = vld [vmem:[%s733 + $0x3c] sm:$0xf]
        %v890 = vld [vmem:[%s733 + $0x40] sm:$0xf]
        %v891 = vld [vmem:[%s733 + $0x44] sm:$0xf]
        %v892 = vld [vmem:[%s733 + $0x48] sm:$0xf]
        %v893 = vld [vmem:[%s733 + $0x4c] sm:$0xf]
        %v894 = vld [vmem:[%s733 + $0x50] sm:$0xf]
        %v895 = vld [vmem:[%s733 + $0x54] sm:$0xf]
        %v896 = vld [vmem:[%s733 + $0x58] sm:$0xf]
        %v897 = vld [vmem:[%s733 + $0x5c] sm:$0xf]
        %v898 = vld [vmem:[%s733 + $0x60] sm:$0xf]
        %v899 = vld [vmem:[%s733 + $0x64] sm:$0xf]
        %v900 = vld [vmem:[%s733 + $0x68] sm:$0xf]
        %v901 = vld [vmem:[%s733 + $0x6c] sm:$0xf]
        %v902 = vld [vmem:[%s733 + $0x70] sm:$0xf]
        %v903 = vld [vmem:[%s733 + $0x74] sm:$0xf]
        %v904 = vld [vmem:[%s733 + $0x78] sm:$0xf]
        %v905 = vld [vmem:[%s733 + $0x7c] sm:$0xf]
        %v906 = vld [vmem:[%s733 + $0x80] sm:$0xf]
        %v907 = vld [vmem:[%s733 + $0x84] sm:$0xf]
        %v908 = vld [vmem:[%s733 + $0x88] sm:$0xf]
        %v909 = vld [vmem:[%s733 + $0x8c] sm:$0xf]
        %v910 = vld [vmem:[%s733 + $0x90] sm:$0xf]
        %v911 = vld [vmem:[%s733 + $0x94] sm:$0xf]
        %v912 = vld [vmem:[%s733 + $0x98] sm:$0xf]
        %v913 = vld [vmem:[%s733 + $0x9c] sm:$0xf]
        %v914 = vld [vmem:[%s733 + $0xa0] sm:$0xf]
        %v915 = vld [vmem:[%s733 + $0xa4] sm:$0xf]
        %v916 = vld [vmem:[%s733 + $0xa8] sm:$0xf]
        %v917 = vld [vmem:[%s733 + $0xac] sm:$0xf]
        %v918 = vld [vmem:[%s733 + $0xb0] sm:$0xf]
        %v919 = vld [vmem:[%s733 + $0xb4] sm:$0xf]
        %v920 = vld [vmem:[%s733 + $0xb8] sm:$0xf]
        %v921 = vld [vmem:[%s733 + $0xbc] sm:$0xf]
        %v922 = vld [vmem:[%s733 + $0xc0] sm:$0xf]
        %v923 = vld [vmem:[%s733 + $0xc4] sm:$0xf]
        %v924 = vld [vmem:[%s733 + $0xc8] sm:$0xf]
        %v925 = vld [vmem:[%s733 + $0xcc] sm:$0xf]
        %v926 = vld [vmem:[%s733 + $0xd0] sm:$0xf]
        %v927 = vld [vmem:[%s733 + $0xd4] sm:$0xf]
        %v928 = vld [vmem:[%s733 + $0xd8] sm:$0xf]
        %v929 = vld [vmem:[%s733 + $0xdc] sm:$0xf]
        %v930 = vld [vmem:[%s733 + $0xe0] sm:$0xf]
        %v931 = vld [vmem:[%s733 + $0xe4] sm:$0xf]
        %v932 = vld [vmem:[%s733 + $0xe8] sm:$0xf]
        %v933 = vld [vmem:[%s733 + $0xec] sm:$0xf]
        %v934 = vld [vmem:[%s733 + $0xf0] sm:$0xf]
        %v935 = vld [vmem:[%s733 + $0xf4] sm:$0xf]
        %v936 = vld [vmem:[%s733 + $0xf8] sm:$0xf]
        %v937 = vld [vmem:[%s733 + $0xfc] sm:$0xf]
        %v938 = vlaneseq
        %v939 = vand.u32 %v938, 127
        %vm940 = vcmp.lt.s32.totalorder %v939, 16
        %v941 = vadd.s32 %v809, 16
        %v942 = vadd.s32 %v810, 16
        %v943 = vadd.s32 %v811, 16
        %v944 = vadd.s32 %v812, 16
        %v945 = vadd.s32 %v813, 16
        %v946 = vadd.s32 %v814, 16
        %v947 = vadd.s32 %v815, 16
        %v948 = vadd.s32 %v816, 16
        %v949 = vadd.s32 %v817, 16
        %v950 = vadd.s32 %v818, 16
        %v951 = vadd.s32 %v819, 16
        %v952 = vadd.s32 %v820, 16
        %v953 = vadd.s32 %v821, 16
        %v954 = vadd.s32 %v822, 16
        %v955 = vadd.s32 %v823, 16
        %v956 = vadd.s32 %v824, 16
        %v957 = vadd.s32 %v825, 16
        %v958 = vadd.s32 %v826, 16
        %v959 = vadd.s32 %v827, 16
        %v960 = vadd.s32 %v828, 16
        %v961 = vadd.s32 %v829, 16
        %v962 = vadd.s32 %v830, 16
        %v963 = vadd.s32 %v831, 16
        %v964 = vadd.s32 %v832, 16
        %v965 = vadd.s32 %v833, 16
        %v966 = vadd.s32 %v834, 16
        %v967 = vadd.s32 %v835, 16
        %v968 = vadd.s32 %v836, 16
        %v969 = vadd.s32 %v837, 16
        %v970 = vadd.s32 %v838, 16
        %v971 = vadd.s32 %v839, 16
        %v972 = vadd.s32 %v840, 16
        %v973 = vadd.s32 %v841, 16
        %v974 = vadd.s32 %v842, 16
        %v975 = vadd.s32 %v843, 16
        %v976 = vadd.s32 %v844, 16
        %v977 = vadd.s32 %v845, 16
        %v978 = vadd.s32 %v846, 16
        %v979 = vadd.s32 %v847, 16
        %v980 = vadd.s32 %v848, 16
        %v981 = vadd.s32 %v849, 16
        %v982 = vadd.s32 %v850, 16
        %v983 = vadd.s32 %v851, 16
        %v984 = vadd.s32 %v852, 16
        %v985 = vadd.s32 %v853, 16
        %v986 = vadd.s32 %v854, 16
        %v987 = vadd.s32 %v855, 16
        %v988 = vadd.s32 %v856, 16
        %v989 = vadd.s32 %v857, 16
        %v990 = vadd.s32 %v858, 16
        %v991 = vadd.s32 %v859, 16
        %v992 = vadd.s32 %v860, 16
        %v993 = vadd.s32 %v861, 16
        %v994 = vadd.s32 %v862, 16
        %v995 = vadd.s32 %v863, 16
        %v996 = vadd.s32 %v864, 16
        %v997 = vadd.s32 %v865, 16
        %v998 = vadd.s32 %v866, 16
        %v999 = vadd.s32 %v867, 16
        %v1000 = vadd.s32 %v868, 16
        %v1001 = vadd.s32 %v869, 16
        %v1002 = vadd.s32 %v870, 16
        %v1003 = vadd.s32 %v871, 16
        %v1004 = vadd.s32 %v872, 16
        %1005 = vset.pattern.permute.xlu0 0
        %1006 = vperm.xlu0 %1005, %v745
        %v1007 = vpop.permute.xlu0 %1006
        %1008 = vset.pattern.permute.xlu0 0
        %1009 = vperm.xlu0 %1008, %v746
        %v1010 = vpop.permute.xlu0 %1009
        %1011 = vset.pattern.permute.xlu0 0
        %1012 = vperm.xlu0 %1011, %v747
        %v1013 = vpop.permute.xlu0 %1012
        %1014 = vset.pattern.permute.xlu0 0
        %1015 = vperm.xlu0 %1014, %v748
        %v1016 = vpop.permute.xlu0 %1015
        %1017 = vset.pattern.permute.xlu0 0
        %1018 = vperm.xlu0 %1017, %v749
        %v1019 = vpop.permute.xlu0 %1018
        %1020 = vset.pattern.permute.xlu0 0
        %1021 = vperm.xlu0 %1020, %v750
        %v1022 = vpop.permute.xlu0 %1021
        %1023 = vset.pattern.permute.xlu0 0
        %1024 = vperm.xlu0 %1023, %v751
        %v1025 = vpop.permute.xlu0 %1024
        %1026 = vset.pattern.permute.xlu0 0
        %1027 = vperm.xlu0 %1026, %v752
        %v1028 = vpop.permute.xlu0 %1027
        %1029 = vset.pattern.permute.xlu0 0
        %1030 = vperm.xlu0 %1029, %v753
        %v1031 = vpop.permute.xlu0 %1030
        %1032 = vset.pattern.permute.xlu0 0
        %1033 = vperm.xlu0 %1032, %v754
        %v1034 = vpop.permute.xlu0 %1033
        %1035 = vset.pattern.permute.xlu0 0
        %1036 = vperm.xlu0 %1035, %v755
        %v1037 = vpop.permute.xlu0 %1036
        %1038 = vset.pattern.permute.xlu0 0
        %1039 = vperm.xlu0 %1038, %v756
        %v1040 = vpop.permute.xlu0 %1039
        %1041 = vset.pattern.permute.xlu0 0
        %1042 = vperm.xlu0 %1041, %v757
        %v1043 = vpop.permute.xlu0 %1042
        %1044 = vset.pattern.permute.xlu0 0
        %1045 = vperm.xlu0 %1044, %v758
        %v1046 = vpop.permute.xlu0 %1045
        %1047 = vset.pattern.permute.xlu0 0
        %1048 = vperm.xlu0 %1047, %v759
        %v1049 = vpop.permute.xlu0 %1048
        %1050 = vset.pattern.permute.xlu0 0
        %1051 = vperm.xlu0 %1050, %v760
        %v1052 = vpop.permute.xlu0 %1051
        %1053 = vset.pattern.permute.xlu0 0
        %1054 = vperm.xlu0 %1053, %v761
        %v1055 = vpop.permute.xlu0 %1054
        %1056 = vset.pattern.permute.xlu0 0
        %1057 = vperm.xlu0 %1056, %v762
        %v1058 = vpop.permute.xlu0 %1057
        %1059 = vset.pattern.permute.xlu0 0
        %1060 = vperm.xlu0 %1059, %v763
        %v1061 = vpop.permute.xlu0 %1060
        %1062 = vset.pattern.permute.xlu0 0
        %1063 = vperm.xlu0 %1062, %v764
        %v1064 = vpop.permute.xlu0 %1063
        %1065 = vset.pattern.permute.xlu0 0
        %1066 = vperm.xlu0 %1065, %v765
        %v1067 = vpop.permute.xlu0 %1066
        %1068 = vset.pattern.permute.xlu0 0
        %1069 = vperm.xlu0 %1068, %v766
        %v1070 = vpop.permute.xlu0 %1069
        %1071 = vset.pattern.permute.xlu0 0
        %1072 = vperm.xlu0 %1071, %v767
        %v1073 = vpop.permute.xlu0 %1072
        %1074 = vset.pattern.permute.xlu0 0
        %1075 = vperm.xlu0 %1074, %v768
        %v1076 = vpop.permute.xlu0 %1075
        %1077 = vset.pattern.permute.xlu0 0
        %1078 = vperm.xlu0 %1077, %v769
        %v1079 = vpop.permute.xlu0 %1078
        %1080 = vset.pattern.permute.xlu0 0
        %1081 = vperm.xlu0 %1080, %v770
        %v1082 = vpop.permute.xlu0 %1081
        %1083 = vset.pattern.permute.xlu0 0
        %1084 = vperm.xlu0 %1083, %v771
        %v1085 = vpop.permute.xlu0 %1084
        %1086 = vset.pattern.permute.xlu0 0
        %1087 = vperm.xlu0 %1086, %v772
        %v1088 = vpop.permute.xlu0 %1087
        %1089 = vset.pattern.permute.xlu0 0
        %1090 = vperm.xlu0 %1089, %v773
        %v1091 = vpop.permute.xlu0 %1090
        %1092 = vset.pattern.permute.xlu0 0
        %1093 = vperm.xlu0 %1092, %v774
        %v1094 = vpop.permute.xlu0 %1093
        %1095 = vset.pattern.permute.xlu0 0
        %1096 = vperm.xlu0 %1095, %v775
        %v1097 = vpop.permute.xlu0 %1096
        %1098 = vset.pattern.permute.xlu0 0
        %1099 = vperm.xlu0 %1098, %v776
        %v1100 = vpop.permute.xlu0 %1099
        %1101 = vset.pattern.permute.xlu0 0
        %1102 = vperm.xlu0 %1101, %v777
        %v1103 = vpop.permute.xlu0 %1102
        %1104 = vset.pattern.permute.xlu0 0
        %1105 = vperm.xlu0 %1104, %v778
        %v1106 = vpop.permute.xlu0 %1105
        %1107 = vset.pattern.permute.xlu0 0
        %1108 = vperm.xlu0 %1107, %v779
        %v1109 = vpop.permute.xlu0 %1108
        %1110 = vset.pattern.permute.xlu0 0
        %1111 = vperm.xlu0 %1110, %v780
        %v1112 = vpop.permute.xlu0 %1111
        %1113 = vset.pattern.permute.xlu0 0
        %1114 = vperm.xlu0 %1113, %v781
        %v1115 = vpop.permute.xlu0 %1114
        %1116 = vset.pattern.permute.xlu0 0
        %1117 = vperm.xlu0 %1116, %v782
        %v1118 = vpop.permute.xlu0 %1117
        %1119 = vset.pattern.permute.xlu0 0
        %1120 = vperm.xlu0 %1119, %v783
        %v1121 = vpop.permute.xlu0 %1120
        %1122 = vset.pattern.permute.xlu0 0
        %1123 = vperm.xlu0 %1122, %v784
        %v1124 = vpop.permute.xlu0 %1123
        %1125 = vset.pattern.permute.xlu0 0
        %1126 = vperm.xlu0 %1125, %v785
        %v1127 = vpop.permute.xlu0 %1126
        %1128 = vset.pattern.permute.xlu0 0
        %1129 = vperm.xlu0 %1128, %v786
        %v1130 = vpop.permute.xlu0 %1129
        %1131 = vset.pattern.permute.xlu0 0
        %1132 = vperm.xlu0 %1131, %v787
        %v1133 = vpop.permute.xlu0 %1132
        %1134 = vset.pattern.permute.xlu0 0
        %1135 = vperm.xlu0 %1134, %v788
        %v1136 = vpop.permute.xlu0 %1135
        %1137 = vset.pattern.permute.xlu0 0
        %1138 = vperm.xlu0 %1137, %v789
        %v1139 = vpop.permute.xlu0 %1138
        %1140 = vset.pattern.permute.xlu0 0
        %1141 = vperm.xlu0 %1140, %v790
        %v1142 = vpop.permute.xlu0 %1141
        %1143 = vset.pattern.permute.xlu0 0
        %1144 = vperm.xlu0 %1143, %v791
        %v1145 = vpop.permute.xlu0 %1144
        %1146 = vset.pattern.permute.xlu0 0
        %1147 = vperm.xlu0 %1146, %v792
        %v1148 = vpop.permute.xlu0 %1147
        %1149 = vset.pattern.permute.xlu0 0
        %1150 = vperm.xlu0 %1149, %v793
        %v1151 = vpop.permute.xlu0 %1150
        %1152 = vset.pattern.permute.xlu0 0
        %1153 = vperm.xlu0 %1152, %v794
        %v1154 = vpop.permute.xlu0 %1153
        %1155 = vset.pattern.permute.xlu0 0
        %1156 = vperm.xlu0 %1155, %v795
        %v1157 = vpop.permute.xlu0 %1156
        %1158 = vset.pattern.permute.xlu0 0
        %1159 = vperm.xlu0 %1158, %v796
        %v1160 = vpop.permute.xlu0 %1159
        %1161 = vset.pattern.permute.xlu0 0
        %1162 = vperm.xlu0 %1161, %v797
        %v1163 = vpop.permute.xlu0 %1162
        %1164 = vset.pattern.permute.xlu0 0
        %1165 = vperm.xlu0 %1164, %v798
        %v1166 = vpop.permute.xlu0 %1165
        %1167 = vset.pattern.permute.xlu0 0
        %1168 = vperm.xlu0 %1167, %v799
        %v1169 = vpop.permute.xlu0 %1168
        %1170 = vset.pattern.permute.xlu0 0
        %1171 = vperm.xlu0 %1170, %v800
        %v1172 = vpop.permute.xlu0 %1171
        %1173 = vset.pattern.permute.xlu0 0
        %1174 = vperm.xlu0 %1173, %v801
        %v1175 = vpop.permute.xlu0 %1174
        %1176 = vset.pattern.permute.xlu0 0
        %1177 = vperm.xlu0 %1176, %v802
        %v1178 = vpop.permute.xlu0 %1177
        %1179 = vset.pattern.permute.xlu0 0
        %1180 = vperm.xlu0 %1179, %v803
        %v1181 = vpop.permute.xlu0 %1180
        %1182 = vset.pattern.permute.xlu0 0
        %1183 = vperm.xlu0 %1182, %v804
        %v1184 = vpop.permute.xlu0 %1183
        %1185 = vset.pattern.permute.xlu0 0
        %1186 = vperm.xlu0 %1185, %v805
        %v1187 = vpop.permute.xlu0 %1186
        %1188 = vset.pattern.permute.xlu0 0
        %1189 = vperm.xlu0 %1188, %v806
        %v1190 = vpop.permute.xlu0 %1189
        %1191 = vset.pattern.permute.xlu0 0
        %1192 = vperm.xlu0 %1191, %v807
        %v1193 = vpop.permute.xlu0 %1192
        %1194 = vset.pattern.permute.xlu0 0
        %1195 = vperm.xlu0 %1194, %v808
        %v1196 = vpop.permute.xlu0 %1195
        %1197 = vset.pattern.permute.xlu0 0
        %1198 = vperm.xlu0 %1197, %v941
        %v1199 = vpop.permute.xlu0 %1198
        %1200 = vset.pattern.permute.xlu0 0
        %1201 = vperm.xlu0 %1200, %v942
        %v1202 = vpop.permute.xlu0 %1201
        %1203 = vset.pattern.permute.xlu0 0
        %1204 = vperm.xlu0 %1203, %v943
        %v1205 = vpop.permute.xlu0 %1204
        %1206 = vset.pattern.permute.xlu0 0
        %1207 = vperm.xlu0 %1206, %v944
        %v1208 = vpop.permute.xlu0 %1207
        %1209 = vset.pattern.permute.xlu0 0
        %1210 = vperm.xlu0 %1209, %v945
        %v1211 = vpop.permute.xlu0 %1210
        %1212 = vset.pattern.permute.xlu0 0
        %1213 = vperm.xlu0 %1212, %v946
        %v1214 = vpop.permute.xlu0 %1213
        %1215 = vset.pattern.permute.xlu0 0
        %1216 = vperm.xlu0 %1215, %v947
        %v1217 = vpop.permute.xlu0 %1216
        %1218 = vset.pattern.permute.xlu0 0
        %1219 = vperm.xlu0 %1218, %v948
        %v1220 = vpop.permute.xlu0 %1219
        %1221 = vset.pattern.permute.xlu0 0
        %1222 = vperm.xlu0 %1221, %v949
        %v1223 = vpop.permute.xlu0 %1222
        %1224 = vset.pattern.permute.xlu0 0
        %1225 = vperm.xlu0 %1224, %v950
        %v1226 = vpop.permute.xlu0 %1225
        %1227 = vset.pattern.permute.xlu0 0
        %1228 = vperm.xlu0 %1227, %v951
        %v1229 = vpop.permute.xlu0 %1228
        %1230 = vset.pattern.permute.xlu0 0
        %1231 = vperm.xlu0 %1230, %v952
        %v1232 = vpop.permute.xlu0 %1231
        %1233 = vset.pattern.permute.xlu0 0
        %1234 = vperm.xlu0 %1233, %v953
        %v1235 = vpop.permute.xlu0 %1234
        %1236 = vset.pattern.permute.xlu0 0
        %1237 = vperm.xlu0 %1236, %v954
        %v1238 = vpop.permute.xlu0 %1237
        %1239 = vset.pattern.permute.xlu0 0
        %1240 = vperm.xlu0 %1239, %v955
        %v1241 = vpop.permute.xlu0 %1240
        %1242 = vset.pattern.permute.xlu0 0
        %1243 = vperm.xlu0 %1242, %v956
        %v1244 = vpop.permute.xlu0 %1243
        %1245 = vset.pattern.permute.xlu0 0
        %1246 = vperm.xlu0 %1245, %v957
        %v1247 = vpop.permute.xlu0 %1246
        %1248 = vset.pattern.permute.xlu0 0
        %1249 = vperm.xlu0 %1248, %v958
        %v1250 = vpop.permute.xlu0 %1249
        %1251 = vset.pattern.permute.xlu0 0
        %1252 = vperm.xlu0 %1251, %v959
        %v1253 = vpop.permute.xlu0 %1252
        %1254 = vset.pattern.permute.xlu0 0
        %1255 = vperm.xlu0 %1254, %v960
        %v1256 = vpop.permute.xlu0 %1255
        %1257 = vset.pattern.permute.xlu0 0
        %1258 = vperm.xlu0 %1257, %v961
        %v1259 = vpop.permute.xlu0 %1258
        %1260 = vset.pattern.permute.xlu0 0
        %1261 = vperm.xlu0 %1260, %v962
        %v1262 = vpop.permute.xlu0 %1261
        %1263 = vset.pattern.permute.xlu0 0
        %1264 = vperm.xlu0 %1263, %v963
        %v1265 = vpop.permute.xlu0 %1264
        %1266 = vset.pattern.permute.xlu0 0
        %1267 = vperm.xlu0 %1266, %v964
        %v1268 = vpop.permute.xlu0 %1267
        %1269 = vset.pattern.permute.xlu0 0
        %1270 = vperm.xlu0 %1269, %v965
        %v1271 = vpop.permute.xlu0 %1270
        %1272 = vset.pattern.permute.xlu0 0
        %1273 = vperm.xlu0 %1272, %v966
        %v1274 = vpop.permute.xlu0 %1273
        %1275 = vset.pattern.permute.xlu0 0
        %1276 = vperm.xlu0 %1275, %v967
        %v1277 = vpop.permute.xlu0 %1276
        %1278 = vset.pattern.permute.xlu0 0
        %1279 = vperm.xlu0 %1278, %v968
        %v1280 = vpop.permute.xlu0 %1279
        %1281 = vset.pattern.permute.xlu0 0
        %1282 = vperm.xlu0 %1281, %v969
        %v1283 = vpop.permute.xlu0 %1282
        %1284 = vset.pattern.permute.xlu0 0
        %1285 = vperm.xlu0 %1284, %v970
        %v1286 = vpop.permute.xlu0 %1285
        %1287 = vset.pattern.permute.xlu0 0
        %1288 = vperm.xlu0 %1287, %v971
        %v1289 = vpop.permute.xlu0 %1288
        %1290 = vset.pattern.permute.xlu0 0
        %1291 = vperm.xlu0 %1290, %v972
        %v1292 = vpop.permute.xlu0 %1291
        %1293 = vset.pattern.permute.xlu0 0
        %1294 = vperm.xlu0 %1293, %v973
        %v1295 = vpop.permute.xlu0 %1294
        %1296 = vset.pattern.permute.xlu0 0
        %1297 = vperm.xlu0 %1296, %v974
        %v1298 = vpop.permute.xlu0 %1297
        %1299 = vset.pattern.permute.xlu0 0
        %1300 = vperm.xlu0 %1299, %v975
        %v1301 = vpop.permute.xlu0 %1300
        %1302 = vset.pattern.permute.xlu0 0
        %1303 = vperm.xlu0 %1302, %v976
        %v1304 = vpop.permute.xlu0 %1303
        %1305 = vset.pattern.permute.xlu0 0
        %1306 = vperm.xlu0 %1305, %v977
        %v1307 = vpop.permute.xlu0 %1306
        %1308 = vset.pattern.permute.xlu0 0
        %1309 = vperm.xlu0 %1308, %v978
        %v1310 = vpop.permute.xlu0 %1309
        %1311 = vset.pattern.permute.xlu0 0
        %1312 = vperm.xlu0 %1311, %v979
        %v1313 = vpop.permute.xlu0 %1312
        %1314 = vset.pattern.permute.xlu0 0
        %1315 = vperm.xlu0 %1314, %v980
        %v1316 = vpop.permute.xlu0 %1315
        %1317 = vset.pattern.permute.xlu0 0
        %1318 = vperm.xlu0 %1317, %v981
        %v1319 = vpop.permute.xlu0 %1318
        %1320 = vset.pattern.permute.xlu0 0
        %1321 = vperm.xlu0 %1320, %v982
        %v1322 = vpop.permute.xlu0 %1321
        %1323 = vset.pattern.permute.xlu0 0
        %1324 = vperm.xlu0 %1323, %v983
        %v1325 = vpop.permute.xlu0 %1324
        %1326 = vset.pattern.permute.xlu0 0
        %1327 = vperm.xlu0 %1326, %v984
        %v1328 = vpop.permute.xlu0 %1327
        %1329 = vset.pattern.permute.xlu0 0
        %1330 = vperm.xlu0 %1329, %v985
        %v1331 = vpop.permute.xlu0 %1330
        %1332 = vset.pattern.permute.xlu0 0
        %1333 = vperm.xlu0 %1332, %v986
        %v1334 = vpop.permute.xlu0 %1333
        %1335 = vset.pattern.permute.xlu0 0
        %1336 = vperm.xlu0 %1335, %v987
        %v1337 = vpop.permute.xlu0 %1336
        %1338 = vset.pattern.permute.xlu0 0
        %1339 = vperm.xlu0 %1338, %v988
        %v1340 = vpop.permute.xlu0 %1339
        %1341 = vset.pattern.permute.xlu0 0
        %1342 = vperm.xlu0 %1341, %v989
        %v1343 = vpop.permute.xlu0 %1342
        %1344 = vset.pattern.permute.xlu0 0
        %1345 = vperm.xlu0 %1344, %v990
        %v1346 = vpop.permute.xlu0 %1345
        %1347 = vset.pattern.permute.xlu0 0
        %1348 = vperm.xlu0 %1347, %v991
        %v1349 = vpop.permute.xlu0 %1348
        %1350 = vset.pattern.permute.xlu0 0
        %1351 = vperm.xlu0 %1350, %v992
        %v1352 = vpop.permute.xlu0 %1351
        %1353 = vset.pattern.permute.xlu0 0
        %1354 = vperm.xlu0 %1353, %v993
        %v1355 = vpop.permute.xlu0 %1354
        %1356 = vset.pattern.permute.xlu0 0
        %1357 = vperm.xlu0 %1356, %v994
        %v1358 = vpop.permute.xlu0 %1357
        %1359 = vset.pattern.permute.xlu0 0
        %1360 = vperm.xlu0 %1359, %v995
        %v1361 = vpop.permute.xlu0 %1360
        %1362 = vset.pattern.permute.xlu0 0
        %1363 = vperm.xlu0 %1362, %v996
        %v1364 = vpop.permute.xlu0 %1363
        %1365 = vset.pattern.permute.xlu0 0
        %1366 = vperm.xlu0 %1365, %v997
        %v1367 = vpop.permute.xlu0 %1366
        %1368 = vset.pattern.permute.xlu0 0
        %1369 = vperm.xlu0 %1368, %v998
        %v1370 = vpop.permute.xlu0 %1369
        %1371 = vset.pattern.permute.xlu0 0
        %1372 = vperm.xlu0 %1371, %v999
        %v1373 = vpop.permute.xlu0 %1372
        %1374 = vset.pattern.permute.xlu0 0
        %1375 = vperm.xlu0 %1374, %v1000
        %v1376 = vpop.permute.xlu0 %1375
        %1377 = vset.pattern.permute.xlu0 0
        %1378 = vperm.xlu0 %1377, %v1001
        %v1379 = vpop.permute.xlu0 %1378
        %1380 = vset.pattern.permute.xlu0 0
        %1381 = vperm.xlu0 %1380, %v1002
        %v1382 = vpop.permute.xlu0 %1381
        %1383 = vset.pattern.permute.xlu0 0
        %1384 = vperm.xlu0 %1383, %v1003
        %v1385 = vpop.permute.xlu0 %1384
        %1386 = vset.pattern.permute.xlu0 0
        %1387 = vperm.xlu0 %1386, %v1004
        %v1388 = vpop.permute.xlu0 %1387
        %v1389 = vsel %vm940, %v1007, %v1199
        %v1390 = vsel %vm940, %v1010, %v1202
        %v1391 = vsel %vm940, %v1013, %v1205
        %v1392 = vsel %vm940, %v1016, %v1208
        %v1393 = vsel %vm940, %v1019, %v1211
        %v1394 = vsel %vm940, %v1022, %v1214
        %v1395 = vsel %vm940, %v1025, %v1217
        %v1396 = vsel %vm940, %v1028, %v1220
        %v1397 = vsel %vm940, %v1031, %v1223
        %v1398 = vsel %vm940, %v1034, %v1226
        %v1399 = vsel %vm940, %v1037, %v1229
        %v1400 = vsel %vm940, %v1040, %v1232
        %v1401 = vsel %vm940, %v1043, %v1235
        %v1402 = vsel %vm940, %v1046, %v1238
        %v1403 = vsel %vm940, %v1049, %v1241
        %v1404 = vsel %vm940, %v1052, %v1244
        %v1405 = vsel %vm940, %v1055, %v1247
        %v1406 = vsel %vm940, %v1058, %v1250
        %v1407 = vsel %vm940, %v1061, %v1253
        %v1408 = vsel %vm940, %v1064, %v1256
        %v1409 = vsel %vm940, %v1067, %v1259
        %v1410 = vsel %vm940, %v1070, %v1262
        %v1411 = vsel %vm940, %v1073, %v1265
        %v1412 = vsel %vm940, %v1076, %v1268
        %v1413 = vsel %vm940, %v1079, %v1271
        %v1414 = vsel %vm940, %v1082, %v1274
        %v1415 = vsel %vm940, %v1085, %v1277
        %v1416 = vsel %vm940, %v1088, %v1280
        %v1417 = vsel %vm940, %v1091, %v1283
        %v1418 = vsel %vm940, %v1094, %v1286
        %v1419 = vsel %vm940, %v1097, %v1289
        %v1420 = vsel %vm940, %v1100, %v1292
        %v1421 = vsel %vm940, %v1103, %v1295
        %v1422 = vsel %vm940, %v1106, %v1298
        %v1423 = vsel %vm940, %v1109, %v1301
        %v1424 = vsel %vm940, %v1112, %v1304
        %v1425 = vsel %vm940, %v1115, %v1307
        %v1426 = vsel %vm940, %v1118, %v1310
        %v1427 = vsel %vm940, %v1121, %v1313
        %v1428 = vsel %vm940, %v1124, %v1316
        %v1429 = vsel %vm940, %v1127, %v1319
        %v1430 = vsel %vm940, %v1130, %v1322
        %v1431 = vsel %vm940, %v1133, %v1325
        %v1432 = vsel %vm940, %v1136, %v1328
        %v1433 = vsel %vm940, %v1139, %v1331
        %v1434 = vsel %vm940, %v1142, %v1334
        %v1435 = vsel %vm940, %v1145, %v1337
        %v1436 = vsel %vm940, %v1148, %v1340
        %v1437 = vsel %vm940, %v1151, %v1343
        %v1438 = vsel %vm940, %v1154, %v1346
        %v1439 = vsel %vm940, %v1157, %v1349
        %v1440 = vsel %vm940, %v1160, %v1352
        %v1441 = vsel %vm940, %v1163, %v1355
        %v1442 = vsel %vm940, %v1166, %v1358
        %v1443 = vsel %vm940, %v1169, %v1361
        %v1444 = vsel %vm940, %v1172, %v1364
        %v1445 = vsel %vm940, %v1175, %v1367
        %v1446 = vsel %vm940, %v1178, %v1370
        %v1447 = vsel %vm940, %v1181, %v1373
        %v1448 = vsel %vm940, %v1184, %v1376
        %v1449 = vsel %vm940, %v1187, %v1379
        %v1450 = vsel %vm940, %v1190, %v1382
        %v1451 = vsel %vm940, %v1193, %v1385
        %v1452 = vsel %vm940, %v1196, %v1388
        %vm1453 = vcmp.eq.s32.totalorder %v939, %v1389
        %vm1454 = vcmp.eq.s32.totalorder %v939, %v1390
        %vm1455 = vcmp.eq.s32.totalorder %v939, %v1391
        %vm1456 = vcmp.eq.s32.totalorder %v939, %v1392
        %vm1457 = vcmp.eq.s32.totalorder %v939, %v1393
        %vm1458 = vcmp.eq.s32.totalorder %v939, %v1394
        %vm1459 = vcmp.eq.s32.totalorder %v939, %v1395
        %vm1460 = vcmp.eq.s32.totalorder %v939, %v1396
        %vm1461 = vcmp.eq.s32.totalorder %v939, %v1397
        %vm1462 = vcmp.eq.s32.totalorder %v939, %v1398
        %vm1463 = vcmp.eq.s32.totalorder %v939, %v1399
        %vm1464 = vcmp.eq.s32.totalorder %v939, %v1400
        %vm1465 = vcmp.eq.s32.totalorder %v939, %v1401
        %vm1466 = vcmp.eq.s32.totalorder %v939, %v1402
        %vm1467 = vcmp.eq.s32.totalorder %v939, %v1403
        %vm1468 = vcmp.eq.s32.totalorder %v939, %v1404
        %vm1469 = vcmp.eq.s32.totalorder %v939, %v1405
        %vm1470 = vcmp.eq.s32.totalorder %v939, %v1406
        %vm1471 = vcmp.eq.s32.totalorder %v939, %v1407
        %vm1472 = vcmp.eq.s32.totalorder %v939, %v1408
        %vm1473 = vcmp.eq.s32.totalorder %v939, %v1409
        %vm1474 = vcmp.eq.s32.totalorder %v939, %v1410
        %vm1475 = vcmp.eq.s32.totalorder %v939, %v1411
        %vm1476 = vcmp.eq.s32.totalorder %v939, %v1412
        %vm1477 = vcmp.eq.s32.totalorder %v939, %v1413
        %vm1478 = vcmp.eq.s32.totalorder %v939, %v1414
        %vm1479 = vcmp.eq.s32.totalorder %v939, %v1415
        %vm1480 = vcmp.eq.s32.totalorder %v939, %v1416
        %vm1481 = vcmp.eq.s32.totalorder %v939, %v1417
        %vm1482 = vcmp.eq.s32.totalorder %v939, %v1418
        %vm1483 = vcmp.eq.s32.totalorder %v939, %v1419
        %vm1484 = vcmp.eq.s32.totalorder %v939, %v1420
        %vm1485 = vcmp.eq.s32.totalorder %v939, %v1421
        %vm1486 = vcmp.eq.s32.totalorder %v939, %v1422
        %vm1487 = vcmp.eq.s32.totalorder %v939, %v1423
        %vm1488 = vcmp.eq.s32.totalorder %v939, %v1424
        %vm1489 = vcmp.eq.s32.totalorder %v939, %v1425
        %vm1490 = vcmp.eq.s32.totalorder %v939, %v1426
        %vm1491 = vcmp.eq.s32.totalorder %v939, %v1427
        %vm1492 = vcmp.eq.s32.totalorder %v939, %v1428
        %vm1493 = vcmp.eq.s32.totalorder %v939, %v1429
        %vm1494 = vcmp.eq.s32.totalorder %v939, %v1430
        %vm1495 = vcmp.eq.s32.totalorder %v939, %v1431
        %vm1496 = vcmp.eq.s32.totalorder %v939, %v1432
        %vm1497 = vcmp.eq.s32.totalorder %v939, %v1433
        %vm1498 = vcmp.eq.s32.totalorder %v939, %v1434
        %vm1499 = vcmp.eq.s32.totalorder %v939, %v1435
        %vm1500 = vcmp.eq.s32.totalorder %v939, %v1436
        %vm1501 = vcmp.eq.s32.totalorder %v939, %v1437
        %vm1502 = vcmp.eq.s32.totalorder %v939, %v1438
        %vm1503 = vcmp.eq.s32.totalorder %v939, %v1439
        %vm1504 = vcmp.eq.s32.totalorder %v939, %v1440
        %vm1505 = vcmp.eq.s32.totalorder %v939, %v1441
        %vm1506 = vcmp.eq.s32.totalorder %v939, %v1442
        %vm1507 = vcmp.eq.s32.totalorder %v939, %v1443
        %vm1508 = vcmp.eq.s32.totalorder %v939, %v1444
        %vm1509 = vcmp.eq.s32.totalorder %v939, %v1445
        %vm1510 = vcmp.eq.s32.totalorder %v939, %v1446
        %vm1511 = vcmp.eq.s32.totalorder %v939, %v1447
        %vm1512 = vcmp.eq.s32.totalorder %v939, %v1448
        %vm1513 = vcmp.eq.s32.totalorder %v939, %v1449
        %vm1514 = vcmp.eq.s32.totalorder %v939, %v1450
        %vm1515 = vcmp.eq.s32.totalorder %v939, %v1451
        %vm1516 = vcmp.eq.s32.totalorder %v939, %v1452
        %v1517 = vsel %vm1453, 1, 0
        %v1518 = vsel %vm1454, 1, 0
        %v1519 = vsel %vm1455, 1, 0
        %v1520 = vsel %vm1456, 1, 0
        %v1521 = vsel %vm1457, 1, 0
        %v1522 = vsel %vm1458, 1, 0
        %v1523 = vsel %vm1459, 1, 0
        %v1524 = vsel %vm1460, 1, 0
        %v1525 = vsel %vm1461, 1, 0
        %v1526 = vsel %vm1462, 1, 0
        %v1527 = vsel %vm1463, 1, 0
        %v1528 = vsel %vm1464, 1, 0
        %v1529 = vsel %vm1465, 1, 0
        %v1530 = vsel %vm1466, 1, 0
        %v1531 = vsel %vm1467, 1, 0
        %v1532 = vsel %vm1468, 1, 0
        %v1533 = vsel %vm1469, 1, 0
        %v1534 = vsel %vm1470, 1, 0
        %v1535 = vsel %vm1471, 1, 0
        %v1536 = vsel %vm1472, 1, 0
        %v1537 = vsel %vm1473, 1, 0
        %v1538 = vsel %vm1474, 1, 0
        %v1539 = vsel %vm1475, 1, 0
        %v1540 = vsel %vm1476, 1, 0
        %v1541 = vsel %vm1477, 1, 0
        %v1542 = vsel %vm1478, 1, 0
        %v1543 = vsel %vm1479, 1, 0
        %v1544 = vsel %vm1480, 1, 0
        %v1545 = vsel %vm1481, 1, 0
        %v1546 = vsel %vm1482, 1, 0
        %v1547 = vsel %vm1483, 1, 0
        %v1548 = vsel %vm1484, 1, 0
        %v1549 = vsel %vm1485, 1, 0
        %v1550 = vsel %vm1486, 1, 0
        %v1551 = vsel %vm1487, 1, 0
        %v1552 = vsel %vm1488, 1, 0
        %v1553 = vsel %vm1489, 1, 0
        %v1554 = vsel %vm1490, 1, 0
        %v1555 = vsel %vm1491, 1, 0
        %v1556 = vsel %vm1492, 1, 0
        %v1557 = vsel %vm1493, 1, 0
        %v1558 = vsel %vm1494, 1, 0
        %v1559 = vsel %vm1495, 1, 0
        %v1560 = vsel %vm1496, 1, 0
        %v1561 = vsel %vm1497, 1, 0
        %v1562 = vsel %vm1498, 1, 0
        %v1563 = vsel %vm1499, 1, 0
        %v1564 = vsel %vm1500, 1, 0
        %v1565 = vsel %vm1501, 1, 0
        %v1566 = vsel %vm1502, 1, 0
        %v1567 = vsel %vm1503, 1, 0
        %v1568 = vsel %vm1504, 1, 0
        %v1569 = vsel %vm1505, 1, 0
        %v1570 = vsel %vm1506, 1, 0
        %v1571 = vsel %vm1507, 1, 0
        %v1572 = vsel %vm1508, 1, 0
        %v1573 = vsel %vm1509, 1, 0
        %v1574 = vsel %vm1510, 1, 0
        %v1575 = vsel %vm1511, 1, 0
        %v1576 = vsel %vm1512, 1, 0
        %v1577 = vsel %vm1513, 1, 0
        %v1578 = vsel %vm1514, 1, 0
        %v1579 = vsel %vm1515, 1, 0
        %v1580 = vsel %vm1516, 1, 0
        %v1581 = vcvt.s32.f32 %v1517
        %v1582 = vcvt.s32.f32 %v1518
        %v1583 = vcvt.s32.f32 %v1519
        %v1584 = vcvt.s32.f32 %v1520
        %v1585 = vcvt.s32.f32 %v1521
        %v1586 = vcvt.s32.f32 %v1522
        %v1587 = vcvt.s32.f32 %v1523
        %v1588 = vcvt.s32.f32 %v1524
        %v1589 = vcvt.s32.f32 %v1525
        %v1590 = vcvt.s32.f32 %v1526
        %v1591 = vcvt.s32.f32 %v1527
        %v1592 = vcvt.s32.f32 %v1528
        %v1593 = vcvt.s32.f32 %v1529
        %v1594 = vcvt.s32.f32 %v1530
        %v1595 = vcvt.s32.f32 %v1531
        %v1596 = vcvt.s32.f32 %v1532
        %v1597 = vcvt.s32.f32 %v1533
        %v1598 = vcvt.s32.f32 %v1534
        %v1599 = vcvt.s32.f32 %v1535
        %v1600 = vcvt.s32.f32 %v1536
        %v1601 = vcvt.s32.f32 %v1537
        %v1602 = vcvt.s32.f32 %v1538
        %v1603 = vcvt.s32.f32 %v1539
        %v1604 = vcvt.s32.f32 %v1540
        %v1605 = vcvt.s32.f32 %v1541
        %v1606 = vcvt.s32.f32 %v1542
        %v1607 = vcvt.s32.f32 %v1543
        %v1608 = vcvt.s32.f32 %v1544
        %v1609 = vcvt.s32.f32 %v1545
        %v1610 = vcvt.s32.f32 %v1546
        %v1611 = vcvt.s32.f32 %v1547
        %v1612 = vcvt.s32.f32 %v1548
        %v1613 = vcvt.s32.f32 %v1549
        %v1614 = vcvt.s32.f32 %v1550
        %v1615 = vcvt.s32.f32 %v1551
        %v1616 = vcvt.s32.f32 %v1552
        %v1617 = vcvt.s32.f32 %v1553
        %v1618 = vcvt.s32.f32 %v1554
        %v1619 = vcvt.s32.f32 %v1555
        %v1620 = vcvt.s32.f32 %v1556
        %v1621 = vcvt.s32.f32 %v1557
        %v1622 = vcvt.s32.f32 %v1558
        %v1623 = vcvt.s32.f32 %v1559
        %v1624 = vcvt.s32.f32 %v1560
        %v1625 = vcvt.s32.f32 %v1561
        %v1626 = vcvt.s32.f32 %v1562
        %v1627 = vcvt.s32.f32 %v1563
        %v1628 = vcvt.s32.f32 %v1564
        %v1629 = vcvt.s32.f32 %v1565
        %v1630 = vcvt.s32.f32 %v1566
        %v1631 = vcvt.s32.f32 %v1567
        %v1632 = vcvt.s32.f32 %v1568
        %v1633 = vcvt.s32.f32 %v1569
        %v1634 = vcvt.s32.f32 %v1570
        %v1635 = vcvt.s32.f32 %v1571
        %v1636 = vcvt.s32.f32 %v1572
        %v1637 = vcvt.s32.f32 %v1573
        %v1638 = vcvt.s32.f32 %v1574
        %v1639 = vcvt.s32.f32 %v1575
        %v1640 = vcvt.s32.f32 %v1576
        %v1641 = vcvt.s32.f32 %v1577
        %v1642 = vcvt.s32.f32 %v1578
        %v1643 = vcvt.s32.f32 %v1579
        %v1644 = vcvt.s32.f32 %v1580
        %v1645 = vpack.c.bf16 %v1582, %v1581
        %v1646 = vpack.c.bf16 %v1584, %v1583
        %v1647 = vpack.c.bf16 %v1586, %v1585
        %v1648 = vpack.c.bf16 %v1588, %v1587
        %v1649 = vpack.c.bf16 %v1590, %v1589
        %v1650 = vpack.c.bf16 %v1592, %v1591
        %v1651 = vpack.c.bf16 %v1594, %v1593
        %v1652 = vpack.c.bf16 %v1596, %v1595
        %v1653 = vpack.c.bf16 %v1598, %v1597
        %v1654 = vpack.c.bf16 %v1600, %v1599
        %v1655 = vpack.c.bf16 %v1602, %v1601
        %v1656 = vpack.c.bf16 %v1604, %v1603
        %v1657 = vpack.c.bf16 %v1606, %v1605
        %v1658 = vpack.c.bf16 %v1608, %v1607
        %v1659 = vpack.c.bf16 %v1610, %v1609
        %v1660 = vpack.c.bf16 %v1612, %v1611
        %v1661 = vpack.c.bf16 %v1614, %v1613
        %v1662 = vpack.c.bf16 %v1616, %v1615
        %v1663 = vpack.c.bf16 %v1618, %v1617
        %v1664 = vpack.c.bf16 %v1620, %v1619
        %v1665 = vpack.c.bf16 %v1622, %v1621
        %v1666 = vpack.c.bf16 %v1624, %v1623
        %v1667 = vpack.c.bf16 %v1626, %v1625
        %v1668 = vpack.c.bf16 %v1628, %v1627
        %v1669 = vpack.c.bf16 %v1630, %v1629
        %v1670 = vpack.c.bf16 %v1632, %v1631
        %v1671 = vpack.c.bf16 %v1634, %v1633
        %v1672 = vpack.c.bf16 %v1636, %v1635
        %v1673 = vpack.c.bf16 %v1638, %v1637
        %v1674 = vpack.c.bf16 %v1640, %v1639
        %v1675 = vpack.c.bf16 %v1642, %v1641
        %v1676 = vpack.c.bf16 %v1644, %v1643
        %v1677 = vld [vmem:[%s5] sm:$0xf]
        %v1678 = vld [vmem:[%s5 + $0x4] sm:$0xf]
        %v1679 = vld [vmem:[%s5 + $0x8] sm:$0xf]
        %v1680 = vld [vmem:[%s5 + $0xc] sm:$0xf]
        %v1681 = vld [vmem:[%s7] sm:$0xf]
        %v1682 = vld [vmem:[%s7 + $0x4] sm:$0xf]
        %v1683 = vld [vmem:[%s7 + $0x8] sm:$0xf]
        %v1684 = vld [vmem:[%s7 + $0xc] sm:$0xf]
        %v1749 = vunpack.c.l.b16 %v874
        %v1750 = vunpack.c.l.b16 %v875
        %v1751 = vunpack.c.l.b16 %v876
        %v1752 = vunpack.c.l.b16 %v877
        %v1753 = vunpack.c.l.b16 %v878
        %v1754 = vunpack.c.l.b16 %v879
        %v1755 = vunpack.c.l.b16 %v880
        %v1756 = vunpack.c.l.b16 %v881
        %v1757 = vunpack.c.l.b16 %v882
        %v1758 = vunpack.c.l.b16 %v883
        %v1759 = vunpack.c.l.b16 %v884
        %v1760 = vunpack.c.l.b16 %v885
        %v1761 = vunpack.c.l.b16 %v886
        %v1762 = vunpack.c.l.b16 %v887
        %v1763 = vunpack.c.l.b16 %v888
        %v1764 = vunpack.c.l.b16 %v889
        %v1765 = vunpack.c.l.b16 %v890
        %v1766 = vunpack.c.l.b16 %v891
        %v1767 = vunpack.c.l.b16 %v892
        %v1768 = vunpack.c.l.b16 %v893
        %v1769 = vunpack.c.l.b16 %v894
        %v1770 = vunpack.c.l.b16 %v895
        %v1771 = vunpack.c.l.b16 %v896
        %v1772 = vunpack.c.l.b16 %v897
        %v1773 = vunpack.c.l.b16 %v898
        %v1774 = vunpack.c.l.b16 %v899
        %v1775 = vunpack.c.l.b16 %v900
        %v1776 = vunpack.c.l.b16 %v901
        %v1777 = vunpack.c.l.b16 %v902
        %v1778 = vunpack.c.l.b16 %v903
        %v1779 = vunpack.c.l.b16 %v904
        %v1780 = vunpack.c.l.b16 %v905
        %v1781 = vunpack.c.l.b16 %v906
        %v1782 = vunpack.c.l.b16 %v907
        %v1783 = vunpack.c.l.b16 %v908
        %v1784 = vunpack.c.l.b16 %v909
        %v1785 = vunpack.c.l.b16 %v910
        %v1786 = vunpack.c.l.b16 %v911
        %v1787 = vunpack.c.l.b16 %v912
        %v1788 = vunpack.c.l.b16 %v913
        %v1789 = vunpack.c.l.b16 %v914
        %v1790 = vunpack.c.l.b16 %v915
        %v1791 = vunpack.c.l.b16 %v916
        %v1792 = vunpack.c.l.b16 %v917
        %v1793 = vunpack.c.l.b16 %v918
        %v1794 = vunpack.c.l.b16 %v919
        %v1795 = vunpack.c.l.b16 %v920
        %v1796 = vunpack.c.l.b16 %v921
        %v1797 = vunpack.c.l.b16 %v922
        %v1798 = vunpack.c.l.b16 %v923
        %v1799 = vunpack.c.l.b16 %v924
        %v1800 = vunpack.c.l.b16 %v925
        %v1801 = vunpack.c.l.b16 %v926
        %v1802 = vunpack.c.l.b16 %v927
        %v1803 = vunpack.c.l.b16 %v928
        %v1804 = vunpack.c.l.b16 %v929
        %v1805 = vunpack.c.l.b16 %v930
        %v1806 = vunpack.c.l.b16 %v931
        %v1807 = vunpack.c.l.b16 %v932
        %v1808 = vunpack.c.l.b16 %v933
        %v1809 = vunpack.c.l.b16 %v934
        %v1810 = vunpack.c.l.b16 %v935
        %v1811 = vunpack.c.l.b16 %v936
        %v1812 = vunpack.c.l.b16 %v937
        %v1813 = vpack.c.b16 %v1750, %v1749
        %v1814 = vpack.c.b16 %v1752, %v1751
        %v1815 = vpack.c.b16 %v1754, %v1753
        %v1816 = vpack.c.b16 %v1756, %v1755
        %v1817 = vpack.c.b16 %v1758, %v1757
        %v1818 = vpack.c.b16 %v1760, %v1759
        %v1819 = vpack.c.b16 %v1762, %v1761
        %v1820 = vpack.c.b16 %v1764, %v1763
        %v1821 = vpack.c.b16 %v1766, %v1765
        %v1822 = vpack.c.b16 %v1768, %v1767
        %v1823 = vpack.c.b16 %v1770, %v1769
        %v1824 = vpack.c.b16 %v1772, %v1771
        %v1825 = vpack.c.b16 %v1774, %v1773
        %v1826 = vpack.c.b16 %v1776, %v1775
        %v1827 = vpack.c.b16 %v1778, %v1777
        %v1828 = vpack.c.b16 %v1780, %v1779
        %v1829 = vpack.c.b16 %v1782, %v1781
        %v1830 = vpack.c.b16 %v1784, %v1783
        %v1831 = vpack.c.b16 %v1786, %v1785
        %v1832 = vpack.c.b16 %v1788, %v1787
        %v1833 = vpack.c.b16 %v1790, %v1789
        %v1834 = vpack.c.b16 %v1792, %v1791
        %v1835 = vpack.c.b16 %v1794, %v1793
        %v1836 = vpack.c.b16 %v1796, %v1795
        %v1837 = vpack.c.b16 %v1798, %v1797
        %v1838 = vpack.c.b16 %v1800, %v1799
        %v1839 = vpack.c.b16 %v1802, %v1801
        %v1840 = vpack.c.b16 %v1804, %v1803
        %v1841 = vpack.c.b16 %v1806, %v1805
        %v1842 = vpack.c.b16 %v1808, %v1807
        %v1843 = vpack.c.b16 %v1810, %v1809
        %v1844 = vpack.c.b16 %v1812, %v1811
        %v1849 = vunpack.c.l.b16 %v1681
        %v1850 = vunpack.c.l.b16 %v1682
        %v1851 = vunpack.c.l.b16 %v1683
        %v1852 = vunpack.c.l.b16 %v1684
        %v1853 = vpack.c.b16 %v1850, %v1849
        %v1854 = vpack.c.b16 %v1852, %v1851
        %vm1857 = vcmask 261120
        %v1859 = vsel %vm1857, %v1813, 0
        %v1862 = vsel %vm1857, %v1814, 0
        %v1865 = vsel %vm1857, %v1815, 0
        %v1868 = vsel %vm1857, %v1816, 0
        %v1871 = vsel %vm1857, %v1817, 0
        %v1874 = vsel %vm1857, %v1818, 0
        %v1877 = vsel %vm1857, %v1819, 0
        %v1880 = vsel %vm1857, %v1820, 0
        %v1883 = vsel %vm1857, %v1821, 0
        %v1886 = vsel %vm1857, %v1822, 0
        %v1889 = vsel %vm1857, %v1823, 0
        %v1892 = vsel %vm1857, %v1824, 0
        %v1895 = vsel %vm1857, %v1825, 0
        %v1898 = vsel %vm1857, %v1826, 0
        %v1901 = vsel %vm1857, %v1827, 0
        %v1904 = vsel %vm1857, %v1828, 0
        %v1907 = vsel %vm1857, %v1829, 0
        %v1910 = vsel %vm1857, %v1830, 0
        %v1913 = vsel %vm1857, %v1831, 0
        %v1916 = vsel %vm1857, %v1832, 0
        %v1919 = vsel %vm1857, %v1833, 0
        %v1922 = vsel %vm1857, %v1834, 0
        %v1925 = vsel %vm1857, %v1835, 0
        %v1928 = vsel %vm1857, %v1836, 0
        %v1931 = vsel %vm1857, %v1837, 0
        %v1934 = vsel %vm1857, %v1838, 0
        %v1937 = vsel %vm1857, %v1839, 0
        %v1940 = vsel %vm1857, %v1840, 0
        %v1943 = vsel %vm1857, %v1841, 0
        %v1946 = vsel %vm1857, %v1842, 0
        %v1949 = vsel %vm1857, %v1843, 0
        %v1952 = vsel %vm1857, %v1844, 0
        %1954 = vmatprep.subr.bf16.mxu0 0
        %1955 = vmatpush1.bf16.msra.mxu0 %v1853
        %1956 = vmatprep.subr.bf16.mxu0 0
        %1957 = vmatpush1.bf16.msra.mxu0 %v1854
        %1958 = vmatprep.subr.bf16.mxu0 0
        %1959 = vmatpush1.bf16.msra.mxu0 0
        %1960 = vmatprep.subr.bf16.mxu0 0
        %1961 = vmatpush1.bf16.msra.mxu0 0
        %1962 = vmatprep.subr.bf16.mxu0 0
        %1963 = vmatpush1.bf16.msra.mxu0 0
        %1964 = vmatprep.subr.bf16.mxu0 0
        %1965 = vmatpush1.bf16.msra.mxu0 0
        %1966 = vmatprep.subr.bf16.mxu0 0
        %1967 = vmatpush1.bf16.msra.mxu0 0
        %1968 = vmatprep.subr.bf16.mxu0 0
        %1969 = vmatpush1.bf16.msra.mxu0 0
        %1970 = vmatprep.subr.bf16.mxu0 0
        %1971 = vmatpush1.bf16.msra.mxu0 0
        %1972 = vmatprep.subr.bf16.mxu0 0
        %1973 = vmatpush1.bf16.msra.mxu0 0
        %1974 = vmatprep.subr.bf16.mxu0 0
        %1975 = vmatpush1.bf16.msra.mxu0 0
        %1976 = vmatprep.subr.bf16.mxu0 0
        %1977 = vmatpush1.bf16.msra.mxu0 0
        %1978 = vmatprep.subr.bf16.mxu0 0
        %1979 = vmatpush1.bf16.msra.mxu0 0
        %1980 = vmatprep.subr.bf16.mxu0 0
        %1981 = vmatpush1.bf16.msra.mxu0 0
        %1982 = vmatprep.subr.bf16.mxu0 0
        %1983 = vmatpush1.bf16.msra.mxu0 0
        %1984 = vmatprep.subr.bf16.mxu0 0
        %1985 = vmatpush1.bf16.msra.mxu0 0
        %1986 = vmatprep.mubr.bf16.mxu0 0
        %1987 = vmatmul.mubr.bf16.gmra.mrb[0].mxu0 %v1859
        %v1988 = vpop.f32.mrb[0].mxu0
        %v1989 = vadd.f32 0.0, %v1988
        %v1990 = vpop.f32.mrb[0].mxu0
        %v1991 = vpop.f32.mrb[0].mxu0
        %v1992 = vadd.f32 0.0, %v1991
        %v1993 = vpop.f32.mrb[0].mxu0
        %1994 = vmatprep.mubr.bf16.mxu0 0
        %1995 = vmatmul.mubr.bf16.gmra.mrb[0].mxu0 %v1862
        %v1996 = vpop.f32.mrb[0].mxu0
        %v1997 = vadd.f32 0.0, %v1996
        %v1998 = vpop.f32.mrb[0].mxu0
        %v1999 = vpop.f32.mrb[0].mxu0
        %v2000 = vadd.f32 0.0, %v1999
        %v2001 = vpop.f32.mrb[0].mxu0
        %2002 = vmatprep.mubr.bf16.mxu0 0
        %2003 = vmatmul.mubr.bf16.gmra.mrb[0].mxu0 %v1865
        %v2004 = vpop.f32.mrb[0].mxu0
        %v2005 = vadd.f32 0.0, %v2004
        %v2006 = vpop.f32.mrb[0].mxu0
        %v2007 = vpop.f32.mrb[0].mxu0
        %v2008 = vadd.f32 0.0, %v2007
        %v2009 = vpop.f32.mrb[0].mxu0
        %2010 = vmatprep.mubr.bf16.mxu0 0
        %2011 = vmatmul.mubr.bf16.gmra.mrb[0].mxu0 %v1868
        %v2012 = vpop.f32.mrb[0].mxu0
        %v2013 = vadd.f32 0.0, %v2012
        %v2014 = vpop.f32.mrb[0].mxu0
        %v2015 = vpop.f32.mrb[0].mxu0
        %v2016 = vadd.f32 0.0, %v2015
        %v2017 = vpop.f32.mrb[0].mxu0
        %2018 = vmatprep.mubr.bf16.mxu0 0
        %2019 = vmatmul.mubr.bf16.gmra.mrb[0].mxu0 %v1871
        %v2020 = vpop.f32.mrb[0].mxu0
        %v2021 = vadd.f32 0.0, %v2020
        %v2022 = vpop.f32.mrb[0].mxu0
        %v2023 = vpop.f32.mrb[0].mxu0
        %v2024 = vadd.f32 0.0, %v2023
        %v2025 = vpop.f32.mrb[0].mxu0
        %2026 = vmatprep.mubr.bf16.mxu0 0
        %2027 = vmatmul.mubr.bf16.gmra.mrb[0].mxu0 %v1874
        %v2028 = vpop.f32.mrb[0].mxu0
        %v2029 = vadd.f32 0.0, %v2028
        %v2030 = vpop.f32.mrb[0].mxu0
        %v2031 = vpop.f32.mrb[0].mxu0
        %v2032 = vadd.f32 0.0, %v2031
        %v2033 = vpop.f32.mrb[0].mxu0
        %2034 = vmatprep.mubr.bf16.mxu0 0
        %2035 = vmatmul.mubr.bf16.gmra.mrb[0].mxu0 %v1877
        %v2036 = vpop.f32.mrb[0].mxu0
        %v2037 = vadd.f32 0.0, %v2036
        %v2038 = vpop.f32.mrb[0].mxu0
        %v2039 = vpop.f32.mrb[0].mxu0
        %v2040 = vadd.f32 0.0, %v2039
        %v2041 = vpop.f32.mrb[0].mxu0
        %2042 = vmatprep.mubr.bf16.mxu0 0
        %2043 = vmatmul.mubr.bf16.gmra.mrb[0].mxu0 %v1880
        %v2044 = vpop.f32.mrb[0].mxu0
        %v2045 = vadd.f32 0.0, %v2044
        %v2046 = vpop.f32.mrb[0].mxu0
        %v2047 = vpop.f32.mrb[0].mxu0
        %v2048 = vadd.f32 0.0, %v2047
        %v2049 = vpop.f32.mrb[0].mxu0
        %2050 = vmatprep.mubr.bf16.mxu0 0
        %2051 = vmatmul.mubr.bf16.gmra.mrb[0].mxu0 %v1883
        %v2052 = vpop.f32.mrb[0].mxu0
        %v2053 = vadd.f32 0.0, %v2052
        %v2054 = vpop.f32.mrb[0].mxu0
        %v2055 = vpop.f32.mrb[0].mxu0
        %v2056 = vadd.f32 0.0, %v2055
        %v2057 = vpop.f32.mrb[0].mxu0
        %2058 = vmatprep.mubr.bf16.mxu0 0
        %2059 = vmatmul.mubr.bf16.gmra.mrb[0].mxu0 %v1886
        %v2060 = vpop.f32.mrb[0].mxu0
        %v2061 = vadd.f32 0.0, %v2060
        %v2062 = vpop.f32.mrb[0].mxu0
        %v2063 = vpop.f32.mrb[0].mxu0
        %v2064 = vadd.f32 0.0, %v2063
        %v2065 = vpop.f32.mrb[0].mxu0
        %2066 = vmatprep.mubr.bf16.mxu0 0
        %2067 = vmatmul.mubr.bf16.gmra.mrb[0].mxu0 %v1889
        %v2068 = vpop.f32.mrb[0].mxu0
        %v2069 = vadd.f32 0.0, %v2068
        %v2070 = vpop.f32.mrb[0].mxu0
        %v2071 = vpop.f32.mrb[0].mxu0
        %v2072 = vadd.f32 0.0, %v2071
        %v2073 = vpop.f32.mrb[0].mxu0
        %2074 = vmatprep.mubr.bf16.mxu0 0
        %2075 = vmatmul.mubr.bf16.gmra.mrb[0].mxu0 %v1892
        %v2076 = vpop.f32.mrb[0].mxu0
        %v2077 = vadd.f32 0.0, %v2076
        %v2078 = vpop.f32.mrb[0].mxu0
        %v2079 = vpop.f32.mrb[0].mxu0
        %v2080 = vadd.f32 0.0, %v2079
        %v2081 = vpop.f32.mrb[0].mxu0
        %2082 = vmatprep.mubr.bf16.mxu0 0
        %2083 = vmatmul.mubr.bf16.gmra.mrb[0].mxu0 %v1895
        %v2084 = vpop.f32.mrb[0].mxu0
        %v2085 = vadd.f32 0.0, %v2084
        %v2086 = vpop.f32.mrb[0].mxu0
        %v2087 = vpop.f32.mrb[0].mxu0
        %v2088 = vadd.f32 0.0, %v2087
        %v2089 = vpop.f32.mrb[0].mxu0
        %2090 = vmatprep.mubr.bf16.mxu0 0
        %2091 = vmatmul.mubr.bf16.gmra.mrb[0].mxu0 %v1898
        %v2092 = vpop.f32.mrb[0].mxu0
        %v2093 = vadd.f32 0.0, %v2092
        %v2094 = vpop.f32.mrb[0].mxu0
        %v2095 = vpop.f32.mrb[0].mxu0
        %v2096 = vadd.f32 0.0, %v2095
        %v2097 = vpop.f32.mrb[0].mxu0
        %2098 = vmatprep.mubr.bf16.mxu0 0
        %2099 = vmatmul.mubr.bf16.gmra.mrb[0].mxu0 %v1901
        %v2100 = vpop.f32.mrb[0].mxu0
        %v2101 = vadd.f32 0.0, %v2100
        %v2102 = vpop.f32.mrb[0].mxu0
        %v2103 = vpop.f32.mrb[0].mxu0
        %v2104 = vadd.f32 0.0, %v2103
        %v2105 = vpop.f32.mrb[0].mxu0
        %2106 = vmatprep.mubr.bf16.mxu0 0
        %2107 = vmatmul.mubr.bf16.gmra.mrb[0].mxu0 %v1904
        %v2108 = vpop.f32.mrb[0].mxu0
        %v2109 = vadd.f32 0.0, %v2108
        %v2110 = vpop.f32.mrb[0].mxu0
        %v2111 = vpop.f32.mrb[0].mxu0
        %v2112 = vadd.f32 0.0, %v2111
        %v2113 = vpop.f32.mrb[0].mxu0
        %2114 = vmatprep.mubr.bf16.mxu0 0
        %2115 = vmatmul.mubr.bf16.gmra.mrb[0].mxu0 %v1907
        %v2116 = vpop.f32.mrb[0].mxu0
        %v2117 = vadd.f32 0.0, %v2116
        %v2118 = vpop.f32.mrb[0].mxu0
        %v2119 = vpop.f32.mrb[0].mxu0
        %v2120 = vadd.f32 0.0, %v2119
        %v2121 = vpop.f32.mrb[0].mxu0
        %2122 = vmatprep.mubr.bf16.mxu0 0
        %2123 = vmatmul.mubr.bf16.gmra.mrb[0].mxu0 %v1910
        %v2124 = vpop.f32.mrb[0].mxu0
        %v2125 = vadd.f32 0.0, %v2124
        %v2126 = vpop.f32.mrb[0].mxu0
        %v2127 = vpop.f32.mrb[0].mxu0
        %v2128 = vadd.f32 0.0, %v2127
        %v2129 = vpop.f32.mrb[0].mxu0
        %2130 = vmatprep.mubr.bf16.mxu0 0
        %2131 = vmatmul.mubr.bf16.gmra.mrb[0].mxu0 %v1913
        %v2132 = vpop.f32.mrb[0].mxu0
        %v2133 = vadd.f32 0.0, %v2132
        %v2134 = vpop.f32.mrb[0].mxu0
        %v2135 = vpop.f32.mrb[0].mxu0
        %v2136 = vadd.f32 0.0, %v2135
        %v2137 = vpop.f32.mrb[0].mxu0
        %2138 = vmatprep.mubr.bf16.mxu0 0
        %2139 = vmatmul.mubr.bf16.gmra.mrb[0].mxu0 %v1916
        %v2140 = vpop.f32.mrb[0].mxu0
        %v2141 = vadd.f32 0.0, %v2140
        %v2142 = vpop.f32.mrb[0].mxu0
        %v2143 = vpop.f32.mrb[0].mxu0
        %v2144 = vadd.f32 0.0, %v2143
        %v2145 = vpop.f32.mrb[0].mxu0
        %2146 = vmatprep.mubr.bf16.mxu0 0
        %2147 = vmatmul.mubr.bf16.gmra.mrb[0].mxu0 %v1919
        %v2148 = vpop.f32.mrb[0].mxu0
        %v2149 = vadd.f32 0.0, %v2148
        %v2150 = vpop.f32.mrb[0].mxu0
        %v2151 = vpop.f32.mrb[0].mxu0
        %v2152 = vadd.f32 0.0, %v2151
        %v2153 = vpop.f32.mrb[0].mxu0
        %2154 = vmatprep.mubr.bf16.mxu0 0
        %2155 = vmatmul.mubr.bf16.gmra.mrb[0].mxu0 %v1922
        %v2156 = vpop.f32.mrb[0].mxu0
        %v2157 = vadd.f32 0.0, %v2156
        %v2158 = vpop.f32.mrb[0].mxu0
        %v2159 = vpop.f32.mrb[0].mxu0
        %v2160 = vadd.f32 0.0, %v2159
        %v2161 = vpop.f32.mrb[0].mxu0
        %2162 = vmatprep.mubr.bf16.mxu0 0
        %2163 = vmatmul.mubr.bf16.gmra.mrb[0].mxu0 %v1925
        %v2164 = vpop.f32.mrb[0].mxu0
        %v2165 = vadd.f32 0.0, %v2164
        %v2166 = vpop.f32.mrb[0].mxu0
        %v2167 = vpop.f32.mrb[0].mxu0
        %v2168 = vadd.f32 0.0, %v2167
        %v2169 = vpop.f32.mrb[0].mxu0
        %2170 = vmatprep.mubr.bf16.mxu0 0
        %2171 = vmatmul.mubr.bf16.gmra.mrb[0].mxu0 %v1928
        %v2172 = vpop.f32.mrb[0].mxu0
        %v2173 = vadd.f32 0.0, %v2172
        %v2174 = vpop.f32.mrb[0].mxu0
        %v2175 = vpop.f32.mrb[0].mxu0
        %v2176 = vadd.f32 0.0, %v2175
        %v2177 = vpop.f32.mrb[0].mxu0
        %2178 = vmatprep.mubr.bf16.mxu0 0
        %2179 = vmatmul.mubr.bf16.gmra.mrb[0].mxu0 %v1931
        %v2180 = vpop.f32.mrb[0].mxu0
        %v2181 = vadd.f32 0.0, %v2180
        %v2182 = vpop.f32.mrb[0].mxu0
        %v2183 = vpop.f32.mrb[0].mxu0
        %v2184 = vadd.f32 0.0, %v2183
        %v2185 = vpop.f32.mrb[0].mxu0
        %2186 = vmatprep.mubr.bf16.mxu0 0
        %2187 = vmatmul.mubr.bf16.gmra.mrb[0].mxu0 %v1934
        %v2188 = vpop.f32.mrb[0].mxu0
        %v2189 = vadd.f32 0.0, %v2188
        %v2190 = vpop.f32.mrb[0].mxu0
        %v2191 = vpop.f32.mrb[0].mxu0
        %v2192 = vadd.f32 0.0, %v2191
        %v2193 = vpop.f32.mrb[0].mxu0
        %2194 = vmatprep.mubr.bf16.mxu0 0
        %2195 = vmatmul.mubr.bf16.gmra.mrb[0].mxu0 %v1937
        %v2196 = vpop.f32.mrb[0].mxu0
        %v2197 = vadd.f32 0.0, %v2196
        %v2198 = vpop.f32.mrb[0].mxu0
        %v2199 = vpop.f32.mrb[0].mxu0
        %v2200 = vadd.f32 0.0, %v2199
        %v2201 = vpop.f32.mrb[0].mxu0
        %2202 = vmatprep.mubr.bf16.mxu0 0
        %2203 = vmatmul.mubr.bf16.gmra.mrb[0].mxu0 %v1940
        %v2204 = vpop.f32.mrb[0].mxu0
        %v2205 = vadd.f32 0.0, %v2204
        %v2206 = vpop.f32.mrb[0].mxu0
        %v2207 = vpop.f32.mrb[0].mxu0
        %v2208 = vadd.f32 0.0, %v2207
        %v2209 = vpop.f32.mrb[0].mxu0
        %2210 = vmatprep.mubr.bf16.mxu0 0
        %2211 = vmatmul.mubr.bf16.gmra.mrb[0].mxu0 %v1943
        %v2212 = vpop.f32.mrb[0].mxu0
        %v2213 = vadd.f32 0.0, %v2212
        %v2214 = vpop.f32.mrb[0].mxu0
        %v2215 = vpop.f32.mrb[0].mxu0
        %v2216 = vadd.f32 0.0, %v2215
        %v2217 = vpop.f32.mrb[0].mxu0
        %2218 = vmatprep.mubr.bf16.mxu0 0
        %2219 = vmatmul.mubr.bf16.gmra.mrb[0].mxu0 %v1946
        %v2220 = vpop.f32.mrb[0].mxu0
        %v2221 = vadd.f32 0.0, %v2220
        %v2222 = vpop.f32.mrb[0].mxu0
        %v2223 = vpop.f32.mrb[0].mxu0
        %v2224 = vadd.f32 0.0, %v2223
        %v2225 = vpop.f32.mrb[0].mxu0
        %2226 = vmatprep.mubr.bf16.mxu0 0
        %2227 = vmatmul.mubr.bf16.gmra.mrb[0].mxu0 %v1949
        %v2228 = vpop.f32.mrb[0].mxu0
        %v2229 = vadd.f32 0.0, %v2228
        %v2230 = vpop.f32.mrb[0].mxu0
        %v2231 = vpop.f32.mrb[0].mxu0
        %v2232 = vadd.f32 0.0, %v2231
        %v2233 = vpop.f32.mrb[0].mxu0
        %2234 = vmatprep.mubr.bf16.mxu0 0
        %2235 = vmatmul.mubr.bf16.gmra.mrb[0].mxu0 %v1952
        %v2236 = vpop.f32.mrb[0].mxu0
        %v2237 = vadd.f32 0.0, %v2236
        %v2238 = vpop.f32.mrb[0].mxu0
        %v2239 = vpop.f32.mrb[0].mxu0
        %v2240 = vadd.f32 0.0, %v2239
        %v2241 = vpop.f32.mrb[0].mxu0
        %2242 = vdwg.mxu0
        %v2247 = vunpack.c.l.b16 %v1677
        %v2248 = vunpack.c.l.b16 %v1678
        %v2249 = vunpack.c.l.b16 %v1679
        %v2250 = vunpack.c.l.b16 %v1680
        %v2251 = vpack.c.b16 %v2248, %v2247
        %v2252 = vpack.c.b16 %v2250, %v2249
        %v2256 = vsel %vm1857, %v1645, 0
        %v2259 = vsel %vm1857, %v1646, 0
        %v2262 = vsel %vm1857, %v1647, 0
        %v2265 = vsel %vm1857, %v1648, 0
        %v2268 = vsel %vm1857, %v1649, 0
        %v2271 = vsel %vm1857, %v1650, 0
        %v2274 = vsel %vm1857, %v1651, 0
        %v2277 = vsel %vm1857, %v1652, 0
        %v2280 = vsel %vm1857, %v1653, 0
        %v2283 = vsel %vm1857, %v1654, 0
        %v2286 = vsel %vm1857, %v1655, 0
        %v2289 = vsel %vm1857, %v1656, 0
        %v2292 = vsel %vm1857, %v1657, 0
        %v2295 = vsel %vm1857, %v1658, 0
        %v2298 = vsel %vm1857, %v1659, 0
        %v2301 = vsel %vm1857, %v1660, 0
        %v2304 = vsel %vm1857, %v1661, 0
        %v2307 = vsel %vm1857, %v1662, 0
        %v2310 = vsel %vm1857, %v1663, 0
        %v2313 = vsel %vm1857, %v1664, 0
        %v2316 = vsel %vm1857, %v1665, 0
        %v2319 = vsel %vm1857, %v1666, 0
        %v2322 = vsel %vm1857, %v1667, 0
        %v2325 = vsel %vm1857, %v1668, 0
        %v2328 = vsel %vm1857, %v1669, 0
        %v2331 = vsel %vm1857, %v1670, 0
        %v2334 = vsel %vm1857, %v1671, 0
        %v2337 = vsel %vm1857, %v1672, 0
        %v2340 = vsel %vm1857, %v1673, 0
        %v2343 = vsel %vm1857, %v1674, 0
        %v2346 = vsel %vm1857, %v1675, 0
        %v2349 = vsel %vm1857, %v1676, 0
        %2351 = vmatprep.subr.bf16.mxu0 0
        %2352 = vmatpush1.bf16.msra.mxu0 %v2251
        %2353 = vmatprep.subr.bf16.mxu0 0
        %2354 = vmatpush1.bf16.msra.mxu0 %v2252
        %2355 = vmatprep.subr.bf16.mxu0 0
        %2356 = vmatpush1.bf16.msra.mxu0 0
        %2357 = vmatprep.subr.bf16.mxu0 0
        %2358 = vmatpush1.bf16.msra.mxu0 0
        %2359 = vmatprep.subr.bf16.mxu0 0
        %2360 = vmatpush1.bf16.msra.mxu0 0
        %2361 = vmatprep.subr.bf16.mxu0 0
        %2362 = vmatpush1.bf16.msra.mxu0 0
        %2363 = vmatprep.subr.bf16.mxu0 0
        %2364 = vmatpush1.bf16.msra.mxu0 0
        %2365 = vmatprep.subr.bf16.mxu0 0
        %2366 = vmatpush1.bf16.msra.mxu0 0
        %2367 = vmatprep.subr.bf16.mxu0 0
        %2368 = vmatpush1.bf16.msra.mxu0 0
        %2369 = vmatprep.subr.bf16.mxu0 0
        %2370 = vmatpush1.bf16.msra.mxu0 0
        %2371 = vmatprep.subr.bf16.mxu0 0
        %2372 = vmatpush1.bf16.msra.mxu0 0
        %2373 = vmatprep.subr.bf16.mxu0 0
        %2374 = vmatpush1.bf16.msra.mxu0 0
        %2375 = vmatprep.subr.bf16.mxu0 0
        %2376 = vmatpush1.bf16.msra.mxu0 0
        %2377 = vmatprep.subr.bf16.mxu0 0
        %2378 = vmatpush1.bf16.msra.mxu0 0
        %2379 = vmatprep.subr.bf16.mxu0 0
        %2380 = vmatpush1.bf16.msra.mxu0 0
        %2381 = vmatprep.subr.bf16.mxu0 0
        %2382 = vmatpush1.bf16.msra.mxu0 0
        %2383 = vmatprep.mubr.bf16.mxu0 0
        %2384 = vmatmul.mubr.bf16.gmra.mrb[0].mxu0 %v2256
        %v2385 = vpop.f32.mrb[0].mxu0
        %v2386 = vadd.f32 %v1989, %v2385
        %v2387 = vpop.f32.mrb[0].mxu0
        %v2388 = vpop.f32.mrb[0].mxu0
        %v2389 = vadd.f32 %v1992, %v2388
        %v2390 = vpop.f32.mrb[0].mxu0
        %2391 = vmatprep.mubr.bf16.mxu0 0
        %2392 = vmatmul.mubr.bf16.gmra.mrb[0].mxu0 %v2259
        %v2393 = vpop.f32.mrb[0].mxu0
        %v2394 = vadd.f32 %v1997, %v2393
        %v2395 = vpop.f32.mrb[0].mxu0
        %v2396 = vpop.f32.mrb[0].mxu0
        %v2397 = vadd.f32 %v2000, %v2396
        %v2398 = vpop.f32.mrb[0].mxu0
        %2399 = vmatprep.mubr.bf16.mxu0 0
        %2400 = vmatmul.mubr.bf16.gmra.mrb[0].mxu0 %v2262
        %v2401 = vpop.f32.mrb[0].mxu0
        %v2402 = vadd.f32 %v2005, %v2401
        %v2403 = vpop.f32.mrb[0].mxu0
        %v2404 = vpop.f32.mrb[0].mxu0
        %v2405 = vadd.f32 %v2008, %v2404
        %v2406 = vpop.f32.mrb[0].mxu0
        %2407 = vmatprep.mubr.bf16.mxu0 0
        %2408 = vmatmul.mubr.bf16.gmra.mrb[0].mxu0 %v2265
        %v2409 = vpop.f32.mrb[0].mxu0
        %v2410 = vadd.f32 %v2013, %v2409
        %v2411 = vpop.f32.mrb[0].mxu0
        %v2412 = vpop.f32.mrb[0].mxu0
        %v2413 = vadd.f32 %v2016, %v2412
        %v2414 = vpop.f32.mrb[0].mxu0
        %2415 = vmatprep.mubr.bf16.mxu0 0
        %2416 = vmatmul.mubr.bf16.gmra.mrb[0].mxu0 %v2268
        %v2417 = vpop.f32.mrb[0].mxu0
        %v2418 = vadd.f32 %v2021, %v2417
        %v2419 = vpop.f32.mrb[0].mxu0
        %v2420 = vpop.f32.mrb[0].mxu0
        %v2421 = vadd.f32 %v2024, %v2420
        %v2422 = vpop.f32.mrb[0].mxu0
        %2423 = vmatprep.mubr.bf16.mxu0 0
        %2424 = vmatmul.mubr.bf16.gmra.mrb[0].mxu0 %v2271
        %v2425 = vpop.f32.mrb[0].mxu0
        %v2426 = vadd.f32 %v2029, %v2425
        %v2427 = vpop.f32.mrb[0].mxu0
        %v2428 = vpop.f32.mrb[0].mxu0
        %v2429 = vadd.f32 %v2032, %v2428
        %v2430 = vpop.f32.mrb[0].mxu0
        %2431 = vmatprep.mubr.bf16.mxu0 0
        %2432 = vmatmul.mubr.bf16.gmra.mrb[0].mxu0 %v2274
        %v2433 = vpop.f32.mrb[0].mxu0
        %v2434 = vadd.f32 %v2037, %v2433
        %v2435 = vpop.f32.mrb[0].mxu0
        %v2436 = vpop.f32.mrb[0].mxu0
        %v2437 = vadd.f32 %v2040, %v2436
        %v2438 = vpop.f32.mrb[0].mxu0
        %2439 = vmatprep.mubr.bf16.mxu0 0
        %2440 = vmatmul.mubr.bf16.gmra.mrb[0].mxu0 %v2277
        %v2441 = vpop.f32.mrb[0].mxu0
        %v2442 = vadd.f32 %v2045, %v2441
        %v2443 = vpop.f32.mrb[0].mxu0
        %v2444 = vpop.f32.mrb[0].mxu0
        %v2445 = vadd.f32 %v2048, %v2444
        %v2446 = vpop.f32.mrb[0].mxu0
        %2447 = vmatprep.mubr.bf16.mxu0 0
        %2448 = vmatmul.mubr.bf16.gmra.mrb[0].mxu0 %v2280
        %v2449 = vpop.f32.mrb[0].mxu0
        %v2450 = vadd.f32 %v2053, %v2449
        %v2451 = vpop.f32.mrb[0].mxu0
        %v2452 = vpop.f32.mrb[0].mxu0
        %v2453 = vadd.f32 %v2056, %v2452
        %v2454 = vpop.f32.mrb[0].mxu0
        %2455 = vmatprep.mubr.bf16.mxu0 0
        %2456 = vmatmul.mubr.bf16.gmra.mrb[0].mxu0 %v2283
        %v2457 = vpop.f32.mrb[0].mxu0
        %v2458 = vadd.f32 %v2061, %v2457
        %v2459 = vpop.f32.mrb[0].mxu0
        %v2460 = vpop.f32.mrb[0].mxu0
        %v2461 = vadd.f32 %v2064, %v2460
        %v2462 = vpop.f32.mrb[0].mxu0
        %2463 = vmatprep.mubr.bf16.mxu0 0
        %2464 = vmatmul.mubr.bf16.gmra.mrb[0].mxu0 %v2286
        %v2465 = vpop.f32.mrb[0].mxu0
        %v2466 = vadd.f32 %v2069, %v2465
        %v2467 = vpop.f32.mrb[0].mxu0
        %v2468 = vpop.f32.mrb[0].mxu0
        %v2469 = vadd.f32 %v2072, %v2468
        %v2470 = vpop.f32.mrb[0].mxu0
        %2471 = vmatprep.mubr.bf16.mxu0 0
        %2472 = vmatmul.mubr.bf16.gmra.mrb[0].mxu0 %v2289
        %v2473 = vpop.f32.mrb[0].mxu0
        %v2474 = vadd.f32 %v2077, %v2473
        %v2475 = vpop.f32.mrb[0].mxu0
        %v2476 = vpop.f32.mrb[0].mxu0
        %v2477 = vadd.f32 %v2080, %v2476
        %v2478 = vpop.f32.mrb[0].mxu0
        %2479 = vmatprep.mubr.bf16.mxu0 0
        %2480 = vmatmul.mubr.bf16.gmra.mrb[0].mxu0 %v2292
        %v2481 = vpop.f32.mrb[0].mxu0
        %v2482 = vadd.f32 %v2085, %v2481
        %v2483 = vpop.f32.mrb[0].mxu0
        %v2484 = vpop.f32.mrb[0].mxu0
        %v2485 = vadd.f32 %v2088, %v2484
        %v2486 = vpop.f32.mrb[0].mxu0
        %2487 = vmatprep.mubr.bf16.mxu0 0
        %2488 = vmatmul.mubr.bf16.gmra.mrb[0].mxu0 %v2295
        %v2489 = vpop.f32.mrb[0].mxu0
        %v2490 = vadd.f32 %v2093, %v2489
        %v2491 = vpop.f32.mrb[0].mxu0
        %v2492 = vpop.f32.mrb[0].mxu0
        %v2493 = vadd.f32 %v2096, %v2492
        %v2494 = vpop.f32.mrb[0].mxu0
        %2495 = vmatprep.mubr.bf16.mxu0 0
        %2496 = vmatmul.mubr.bf16.gmra.mrb[0].mxu0 %v2298
        %v2497 = vpop.f32.mrb[0].mxu0
        %v2498 = vadd.f32 %v2101, %v2497
        %v2499 = vpop.f32.mrb[0].mxu0
        %v2500 = vpop.f32.mrb[0].mxu0
        %v2501 = vadd.f32 %v2104, %v2500
        %v2502 = vpop.f32.mrb[0].mxu0
        %2503 = vmatprep.mubr.bf16.mxu0 0
        %2504 = vmatmul.mubr.bf16.gmra.mrb[0].mxu0 %v2301
        %v2505 = vpop.f32.mrb[0].mxu0
        %v2506 = vadd.f32 %v2109, %v2505
        %v2507 = vpop.f32.mrb[0].mxu0
        %v2508 = vpop.f32.mrb[0].mxu0
        %v2509 = vadd.f32 %v2112, %v2508
        %v2510 = vpop.f32.mrb[0].mxu0
        %2511 = vmatprep.mubr.bf16.mxu0 0
        %2512 = vmatmul.mubr.bf16.gmra.mrb[0].mxu0 %v2304
        %v2513 = vpop.f32.mrb[0].mxu0
        %v2514 = vadd.f32 %v2117, %v2513
        %v2515 = vpop.f32.mrb[0].mxu0
        %v2516 = vpop.f32.mrb[0].mxu0
        %v2517 = vadd.f32 %v2120, %v2516
        %v2518 = vpop.f32.mrb[0].mxu0
        %2519 = vmatprep.mubr.bf16.mxu0 0
        %2520 = vmatmul.mubr.bf16.gmra.mrb[0].mxu0 %v2307
        %v2521 = vpop.f32.mrb[0].mxu0
        %v2522 = vadd.f32 %v2125, %v2521
        %v2523 = vpop.f32.mrb[0].mxu0
        %v2524 = vpop.f32.mrb[0].mxu0
        %v2525 = vadd.f32 %v2128, %v2524
        %v2526 = vpop.f32.mrb[0].mxu0
        %2527 = vmatprep.mubr.bf16.mxu0 0
        %2528 = vmatmul.mubr.bf16.gmra.mrb[0].mxu0 %v2310
        %v2529 = vpop.f32.mrb[0].mxu0
        %v2530 = vadd.f32 %v2133, %v2529
        %v2531 = vpop.f32.mrb[0].mxu0
        %v2532 = vpop.f32.mrb[0].mxu0
        %v2533 = vadd.f32 %v2136, %v2532
        %v2534 = vpop.f32.mrb[0].mxu0
        %2535 = vmatprep.mubr.bf16.mxu0 0
        %2536 = vmatmul.mubr.bf16.gmra.mrb[0].mxu0 %v2313
        %v2537 = vpop.f32.mrb[0].mxu0
        %v2538 = vadd.f32 %v2141, %v2537
        %v2539 = vpop.f32.mrb[0].mxu0
        %v2540 = vpop.f32.mrb[0].mxu0
        %v2541 = vadd.f32 %v2144, %v2540
        %v2542 = vpop.f32.mrb[0].mxu0
        %2543 = vmatprep.mubr.bf16.mxu0 0
        %2544 = vmatmul.mubr.bf16.gmra.mrb[0].mxu0 %v2316
        %v2545 = vpop.f32.mrb[0].mxu0
        %v2546 = vadd.f32 %v2149, %v2545
        %v2547 = vpop.f32.mrb[0].mxu0
        %v2548 = vpop.f32.mrb[0].mxu0
        %v2549 = vadd.f32 %v2152, %v2548
        %v2550 = vpop.f32.mrb[0].mxu0
        %2551 = vmatprep.mubr.bf16.mxu0 0
        %2552 = vmatmul.mubr.bf16.gmra.mrb[0].mxu0 %v2319
        %v2553 = vpop.f32.mrb[0].mxu0
        %v2554 = vadd.f32 %v2157, %v2553
        %v2555 = vpop.f32.mrb[0].mxu0
        %v2556 = vpop.f32.mrb[0].mxu0
        %v2557 = vadd.f32 %v2160, %v2556
        %v2558 = vpop.f32.mrb[0].mxu0
        %2559 = vmatprep.mubr.bf16.mxu0 0
        %2560 = vmatmul.mubr.bf16.gmra.mrb[0].mxu0 %v2322
        %v2561 = vpop.f32.mrb[0].mxu0
        %v2562 = vadd.f32 %v2165, %v2561
        %v2563 = vpop.f32.mrb[0].mxu0
        %v2564 = vpop.f32.mrb[0].mxu0
        %v2565 = vadd.f32 %v2168, %v2564
        %v2566 = vpop.f32.mrb[0].mxu0
        %2567 = vmatprep.mubr.bf16.mxu0 0
        %2568 = vmatmul.mubr.bf16.gmra.mrb[0].mxu0 %v2325
        %v2569 = vpop.f32.mrb[0].mxu0
        %v2570 = vadd.f32 %v2173, %v2569
        %v2571 = vpop.f32.mrb[0].mxu0
        %v2572 = vpop.f32.mrb[0].mxu0
        %v2573 = vadd.f32 %v2176, %v2572
        %v2574 = vpop.f32.mrb[0].mxu0
        %2575 = vmatprep.mubr.bf16.mxu0 0
        %2576 = vmatmul.mubr.bf16.gmra.mrb[0].mxu0 %v2328
        %v2577 = vpop.f32.mrb[0].mxu0
        %v2578 = vadd.f32 %v2181, %v2577
        %v2579 = vpop.f32.mrb[0].mxu0
        %v2580 = vpop.f32.mrb[0].mxu0
        %v2581 = vadd.f32 %v2184, %v2580
        %v2582 = vpop.f32.mrb[0].mxu0
        %2583 = vmatprep.mubr.bf16.mxu0 0
        %2584 = vmatmul.mubr.bf16.gmra.mrb[0].mxu0 %v2331
        %v2585 = vpop.f32.mrb[0].mxu0
        %v2586 = vadd.f32 %v2189, %v2585
        %v2587 = vpop.f32.mrb[0].mxu0
        %v2588 = vpop.f32.mrb[0].mxu0
        %v2589 = vadd.f32 %v2192, %v2588
        %v2590 = vpop.f32.mrb[0].mxu0
        %2591 = vmatprep.mubr.bf16.mxu0 0
        %2592 = vmatmul.mubr.bf16.gmra.mrb[0].mxu0 %v2334
        %v2593 = vpop.f32.mrb[0].mxu0
        %v2594 = vadd.f32 %v2197, %v2593
        %v2595 = vpop.f32.mrb[0].mxu0
        %v2596 = vpop.f32.mrb[0].mxu0
        %v2597 = vadd.f32 %v2200, %v2596
        %v2598 = vpop.f32.mrb[0].mxu0
        %2599 = vmatprep.mubr.bf16.mxu0 0
        %2600 = vmatmul.mubr.bf16.gmra.mrb[0].mxu0 %v2337
        %v2601 = vpop.f32.mrb[0].mxu0
        %v2602 = vadd.f32 %v2205, %v2601
        %v2603 = vpop.f32.mrb[0].mxu0
        %v2604 = vpop.f32.mrb[0].mxu0
        %v2605 = vadd.f32 %v2208, %v2604
        %v2606 = vpop.f32.mrb[0].mxu0
        %2607 = vmatprep.mubr.bf16.mxu0 0
        %2608 = vmatmul.mubr.bf16.gmra.mrb[0].mxu0 %v2340
        %v2609 = vpop.f32.mrb[0].mxu0
        %v2610 = vadd.f32 %v2213, %v2609
        %v2611 = vpop.f32.mrb[0].mxu0
        %v2612 = vpop.f32.mrb[0].mxu0
        %v2613 = vadd.f32 %v2216, %v2612
        %v2614 = vpop.f32.mrb[0].mxu0
        %2615 = vmatprep.mubr.bf16.mxu0 0
        %2616 = vmatmul.mubr.bf16.gmra.mrb[0].mxu0 %v2343
        %v2617 = vpop.f32.mrb[0].mxu0
        %v2618 = vadd.f32 %v2221, %v2617
        %v2619 = vpop.f32.mrb[0].mxu0
        %v2620 = vpop.f32.mrb[0].mxu0
        %v2621 = vadd.f32 %v2224, %v2620
        %v2622 = vpop.f32.mrb[0].mxu0
        %2623 = vmatprep.mubr.bf16.mxu0 0
        %2624 = vmatmul.mubr.bf16.gmra.mrb[0].mxu0 %v2346
        %v2625 = vpop.f32.mrb[0].mxu0
        %v2626 = vadd.f32 %v2229, %v2625
        %v2627 = vpop.f32.mrb[0].mxu0
        %v2628 = vpop.f32.mrb[0].mxu0
        %v2629 = vadd.f32 %v2232, %v2628
        %v2630 = vpop.f32.mrb[0].mxu0
        %2631 = vmatprep.mubr.bf16.mxu0 0
        %2632 = vmatmul.mubr.bf16.gmra.mrb[0].mxu0 %v2349
        %v2633 = vpop.f32.mrb[0].mxu0
        %v2634 = vadd.f32 %v2237, %v2633
        %v2635 = vpop.f32.mrb[0].mxu0
        %v2636 = vpop.f32.mrb[0].mxu0
        %v2637 = vadd.f32 %v2240, %v2636
        %v2638 = vpop.f32.mrb[0].mxu0
        %2639 = vdwg.mxu0
        %v2640 = vld [vmem:[%s9] sm:$0x1]
        %v2642 = vlaneseq
        %v2643 = vshrl.u32 %v2642, 7
        %v2644 = vsub.s32 0, %v2643
        %v2645 = vrot.slane %v2640, %v2644
        %v2647 = vadd.f32 %v2386, %v2645
        %v2648 = vadd.f32 %v2389, %v2645
        %v2649 = vadd.f32 %v2394, %v2645
        %v2650 = vadd.f32 %v2397, %v2645
        %v2651 = vadd.f32 %v2402, %v2645
        %v2652 = vadd.f32 %v2405, %v2645
        %v2653 = vadd.f32 %v2410, %v2645
        %v2654 = vadd.f32 %v2413, %v2645
        %v2655 = vadd.f32 %v2418, %v2645
        %v2656 = vadd.f32 %v2421, %v2645
        %v2657 = vadd.f32 %v2426, %v2645
        %v2658 = vadd.f32 %v2429, %v2645
        %v2659 = vadd.f32 %v2434, %v2645
        %v2660 = vadd.f32 %v2437, %v2645
        %v2661 = vadd.f32 %v2442, %v2645
        %v2662 = vadd.f32 %v2445, %v2645
        %v2663 = vadd.f32 %v2450, %v2645
        %v2664 = vadd.f32 %v2453, %v2645
        %v2665 = vadd.f32 %v2458, %v2645
        %v2666 = vadd.f32 %v2461, %v2645
        %v2667 = vadd.f32 %v2466, %v2645
        %v2668 = vadd.f32 %v2469, %v2645
        %v2669 = vadd.f32 %v2474, %v2645
        %v2670 = vadd.f32 %v2477, %v2645
        %v2671 = vadd.f32 %v2482, %v2645
        %v2672 = vadd.f32 %v2485, %v2645
        %v2673 = vadd.f32 %v2490, %v2645
        %v2674 = vadd.f32 %v2493, %v2645
        %v2675 = vadd.f32 %v2498, %v2645
        %v2676 = vadd.f32 %v2501, %v2645
        %v2677 = vadd.f32 %v2506, %v2645
        %v2678 = vadd.f32 %v2509, %v2645
        %v2679 = vadd.f32 %v2514, %v2645
        %v2680 = vadd.f32 %v2517, %v2645
        %v2681 = vadd.f32 %v2522, %v2645
        %v2682 = vadd.f32 %v2525, %v2645
        %v2683 = vadd.f32 %v2530, %v2645
        %v2684 = vadd.f32 %v2533, %v2645
        %v2685 = vadd.f32 %v2538, %v2645
        %v2686 = vadd.f32 %v2541, %v2645
        %v2687 = vadd.f32 %v2546, %v2645
        %v2688 = vadd.f32 %v2549, %v2645
        %v2689 = vadd.f32 %v2554, %v2645
        %v2690 = vadd.f32 %v2557, %v2645
        %v2691 = vadd.f32 %v2562, %v2645
        %v2692 = vadd.f32 %v2565, %v2645
        %v2693 = vadd.f32 %v2570, %v2645
        %v2694 = vadd.f32 %v2573, %v2645
        %v2695 = vadd.f32 %v2578, %v2645
        %v2696 = vadd.f32 %v2581, %v2645
        %v2697 = vadd.f32 %v2586, %v2645
        %v2698 = vadd.f32 %v2589, %v2645
        %v2699 = vadd.f32 %v2594, %v2645
        %v2700 = vadd.f32 %v2597, %v2645
        %v2701 = vadd.f32 %v2602, %v2645
        %v2702 = vadd.f32 %v2605, %v2645
        %v2703 = vadd.f32 %v2610, %v2645
        %v2704 = vadd.f32 %v2613, %v2645
        %v2705 = vadd.f32 %v2618, %v2645
        %v2706 = vadd.f32 %v2621, %v2645
        %v2707 = vadd.f32 %v2626, %v2645
        %v2708 = vadd.f32 %v2629, %v2645
        %v2709 = vadd.f32 %v2634, %v2645
        %v2710 = vadd.f32 %v2637, %v2645
        %v2711 = vmul.f32 %v2647, 0.5
        %v2712 = vmul.f32 %v2648, 0.5
        %v2713 = vmul.f32 %v2649, 0.5
        %v2714 = vmul.f32 %v2650, 0.5
        %v2715 = vmul.f32 %v2651, 0.5
        %v2716 = vmul.f32 %v2652, 0.5
        %v2717 = vmul.f32 %v2653, 0.5
        %v2718 = vmul.f32 %v2654, 0.5
        %v2719 = vmul.f32 %v2655, 0.5
        %v2720 = vmul.f32 %v2656, 0.5
        %v2721 = vmul.f32 %v2657, 0.5
        %v2722 = vmul.f32 %v2658, 0.5
        %v2723 = vmul.f32 %v2659, 0.5
        %v2724 = vmul.f32 %v2660, 0.5
        %v2725 = vmul.f32 %v2661, 0.5
        %v2726 = vmul.f32 %v2662, 0.5
        %v2727 = vmul.f32 %v2663, 0.5
        %v2728 = vmul.f32 %v2664, 0.5
        %v2729 = vmul.f32 %v2665, 0.5
        %v2730 = vmul.f32 %v2666, 0.5
        %v2731 = vmul.f32 %v2667, 0.5
        %v2732 = vmul.f32 %v2668, 0.5
        %v2733 = vmul.f32 %v2669, 0.5
        %v2734 = vmul.f32 %v2670, 0.5
        %v2735 = vmul.f32 %v2671, 0.5
        %v2736 = vmul.f32 %v2672, 0.5
        %v2737 = vmul.f32 %v2673, 0.5
        %v2738 = vmul.f32 %v2674, 0.5
        %v2739 = vmul.f32 %v2675, 0.5
        %v2740 = vmul.f32 %v2676, 0.5
        %v2741 = vmul.f32 %v2677, 0.5
        %v2742 = vmul.f32 %v2678, 0.5
        %v2743 = vmul.f32 %v2679, 0.5
        %v2744 = vmul.f32 %v2680, 0.5
        %v2745 = vmul.f32 %v2681, 0.5
        %v2746 = vmul.f32 %v2682, 0.5
        %v2747 = vmul.f32 %v2683, 0.5
        %v2748 = vmul.f32 %v2684, 0.5
        %v2749 = vmul.f32 %v2685, 0.5
        %v2750 = vmul.f32 %v2686, 0.5
        %v2751 = vmul.f32 %v2687, 0.5
        %v2752 = vmul.f32 %v2688, 0.5
        %v2753 = vmul.f32 %v2689, 0.5
        %v2754 = vmul.f32 %v2690, 0.5
        %v2755 = vmul.f32 %v2691, 0.5
        %v2756 = vmul.f32 %v2692, 0.5
        %v2757 = vmul.f32 %v2693, 0.5
        %v2758 = vmul.f32 %v2694, 0.5
        %v2759 = vmul.f32 %v2695, 0.5
        %v2760 = vmul.f32 %v2696, 0.5
        %v2761 = vmul.f32 %v2697, 0.5
        %v2762 = vmul.f32 %v2698, 0.5
        %v2763 = vmul.f32 %v2699, 0.5
        %v2764 = vmul.f32 %v2700, 0.5
        %v2765 = vmul.f32 %v2701, 0.5
        %v2766 = vmul.f32 %v2702, 0.5
        %v2767 = vmul.f32 %v2703, 0.5
        %v2768 = vmul.f32 %v2704, 0.5
        %v2769 = vmul.f32 %v2705, 0.5
        %v2770 = vmul.f32 %v2706, 0.5
        %v2771 = vmul.f32 %v2707, 0.5
        %v2772 = vmul.f32 %v2708, 0.5
        %v2773 = vmul.f32 %v2709, 0.5
        %v2774 = vmul.f32 %v2710, 0.5
        %v2775 = vmul.f32 %v2647, 0.044715
        %v2776 = vmul.f32 %v2648, 0.044715
        %v2777 = vmul.f32 %v2649, 0.044715
        %v2778 = vmul.f32 %v2650, 0.044715
        %v2779 = vmul.f32 %v2651, 0.044715
        %v2780 = vmul.f32 %v2652, 0.044715
        %v2781 = vmul.f32 %v2653, 0.044715
        %v2782 = vmul.f32 %v2654, 0.044715
        %v2783 = vmul.f32 %v2655, 0.044715
        %v2784 = vmul.f32 %v2656, 0.044715
        %v2785 = vmul.f32 %v2657, 0.044715
        %v2786 = vmul.f32 %v2658, 0.044715
        %v2787 = vmul.f32 %v2659, 0.044715
        %v2788 = vmul.f32 %v2660, 0.044715
        %v2789 = vmul.f32 %v2661, 0.044715
        %v2790 = vmul.f32 %v2662, 0.044715
        %v2791 = vmul.f32 %v2663, 0.044715
        %v2792 = vmul.f32 %v2664, 0.044715
        %v2793 = vmul.f32 %v2665, 0.044715
        %v2794 = vmul.f32 %v2666, 0.044715
        %v2795 = vmul.f32 %v2667, 0.044715
        %v2796 = vmul.f32 %v2668, 0.044715
        %v2797 = vmul.f32 %v2669, 0.044715
        %v2798 = vmul.f32 %v2670, 0.044715
        %v2799 = vmul.f32 %v2671, 0.044715
        %v2800 = vmul.f32 %v2672, 0.044715
        %v2801 = vmul.f32 %v2673, 0.044715
        %v2802 = vmul.f32 %v2674, 0.044715
        %v2803 = vmul.f32 %v2675, 0.044715
        %v2804 = vmul.f32 %v2676, 0.044715
        %v2805 = vmul.f32 %v2677, 0.044715
        %v2806 = vmul.f32 %v2678, 0.044715
        %v2807 = vmul.f32 %v2679, 0.044715
        %v2808 = vmul.f32 %v2680, 0.044715
        %v2809 = vmul.f32 %v2681, 0.044715
        %v2810 = vmul.f32 %v2682, 0.044715
        %v2811 = vmul.f32 %v2683, 0.044715
        %v2812 = vmul.f32 %v2684, 0.044715
        %v2813 = vmul.f32 %v2685, 0.044715
        %v2814 = vmul.f32 %v2686, 0.044715
        %v2815 = vmul.f32 %v2687, 0.044715
        %v2816 = vmul.f32 %v2688, 0.044715
        %v2817 = vmul.f32 %v2689, 0.044715
        %v2818 = vmul.f32 %v2690, 0.044715
        %v2819 = vmul.f32 %v2691, 0.044715
        %v2820 = vmul.f32 %v2692, 0.044715
        %v2821 = vmul.f32 %v2693, 0.044715
        %v2822 = vmul.f32 %v2694, 0.044715
        %v2823 = vmul.f32 %v2695, 0.044715
        %v2824 = vmul.f32 %v2696, 0.044715
        %v2825 = vmul.f32 %v2697, 0.044715
        %v2826 = vmul.f32 %v2698, 0.044715
        %v2827 = vmul.f32 %v2699, 0.044715
        %v2828 = vmul.f32 %v2700, 0.044715
        %v2829 = vmul.f32 %v2701, 0.044715
        %v2830 = vmul.f32 %v2702, 0.044715
        %v2831 = vmul.f32 %v2703, 0.044715
        %v2832 = vmul.f32 %v2704, 0.044715
        %v2833 = vmul.f32 %v2705, 0.044715
        %v2834 = vmul.f32 %v2706, 0.044715
        %v2835 = vmul.f32 %v2707, 0.044715
        %v2836 = vmul.f32 %v2708, 0.044715
        %v2837 = vmul.f32 %v2709, 0.044715
        %v2838 = vmul.f32 %v2710, 0.044715
        %v2839 = vmul.f32 %v2775, %v2647
        %v2840 = vmul.f32 %v2776, %v2648
        %v2841 = vmul.f32 %v2777, %v2649
        %v2842 = vmul.f32 %v2778, %v2650
        %v2843 = vmul.f32 %v2779, %v2651
        %v2844 = vmul.f32 %v2780, %v2652
        %v2845 = vmul.f32 %v2781, %v2653
        %v2846 = vmul.f32 %v2782, %v2654
        %v2847 = vmul.f32 %v2783, %v2655
        %v2848 = vmul.f32 %v2784, %v2656
        %v2849 = vmul.f32 %v2785, %v2657
        %v2850 = vmul.f32 %v2786, %v2658
        %v2851 = vmul.f32 %v2787, %v2659
        %v2852 = vmul.f32 %v2788, %v2660
        %v2853 = vmul.f32 %v2789, %v2661
        %v2854 = vmul.f32 %v2790, %v2662
        %v2855 = vmul.f32 %v2791, %v2663
        %v2856 = vmul.f32 %v2792, %v2664
        %v2857 = vmul.f32 %v2793, %v2665
        %v2858 = vmul.f32 %v2794, %v2666
        %v2859 = vmul.f32 %v2795, %v2667
        %v2860 = vmul.f32 %v2796, %v2668
        %v2861 = vmul.f32 %v2797, %v2669
        %v2862 = vmul.f32 %v2798, %v2670
        %v2863 = vmul.f32 %v2799, %v2671
        %v2864 = vmul.f32 %v2800, %v2672
        %v2865 = vmul.f32 %v2801, %v2673
        %v2866 = vmul.f32 %v2802, %v2674
        %v2867 = vmul.f32 %v2803, %v2675
        %v2868 = vmul.f32 %v2804, %v2676
        %v2869 = vmul.f32 %v2805, %v2677
        %v2870 = vmul.f32 %v2806, %v2678
        %v2871 = vmul.f32 %v2807, %v2679
        %v2872 = vmul.f32 %v2808, %v2680
        %v2873 = vmul.f32 %v2809, %v2681
        %v2874 = vmul.f32 %v2810, %v2682
        %v2875 = vmul.f32 %v2811, %v2683
        %v2876 = vmul.f32 %v2812, %v2684
        %v2877 = vmul.f32 %v2813, %v2685
        %v2878 = vmul.f32 %v2814, %v2686
        %v2879 = vmul.f32 %v2815, %v2687
        %v2880 = vmul.f32 %v2816, %v2688
        %v2881 = vmul.f32 %v2817, %v2689
        %v2882 = vmul.f32 %v2818, %v2690
        %v2883 = vmul.f32 %v2819, %v2691
        %v2884 = vmul.f32 %v2820, %v2692
        %v2885 = vmul.f32 %v2821, %v2693
        %v2886 = vmul.f32 %v2822, %v2694
        %v2887 = vmul.f32 %v2823, %v2695
        %v2888 = vmul.f32 %v2824, %v2696
        %v2889 = vmul.f32 %v2825, %v2697
        %v2890 = vmul.f32 %v2826, %v2698
        %v2891 = vmul.f32 %v2827, %v2699
        %v2892 = vmul.f32 %v2828, %v2700
        %v2893 = vmul.f32 %v2829, %v2701
        %v2894 = vmul.f32 %v2830, %v2702
        %v2895 = vmul.f32 %v2831, %v2703
        %v2896 = vmul.f32 %v2832, %v2704
        %v2897 = vmul.f32 %v2833, %v2705
        %v2898 = vmul.f32 %v2834, %v2706
        %v2899 = vmul.f32 %v2835, %v2707
        %v2900 = vmul.f32 %v2836, %v2708
        %v2901 = vmul.f32 %v2837, %v2709
        %v2902 = vmul.f32 %v2838, %v2710
        %v2903 = vmul.f32 %v2839, %v2647
        %v2904 = vmul.f32 %v2840, %v2648
        %v2905 = vmul.f32 %v2841, %v2649
        %v2906 = vmul.f32 %v2842, %v2650
        %v2907 = vmul.f32 %v2843, %v2651
        %v2908 = vmul.f32 %v2844, %v2652
        %v2909 = vmul.f32 %v2845, %v2653
        %v2910 = vmul.f32 %v2846, %v2654
        %v2911 = vmul.f32 %v2847, %v2655
        %v2912 = vmul.f32 %v2848, %v2656
        %v2913 = vmul.f32 %v2849, %v2657
        %v2914 = vmul.f32 %v2850, %v2658
        %v2915 = vmul.f32 %v2851, %v2659
        %v2916 = vmul.f32 %v2852, %v2660
        %v2917 = vmul.f32 %v2853, %v2661
        %v2918 = vmul.f32 %v2854, %v2662
        %v2919 = vmul.f32 %v2855, %v2663
        %v2920 = vmul.f32 %v2856, %v2664
        %v2921 = vmul.f32 %v2857, %v2665
        %v2922 = vmul.f32 %v2858, %v2666
        %v2923 = vmul.f32 %v2859, %v2667
        %v2924 = vmul.f32 %v2860, %v2668
        %v2925 = vmul.f32 %v2861, %v2669
        %v2926 = vmul.f32 %v2862, %v2670
        %v2927 = vmul.f32 %v2863, %v2671
        %v2928 = vmul.f32 %v2864, %v2672
        %v2929 = vmul.f32 %v2865, %v2673
        %v2930 = vmul.f32 %v2866, %v2674
        %v2931 = vmul.f32 %v2867, %v2675
        %v2932 = vmul.f32 %v2868, %v2676
        %v2933 = vmul.f32 %v2869, %v2677
        %v2934 = vmul.f32 %v2870, %v2678
        %v2935 = vmul.f32 %v2871, %v2679
        %v2936 = vmul.f32 %v2872, %v2680
        %v2937 = vmul.f32 %v2873, %v2681
        %v2938 = vmul.f32 %v2874, %v2682
        %v2939 = vmul.f32 %v2875, %v2683
        %v2940 = vmul.f32 %v2876, %v2684
        %v2941 = vmul.f32 %v2877, %v2685
        %v2942 = vmul.f32 %v2878, %v2686
        %v2943 = vmul.f32 %v2879, %v2687
        %v2944 = vmul.f32 %v2880, %v2688
        %v2945 = vmul.f32 %v2881, %v2689
        %v2946 = vmul.f32 %v2882, %v2690
        %v2947 = vmul.f32 %v2883, %v2691
        %v2948 = vmul.f32 %v2884, %v2692
        %v2949 = vmul.f32 %v2885, %v2693
        %v2950 = vmul.f32 %v2886, %v2694
        %v2951 = vmul.f32 %v2887, %v2695
        %v2952 = vmul.f32 %v2888, %v2696
        %v2953 = vmul.f32 %v2889, %v2697
        %v2954 = vmul.f32 %v2890, %v2698
        %v2955 = vmul.f32 %v2891, %v2699
        %v2956 = vmul.f32 %v2892, %v2700
        %v2957 = vmul.f32 %v2893, %v2701
        %v2958 = vmul.f32 %v2894, %v2702
        %v2959 = vmul.f32 %v2895, %v2703
        %v2960 = vmul.f32 %v2896, %v2704
        %v2961 = vmul.f32 %v2897, %v2705
        %v2962 = vmul.f32 %v2898, %v2706
        %v2963 = vmul.f32 %v2899, %v2707
        %v2964 = vmul.f32 %v2900, %v2708
        %v2965 = vmul.f32 %v2901, %v2709
        %v2966 = vmul.f32 %v2902, %v2710
        %v2967 = vadd.f32 %v2647, %v2903
        %v2968 = vadd.f32 %v2648, %v2904
        %v2969 = vadd.f32 %v2649, %v2905
        %v2970 = vadd.f32 %v2650, %v2906
        %v2971 = vadd.f32 %v2651, %v2907
        %v2972 = vadd.f32 %v2652, %v2908
        %v2973 = vadd.f32 %v2653, %v2909
        %v2974 = vadd.f32 %v2654, %v2910
        %v2975 = vadd.f32 %v2655, %v2911
        %v2976 = vadd.f32 %v2656, %v2912
        %v2977 = vadd.f32 %v2657, %v2913
        %v2978 = vadd.f32 %v2658, %v2914
        %v2979 = vadd.f32 %v2659, %v2915
        %v2980 = vadd.f32 %v2660, %v2916
        %v2981 = vadd.f32 %v2661, %v2917
        %v2982 = vadd.f32 %v2662, %v2918
        %v2983 = vadd.f32 %v2663, %v2919
        %v2984 = vadd.f32 %v2664, %v2920
        %v2985 = vadd.f32 %v2665, %v2921
        %v2986 = vadd.f32 %v2666, %v2922
        %v2987 = vadd.f32 %v2667, %v2923
        %v2988 = vadd.f32 %v2668, %v2924
        %v2989 = vadd.f32 %v2669, %v2925
        %v2990 = vadd.f32 %v2670, %v2926
        %v2991 = vadd.f32 %v2671, %v2927
        %v2992 = vadd.f32 %v2672, %v2928
        %v2993 = vadd.f32 %v2673, %v2929
        %v2994 = vadd.f32 %v2674, %v2930
        %v2995 = vadd.f32 %v2675, %v2931
        %v2996 = vadd.f32 %v2676, %v2932
        %v2997 = vadd.f32 %v2677, %v2933
        %v2998 = vadd.f32 %v2678, %v2934
        %v2999 = vadd.f32 %v2679, %v2935
        %v3000 = vadd.f32 %v2680, %v2936
        %v3001 = vadd.f32 %v2681, %v2937
        %v3002 = vadd.f32 %v2682, %v2938
        %v3003 = vadd.f32 %v2683, %v2939
        %v3004 = vadd.f32 %v2684, %v2940
        %v3005 = vadd.f32 %v2685, %v2941
        %v3006 = vadd.f32 %v2686, %v2942
        %v3007 = vadd.f32 %v2687, %v2943
        %v3008 = vadd.f32 %v2688, %v2944
        %v3009 = vadd.f32 %v2689, %v2945
        %v3010 = vadd.f32 %v2690, %v2946
        %v3011 = vadd.f32 %v2691, %v2947
        %v3012 = vadd.f32 %v2692, %v2948
        %v3013 = vadd.f32 %v2693, %v2949
        %v3014 = vadd.f32 %v2694, %v2950
        %v3015 = vadd.f32 %v2695, %v2951
        %v3016 = vadd.f32 %v2696, %v2952
        %v3017 = vadd.f32 %v2697, %v2953
        %v3018 = vadd.f32 %v2698, %v2954
        %v3019 = vadd.f32 %v2699, %v2955
        %v3020 = vadd.f32 %v2700, %v2956
        %v3021 = vadd.f32 %v2701, %v2957
        %v3022 = vadd.f32 %v2702, %v2958
        %v3023 = vadd.f32 %v2703, %v2959
        %v3024 = vadd.f32 %v2704, %v2960
        %v3025 = vadd.f32 %v2705, %v2961
        %v3026 = vadd.f32 %v2706, %v2962
        %v3027 = vadd.f32 %v2707, %v2963
        %v3028 = vadd.f32 %v2708, %v2964
        %v3029 = vadd.f32 %v2709, %v2965
        %v3030 = vadd.f32 %v2710, %v2966
        %v3031 = vmul.f32 %v2967, 0.7978846
        %v3032 = vmul.f32 %v2968, 0.7978846
        %v3033 = vmul.f32 %v2969, 0.7978846
        %v3034 = vmul.f32 %v2970, 0.7978846
        %v3035 = vmul.f32 %v2971, 0.7978846
        %v3036 = vmul.f32 %v2972, 0.7978846
        %v3037 = vmul.f32 %v2973, 0.7978846
        %v3038 = vmul.f32 %v2974, 0.7978846
        %v3039 = vmul.f32 %v2975, 0.7978846
        %v3040 = vmul.f32 %v2976, 0.7978846
        %v3041 = vmul.f32 %v2977, 0.7978846
        %v3042 = vmul.f32 %v2978, 0.7978846
        %v3043 = vmul.f32 %v2979, 0.7978846
        %v3044 = vmul.f32 %v2980, 0.7978846
        %v3045 = vmul.f32 %v2981, 0.7978846
        %v3046 = vmul.f32 %v2982, 0.7978846
        %v3047 = vmul.f32 %v2983, 0.7978846
        %v3048 = vmul.f32 %v2984, 0.7978846
        %v3049 = vmul.f32 %v2985, 0.7978846
        %v3050 = vmul.f32 %v2986, 0.7978846
        %v3051 = vmul.f32 %v2987, 0.7978846
        %v3052 = vmul.f32 %v2988, 0.7978846
        %v3053 = vmul.f32 %v2989, 0.7978846
        %v3054 = vmul.f32 %v2990, 0.7978846
        %v3055 = vmul.f32 %v2991, 0.7978846
        %v3056 = vmul.f32 %v2992, 0.7978846
        %v3057 = vmul.f32 %v2993, 0.7978846
        %v3058 = vmul.f32 %v2994, 0.7978846
        %v3059 = vmul.f32 %v2995, 0.7978846
        %v3060 = vmul.f32 %v2996, 0.7978846
        %v3061 = vmul.f32 %v2997, 0.7978846
        %v3062 = vmul.f32 %v2998, 0.7978846
        %v3063 = vmul.f32 %v2999, 0.7978846
        %v3064 = vmul.f32 %v3000, 0.7978846
        %v3065 = vmul.f32 %v3001, 0.7978846
        %v3066 = vmul.f32 %v3002, 0.7978846
        %v3067 = vmul.f32 %v3003, 0.7978846
        %v3068 = vmul.f32 %v3004, 0.7978846
        %v3069 = vmul.f32 %v3005, 0.7978846
        %v3070 = vmul.f32 %v3006, 0.7978846
        %v3071 = vmul.f32 %v3007, 0.7978846
        %v3072 = vmul.f32 %v3008, 0.7978846
        %v3073 = vmul.f32 %v3009, 0.7978846
        %v3074 = vmul.f32 %v3010, 0.7978846
        %v3075 = vmul.f32 %v3011, 0.7978846
        %v3076 = vmul.f32 %v3012, 0.7978846
        %v3077 = vmul.f32 %v3013, 0.7978846
        %v3078 = vmul.f32 %v3014, 0.7978846
        %v3079 = vmul.f32 %v3015, 0.7978846
        %v3080 = vmul.f32 %v3016, 0.7978846
        %v3081 = vmul.f32 %v3017, 0.7978846
        %v3082 = vmul.f32 %v3018, 0.7978846
        %v3083 = vmul.f32 %v3019, 0.7978846
        %v3084 = vmul.f32 %v3020, 0.7978846
        %v3085 = vmul.f32 %v3021, 0.7978846
        %v3086 = vmul.f32 %v3022, 0.7978846
        %v3087 = vmul.f32 %v3023, 0.7978846
        %v3088 = vmul.f32 %v3024, 0.7978846
        %v3089 = vmul.f32 %v3025, 0.7978846
        %v3090 = vmul.f32 %v3026, 0.7978846
        %v3091 = vmul.f32 %v3027, 0.7978846
        %v3092 = vmul.f32 %v3028, 0.7978846
        %v3093 = vmul.f32 %v3029, 0.7978846
        %v3094 = vmul.f32 %v3030, 0.7978846
        %v3095 = vtanh.pop %v3031
        %v3096 = vtanh.pop %v3032
        %v3097 = vtanh.pop %v3033
        %v3098 = vtanh.pop %v3034
        %v3099 = vtanh.pop %v3035
        %v3100 = vtanh.pop %v3036
        %v3101 = vtanh.pop %v3037
        %v3102 = vtanh.pop %v3038
        %v3103 = vtanh.pop %v3039
        %v3104 = vtanh.pop %v3040
        %v3105 = vtanh.pop %v3041
        %v3106 = vtanh.pop %v3042
        %v3107 = vtanh.pop %v3043
        %v3108 = vtanh.pop %v3044
        %v3109 = vtanh.pop %v3045
        %v3110 = vtanh.pop %v3046
        %v3111 = vtanh.pop %v3047
        %v3112 = vtanh.pop %v3048
        %v3113 = vtanh.pop %v3049
        %v3114 = vtanh.pop %v3050
        %v3115 = vtanh.pop %v3051
        %v3116 = vtanh.pop %v3052
        %v3117 = vtanh.pop %v3053
        %v3118 = vtanh.pop %v3054
        %v3119 = vtanh.pop %v3055
        %v3120 = vtanh.pop %v3056
        %v3121 = vtanh.pop %v3057
        %v3122 = vtanh.pop %v3058
        %v3123 = vtanh.pop %v3059
        %v3124 = vtanh.pop %v3060
        %v3125 = vtanh.pop %v3061
        %v3126 = vtanh.pop %v3062
        %v3127 = vtanh.pop %v3063
        %v3128 = vtanh.pop %v3064
        %v3129 = vtanh.pop %v3065
        %v3130 = vtanh.pop %v3066
        %v3131 = vtanh.pop %v3067
        %v3132 = vtanh.pop %v3068
        %v3133 = vtanh.pop %v3069
        %v3134 = vtanh.pop %v3070
        %v3135 = vtanh.pop %v3071
        %v3136 = vtanh.pop %v3072
        %v3137 = vtanh.pop %v3073
        %v3138 = vtanh.pop %v3074
        %v3139 = vtanh.pop %v3075
        %v3140 = vtanh.pop %v3076
        %v3141 = vtanh.pop %v3077
        %v3142 = vtanh.pop %v3078
        %v3143 = vtanh.pop %v3079
        %v3144 = vtanh.pop %v3080
        %v3145 = vtanh.pop %v3081
        %v3146 = vtanh.pop %v3082
        %v3147 = vtanh.pop %v3083
        %v3148 = vtanh.pop %v3084
        %v3149 = vtanh.pop %v3085
        %v3150 = vtanh.pop %v3086
        %v3151 = vtanh.pop %v3087
        %v3152 = vtanh.pop %v3088
        %v3153 = vtanh.pop %v3089
        %v3154 = vtanh.pop %v3090
        %v3155 = vtanh.pop %v3091
        %v3156 = vtanh.pop %v3092
        %v3157 = vtanh.pop %v3093
        %v3158 = vtanh.pop %v3094
        %v3159 = vadd.f32 %v3095, 1.0
        %v3160 = vadd.f32 %v3096, 1.0
        %v3161 = vadd.f32 %v3097, 1.0
        %v3162 = vadd.f32 %v3098, 1.0
        %v3163 = vadd.f32 %v3099, 1.0
        %v3164 = vadd.f32 %v3100, 1.0
        %v3165 = vadd.f32 %v3101, 1.0
        %v3166 = vadd.f32 %v3102, 1.0
        %v3167 = vadd.f32 %v3103, 1.0
        %v3168 = vadd.f32 %v3104, 1.0
        %v3169 = vadd.f32 %v3105, 1.0
        %v3170 = vadd.f32 %v3106, 1.0
        %v3171 = vadd.f32 %v3107, 1.0
        %v3172 = vadd.f32 %v3108, 1.0
        %v3173 = vadd.f32 %v3109, 1.0
        %v3174 = vadd.f32 %v3110, 1.0
        %v3175 = vadd.f32 %v3111, 1.0
        %v3176 = vadd.f32 %v3112, 1.0
        %v3177 = vadd.f32 %v3113, 1.0
        %v3178 = vadd.f32 %v3114, 1.0
        %v3179 = vadd.f32 %v3115, 1.0
        %v3180 = vadd.f32 %v3116, 1.0
        %v3181 = vadd.f32 %v3117, 1.0
        %v3182 = vadd.f32 %v3118, 1.0
        %v3183 = vadd.f32 %v3119, 1.0
        %v3184 = vadd.f32 %v3120, 1.0
        %v3185 = vadd.f32 %v3121, 1.0
        %v3186 = vadd.f32 %v3122, 1.0
        %v3187 = vadd.f32 %v3123, 1.0
        %v3188 = vadd.f32 %v3124, 1.0
        %v3189 = vadd.f32 %v3125, 1.0
        %v3190 = vadd.f32 %v3126, 1.0
        %v3191 = vadd.f32 %v3127, 1.0
        %v3192 = vadd.f32 %v3128, 1.0
        %v3193 = vadd.f32 %v3129, 1.0
        %v3194 = vadd.f32 %v3130, 1.0
        %v3195 = vadd.f32 %v3131, 1.0
        %v3196 = vadd.f32 %v3132, 1.0
        %v3197 = vadd.f32 %v3133, 1.0
        %v3198 = vadd.f32 %v3134, 1.0
        %v3199 = vadd.f32 %v3135, 1.0
        %v3200 = vadd.f32 %v3136, 1.0
        %v3201 = vadd.f32 %v3137, 1.0
        %v3202 = vadd.f32 %v3138, 1.0
        %v3203 = vadd.f32 %v3139, 1.0
        %v3204 = vadd.f32 %v3140, 1.0
        %v3205 = vadd.f32 %v3141, 1.0
        %v3206 = vadd.f32 %v3142, 1.0
        %v3207 = vadd.f32 %v3143, 1.0
        %v3208 = vadd.f32 %v3144, 1.0
        %v3209 = vadd.f32 %v3145, 1.0
        %v3210 = vadd.f32 %v3146, 1.0
        %v3211 = vadd.f32 %v3147, 1.0
        %v3212 = vadd.f32 %v3148, 1.0
        %v3213 = vadd.f32 %v3149, 1.0
        %v3214 = vadd.f32 %v3150, 1.0
        %v3215 = vadd.f32 %v3151, 1.0
        %v3216 = vadd.f32 %v3152, 1.0
        %v3217 = vadd.f32 %v3153, 1.0
        %v3218 = vadd.f32 %v3154, 1.0
        %v3219 = vadd.f32 %v3155, 1.0
        %v3220 = vadd.f32 %v3156, 1.0
        %v3221 = vadd.f32 %v3157, 1.0
        %v3222 = vadd.f32 %v3158, 1.0
        %v3223 = vmul.f32 %v2711, %v3159
        %v3224 = vmul.f32 %v2712, %v3160
        %v3225 = vmul.f32 %v2713, %v3161
        %v3226 = vmul.f32 %v2714, %v3162
        %v3227 = vmul.f32 %v2715, %v3163
        %v3228 = vmul.f32 %v2716, %v3164
        %v3229 = vmul.f32 %v2717, %v3165
        %v3230 = vmul.f32 %v2718, %v3166
        %v3231 = vmul.f32 %v2719, %v3167
        %v3232 = vmul.f32 %v2720, %v3168
        %v3233 = vmul.f32 %v2721, %v3169
        %v3234 = vmul.f32 %v2722, %v3170
        %v3235 = vmul.f32 %v2723, %v3171
        %v3236 = vmul.f32 %v2724, %v3172
        %v3237 = vmul.f32 %v2725, %v3173
        %v3238 = vmul.f32 %v2726, %v3174
        %v3239 = vmul.f32 %v2727, %v3175
        %v3240 = vmul.f32 %v2728, %v3176
        %v3241 = vmul.f32 %v2729, %v3177
        %v3242 = vmul.f32 %v2730, %v3178
        %v3243 = vmul.f32 %v2731, %v3179
        %v3244 = vmul.f32 %v2732, %v3180
        %v3245 = vmul.f32 %v2733, %v3181
        %v3246 = vmul.f32 %v2734, %v3182
        %v3247 = vmul.f32 %v2735, %v3183
        %v3248 = vmul.f32 %v2736, %v3184
        %v3249 = vmul.f32 %v2737, %v3185
        %v3250 = vmul.f32 %v2738, %v3186
        %v3251 = vmul.f32 %v2739, %v3187
        %v3252 = vmul.f32 %v2740, %v3188
        %v3253 = vmul.f32 %v2741, %v3189
        %v3254 = vmul.f32 %v2742, %v3190
        %v3255 = vmul.f32 %v2743, %v3191
        %v3256 = vmul.f32 %v2744, %v3192
        %v3257 = vmul.f32 %v2745, %v3193
        %v3258 = vmul.f32 %v2746, %v3194
        %v3259 = vmul.f32 %v2747, %v3195
        %v3260 = vmul.f32 %v2748, %v3196
        %v3261 = vmul.f32 %v2749, %v3197
        %v3262 = vmul.f32 %v2750, %v3198
        %v3263 = vmul.f32 %v2751, %v3199
        %v3264 = vmul.f32 %v2752, %v3200
        %v3265 = vmul.f32 %v2753, %v3201
        %v3266 = vmul.f32 %v2754, %v3202
        %v3267 = vmul.f32 %v2755, %v3203
        %v3268 = vmul.f32 %v2756, %v3204
        %v3269 = vmul.f32 %v2757, %v3205
        %v3270 = vmul.f32 %v2758, %v3206
        %v3271 = vmul.f32 %v2759, %v3207
        %v3272 = vmul.f32 %v2760, %v3208
        %v3273 = vmul.f32 %v2761, %v3209
        %v3274 = vmul.f32 %v2762, %v3210
        %v3275 = vmul.f32 %v2763, %v3211
        %v3276 = vmul.f32 %v2764, %v3212
        %v3277 = vmul.f32 %v2765, %v3213
        %v3278 = vmul.f32 %v2766, %v3214
        %v3279 = vmul.f32 %v2767, %v3215
        %v3280 = vmul.f32 %v2768, %v3216
        %v3281 = vmul.f32 %v2769, %v3217
        %v3282 = vmul.f32 %v2770, %v3218
        %v3283 = vmul.f32 %v2771, %v3219
        %v3284 = vmul.f32 %v2772, %v3220
        %v3285 = vmul.f32 %v2773, %v3221
        %v3286 = vmul.f32 %v2774, %v3222
        %v3287 = vpack.c.bf16 %v3224, %v3223
        %v3288 = vpack.c.bf16 %v3226, %v3225
        %v3289 = vpack.c.bf16 %v3228, %v3227
        %v3290 = vpack.c.bf16 %v3230, %v3229
        %v3291 = vpack.c.bf16 %v3232, %v3231
        %v3292 = vpack.c.bf16 %v3234, %v3233
        %v3293 = vpack.c.bf16 %v3236, %v3235
        %v3294 = vpack.c.bf16 %v3238, %v3237
        %v3295 = vpack.c.bf16 %v3240, %v3239
        %v3296 = vpack.c.bf16 %v3242, %v3241
        %v3297 = vpack.c.bf16 %v3244, %v3243
        %v3298 = vpack.c.bf16 %v3246, %v3245
        %v3299 = vpack.c.bf16 %v3248, %v3247
        %v3300 = vpack.c.bf16 %v3250, %v3249
        %v3301 = vpack.c.bf16 %v3252, %v3251
        %v3302 = vpack.c.bf16 %v3254, %v3253
        %v3303 = vpack.c.bf16 %v3256, %v3255
        %v3304 = vpack.c.bf16 %v3258, %v3257
        %v3305 = vpack.c.bf16 %v3260, %v3259
        %v3306 = vpack.c.bf16 %v3262, %v3261
        %v3307 = vpack.c.bf16 %v3264, %v3263
        %v3308 = vpack.c.bf16 %v3266, %v3265
        %v3309 = vpack.c.bf16 %v3268, %v3267
        %v3310 = vpack.c.bf16 %v3270, %v3269
        %v3311 = vpack.c.bf16 %v3272, %v3271
        %v3312 = vpack.c.bf16 %v3274, %v3273
        %v3313 = vpack.c.bf16 %v3276, %v3275
        %v3314 = vpack.c.bf16 %v3278, %v3277
        %v3315 = vpack.c.bf16 %v3280, %v3279
        %v3316 = vpack.c.bf16 %v3282, %v3281
        %v3317 = vpack.c.bf16 %v3284, %v3283
        %v3318 = vpack.c.bf16 %v3286, %v3285
        %v3319 = vld [vmem:[%s10] sm:$0xf]
        %v3320 = vld [vmem:[%s10 + $0x4] sm:$0xf]
        %v3321 = vld [vmem:[%s10 + $0x8] sm:$0xf]
        %v3322 = vld [vmem:[%s10 + $0xc] sm:$0xf]
        %v3323 = vld [vmem:[%s11] sm:$0x1]
        %v3325 = vlaneseq
        %v3326 = vshrl.u32 %v3325, 7
        %v3327 = vsub.s32 0, %v3326
        %v3328 = vrot.slane %v3323, %v3327
        %v3334 = vunpack.c.l.b16 %v3319
        %v3335 = vunpack.c.l.b16 %v3320
        %v3336 = vunpack.c.l.b16 %v3321
        %v3337 = vunpack.c.l.b16 %v3322
        %v3338 = vpack.c.b16 %v3335, %v3334
        %v3339 = vpack.c.b16 %v3337, %v3336
        %v3343 = vsel %vm1857, %v3287, 0
        %v3346 = vsel %vm1857, %v3288, 0
        %v3349 = vsel %vm1857, %v3289, 0
        %v3352 = vsel %vm1857, %v3290, 0
        %v3355 = vsel %vm1857, %v3291, 0
        %v3358 = vsel %vm1857, %v3292, 0
        %v3361 = vsel %vm1857, %v3293, 0
        %v3364 = vsel %vm1857, %v3294, 0
        %v3367 = vsel %vm1857, %v3295, 0
        %v3370 = vsel %vm1857, %v3296, 0
        %v3373 = vsel %vm1857, %v3297, 0
        %v3376 = vsel %vm1857, %v3298, 0
        %v3379 = vsel %vm1857, %v3299, 0
        %v3382 = vsel %vm1857, %v3300, 0
        %v3385 = vsel %vm1857, %v3301, 0
        %v3388 = vsel %vm1857, %v3302, 0
        %v3391 = vsel %vm1857, %v3303, 0
        %v3394 = vsel %vm1857, %v3304, 0
        %v3397 = vsel %vm1857, %v3305, 0
        %v3400 = vsel %vm1857, %v3306, 0
        %v3403 = vsel %vm1857, %v3307, 0
        %v3406 = vsel %vm1857, %v3308, 0
        %v3409 = vsel %vm1857, %v3309, 0
        %v3412 = vsel %vm1857, %v3310, 0
        %v3415 = vsel %vm1857, %v3311, 0
        %v3418 = vsel %vm1857, %v3312, 0
        %v3421 = vsel %vm1857, %v3313, 0
        %v3424 = vsel %vm1857, %v3314, 0
        %v3427 = vsel %vm1857, %v3315, 0
        %v3430 = vsel %vm1857, %v3316, 0
        %v3433 = vsel %vm1857, %v3317, 0
        %v3436 = vsel %vm1857, %v3318, 0
        %3438 = vmatprep.subr.bf16.mxu0 0
        %3439 = vmatpush1.bf16.msra.mxu0 %v3338
        %3440 = vmatprep.subr.bf16.mxu0 0
        %3441 = vmatpush1.bf16.msra.mxu0 %v3339
        %3442 = vmatprep.subr.bf16.mxu0 0
        %3443 = vmatpush1.bf16.msra.mxu0 0
        %3444 = vmatprep.subr.bf16.mxu0 0
        %3445 = vmatpush1.bf16.msra.mxu0 0
        %3446 = vmatprep.subr.bf16.mxu0 0
        %3447 = vmatpush1.bf16.msra.mxu0 0
        %3448 = vmatprep.subr.bf16.mxu0 0
        %3449 = vmatpush1.bf16.msra.mxu0 0
        %3450 = vmatprep.subr.bf16.mxu0 0
        %3451 = vmatpush1.bf16.msra.mxu0 0
        %3452 = vmatprep.subr.bf16.mxu0 0
        %3453 = vmatpush1.bf16.msra.mxu0 0
        %3454 = vmatprep.subr.bf16.mxu0 0
        %3455 = vmatpush1.bf16.msra.mxu0 0
        %3456 = vmatprep.subr.bf16.mxu0 0
        %3457 = vmatpush1.bf16.msra.mxu0 0
        %3458 = vmatprep.subr.bf16.mxu0 0
        %3459 = vmatpush1.bf16.msra.mxu0 0
        %3460 = vmatprep.subr.bf16.mxu0 0
        %3461 = vmatpush1.bf16.msra.mxu0 0
        %3462 = vmatprep.subr.bf16.mxu0 0
        %3463 = vmatpush1.bf16.msra.mxu0 0
        %3464 = vmatprep.subr.bf16.mxu0 0
        %3465 = vmatpush1.bf16.msra.mxu0 0
        %3466 = vmatprep.subr.bf16.mxu0 0
        %3467 = vmatpush1.bf16.msra.mxu0 0
        %3468 = vmatprep.subr.bf16.mxu0 0
        %3469 = vmatpush1.bf16.msra.mxu0 0
        %3470 = vmatprep.mubr.bf16.mxu0 0
        %3471 = vmatmul.mubr.bf16.gmra.mrb[0].mxu0 %v3343
        %v3472 = vpop.f32.mrb[0].mxu0
        %v3473 = vadd.f32 %v3328, %v3472
        %v3474 = vpop.f32.mrb[0].mxu0
        %v3475 = vpop.f32.mrb[0].mxu0
        %v3476 = vadd.f32 %v3328, %v3475
        %v3477 = vpop.f32.mrb[0].mxu0
        %3478 = vmatprep.mubr.bf16.mxu0 0
        %3479 = vmatmul.mubr.bf16.gmra.mrb[0].mxu0 %v3346
        %v3480 = vpop.f32.mrb[0].mxu0
        %v3481 = vadd.f32 %v3328, %v3480
        %v3482 = vpop.f32.mrb[0].mxu0
        %v3483 = vpop.f32.mrb[0].mxu0
        %v3484 = vadd.f32 %v3328, %v3483
        %v3485 = vpop.f32.mrb[0].mxu0
        %3486 = vmatprep.mubr.bf16.mxu0 0
        %3487 = vmatmul.mubr.bf16.gmra.mrb[0].mxu0 %v3349
        %v3488 = vpop.f32.mrb[0].mxu0
        %v3489 = vadd.f32 %v3328, %v3488
        %v3490 = vpop.f32.mrb[0].mxu0
        %v3491 = vpop.f32.mrb[0].mxu0
        %v3492 = vadd.f32 %v3328, %v3491
        %v3493 = vpop.f32.mrb[0].mxu0
        %3494 = vmatprep.mubr.bf16.mxu0 0
        %3495 = vmatmul.mubr.bf16.gmra.mrb[0].mxu0 %v3352
        %v3496 = vpop.f32.mrb[0].mxu0
        %v3497 = vadd.f32 %v3328, %v3496
        %v3498 = vpop.f32.mrb[0].mxu0
        %v3499 = vpop.f32.mrb[0].mxu0
        %v3500 = vadd.f32 %v3328, %v3499
        %v3501 = vpop.f32.mrb[0].mxu0
        %3502 = vmatprep.mubr.bf16.mxu0 0
        %3503 = vmatmul.mubr.bf16.gmra.mrb[0].mxu0 %v3355
        %v3504 = vpop.f32.mrb[0].mxu0
        %v3505 = vadd.f32 %v3328, %v3504
        %v3506 = vpop.f32.mrb[0].mxu0
        %v3507 = vpop.f32.mrb[0].mxu0
        %v3508 = vadd.f32 %v3328, %v3507
        %v3509 = vpop.f32.mrb[0].mxu0
        %3510 = vmatprep.mubr.bf16.mxu0 0
        %3511 = vmatmul.mubr.bf16.gmra.mrb[0].mxu0 %v3358
        %v3512 = vpop.f32.mrb[0].mxu0
        %v3513 = vadd.f32 %v3328, %v3512
        %v3514 = vpop.f32.mrb[0].mxu0
        %v3515 = vpop.f32.mrb[0].mxu0
        %v3516 = vadd.f32 %v3328, %v3515
        %v3517 = vpop.f32.mrb[0].mxu0
        %3518 = vmatprep.mubr.bf16.mxu0 0
        %3519 = vmatmul.mubr.bf16.gmra.mrb[0].mxu0 %v3361
        %v3520 = vpop.f32.mrb[0].mxu0
        %v3521 = vadd.f32 %v3328, %v3520
        %v3522 = vpop.f32.mrb[0].mxu0
        %v3523 = vpop.f32.mrb[0].mxu0
        %v3524 = vadd.f32 %v3328, %v3523
        %v3525 = vpop.f32.mrb[0].mxu0
        %3526 = vmatprep.mubr.bf16.mxu0 0
        %3527 = vmatmul.mubr.bf16.gmra.mrb[0].mxu0 %v3364
        %v3528 = vpop.f32.mrb[0].mxu0
        %v3529 = vadd.f32 %v3328, %v3528
        %v3530 = vpop.f32.mrb[0].mxu0
        %v3531 = vpop.f32.mrb[0].mxu0
        %v3532 = vadd.f32 %v3328, %v3531
        %v3533 = vpop.f32.mrb[0].mxu0
        %3534 = vmatprep.mubr.bf16.mxu0 0
        %3535 = vmatmul.mubr.bf16.gmra.mrb[0].mxu0 %v3367
        %v3536 = vpop.f32.mrb[0].mxu0
        %v3537 = vadd.f32 %v3328, %v3536
        %v3538 = vpop.f32.mrb[0].mxu0
        %v3539 = vpop.f32.mrb[0].mxu0
        %v3540 = vadd.f32 %v3328, %v3539
        %v3541 = vpop.f32.mrb[0].mxu0
        %3542 = vmatprep.mubr.bf16.mxu0 0
        %3543 = vmatmul.mubr.bf16.gmra.mrb[0].mxu0 %v3370
        %v3544 = vpop.f32.mrb[0].mxu0
        %v3545 = vadd.f32 %v3328, %v3544
        %v3546 = vpop.f32.mrb[0].mxu0
        %v3547 = vpop.f32.mrb[0].mxu0
        %v3548 = vadd.f32 %v3328, %v3547
        %v3549 = vpop.f32.mrb[0].mxu0
        %3550 = vmatprep.mubr.bf16.mxu0 0
        %3551 = vmatmul.mubr.bf16.gmra.mrb[0].mxu0 %v3373
        %v3552 = vpop.f32.mrb[0].mxu0
        %v3553 = vadd.f32 %v3328, %v3552
        %v3554 = vpop.f32.mrb[0].mxu0
        %v3555 = vpop.f32.mrb[0].mxu0
        %v3556 = vadd.f32 %v3328, %v3555
        %v3557 = vpop.f32.mrb[0].mxu0
        %3558 = vmatprep.mubr.bf16.mxu0 0
        %3559 = vmatmul.mubr.bf16.gmra.mrb[0].mxu0 %v3376
        %v3560 = vpop.f32.mrb[0].mxu0
        %v3561 = vadd.f32 %v3328, %v3560
        %v3562 = vpop.f32.mrb[0].mxu0
        %v3563 = vpop.f32.mrb[0].mxu0
        %v3564 = vadd.f32 %v3328, %v3563
        %v3565 = vpop.f32.mrb[0].mxu0
        %3566 = vmatprep.mubr.bf16.mxu0 0
        %3567 = vmatmul.mubr.bf16.gmra.mrb[0].mxu0 %v3379
        %v3568 = vpop.f32.mrb[0].mxu0
        %v3569 = vadd.f32 %v3328, %v3568
        %v3570 = vpop.f32.mrb[0].mxu0
        %v3571 = vpop.f32.mrb[0].mxu0
        %v3572 = vadd.f32 %v3328, %v3571
        %v3573 = vpop.f32.mrb[0].mxu0
        %3574 = vmatprep.mubr.bf16.mxu0 0
        %3575 = vmatmul.mubr.bf16.gmra.mrb[0].mxu0 %v3382
        %v3576 = vpop.f32.mrb[0].mxu0
        %v3577 = vadd.f32 %v3328, %v3576
        %v3578 = vpop.f32.mrb[0].mxu0
        %v3579 = vpop.f32.mrb[0].mxu0
        %v3580 = vadd.f32 %v3328, %v3579
        %v3581 = vpop.f32.mrb[0].mxu0
        %3582 = vmatprep.mubr.bf16.mxu0 0
        %3583 = vmatmul.mubr.bf16.gmra.mrb[0].mxu0 %v3385
        %v3584 = vpop.f32.mrb[0].mxu0
        %v3585 = vadd.f32 %v3328, %v3584
        %v3586 = vpop.f32.mrb[0].mxu0
        %v3587 = vpop.f32.mrb[0].mxu0
        %v3588 = vadd.f32 %v3328, %v3587
        %v3589 = vpop.f32.mrb[0].mxu0
        %3590 = vmatprep.mubr.bf16.mxu0 0
        %3591 = vmatmul.mubr.bf16.gmra.mrb[0].mxu0 %v3388
        %v3592 = vpop.f32.mrb[0].mxu0
        %v3593 = vadd.f32 %v3328, %v3592
        %v3594 = vpop.f32.mrb[0].mxu0
        %v3595 = vpop.f32.mrb[0].mxu0
        %v3596 = vadd.f32 %v3328, %v3595
        %v3597 = vpop.f32.mrb[0].mxu0
        %3598 = vmatprep.mubr.bf16.mxu0 0
        %3599 = vmatmul.mubr.bf16.gmra.mrb[0].mxu0 %v3391
        %v3600 = vpop.f32.mrb[0].mxu0
        %v3601 = vadd.f32 %v3328, %v3600
        %v3602 = vpop.f32.mrb[0].mxu0
        %v3603 = vpop.f32.mrb[0].mxu0
        %v3604 = vadd.f32 %v3328, %v3603
        %v3605 = vpop.f32.mrb[0].mxu0
        %3606 = vmatprep.mubr.bf16.mxu0 0
        %3607 = vmatmul.mubr.bf16.gmra.mrb[0].mxu0 %v3394
        %v3608 = vpop.f32.mrb[0].mxu0
        %v3609 = vadd.f32 %v3328, %v3608
        %v3610 = vpop.f32.mrb[0].mxu0
        %v3611 = vpop.f32.mrb[0].mxu0
        %v3612 = vadd.f32 %v3328, %v3611
        %v3613 = vpop.f32.mrb[0].mxu0
        %3614 = vmatprep.mubr.bf16.mxu0 0
        %3615 = vmatmul.mubr.bf16.gmra.mrb[0].mxu0 %v3397
        %v3616 = vpop.f32.mrb[0].mxu0
        %v3617 = vadd.f32 %v3328, %v3616
        %v3618 = vpop.f32.mrb[0].mxu0
        %v3619 = vpop.f32.mrb[0].mxu0
        %v3620 = vadd.f32 %v3328, %v3619
        %v3621 = vpop.f32.mrb[0].mxu0
        %3622 = vmatprep.mubr.bf16.mxu0 0
        %3623 = vmatmul.mubr.bf16.gmra.mrb[0].mxu0 %v3400
        %v3624 = vpop.f32.mrb[0].mxu0
        %v3625 = vadd.f32 %v3328, %v3624
        %v3626 = vpop.f32.mrb[0].mxu0
        %v3627 = vpop.f32.mrb[0].mxu0
        %v3628 = vadd.f32 %v3328, %v3627
        %v3629 = vpop.f32.mrb[0].mxu0
        %3630 = vmatprep.mubr.bf16.mxu0 0
        %3631 = vmatmul.mubr.bf16.gmra.mrb[0].mxu0 %v3403
        %v3632 = vpop.f32.mrb[0].mxu0
        %v3633 = vadd.f32 %v3328, %v3632
        %v3634 = vpop.f32.mrb[0].mxu0
        %v3635 = vpop.f32.mrb[0].mxu0
        %v3636 = vadd.f32 %v3328, %v3635
        %v3637 = vpop.f32.mrb[0].mxu0
        %3638 = vmatprep.mubr.bf16.mxu0 0
        %3639 = vmatmul.mubr.bf16.gmra.mrb[0].mxu0 %v3406
        %v3640 = vpop.f32.mrb[0].mxu0
        %v3641 = vadd.f32 %v3328, %v3640
        %v3642 = vpop.f32.mrb[0].mxu0
        %v3643 = vpop.f32.mrb[0].mxu0
        %v3644 = vadd.f32 %v3328, %v3643
        %v3645 = vpop.f32.mrb[0].mxu0
        %3646 = vmatprep.mubr.bf16.mxu0 0
        %3647 = vmatmul.mubr.bf16.gmra.mrb[0].mxu0 %v3409
        %v3648 = vpop.f32.mrb[0].mxu0
        %v3649 = vadd.f32 %v3328, %v3648
        %v3650 = vpop.f32.mrb[0].mxu0
        %v3651 = vpop.f32.mrb[0].mxu0
        %v3652 = vadd.f32 %v3328, %v3651
        %v3653 = vpop.f32.mrb[0].mxu0
        %3654 = vmatprep.mubr.bf16.mxu0 0
        %3655 = vmatmul.mubr.bf16.gmra.mrb[0].mxu0 %v3412
        %v3656 = vpop.f32.mrb[0].mxu0
        %v3657 = vadd.f32 %v3328, %v3656
        %v3658 = vpop.f32.mrb[0].mxu0
        %v3659 = vpop.f32.mrb[0].mxu0
        %v3660 = vadd.f32 %v3328, %v3659
        %v3661 = vpop.f32.mrb[0].mxu0
        %3662 = vmatprep.mubr.bf16.mxu0 0
        %3663 = vmatmul.mubr.bf16.gmra.mrb[0].mxu0 %v3415
        %v3664 = vpop.f32.mrb[0].mxu0
        %v3665 = vadd.f32 %v3328, %v3664
        %v3666 = vpop.f32.mrb[0].mxu0
        %v3667 = vpop.f32.mrb[0].mxu0
        %v3668 = vadd.f32 %v3328, %v3667
        %v3669 = vpop.f32.mrb[0].mxu0
        %3670 = vmatprep.mubr.bf16.mxu0 0
        %3671 = vmatmul.mubr.bf16.gmra.mrb[0].mxu0 %v3418
        %v3672 = vpop.f32.mrb[0].mxu0
        %v3673 = vadd.f32 %v3328, %v3672
        %v3674 = vpop.f32.mrb[0].mxu0
        %v3675 = vpop.f32.mrb[0].mxu0
        %v3676 = vadd.f32 %v3328, %v3675
        %v3677 = vpop.f32.mrb[0].mxu0
        %3678 = vmatprep.mubr.bf16.mxu0 0
        %3679 = vmatmul.mubr.bf16.gmra.mrb[0].mxu0 %v3421
        %v3680 = vpop.f32.mrb[0].mxu0
        %v3681 = vadd.f32 %v3328, %v3680
        %v3682 = vpop.f32.mrb[0].mxu0
        %v3683 = vpop.f32.mrb[0].mxu0
        %v3684 = vadd.f32 %v3328, %v3683
        %v3685 = vpop.f32.mrb[0].mxu0
        %3686 = vmatprep.mubr.bf16.mxu0 0
        %3687 = vmatmul.mubr.bf16.gmra.mrb[0].mxu0 %v3424
        %v3688 = vpop.f32.mrb[0].mxu0
        %v3689 = vadd.f32 %v3328, %v3688
        %v3690 = vpop.f32.mrb[0].mxu0
        %v3691 = vpop.f32.mrb[0].mxu0
        %v3692 = vadd.f32 %v3328, %v3691
        %v3693 = vpop.f32.mrb[0].mxu0
        %3694 = vmatprep.mubr.bf16.mxu0 0
        %3695 = vmatmul.mubr.bf16.gmra.mrb[0].mxu0 %v3427
        %v3696 = vpop.f32.mrb[0].mxu0
        %v3697 = vadd.f32 %v3328, %v3696
        %v3698 = vpop.f32.mrb[0].mxu0
        %v3699 = vpop.f32.mrb[0].mxu0
        %v3700 = vadd.f32 %v3328, %v3699
        %v3701 = vpop.f32.mrb[0].mxu0
        %3702 = vmatprep.mubr.bf16.mxu0 0
        %3703 = vmatmul.mubr.bf16.gmra.mrb[0].mxu0 %v3430
        %v3704 = vpop.f32.mrb[0].mxu0
        %v3705 = vadd.f32 %v3328, %v3704
        %v3706 = vpop.f32.mrb[0].mxu0
        %v3707 = vpop.f32.mrb[0].mxu0
        %v3708 = vadd.f32 %v3328, %v3707
        %v3709 = vpop.f32.mrb[0].mxu0
        %3710 = vmatprep.mubr.bf16.mxu0 0
        %3711 = vmatmul.mubr.bf16.gmra.mrb[0].mxu0 %v3433
        %v3712 = vpop.f32.mrb[0].mxu0
        %v3713 = vadd.f32 %v3328, %v3712
        %v3714 = vpop.f32.mrb[0].mxu0
        %v3715 = vpop.f32.mrb[0].mxu0
        %v3716 = vadd.f32 %v3328, %v3715
        %v3717 = vpop.f32.mrb[0].mxu0
        %3718 = vmatprep.mubr.bf16.mxu0 0
        %3719 = vmatmul.mubr.bf16.gmra.mrb[0].mxu0 %v3436
        %v3720 = vpop.f32.mrb[0].mxu0
        %v3721 = vadd.f32 %v3328, %v3720
        %v3722 = vpop.f32.mrb[0].mxu0
        %v3723 = vpop.f32.mrb[0].mxu0
        %v3724 = vadd.f32 %v3328, %v3723
        %v3725 = vpop.f32.mrb[0].mxu0
        %3726 = vdwg.mxu0
        %v3727 = vmul.f32 %v3473, 0.5
        %v3728 = vmul.f32 %v3476, 0.5
        %v3729 = vmul.f32 %v3481, 0.5
        %v3730 = vmul.f32 %v3484, 0.5
        %v3731 = vmul.f32 %v3489, 0.5
        %v3732 = vmul.f32 %v3492, 0.5
        %v3733 = vmul.f32 %v3497, 0.5
        %v3734 = vmul.f32 %v3500, 0.5
        %v3735 = vmul.f32 %v3505, 0.5
        %v3736 = vmul.f32 %v3508, 0.5
        %v3737 = vmul.f32 %v3513, 0.5
        %v3738 = vmul.f32 %v3516, 0.5
        %v3739 = vmul.f32 %v3521, 0.5
        %v3740 = vmul.f32 %v3524, 0.5
        %v3741 = vmul.f32 %v3529, 0.5
        %v3742 = vmul.f32 %v3532, 0.5
        %v3743 = vmul.f32 %v3537, 0.5
        %v3744 = vmul.f32 %v3540, 0.5
        %v3745 = vmul.f32 %v3545, 0.5
        %v3746 = vmul.f32 %v3548, 0.5
        %v3747 = vmul.f32 %v3553, 0.5
        %v3748 = vmul.f32 %v3556, 0.5
        %v3749 = vmul.f32 %v3561, 0.5
        %v3750 = vmul.f32 %v3564, 0.5
        %v3751 = vmul.f32 %v3569, 0.5
        %v3752 = vmul.f32 %v3572, 0.5
        %v3753 = vmul.f32 %v3577, 0.5
        %v3754 = vmul.f32 %v3580, 0.5
        %v3755 = vmul.f32 %v3585, 0.5
        %v3756 = vmul.f32 %v3588, 0.5
        %v3757 = vmul.f32 %v3593, 0.5
        %v3758 = vmul.f32 %v3596, 0.5
        %v3759 = vmul.f32 %v3601, 0.5
        %v3760 = vmul.f32 %v3604, 0.5
        %v3761 = vmul.f32 %v3609, 0.5
        %v3762 = vmul.f32 %v3612, 0.5
        %v3763 = vmul.f32 %v3617, 0.5
        %v3764 = vmul.f32 %v3620, 0.5
        %v3765 = vmul.f32 %v3625, 0.5
        %v3766 = vmul.f32 %v3628, 0.5
        %v3767 = vmul.f32 %v3633, 0.5
        %v3768 = vmul.f32 %v3636, 0.5
        %v3769 = vmul.f32 %v3641, 0.5
        %v3770 = vmul.f32 %v3644, 0.5
        %v3771 = vmul.f32 %v3649, 0.5
        %v3772 = vmul.f32 %v3652, 0.5
        %v3773 = vmul.f32 %v3657, 0.5
        %v3774 = vmul.f32 %v3660, 0.5
        %v3775 = vmul.f32 %v3665, 0.5
        %v3776 = vmul.f32 %v3668, 0.5
        %v3777 = vmul.f32 %v3673, 0.5
        %v3778 = vmul.f32 %v3676, 0.5
        %v3779 = vmul.f32 %v3681, 0.5
        %v3780 = vmul.f32 %v3684, 0.5
        %v3781 = vmul.f32 %v3689, 0.5
        %v3782 = vmul.f32 %v3692, 0.5
        %v3783 = vmul.f32 %v3697, 0.5
        %v3784 = vmul.f32 %v3700, 0.5
        %v3785 = vmul.f32 %v3705, 0.5
        %v3786 = vmul.f32 %v3708, 0.5
        %v3787 = vmul.f32 %v3713, 0.5
        %v3788 = vmul.f32 %v3716, 0.5
        %v3789 = vmul.f32 %v3721, 0.5
        %v3790 = vmul.f32 %v3724, 0.5
        %v3791 = vmul.f32 %v3473, 0.044715
        %v3792 = vmul.f32 %v3476, 0.044715
        %v3793 = vmul.f32 %v3481, 0.044715
        %v3794 = vmul.f32 %v3484, 0.044715
        %v3795 = vmul.f32 %v3489, 0.044715
        %v3796 = vmul.f32 %v3492, 0.044715
        %v3797 = vmul.f32 %v3497, 0.044715
        %v3798 = vmul.f32 %v3500, 0.044715
        %v3799 = vmul.f32 %v3505, 0.044715
        %v3800 = vmul.f32 %v3508, 0.044715
        %v3801 = vmul.f32 %v3513, 0.044715
        %v3802 = vmul.f32 %v3516, 0.044715
        %v3803 = vmul.f32 %v3521, 0.044715
        %v3804 = vmul.f32 %v3524, 0.044715
        %v3805 = vmul.f32 %v3529, 0.044715
        %v3806 = vmul.f32 %v3532, 0.044715
        %v3807 = vmul.f32 %v3537, 0.044715
        %v3808 = vmul.f32 %v3540, 0.044715
        %v3809 = vmul.f32 %v3545, 0.044715
        %v3810 = vmul.f32 %v3548, 0.044715
        %v3811 = vmul.f32 %v3553, 0.044715
        %v3812 = vmul.f32 %v3556, 0.044715
        %v3813 = vmul.f32 %v3561, 0.044715
        %v3814 = vmul.f32 %v3564, 0.044715
        %v3815 = vmul.f32 %v3569, 0.044715
        %v3816 = vmul.f32 %v3572, 0.044715
        %v3817 = vmul.f32 %v3577, 0.044715
        %v3818 = vmul.f32 %v3580, 0.044715
        %v3819 = vmul.f32 %v3585, 0.044715
        %v3820 = vmul.f32 %v3588, 0.044715
        %v3821 = vmul.f32 %v3593, 0.044715
        %v3822 = vmul.f32 %v3596, 0.044715
        %v3823 = vmul.f32 %v3601, 0.044715
        %v3824 = vmul.f32 %v3604, 0.044715
        %v3825 = vmul.f32 %v3609, 0.044715
        %v3826 = vmul.f32 %v3612, 0.044715
        %v3827 = vmul.f32 %v3617, 0.044715
        %v3828 = vmul.f32 %v3620, 0.044715
        %v3829 = vmul.f32 %v3625, 0.044715
        %v3830 = vmul.f32 %v3628, 0.044715
        %v3831 = vmul.f32 %v3633, 0.044715
        %v3832 = vmul.f32 %v3636, 0.044715
        %v3833 = vmul.f32 %v3641, 0.044715
        %v3834 = vmul.f32 %v3644, 0.044715
        %v3835 = vmul.f32 %v3649, 0.044715
        %v3836 = vmul.f32 %v3652, 0.044715
        %v3837 = vmul.f32 %v3657, 0.044715
        %v3838 = vmul.f32 %v3660, 0.044715
        %v3839 = vmul.f32 %v3665, 0.044715
        %v3840 = vmul.f32 %v3668, 0.044715
        %v3841 = vmul.f32 %v3673, 0.044715
        %v3842 = vmul.f32 %v3676, 0.044715
        %v3843 = vmul.f32 %v3681, 0.044715
        %v3844 = vmul.f32 %v3684, 0.044715
        %v3845 = vmul.f32 %v3689, 0.044715
        %v3846 = vmul.f32 %v3692, 0.044715
        %v3847 = vmul.f32 %v3697, 0.044715
        %v3848 = vmul.f32 %v3700, 0.044715
        %v3849 = vmul.f32 %v3705, 0.044715
        %v3850 = vmul.f32 %v3708, 0.044715
        %v3851 = vmul.f32 %v3713, 0.044715
        %v3852 = vmul.f32 %v3716, 0.044715
        %v3853 = vmul.f32 %v3721, 0.044715
        %v3854 = vmul.f32 %v3724, 0.044715
        %v3855 = vmul.f32 %v3791, %v3473
        %v3856 = vmul.f32 %v3792, %v3476
        %v3857 = vmul.f32 %v3793, %v3481
        %v3858 = vmul.f32 %v3794, %v3484
        %v3859 = vmul.f32 %v3795, %v3489
        %v3860 = vmul.f32 %v3796, %v3492
        %v3861 = vmul.f32 %v3797, %v3497
        %v3862 = vmul.f32 %v3798, %v3500
        %v3863 = vmul.f32 %v3799, %v3505
        %v3864 = vmul.f32 %v3800, %v3508
        %v3865 = vmul.f32 %v3801, %v3513
        %v3866 = vmul.f32 %v3802, %v3516
        %v3867 = vmul.f32 %v3803, %v3521
        %v3868 = vmul.f32 %v3804, %v3524
        %v3869 = vmul.f32 %v3805, %v3529
        %v3870 = vmul.f32 %v3806, %v3532
        %v3871 = vmul.f32 %v3807, %v3537
        %v3872 = vmul.f32 %v3808, %v3540
        %v3873 = vmul.f32 %v3809, %v3545
        %v3874 = vmul.f32 %v3810, %v3548
        %v3875 = vmul.f32 %v3811, %v3553
        %v3876 = vmul.f32 %v3812, %v3556
        %v3877 = vmul.f32 %v3813, %v3561
        %v3878 = vmul.f32 %v3814, %v3564
        %v3879 = vmul.f32 %v3815, %v3569
        %v3880 = vmul.f32 %v3816, %v3572
        %v3881 = vmul.f32 %v3817, %v3577
        %v3882 = vmul.f32 %v3818, %v3580
        %v3883 = vmul.f32 %v3819, %v3585
        %v3884 = vmul.f32 %v3820, %v3588
        %v3885 = vmul.f32 %v3821, %v3593
        %v3886 = vmul.f32 %v3822, %v3596
        %v3887 = vmul.f32 %v3823, %v3601
        %v3888 = vmul.f32 %v3824, %v3604
        %v3889 = vmul.f32 %v3825, %v3609
        %v3890 = vmul.f32 %v3826, %v3612
        %v3891 = vmul.f32 %v3827, %v3617
        %v3892 = vmul.f32 %v3828, %v3620
        %v3893 = vmul.f32 %v3829, %v3625
        %v3894 = vmul.f32 %v3830, %v3628
        %v3895 = vmul.f32 %v3831, %v3633
        %v3896 = vmul.f32 %v3832, %v3636
        %v3897 = vmul.f32 %v3833, %v3641
        %v3898 = vmul.f32 %v3834, %v3644
        %v3899 = vmul.f32 %v3835, %v3649
        %v3900 = vmul.f32 %v3836, %v3652
        %v3901 = vmul.f32 %v3837, %v3657
        %v3902 = vmul.f32 %v3838, %v3660
        %v3903 = vmul.f32 %v3839, %v3665
        %v3904 = vmul.f32 %v3840, %v3668
        %v3905 = vmul.f32 %v3841, %v3673
        %v3906 = vmul.f32 %v3842, %v3676
        %v3907 = vmul.f32 %v3843, %v3681
        %v3908 = vmul.f32 %v3844, %v3684
        %v3909 = vmul.f32 %v3845, %v3689
        %v3910 = vmul.f32 %v3846, %v3692
        %v3911 = vmul.f32 %v3847, %v3697
        %v3912 = vmul.f32 %v3848, %v3700
        %v3913 = vmul.f32 %v3849, %v3705
        %v3914 = vmul.f32 %v3850, %v3708
        %v3915 = vmul.f32 %v3851, %v3713
        %v3916 = vmul.f32 %v3852, %v3716
        %v3917 = vmul.f32 %v3853, %v3721
        %v3918 = vmul.f32 %v3854, %v3724
        %v3919 = vmul.f32 %v3855, %v3473
        %v3920 = vmul.f32 %v3856, %v3476
        %v3921 = vmul.f32 %v3857, %v3481
        %v3922 = vmul.f32 %v3858, %v3484
        %v3923 = vmul.f32 %v3859, %v3489
        %v3924 = vmul.f32 %v3860, %v3492
        %v3925 = vmul.f32 %v3861, %v3497
        %v3926 = vmul.f32 %v3862, %v3500
        %v3927 = vmul.f32 %v3863, %v3505
        %v3928 = vmul.f32 %v3864, %v3508
        %v3929 = vmul.f32 %v3865, %v3513
        %v3930 = vmul.f32 %v3866, %v3516
        %v3931 = vmul.f32 %v3867, %v3521
        %v3932 = vmul.f32 %v3868, %v3524
        %v3933 = vmul.f32 %v3869, %v3529
        %v3934 = vmul.f32 %v3870, %v3532
        %v3935 = vmul.f32 %v3871, %v3537
        %v3936 = vmul.f32 %v3872, %v3540
        %v3937 = vmul.f32 %v3873, %v3545
        %v3938 = vmul.f32 %v3874, %v3548
        %v3939 = vmul.f32 %v3875, %v3553
        %v3940 = vmul.f32 %v3876, %v3556
        %v3941 = vmul.f32 %v3877, %v3561
        %v3942 = vmul.f32 %v3878, %v3564
        %v3943 = vmul.f32 %v3879, %v3569
        %v3944 = vmul.f32 %v3880, %v3572
        %v3945 = vmul.f32 %v3881, %v3577
        %v3946 = vmul.f32 %v3882, %v3580
        %v3947 = vmul.f32 %v3883, %v3585
        %v3948 = vmul.f32 %v3884, %v3588
        %v3949 = vmul.f32 %v3885, %v3593
        %v3950 = vmul.f32 %v3886, %v3596
        %v3951 = vmul.f32 %v3887, %v3601
        %v3952 = vmul.f32 %v3888, %v3604
        %v3953 = vmul.f32 %v3889, %v3609
        %v3954 = vmul.f32 %v3890, %v3612
        %v3955 = vmul.f32 %v3891, %v3617
        %v3956 = vmul.f32 %v3892, %v3620
        %v3957 = vmul.f32 %v3893, %v3625
        %v3958 = vmul.f32 %v3894, %v3628
        %v3959 = vmul.f32 %v3895, %v3633
        %v3960 = vmul.f32 %v3896, %v3636
        %v3961 = vmul.f32 %v3897, %v3641
        %v3962 = vmul.f32 %v3898, %v3644
        %v3963 = vmul.f32 %v3899, %v3649
        %v3964 = vmul.f32 %v3900, %v3652
        %v3965 = vmul.f32 %v3901, %v3657
        %v3966 = vmul.f32 %v3902, %v3660
        %v3967 = vmul.f32 %v3903, %v3665
        %v3968 = vmul.f32 %v3904, %v3668
        %v3969 = vmul.f32 %v3905, %v3673
        %v3970 = vmul.f32 %v3906, %v3676
        %v3971 = vmul.f32 %v3907, %v3681
        %v3972 = vmul.f32 %v3908, %v3684
        %v3973 = vmul.f32 %v3909, %v3689
        %v3974 = vmul.f32 %v3910, %v3692
        %v3975 = vmul.f32 %v3911, %v3697
        %v3976 = vmul.f32 %v3912, %v3700
        %v3977 = vmul.f32 %v3913, %v3705
        %v3978 = vmul.f32 %v3914, %v3708
        %v3979 = vmul.f32 %v3915, %v3713
        %v3980 = vmul.f32 %v3916, %v3716
        %v3981 = vmul.f32 %v3917, %v3721
        %v3982 = vmul.f32 %v3918, %v3724
        %v3983 = vadd.f32 %v3473, %v3919
        %v3984 = vadd.f32 %v3476, %v3920
        %v3985 = vadd.f32 %v3481, %v3921
        %v3986 = vadd.f32 %v3484, %v3922
        %v3987 = vadd.f32 %v3489, %v3923
        %v3988 = vadd.f32 %v3492, %v3924
        %v3989 = vadd.f32 %v3497, %v3925
        %v3990 = vadd.f32 %v3500, %v3926
        %v3991 = vadd.f32 %v3505, %v3927
        %v3992 = vadd.f32 %v3508, %v3928
        %v3993 = vadd.f32 %v3513, %v3929
        %v3994 = vadd.f32 %v3516, %v3930
        %v3995 = vadd.f32 %v3521, %v3931
        %v3996 = vadd.f32 %v3524, %v3932
        %v3997 = vadd.f32 %v3529, %v3933
        %v3998 = vadd.f32 %v3532, %v3934
        %v3999 = vadd.f32 %v3537, %v3935
        %v4000 = vadd.f32 %v3540, %v3936
        %v4001 = vadd.f32 %v3545, %v3937
        %v4002 = vadd.f32 %v3548, %v3938
        %v4003 = vadd.f32 %v3553, %v3939
        %v4004 = vadd.f32 %v3556, %v3940
        %v4005 = vadd.f32 %v3561, %v3941
        %v4006 = vadd.f32 %v3564, %v3942
        %v4007 = vadd.f32 %v3569, %v3943
        %v4008 = vadd.f32 %v3572, %v3944
        %v4009 = vadd.f32 %v3577, %v3945
        %v4010 = vadd.f32 %v3580, %v3946
        %v4011 = vadd.f32 %v3585, %v3947
        %v4012 = vadd.f32 %v3588, %v3948
        %v4013 = vadd.f32 %v3593, %v3949
        %v4014 = vadd.f32 %v3596, %v3950
        %v4015 = vadd.f32 %v3601, %v3951
        %v4016 = vadd.f32 %v3604, %v3952
        %v4017 = vadd.f32 %v3609, %v3953
        %v4018 = vadd.f32 %v3612, %v3954
        %v4019 = vadd.f32 %v3617, %v3955
        %v4020 = vadd.f32 %v3620, %v3956
        %v4021 = vadd.f32 %v3625, %v3957
        %v4022 = vadd.f32 %v3628, %v3958
        %v4023 = vadd.f32 %v3633, %v3959
        %v4024 = vadd.f32 %v3636, %v3960
        %v4025 = vadd.f32 %v3641, %v3961
        %v4026 = vadd.f32 %v3644, %v3962
        %v4027 = vadd.f32 %v3649, %v3963
        %v4028 = vadd.f32 %v3652, %v3964
        %v4029 = vadd.f32 %v3657, %v3965
        %v4030 = vadd.f32 %v3660, %v3966
        %v4031 = vadd.f32 %v3665, %v3967
        %v4032 = vadd.f32 %v3668, %v3968
        %v4033 = vadd.f32 %v3673, %v3969
        %v4034 = vadd.f32 %v3676, %v3970
        %v4035 = vadd.f32 %v3681, %v3971
        %v4036 = vadd.f32 %v3684, %v3972
        %v4037 = vadd.f32 %v3689, %v3973
        %v4038 = vadd.f32 %v3692, %v3974
        %v4039 = vadd.f32 %v3697, %v3975
        %v4040 = vadd.f32 %v3700, %v3976
        %v4041 = vadd.f32 %v3705, %v3977
        %v4042 = vadd.f32 %v3708, %v3978
        %v4043 = vadd.f32 %v3713, %v3979
        %v4044 = vadd.f32 %v3716, %v3980
        %v4045 = vadd.f32 %v3721, %v3981
        %v4046 = vadd.f32 %v3724, %v3982
        %v4047 = vmul.f32 %v3983, 0.7978846
        %v4048 = vmul.f32 %v3984, 0.7978846
        %v4049 = vmul.f32 %v3985, 0.7978846
        %v4050 = vmul.f32 %v3986, 0.7978846
        %v4051 = vmul.f32 %v3987, 0.7978846
        %v4052 = vmul.f32 %v3988, 0.7978846
        %v4053 = vmul.f32 %v3989, 0.7978846
        %v4054 = vmul.f32 %v3990, 0.7978846
        %v4055 = vmul.f32 %v3991, 0.7978846
        %v4056 = vmul.f32 %v3992, 0.7978846
        %v4057 = vmul.f32 %v3993, 0.7978846
        %v4058 = vmul.f32 %v3994, 0.7978846
        %v4059 = vmul.f32 %v3995, 0.7978846
        %v4060 = vmul.f32 %v3996, 0.7978846
        %v4061 = vmul.f32 %v3997, 0.7978846
        %v4062 = vmul.f32 %v3998, 0.7978846
        %v4063 = vmul.f32 %v3999, 0.7978846
        %v4064 = vmul.f32 %v4000, 0.7978846
        %v4065 = vmul.f32 %v4001, 0.7978846
        %v4066 = vmul.f32 %v4002, 0.7978846
        %v4067 = vmul.f32 %v4003, 0.7978846
        %v4068 = vmul.f32 %v4004, 0.7978846
        %v4069 = vmul.f32 %v4005, 0.7978846
        %v4070 = vmul.f32 %v4006, 0.7978846
        %v4071 = vmul.f32 %v4007, 0.7978846
        %v4072 = vmul.f32 %v4008, 0.7978846
        %v4073 = vmul.f32 %v4009, 0.7978846
        %v4074 = vmul.f32 %v4010, 0.7978846
        %v4075 = vmul.f32 %v4011, 0.7978846
        %v4076 = vmul.f32 %v4012, 0.7978846
        %v4077 = vmul.f32 %v4013, 0.7978846
        %v4078 = vmul.f32 %v4014, 0.7978846
        %v4079 = vmul.f32 %v4015, 0.7978846
        %v4080 = vmul.f32 %v4016, 0.7978846
        %v4081 = vmul.f32 %v4017, 0.7978846
        %v4082 = vmul.f32 %v4018, 0.7978846
        %v4083 = vmul.f32 %v4019, 0.7978846
        %v4084 = vmul.f32 %v4020, 0.7978846
        %v4085 = vmul.f32 %v4021, 0.7978846
        %v4086 = vmul.f32 %v4022, 0.7978846
        %v4087 = vmul.f32 %v4023, 0.7978846
        %v4088 = vmul.f32 %v4024, 0.7978846
        %v4089 = vmul.f32 %v4025, 0.7978846
        %v4090 = vmul.f32 %v4026, 0.7978846
        %v4091 = vmul.f32 %v4027, 0.7978846
        %v4092 = vmul.f32 %v4028, 0.7978846
        %v4093 = vmul.f32 %v4029, 0.7978846
        %v4094 = vmul.f32 %v4030, 0.7978846
        %v4095 = vmul.f32 %v4031, 0.7978846
        %v4096 = vmul.f32 %v4032, 0.7978846
        %v4097 = vmul.f32 %v4033, 0.7978846
        %v4098 = vmul.f32 %v4034, 0.7978846
        %v4099 = vmul.f32 %v4035, 0.7978846
        %v4100 = vmul.f32 %v4036, 0.7978846
        %v4101 = vmul.f32 %v4037, 0.7978846
        %v4102 = vmul.f32 %v4038, 0.7978846
        %v4103 = vmul.f32 %v4039, 0.7978846
        %v4104 = vmul.f32 %v4040, 0.7978846
        %v4105 = vmul.f32 %v4041, 0.7978846
        %v4106 = vmul.f32 %v4042, 0.7978846
        %v4107 = vmul.f32 %v4043, 0.7978846
        %v4108 = vmul.f32 %v4044, 0.7978846
        %v4109 = vmul.f32 %v4045, 0.7978846
        %v4110 = vmul.f32 %v4046, 0.7978846
        %v4111 = vtanh.pop %v4047
        %v4112 = vtanh.pop %v4048
        %v4113 = vtanh.pop %v4049
        %v4114 = vtanh.pop %v4050
        %v4115 = vtanh.pop %v4051
        %v4116 = vtanh.pop %v4052
        %v4117 = vtanh.pop %v4053
        %v4118 = vtanh.pop %v4054
        %v4119 = vtanh.pop %v4055
        %v4120 = vtanh.pop %v4056
        %v4121 = vtanh.pop %v4057
        %v4122 = vtanh.pop %v4058
        %v4123 = vtanh.pop %v4059
        %v4124 = vtanh.pop %v4060
        %v4125 = vtanh.pop %v4061
        %v4126 = vtanh.pop %v4062
        %v4127 = vtanh.pop %v4063
        %v4128 = vtanh.pop %v4064
        %v4129 = vtanh.pop %v4065
        %v4130 = vtanh.pop %v4066
        %v4131 = vtanh.pop %v4067
        %v4132 = vtanh.pop %v4068
        %v4133 = vtanh.pop %v4069
        %v4134 = vtanh.pop %v4070
        %v4135 = vtanh.pop %v4071
        %v4136 = vtanh.pop %v4072
        %v4137 = vtanh.pop %v4073
        %v4138 = vtanh.pop %v4074
        %v4139 = vtanh.pop %v4075
        %v4140 = vtanh.pop %v4076
        %v4141 = vtanh.pop %v4077
        %v4142 = vtanh.pop %v4078
        %v4143 = vtanh.pop %v4079
        %v4144 = vtanh.pop %v4080
        %v4145 = vtanh.pop %v4081
        %v4146 = vtanh.pop %v4082
        %v4147 = vtanh.pop %v4083
        %v4148 = vtanh.pop %v4084
        %v4149 = vtanh.pop %v4085
        %v4150 = vtanh.pop %v4086
        %v4151 = vtanh.pop %v4087
        %v4152 = vtanh.pop %v4088
        %v4153 = vtanh.pop %v4089
        %v4154 = vtanh.pop %v4090
        %v4155 = vtanh.pop %v4091
        %v4156 = vtanh.pop %v4092
        %v4157 = vtanh.pop %v4093
        %v4158 = vtanh.pop %v4094
        %v4159 = vtanh.pop %v4095
        %v4160 = vtanh.pop %v4096
        %v4161 = vtanh.pop %v4097
        %v4162 = vtanh.pop %v4098
        %v4163 = vtanh.pop %v4099
        %v4164 = vtanh.pop %v4100
        %v4165 = vtanh.pop %v4101
        %v4166 = vtanh.pop %v4102
        %v4167 = vtanh.pop %v4103
        %v4168 = vtanh.pop %v4104
        %v4169 = vtanh.pop %v4105
        %v4170 = vtanh.pop %v4106
        %v4171 = vtanh.pop %v4107
        %v4172 = vtanh.pop %v4108
        %v4173 = vtanh.pop %v4109
        %v4174 = vtanh.pop %v4110
        %v4175 = vadd.f32 %v4111, 1.0
        %v4176 = vadd.f32 %v4112, 1.0
        %v4177 = vadd.f32 %v4113, 1.0
        %v4178 = vadd.f32 %v4114, 1.0
        %v4179 = vadd.f32 %v4115, 1.0
        %v4180 = vadd.f32 %v4116, 1.0
        %v4181 = vadd.f32 %v4117, 1.0
        %v4182 = vadd.f32 %v4118, 1.0
        %v4183 = vadd.f32 %v4119, 1.0
        %v4184 = vadd.f32 %v4120, 1.0
        %v4185 = vadd.f32 %v4121, 1.0
        %v4186 = vadd.f32 %v4122, 1.0
        %v4187 = vadd.f32 %v4123, 1.0
        %v4188 = vadd.f32 %v4124, 1.0
        %v4189 = vadd.f32 %v4125, 1.0
        %v4190 = vadd.f32 %v4126, 1.0
        %v4191 = vadd.f32 %v4127, 1.0
        %v4192 = vadd.f32 %v4128, 1.0
        %v4193 = vadd.f32 %v4129, 1.0
        %v4194 = vadd.f32 %v4130, 1.0
        %v4195 = vadd.f32 %v4131, 1.0
        %v4196 = vadd.f32 %v4132, 1.0
        %v4197 = vadd.f32 %v4133, 1.0
        %v4198 = vadd.f32 %v4134, 1.0
        %v4199 = vadd.f32 %v4135, 1.0
        %v4200 = vadd.f32 %v4136, 1.0
        %v4201 = vadd.f32 %v4137, 1.0
        %v4202 = vadd.f32 %v4138, 1.0
        %v4203 = vadd.f32 %v4139, 1.0
        %v4204 = vadd.f32 %v4140, 1.0
        %v4205 = vadd.f32 %v4141, 1.0
        %v4206 = vadd.f32 %v4142, 1.0
        %v4207 = vadd.f32 %v4143, 1.0
        %v4208 = vadd.f32 %v4144, 1.0
        %v4209 = vadd.f32 %v4145, 1.0
        %v4210 = vadd.f32 %v4146, 1.0
        %v4211 = vadd.f32 %v4147, 1.0
        %v4212 = vadd.f32 %v4148, 1.0
        %v4213 = vadd.f32 %v4149, 1.0
        %v4214 = vadd.f32 %v4150, 1.0
        %v4215 = vadd.f32 %v4151, 1.0
        %v4216 = vadd.f32 %v4152, 1.0
        %v4217 = vadd.f32 %v4153, 1.0
        %v4218 = vadd.f32 %v4154, 1.0
        %v4219 = vadd.f32 %v4155, 1.0
        %v4220 = vadd.f32 %v4156, 1.0
        %v4221 = vadd.f32 %v4157, 1.0
        %v4222 = vadd.f32 %v4158, 1.0
        %v4223 = vadd.f32 %v4159, 1.0
        %v4224 = vadd.f32 %v4160, 1.0
        %v4225 = vadd.f32 %v4161, 1.0
        %v4226 = vadd.f32 %v4162, 1.0
        %v4227 = vadd.f32 %v4163, 1.0
        %v4228 = vadd.f32 %v4164, 1.0
        %v4229 = vadd.f32 %v4165, 1.0
        %v4230 = vadd.f32 %v4166, 1.0
        %v4231 = vadd.f32 %v4167, 1.0
        %v4232 = vadd.f32 %v4168, 1.0
        %v4233 = vadd.f32 %v4169, 1.0
        %v4234 = vadd.f32 %v4170, 1.0
        %v4235 = vadd.f32 %v4171, 1.0
        %v4236 = vadd.f32 %v4172, 1.0
        %v4237 = vadd.f32 %v4173, 1.0
        %v4238 = vadd.f32 %v4174, 1.0
        %v4239 = vmul.f32 %v3727, %v4175
        %v4240 = vmul.f32 %v3728, %v4176
        %v4241 = vmul.f32 %v3729, %v4177
        %v4242 = vmul.f32 %v3730, %v4178
        %v4243 = vmul.f32 %v3731, %v4179
        %v4244 = vmul.f32 %v3732, %v4180
        %v4245 = vmul.f32 %v3733, %v4181
        %v4246 = vmul.f32 %v3734, %v4182
        %v4247 = vmul.f32 %v3735, %v4183
        %v4248 = vmul.f32 %v3736, %v4184
        %v4249 = vmul.f32 %v3737, %v4185
        %v4250 = vmul.f32 %v3738, %v4186
        %v4251 = vmul.f32 %v3739, %v4187
        %v4252 = vmul.f32 %v3740, %v4188
        %v4253 = vmul.f32 %v3741, %v4189
        %v4254 = vmul.f32 %v3742, %v4190
        %v4255 = vmul.f32 %v3743, %v4191
        %v4256 = vmul.f32 %v3744, %v4192
        %v4257 = vmul.f32 %v3745, %v4193
        %v4258 = vmul.f32 %v3746, %v4194
        %v4259 = vmul.f32 %v3747, %v4195
        %v4260 = vmul.f32 %v3748, %v4196
        %v4261 = vmul.f32 %v3749, %v4197
        %v4262 = vmul.f32 %v3750, %v4198
        %v4263 = vmul.f32 %v3751, %v4199
        %v4264 = vmul.f32 %v3752, %v4200
        %v4265 = vmul.f32 %v3753, %v4201
        %v4266 = vmul.f32 %v3754, %v4202
        %v4267 = vmul.f32 %v3755, %v4203
        %v4268 = vmul.f32 %v3756, %v4204
        %v4269 = vmul.f32 %v3757, %v4205
        %v4270 = vmul.f32 %v3758, %v4206
        %v4271 = vmul.f32 %v3759, %v4207
        %v4272 = vmul.f32 %v3760, %v4208
        %v4273 = vmul.f32 %v3761, %v4209
        %v4274 = vmul.f32 %v3762, %v4210
        %v4275 = vmul.f32 %v3763, %v4211
        %v4276 = vmul.f32 %v3764, %v4212
        %v4277 = vmul.f32 %v3765, %v4213
        %v4278 = vmul.f32 %v3766, %v4214
        %v4279 = vmul.f32 %v3767, %v4215
        %v4280 = vmul.f32 %v3768, %v4216
        %v4281 = vmul.f32 %v3769, %v4217
        %v4282 = vmul.f32 %v3770, %v4218
        %v4283 = vmul.f32 %v3771, %v4219
        %v4284 = vmul.f32 %v3772, %v4220
        %v4285 = vmul.f32 %v3773, %v4221
        %v4286 = vmul.f32 %v3774, %v4222
        %v4287 = vmul.f32 %v3775, %v4223
        %v4288 = vmul.f32 %v3776, %v4224
        %v4289 = vmul.f32 %v3777, %v4225
        %v4290 = vmul.f32 %v3778, %v4226
        %v4291 = vmul.f32 %v3779, %v4227
        %v4292 = vmul.f32 %v3780, %v4228
        %v4293 = vmul.f32 %v3781, %v4229
        %v4294 = vmul.f32 %v3782, %v4230
        %v4295 = vmul.f32 %v3783, %v4231
        %v4296 = vmul.f32 %v3784, %v4232
        %v4297 = vmul.f32 %v3785, %v4233
        %v4298 = vmul.f32 %v3786, %v4234
        %v4299 = vmul.f32 %v3787, %v4235
        %v4300 = vmul.f32 %v3788, %v4236
        %v4301 = vmul.f32 %v3789, %v4237
        %v4302 = vmul.f32 %v3790, %v4238
        %v4303 = vpack.c.bf16 %v4240, %v4239
        %v4304 = vpack.c.bf16 %v4242, %v4241
        %v4305 = vpack.c.bf16 %v4244, %v4243
        %v4306 = vpack.c.bf16 %v4246, %v4245
        %v4307 = vpack.c.bf16 %v4248, %v4247
        %v4308 = vpack.c.bf16 %v4250, %v4249
        %v4309 = vpack.c.bf16 %v4252, %v4251
        %v4310 = vpack.c.bf16 %v4254, %v4253
        %v4311 = vpack.c.bf16 %v4256, %v4255
        %v4312 = vpack.c.bf16 %v4258, %v4257
        %v4313 = vpack.c.bf16 %v4260, %v4259
        %v4314 = vpack.c.bf16 %v4262, %v4261
        %v4315 = vpack.c.bf16 %v4264, %v4263
        %v4316 = vpack.c.bf16 %v4266, %v4265
        %v4317 = vpack.c.bf16 %v4268, %v4267
        %v4318 = vpack.c.bf16 %v4270, %v4269
        %v4319 = vpack.c.bf16 %v4272, %v4271
        %v4320 = vpack.c.bf16 %v4274, %v4273
        %v4321 = vpack.c.bf16 %v4276, %v4275
        %v4322 = vpack.c.bf16 %v4278, %v4277
        %v4323 = vpack.c.bf16 %v4280, %v4279
        %v4324 = vpack.c.bf16 %v4282, %v4281
        %v4325 = vpack.c.bf16 %v4284, %v4283
        %v4326 = vpack.c.bf16 %v4286, %v4285
        %v4327 = vpack.c.bf16 %v4288, %v4287
        %v4328 = vpack.c.bf16 %v4290, %v4289
        %v4329 = vpack.c.bf16 %v4292, %v4291
        %v4330 = vpack.c.bf16 %v4294, %v4293
        %v4331 = vpack.c.bf16 %v4296, %v4295
        %v4332 = vpack.c.bf16 %v4298, %v4297
        %v4333 = vpack.c.bf16 %v4300, %v4299
        %v4334 = vpack.c.bf16 %v4302, %v4301
        %v4335 = vld [vmem:[%s12] sm:$0xf]
        %v4336 = vld [vmem:[%s12 + $0x4] sm:$0xf]
        %v4337 = vld [vmem:[%s12 + $0x8] sm:$0xf]
        %v4338 = vld [vmem:[%s12 + $0xc] sm:$0xf]
        %v4339 = vld [vmem:[%s13] sm:$0x1]
        %v4341 = vlaneseq
        %v4342 = vshrl.u32 %v4341, 7
        %v4343 = vsub.s32 0, %v4342
        %v4344 = vrot.slane %v4339, %v4343
        %v4350 = vunpack.c.l.b16 %v4335
        %v4351 = vunpack.c.l.b16 %v4336
        %v4352 = vunpack.c.l.b16 %v4337
        %v4353 = vunpack.c.l.b16 %v4338
        %v4354 = vpack.c.b16 %v4351, %v4350
        %v4355 = vpack.c.b16 %v4353, %v4352
        %v4359 = vsel %vm1857, %v4303, 0
        %v4362 = vsel %vm1857, %v4304, 0
        %v4365 = vsel %vm1857, %v4305, 0
        %v4368 = vsel %vm1857, %v4306, 0
        %v4371 = vsel %vm1857, %v4307, 0
        %v4374 = vsel %vm1857, %v4308, 0
        %v4377 = vsel %vm1857, %v4309, 0
        %v4380 = vsel %vm1857, %v4310, 0
        %v4383 = vsel %vm1857, %v4311, 0
        %v4386 = vsel %vm1857, %v4312, 0
        %v4389 = vsel %vm1857, %v4313, 0
        %v4392 = vsel %vm1857, %v4314, 0
        %v4395 = vsel %vm1857, %v4315, 0
        %v4398 = vsel %vm1857, %v4316, 0
        %v4401 = vsel %vm1857, %v4317, 0
        %v4404 = vsel %vm1857, %v4318, 0
        %v4407 = vsel %vm1857, %v4319, 0
        %v4410 = vsel %vm1857, %v4320, 0
        %v4413 = vsel %vm1857, %v4321, 0
        %v4416 = vsel %vm1857, %v4322, 0
        %v4419 = vsel %vm1857, %v4323, 0
        %v4422 = vsel %vm1857, %v4324, 0
        %v4425 = vsel %vm1857, %v4325, 0
        %v4428 = vsel %vm1857, %v4326, 0
        %v4431 = vsel %vm1857, %v4327, 0
        %v4434 = vsel %vm1857, %v4328, 0
        %v4437 = vsel %vm1857, %v4329, 0
        %v4440 = vsel %vm1857, %v4330, 0
        %v4443 = vsel %vm1857, %v4331, 0
        %v4446 = vsel %vm1857, %v4332, 0
        %v4449 = vsel %vm1857, %v4333, 0
        %v4452 = vsel %vm1857, %v4334, 0
        %4454 = vmatprep.subr.bf16.mxu0 0
        %4455 = vmatpush1.bf16.msra.mxu0 %v4354
        %4456 = vmatprep.subr.bf16.mxu0 0
        %4457 = vmatpush1.bf16.msra.mxu0 %v4355
        %4458 = vmatprep.subr.bf16.mxu0 0
        %4459 = vmatpush1.bf16.msra.mxu0 0
        %4460 = vmatprep.subr.bf16.mxu0 0
        %4461 = vmatpush1.bf16.msra.mxu0 0
        %4462 = vmatprep.subr.bf16.mxu0 0
        %4463 = vmatpush1.bf16.msra.mxu0 0
        %4464 = vmatprep.subr.bf16.mxu0 0
        %4465 = vmatpush1.bf16.msra.mxu0 0
        %4466 = vmatprep.subr.bf16.mxu0 0
        %4467 = vmatpush1.bf16.msra.mxu0 0
        %4468 = vmatprep.subr.bf16.mxu0 0
        %4469 = vmatpush1.bf16.msra.mxu0 0
        %4470 = vmatprep.subr.bf16.mxu0 0
        %4471 = vmatpush1.bf16.msra.mxu0 0
        %4472 = vmatprep.subr.bf16.mxu0 0
        %4473 = vmatpush1.bf16.msra.mxu0 0
        %4474 = vmatprep.subr.bf16.mxu0 0
        %4475 = vmatpush1.bf16.msra.mxu0 0
        %4476 = vmatprep.subr.bf16.mxu0 0
        %4477 = vmatpush1.bf16.msra.mxu0 0
        %4478 = vmatprep.subr.bf16.mxu0 0
        %4479 = vmatpush1.bf16.msra.mxu0 0
        %4480 = vmatprep.subr.bf16.mxu0 0
        %4481 = vmatpush1.bf16.msra.mxu0 0
        %4482 = vmatprep.subr.bf16.mxu0 0
        %4483 = vmatpush1.bf16.msra.mxu0 0
        %4484 = vmatprep.subr.bf16.mxu0 0
        %4485 = vmatpush1.bf16.msra.mxu0 0
        %4486 = vmatprep.mubr.bf16.mxu0 0
        %4487 = vmatmul.mubr.bf16.gmra.mrb[0].mxu0 %v4359
        %v4488 = vpop.f32.mrb[0].mxu0
        %v4489 = vadd.f32 %v4344, %v4488
        %v4490 = vpop.f32.mrb[0].mxu0
        %v4491 = vpop.f32.mrb[0].mxu0
        %v4492 = vadd.f32 %v4344, %v4491
        %v4493 = vpop.f32.mrb[0].mxu0
        %4494 = vmatprep.mubr.bf16.mxu0 0
        %4495 = vmatmul.mubr.bf16.gmra.mrb[0].mxu0 %v4362
        %v4496 = vpop.f32.mrb[0].mxu0
        %v4497 = vadd.f32 %v4344, %v4496
        %v4498 = vpop.f32.mrb[0].mxu0
        %v4499 = vpop.f32.mrb[0].mxu0
        %v4500 = vadd.f32 %v4344, %v4499
        %v4501 = vpop.f32.mrb[0].mxu0
        %4502 = vmatprep.mubr.bf16.mxu0 0
        %4503 = vmatmul.mubr.bf16.gmra.mrb[0].mxu0 %v4365
        %v4504 = vpop.f32.mrb[0].mxu0
        %v4505 = vadd.f32 %v4344, %v4504
        %v4506 = vpop.f32.mrb[0].mxu0
        %v4507 = vpop.f32.mrb[0].mxu0
        %v4508 = vadd.f32 %v4344, %v4507
        %v4509 = vpop.f32.mrb[0].mxu0
        %4510 = vmatprep.mubr.bf16.mxu0 0
        %4511 = vmatmul.mubr.bf16.gmra.mrb[0].mxu0 %v4368
        %v4512 = vpop.f32.mrb[0].mxu0
        %v4513 = vadd.f32 %v4344, %v4512
        %v4514 = vpop.f32.mrb[0].mxu0
        %v4515 = vpop.f32.mrb[0].mxu0
        %v4516 = vadd.f32 %v4344, %v4515
        %v4517 = vpop.f32.mrb[0].mxu0
        %4518 = vmatprep.mubr.bf16.mxu0 0
        %4519 = vmatmul.mubr.bf16.gmra.mrb[0].mxu0 %v4371
        %v4520 = vpop.f32.mrb[0].mxu0
        %v4521 = vadd.f32 %v4344, %v4520
        %v4522 = vpop.f32.mrb[0].mxu0
        %v4523 = vpop.f32.mrb[0].mxu0
        %v4524 = vadd.f32 %v4344, %v4523
        %v4525 = vpop.f32.mrb[0].mxu0
        %4526 = vmatprep.mubr.bf16.mxu0 0
        %4527 = vmatmul.mubr.bf16.gmra.mrb[0].mxu0 %v4374
        %v4528 = vpop.f32.mrb[0].mxu0
        %v4529 = vadd.f32 %v4344, %v4528
        %v4530 = vpop.f32.mrb[0].mxu0
        %v4531 = vpop.f32.mrb[0].mxu0
        %v4532 = vadd.f32 %v4344, %v4531
        %v4533 = vpop.f32.mrb[0].mxu0
        %4534 = vmatprep.mubr.bf16.mxu0 0
        %4535 = vmatmul.mubr.bf16.gmra.mrb[0].mxu0 %v4377
        %v4536 = vpop.f32.mrb[0].mxu0
        %v4537 = vadd.f32 %v4344, %v4536
        %v4538 = vpop.f32.mrb[0].mxu0
        %v4539 = vpop.f32.mrb[0].mxu0
        %v4540 = vadd.f32 %v4344, %v4539
        %v4541 = vpop.f32.mrb[0].mxu0
        %4542 = vmatprep.mubr.bf16.mxu0 0
        %4543 = vmatmul.mubr.bf16.gmra.mrb[0].mxu0 %v4380
        %v4544 = vpop.f32.mrb[0].mxu0
        %v4545 = vadd.f32 %v4344, %v4544
        %v4546 = vpop.f32.mrb[0].mxu0
        %v4547 = vpop.f32.mrb[0].mxu0
        %v4548 = vadd.f32 %v4344, %v4547
        %v4549 = vpop.f32.mrb[0].mxu0
        %4550 = vmatprep.mubr.bf16.mxu0 0
        %4551 = vmatmul.mubr.bf16.gmra.mrb[0].mxu0 %v4383
        %v4552 = vpop.f32.mrb[0].mxu0
        %v4553 = vadd.f32 %v4344, %v4552
        %v4554 = vpop.f32.mrb[0].mxu0
        %v4555 = vpop.f32.mrb[0].mxu0
        %v4556 = vadd.f32 %v4344, %v4555
        %v4557 = vpop.f32.mrb[0].mxu0
        %4558 = vmatprep.mubr.bf16.mxu0 0
        %4559 = vmatmul.mubr.bf16.gmra.mrb[0].mxu0 %v4386
        %v4560 = vpop.f32.mrb[0].mxu0
        %v4561 = vadd.f32 %v4344, %v4560
        %v4562 = vpop.f32.mrb[0].mxu0
        %v4563 = vpop.f32.mrb[0].mxu0
        %v4564 = vadd.f32 %v4344, %v4563
        %v4565 = vpop.f32.mrb[0].mxu0
        %4566 = vmatprep.mubr.bf16.mxu0 0
        %4567 = vmatmul.mubr.bf16.gmra.mrb[0].mxu0 %v4389
        %v4568 = vpop.f32.mrb[0].mxu0
        %v4569 = vadd.f32 %v4344, %v4568
        %v4570 = vpop.f32.mrb[0].mxu0
        %v4571 = vpop.f32.mrb[0].mxu0
        %v4572 = vadd.f32 %v4344, %v4571
        %v4573 = vpop.f32.mrb[0].mxu0
        %4574 = vmatprep.mubr.bf16.mxu0 0
        %4575 = vmatmul.mubr.bf16.gmra.mrb[0].mxu0 %v4392
        %v4576 = vpop.f32.mrb[0].mxu0
        %v4577 = vadd.f32 %v4344, %v4576
        %v4578 = vpop.f32.mrb[0].mxu0
        %v4579 = vpop.f32.mrb[0].mxu0
        %v4580 = vadd.f32 %v4344, %v4579
        %v4581 = vpop.f32.mrb[0].mxu0
        %4582 = vmatprep.mubr.bf16.mxu0 0
        %4583 = vmatmul.mubr.bf16.gmra.mrb[0].mxu0 %v4395
        %v4584 = vpop.f32.mrb[0].mxu0
        %v4585 = vadd.f32 %v4344, %v4584
        %v4586 = vpop.f32.mrb[0].mxu0
        %v4587 = vpop.f32.mrb[0].mxu0
        %v4588 = vadd.f32 %v4344, %v4587
        %v4589 = vpop.f32.mrb[0].mxu0
        %4590 = vmatprep.mubr.bf16.mxu0 0
        %4591 = vmatmul.mubr.bf16.gmra.mrb[0].mxu0 %v4398
        %v4592 = vpop.f32.mrb[0].mxu0
        %v4593 = vadd.f32 %v4344, %v4592
        %v4594 = vpop.f32.mrb[0].mxu0
        %v4595 = vpop.f32.mrb[0].mxu0
        %v4596 = vadd.f32 %v4344, %v4595
        %v4597 = vpop.f32.mrb[0].mxu0
        %4598 = vmatprep.mubr.bf16.mxu0 0
        %4599 = vmatmul.mubr.bf16.gmra.mrb[0].mxu0 %v4401
        %v4600 = vpop.f32.mrb[0].mxu0
        %v4601 = vadd.f32 %v4344, %v4600
        %v4602 = vpop.f32.mrb[0].mxu0
        %v4603 = vpop.f32.mrb[0].mxu0
        %v4604 = vadd.f32 %v4344, %v4603
        %v4605 = vpop.f32.mrb[0].mxu0
        %4606 = vmatprep.mubr.bf16.mxu0 0
        %4607 = vmatmul.mubr.bf16.gmra.mrb[0].mxu0 %v4404
        %v4608 = vpop.f32.mrb[0].mxu0
        %v4609 = vadd.f32 %v4344, %v4608
        %v4610 = vpop.f32.mrb[0].mxu0
        %v4611 = vpop.f32.mrb[0].mxu0
        %v4612 = vadd.f32 %v4344, %v4611
        %v4613 = vpop.f32.mrb[0].mxu0
        %4614 = vmatprep.mubr.bf16.mxu0 0
        %4615 = vmatmul.mubr.bf16.gmra.mrb[0].mxu0 %v4407
        %v4616 = vpop.f32.mrb[0].mxu0
        %v4617 = vadd.f32 %v4344, %v4616
        %v4618 = vpop.f32.mrb[0].mxu0
        %v4619 = vpop.f32.mrb[0].mxu0
        %v4620 = vadd.f32 %v4344, %v4619
        %v4621 = vpop.f32.mrb[0].mxu0
        %4622 = vmatprep.mubr.bf16.mxu0 0
        %4623 = vmatmul.mubr.bf16.gmra.mrb[0].mxu0 %v4410
        %v4624 = vpop.f32.mrb[0].mxu0
        %v4625 = vadd.f32 %v4344, %v4624
        %v4626 = vpop.f32.mrb[0].mxu0
        %v4627 = vpop.f32.mrb[0].mxu0
        %v4628 = vadd.f32 %v4344, %v4627
        %v4629 = vpop.f32.mrb[0].mxu0
        %4630 = vmatprep.mubr.bf16.mxu0 0
        %4631 = vmatmul.mubr.bf16.gmra.mrb[0].mxu0 %v4413
        %v4632 = vpop.f32.mrb[0].mxu0
        %v4633 = vadd.f32 %v4344, %v4632
        %v4634 = vpop.f32.mrb[0].mxu0
        %v4635 = vpop.f32.mrb[0].mxu0
        %v4636 = vadd.f32 %v4344, %v4635
        %v4637 = vpop.f32.mrb[0].mxu0
        %4638 = vmatprep.mubr.bf16.mxu0 0
        %4639 = vmatmul.mubr.bf16.gmra.mrb[0].mxu0 %v4416
        %v4640 = vpop.f32.mrb[0].mxu0
        %v4641 = vadd.f32 %v4344, %v4640
        %v4642 = vpop.f32.mrb[0].mxu0
        %v4643 = vpop.f32.mrb[0].mxu0
        %v4644 = vadd.f32 %v4344, %v4643
        %v4645 = vpop.f32.mrb[0].mxu0
        %4646 = vmatprep.mubr.bf16.mxu0 0
        %4647 = vmatmul.mubr.bf16.gmra.mrb[0].mxu0 %v4419
        %v4648 = vpop.f32.mrb[0].mxu0
        %v4649 = vadd.f32 %v4344, %v4648
        %v4650 = vpop.f32.mrb[0].mxu0
        %v4651 = vpop.f32.mrb[0].mxu0
        %v4652 = vadd.f32 %v4344, %v4651
        %v4653 = vpop.f32.mrb[0].mxu0
        %4654 = vmatprep.mubr.bf16.mxu0 0
        %4655 = vmatmul.mubr.bf16.gmra.mrb[0].mxu0 %v4422
        %v4656 = vpop.f32.mrb[0].mxu0
        %v4657 = vadd.f32 %v4344, %v4656
        %v4658 = vpop.f32.mrb[0].mxu0
        %v4659 = vpop.f32.mrb[0].mxu0
        %v4660 = vadd.f32 %v4344, %v4659
        %v4661 = vpop.f32.mrb[0].mxu0
        %4662 = vmatprep.mubr.bf16.mxu0 0
        %4663 = vmatmul.mubr.bf16.gmra.mrb[0].mxu0 %v4425
        %v4664 = vpop.f32.mrb[0].mxu0
        %v4665 = vadd.f32 %v4344, %v4664
        %v4666 = vpop.f32.mrb[0].mxu0
        %v4667 = vpop.f32.mrb[0].mxu0
        %v4668 = vadd.f32 %v4344, %v4667
        %v4669 = vpop.f32.mrb[0].mxu0
        %4670 = vmatprep.mubr.bf16.mxu0 0
        %4671 = vmatmul.mubr.bf16.gmra.mrb[0].mxu0 %v4428
        %v4672 = vpop.f32.mrb[0].mxu0
        %v4673 = vadd.f32 %v4344, %v4672
        %v4674 = vpop.f32.mrb[0].mxu0
        %v4675 = vpop.f32.mrb[0].mxu0
        %v4676 = vadd.f32 %v4344, %v4675
        %v4677 = vpop.f32.mrb[0].mxu0
        %4678 = vmatprep.mubr.bf16.mxu0 0
        %4679 = vmatmul.mubr.bf16.gmra.mrb[0].mxu0 %v4431
        %v4680 = vpop.f32.mrb[0].mxu0
        %v4681 = vadd.f32 %v4344, %v4680
        %v4682 = vpop.f32.mrb[0].mxu0
        %v4683 = vpop.f32.mrb[0].mxu0
        %v4684 = vadd.f32 %v4344, %v4683
        %v4685 = vpop.f32.mrb[0].mxu0
        %4686 = vmatprep.mubr.bf16.mxu0 0
        %4687 = vmatmul.mubr.bf16.gmra.mrb[0].mxu0 %v4434
        %v4688 = vpop.f32.mrb[0].mxu0
        %v4689 = vadd.f32 %v4344, %v4688
        %v4690 = vpop.f32.mrb[0].mxu0
        %v4691 = vpop.f32.mrb[0].mxu0
        %v4692 = vadd.f32 %v4344, %v4691
        %v4693 = vpop.f32.mrb[0].mxu0
        %4694 = vmatprep.mubr.bf16.mxu0 0
        %4695 = vmatmul.mubr.bf16.gmra.mrb[0].mxu0 %v4437
        %v4696 = vpop.f32.mrb[0].mxu0
        %v4697 = vadd.f32 %v4344, %v4696
        %v4698 = vpop.f32.mrb[0].mxu0
        %v4699 = vpop.f32.mrb[0].mxu0
        %v4700 = vadd.f32 %v4344, %v4699
        %v4701 = vpop.f32.mrb[0].mxu0
        %4702 = vmatprep.mubr.bf16.mxu0 0
        %4703 = vmatmul.mubr.bf16.gmra.mrb[0].mxu0 %v4440
        %v4704 = vpop.f32.mrb[0].mxu0
        %v4705 = vadd.f32 %v4344, %v4704
        %v4706 = vpop.f32.mrb[0].mxu0
        %v4707 = vpop.f32.mrb[0].mxu0
        %v4708 = vadd.f32 %v4344, %v4707
        %v4709 = vpop.f32.mrb[0].mxu0
        %4710 = vmatprep.mubr.bf16.mxu0 0
        %4711 = vmatmul.mubr.bf16.gmra.mrb[0].mxu0 %v4443
        %v4712 = vpop.f32.mrb[0].mxu0
        %v4713 = vadd.f32 %v4344, %v4712
        %v4714 = vpop.f32.mrb[0].mxu0
        %v4715 = vpop.f32.mrb[0].mxu0
        %v4716 = vadd.f32 %v4344, %v4715
        %v4717 = vpop.f32.mrb[0].mxu0
        %4718 = vmatprep.mubr.bf16.mxu0 0
        %4719 = vmatmul.mubr.bf16.gmra.mrb[0].mxu0 %v4446
        %v4720 = vpop.f32.mrb[0].mxu0
        %v4721 = vadd.f32 %v4344, %v4720
        %v4722 = vpop.f32.mrb[0].mxu0
        %v4723 = vpop.f32.mrb[0].mxu0
        %v4724 = vadd.f32 %v4344, %v4723
        %v4725 = vpop.f32.mrb[0].mxu0
        %4726 = vmatprep.mubr.bf16.mxu0 0
        %4727 = vmatmul.mubr.bf16.gmra.mrb[0].mxu0 %v4449
        %v4728 = vpop.f32.mrb[0].mxu0
        %v4729 = vadd.f32 %v4344, %v4728
        %v4730 = vpop.f32.mrb[0].mxu0
        %v4731 = vpop.f32.mrb[0].mxu0
        %v4732 = vadd.f32 %v4344, %v4731
        %v4733 = vpop.f32.mrb[0].mxu0
        %4734 = vmatprep.mubr.bf16.mxu0 0
        %4735 = vmatmul.mubr.bf16.gmra.mrb[0].mxu0 %v4452
        %v4736 = vpop.f32.mrb[0].mxu0
        %v4737 = vadd.f32 %v4344, %v4736
        %v4738 = vpop.f32.mrb[0].mxu0
        %v4739 = vpop.f32.mrb[0].mxu0
        %v4740 = vadd.f32 %v4344, %v4739
        %v4741 = vpop.f32.mrb[0].mxu0
        %4742 = vdwg.mxu0
        %v4743 = vld [vmem:[%s6] sm:$0x1]
        %v4745 = vlaneseq
        %v4746 = vshrl.u32 %v4745, 7
        %v4747 = vsub.s32 0, %v4746
        %v4748 = vrot.slane %v4743, %v4747
        %v4750 = vsel %vm1453, %v4748, 0.0
        %v4751 = vsel %vm1454, %v4748, 0.0
        %v4752 = vsel %vm1455, %v4748, 0.0
        %v4753 = vsel %vm1456, %v4748, 0.0
        %v4754 = vsel %vm1457, %v4748, 0.0
        %v4755 = vsel %vm1458, %v4748, 0.0
        %v4756 = vsel %vm1459, %v4748, 0.0
        %v4757 = vsel %vm1460, %v4748, 0.0
        %v4758 = vsel %vm1461, %v4748, 0.0
        %v4759 = vsel %vm1462, %v4748, 0.0
        %v4760 = vsel %vm1463, %v4748, 0.0
        %v4761 = vsel %vm1464, %v4748, 0.0
        %v4762 = vsel %vm1465, %v4748, 0.0
        %v4763 = vsel %vm1466, %v4748, 0.0
        %v4764 = vsel %vm1467, %v4748, 0.0
        %v4765 = vsel %vm1468, %v4748, 0.0
        %v4766 = vsel %vm1469, %v4748, 0.0
        %v4767 = vsel %vm1470, %v4748, 0.0
        %v4768 = vsel %vm1471, %v4748, 0.0
        %v4769 = vsel %vm1472, %v4748, 0.0
        %v4770 = vsel %vm1473, %v4748, 0.0
        %v4771 = vsel %vm1474, %v4748, 0.0
        %v4772 = vsel %vm1475, %v4748, 0.0
        %v4773 = vsel %vm1476, %v4748, 0.0
        %v4774 = vsel %vm1477, %v4748, 0.0
        %v4775 = vsel %vm1478, %v4748, 0.0
        %v4776 = vsel %vm1479, %v4748, 0.0
        %v4777 = vsel %vm1480, %v4748, 0.0
        %v4778 = vsel %vm1481, %v4748, 0.0
        %v4779 = vsel %vm1482, %v4748, 0.0
        %v4780 = vsel %vm1483, %v4748, 0.0
        %v4781 = vsel %vm1484, %v4748, 0.0
        %v4782 = vsel %vm1485, %v4748, 0.0
        %v4783 = vsel %vm1486, %v4748, 0.0
        %v4784 = vsel %vm1487, %v4748, 0.0
        %v4785 = vsel %vm1488, %v4748, 0.0
        %v4786 = vsel %vm1489, %v4748, 0.0
        %v4787 = vsel %vm1490, %v4748, 0.0
        %v4788 = vsel %vm1491, %v4748, 0.0
        %v4789 = vsel %vm1492, %v4748, 0.0
        %v4790 = vsel %vm1493, %v4748, 0.0
        %v4791 = vsel %vm1494, %v4748, 0.0
        %v4792 = vsel %vm1495, %v4748, 0.0
        %v4793 = vsel %vm1496, %v4748, 0.0
        %v4794 = vsel %vm1497, %v4748, 0.0
        %v4795 = vsel %vm1498, %v4748, 0.0
        %v4796 = vsel %vm1499, %v4748, 0.0
        %v4797 = vsel %vm1500, %v4748, 0.0
        %v4798 = vsel %vm1501, %v4748, 0.0
        %v4799 = vsel %vm1502, %v4748, 0.0
        %v4800 = vsel %vm1503, %v4748, 0.0
        %v4801 = vsel %vm1504, %v4748, 0.0
        %v4802 = vsel %vm1505, %v4748, 0.0
        %v4803 = vsel %vm1506, %v4748, 0.0
        %v4804 = vsel %vm1507, %v4748, 0.0
        %v4805 = vsel %vm1508, %v4748, 0.0
        %v4806 = vsel %vm1509, %v4748, 0.0
        %v4807 = vsel %vm1510, %v4748, 0.0
        %v4808 = vsel %vm1511, %v4748, 0.0
        %v4809 = vsel %vm1512, %v4748, 0.0
        %v4810 = vsel %vm1513, %v4748, 0.0
        %v4811 = vsel %vm1514, %v4748, 0.0
        %v4812 = vsel %vm1515, %v4748, 0.0
        %v4813 = vsel %vm1516, %v4748, 0.0
        %v4814 = vsel %vm1857, %v4750, 0.0
        %4815 = vadd.xlane.f32.xlu0 %v4814
        %v4816 = vpop.xlane.xlu0 %4815
        %v4817 = vsel %vm1857, %v4751, 0.0
        %4818 = vadd.xlane.f32.xlu0 %v4817
        %v4819 = vpop.xlane.xlu0 %4818
        %v4820 = vsel %vm1857, %v4752, 0.0
        %4821 = vadd.xlane.f32.xlu0 %v4820
        %v4822 = vpop.xlane.xlu0 %4821
        %v4823 = vsel %vm1857, %v4753, 0.0
        %4824 = vadd.xlane.f32.xlu0 %v4823
        %v4825 = vpop.xlane.xlu0 %4824
        %v4826 = vsel %vm1857, %v4754, 0.0
        %4827 = vadd.xlane.f32.xlu0 %v4826
        %v4828 = vpop.xlane.xlu0 %4827
        %v4829 = vsel %vm1857, %v4755, 0.0
        %4830 = vadd.xlane.f32.xlu0 %v4829
        %v4831 = vpop.xlane.xlu0 %4830
        %v4832 = vsel %vm1857, %v4756, 0.0
        %4833 = vadd.xlane.f32.xlu0 %v4832
        %v4834 = vpop.xlane.xlu0 %4833
        %v4835 = vsel %vm1857, %v4757, 0.0
        %4836 = vadd.xlane.f32.xlu0 %v4835
        %v4837 = vpop.xlane.xlu0 %4836
        %v4838 = vsel %vm1857, %v4758, 0.0
        %4839 = vadd.xlane.f32.xlu0 %v4838
        %v4840 = vpop.xlane.xlu0 %4839
        %v4841 = vsel %vm1857, %v4759, 0.0
        %4842 = vadd.xlane.f32.xlu0 %v4841
        %v4843 = vpop.xlane.xlu0 %4842
        %v4844 = vsel %vm1857, %v4760, 0.0
        %4845 = vadd.xlane.f32.xlu0 %v4844
        %v4846 = vpop.xlane.xlu0 %4845
        %v4847 = vsel %vm1857, %v4761, 0.0
        %4848 = vadd.xlane.f32.xlu0 %v4847
        %v4849 = vpop.xlane.xlu0 %4848
        %v4850 = vsel %vm1857, %v4762, 0.0
        %4851 = vadd.xlane.f32.xlu0 %v4850
        %v4852 = vpop.xlane.xlu0 %4851
        %v4853 = vsel %vm1857, %v4763, 0.0
        %4854 = vadd.xlane.f32.xlu0 %v4853
        %v4855 = vpop.xlane.xlu0 %4854
        %v4856 = vsel %vm1857, %v4764, 0.0
        %4857 = vadd.xlane.f32.xlu0 %v4856
        %v4858 = vpop.xlane.xlu0 %4857
        %v4859 = vsel %vm1857, %v4765, 0.0
        %4860 = vadd.xlane.f32.xlu0 %v4859
        %v4861 = vpop.xlane.xlu0 %4860
        %v4862 = vsel %vm1857, %v4766, 0.0
        %4863 = vadd.xlane.f32.xlu0 %v4862
        %v4864 = vpop.xlane.xlu0 %4863
        %v4865 = vsel %vm1857, %v4767, 0.0
        %4866 = vadd.xlane.f32.xlu0 %v4865
        %v4867 = vpop.xlane.xlu0 %4866
        %v4868 = vsel %vm1857, %v4768, 0.0
        %4869 = vadd.xlane.f32.xlu0 %v4868
        %v4870 = vpop.xlane.xlu0 %4869
        %v4871 = vsel %vm1857, %v4769, 0.0
        %4872 = vadd.xlane.f32.xlu0 %v4871
        %v4873 = vpop.xlane.xlu0 %4872
        %v4874 = vsel %vm1857, %v4770, 0.0
        %4875 = vadd.xlane.f32.xlu0 %v4874
        %v4876 = vpop.xlane.xlu0 %4875
        %v4877 = vsel %vm1857, %v4771, 0.0
        %4878 = vadd.xlane.f32.xlu0 %v4877
        %v4879 = vpop.xlane.xlu0 %4878
        %v4880 = vsel %vm1857, %v4772, 0.0
        %4881 = vadd.xlane.f32.xlu0 %v4880
        %v4882 = vpop.xlane.xlu0 %4881
        %v4883 = vsel %vm1857, %v4773, 0.0
        %4884 = vadd.xlane.f32.xlu0 %v4883
        %v4885 = vpop.xlane.xlu0 %4884
        %v4886 = vsel %vm1857, %v4774, 0.0
        %4887 = vadd.xlane.f32.xlu0 %v4886
        %v4888 = vpop.xlane.xlu0 %4887
        %v4889 = vsel %vm1857, %v4775, 0.0
        %4890 = vadd.xlane.f32.xlu0 %v4889
        %v4891 = vpop.xlane.xlu0 %4890
        %v4892 = vsel %vm1857, %v4776, 0.0
        %4893 = vadd.xlane.f32.xlu0 %v4892
        %v4894 = vpop.xlane.xlu0 %4893
        %v4895 = vsel %vm1857, %v4777, 0.0
        %4896 = vadd.xlane.f32.xlu0 %v4895
        %v4897 = vpop.xlane.xlu0 %4896
        %v4898 = vsel %vm1857, %v4778, 0.0
        %4899 = vadd.xlane.f32.xlu0 %v4898
        %v4900 = vpop.xlane.xlu0 %4899
        %v4901 = vsel %vm1857, %v4779, 0.0
        %4902 = vadd.xlane.f32.xlu0 %v4901
        %v4903 = vpop.xlane.xlu0 %4902
        %v4904 = vsel %vm1857, %v4780, 0.0
        %4905 = vadd.xlane.f32.xlu0 %v4904
        %v4906 = vpop.xlane.xlu0 %4905
        %v4907 = vsel %vm1857, %v4781, 0.0
        %4908 = vadd.xlane.f32.xlu0 %v4907
        %v4909 = vpop.xlane.xlu0 %4908
        %v4910 = vsel %vm1857, %v4782, 0.0
        %4911 = vadd.xlane.f32.xlu0 %v4910
        %v4912 = vpop.xlane.xlu0 %4911
        %v4913 = vsel %vm1857, %v4783, 0.0
        %4914 = vadd.xlane.f32.xlu0 %v4913
        %v4915 = vpop.xlane.xlu0 %4914
        %v4916 = vsel %vm1857, %v4784, 0.0
        %4917 = vadd.xlane.f32.xlu0 %v4916
        %v4918 = vpop.xlane.xlu0 %4917
        %v4919 = vsel %vm1857, %v4785, 0.0
        %4920 = vadd.xlane.f32.xlu0 %v4919
        %v4921 = vpop.xlane.xlu0 %4920
        %v4922 = vsel %vm1857, %v4786, 0.0
        %4923 = vadd.xlane.f32.xlu0 %v4922
        %v4924 = vpop.xlane.xlu0 %4923
        %v4925 = vsel %vm1857, %v4787, 0.0
        %4926 = vadd.xlane.f32.xlu0 %v4925
        %v4927 = vpop.xlane.xlu0 %4926
        %v4928 = vsel %vm1857, %v4788, 0.0
        %4929 = vadd.xlane.f32.xlu0 %v4928
        %v4930 = vpop.xlane.xlu0 %4929
        %v4931 = vsel %vm1857, %v4789, 0.0
        %4932 = vadd.xlane.f32.xlu0 %v4931
        %v4933 = vpop.xlane.xlu0 %4932
        %v4934 = vsel %vm1857, %v4790, 0.0
        %4935 = vadd.xlane.f32.xlu0 %v4934
        %v4936 = vpop.xlane.xlu0 %4935
        %v4937 = vsel %vm1857, %v4791, 0.0
        %4938 = vadd.xlane.f32.xlu0 %v4937
        %v4939 = vpop.xlane.xlu0 %4938
        %v4940 = vsel %vm1857, %v4792, 0.0
        %4941 = vadd.xlane.f32.xlu0 %v4940
        %v4942 = vpop.xlane.xlu0 %4941
        %v4943 = vsel %vm1857, %v4793, 0.0
        %4944 = vadd.xlane.f32.xlu0 %v4943
        %v4945 = vpop.xlane.xlu0 %4944
        %v4946 = vsel %vm1857, %v4794, 0.0
        %4947 = vadd.xlane.f32.xlu0 %v4946
        %v4948 = vpop.xlane.xlu0 %4947
        %v4949 = vsel %vm1857, %v4795, 0.0
        %4950 = vadd.xlane.f32.xlu0 %v4949
        %v4951 = vpop.xlane.xlu0 %4950
        %v4952 = vsel %vm1857, %v4796, 0.0
        %4953 = vadd.xlane.f32.xlu0 %v4952
        %v4954 = vpop.xlane.xlu0 %4953
        %v4955 = vsel %vm1857, %v4797, 0.0
        %4956 = vadd.xlane.f32.xlu0 %v4955
        %v4957 = vpop.xlane.xlu0 %4956
        %v4958 = vsel %vm1857, %v4798, 0.0
        %4959 = vadd.xlane.f32.xlu0 %v4958
        %v4960 = vpop.xlane.xlu0 %4959
        %v4961 = vsel %vm1857, %v4799, 0.0
        %4962 = vadd.xlane.f32.xlu0 %v4961
        %v4963 = vpop.xlane.xlu0 %4962
        %v4964 = vsel %vm1857, %v4800, 0.0
        %4965 = vadd.xlane.f32.xlu0 %v4964
        %v4966 = vpop.xlane.xlu0 %4965
        %v4967 = vsel %vm1857, %v4801, 0.0
        %4968 = vadd.xlane.f32.xlu0 %v4967
        %v4969 = vpop.xlane.xlu0 %4968
        %v4970 = vsel %vm1857, %v4802, 0.0
        %4971 = vadd.xlane.f32.xlu0 %v4970
        %v4972 = vpop.xlane.xlu0 %4971
        %v4973 = vsel %vm1857, %v4803, 0.0
        %4974 = vadd.xlane.f32.xlu0 %v4973
        %v4975 = vpop.xlane.xlu0 %4974
        %v4976 = vsel %vm1857, %v4804, 0.0
        %4977 = vadd.xlane.f32.xlu0 %v4976
        %v4978 = vpop.xlane.xlu0 %4977
        %v4979 = vsel %vm1857, %v4805, 0.0
        %4980 = vadd.xlane.f32.xlu0 %v4979
        %v4981 = vpop.xlane.xlu0 %4980
        %v4982 = vsel %vm1857, %v4806, 0.0
        %4983 = vadd.xlane.f32.xlu0 %v4982
        %v4984 = vpop.xlane.xlu0 %4983
        %v4985 = vsel %vm1857, %v4807, 0.0
        %4986 = vadd.xlane.f32.xlu0 %v4985
        %v4987 = vpop.xlane.xlu0 %4986
        %v4988 = vsel %vm1857, %v4808, 0.0
        %4989 = vadd.xlane.f32.xlu0 %v4988
        %v4990 = vpop.xlane.xlu0 %4989
        %v4991 = vsel %vm1857, %v4809, 0.0
        %4992 = vadd.xlane.f32.xlu0 %v4991
        %v4993 = vpop.xlane.xlu0 %4992
        %v4994 = vsel %vm1857, %v4810, 0.0
        %4995 = vadd.xlane.f32.xlu0 %v4994
        %v4996 = vpop.xlane.xlu0 %4995
        %v4997 = vsel %vm1857, %v4811, 0.0
        %4998 = vadd.xlane.f32.xlu0 %v4997
        %v4999 = vpop.xlane.xlu0 %4998
        %v5000 = vsel %vm1857, %v4812, 0.0
        %5001 = vadd.xlane.f32.xlu0 %v5000
        %v5002 = vpop.xlane.xlu0 %5001
        %v5003 = vsel %vm1857, %v4813, 0.0
        %5004 = vadd.xlane.f32.xlu0 %v5003
        %v5005 = vpop.xlane.xlu0 %5004
        %v5006 = vunpack.c.l.bf16 %v874
        %v5007 = vunpack.c.l.bf16 %v875
        %v5008 = vunpack.c.l.bf16 %v876
        %v5009 = vunpack.c.l.bf16 %v877
        %v5010 = vunpack.c.l.bf16 %v878
        %v5011 = vunpack.c.l.bf16 %v879
        %v5012 = vunpack.c.l.bf16 %v880
        %v5013 = vunpack.c.l.bf16 %v881
        %v5014 = vunpack.c.l.bf16 %v882
        %v5015 = vunpack.c.l.bf16 %v883
        %v5016 = vunpack.c.l.bf16 %v884
        %v5017 = vunpack.c.l.bf16 %v885
        %v5018 = vunpack.c.l.bf16 %v886
        %v5019 = vunpack.c.l.bf16 %v887
        %v5020 = vunpack.c.l.bf16 %v888
        %v5021 = vunpack.c.l.bf16 %v889
        %v5022 = vunpack.c.l.bf16 %v890
        %v5023 = vunpack.c.l.bf16 %v891
        %v5024 = vunpack.c.l.bf16 %v892
        %v5025 = vunpack.c.l.bf16 %v893
        %v5026 = vunpack.c.l.bf16 %v894
        %v5027 = vunpack.c.l.bf16 %v895
        %v5028 = vunpack.c.l.bf16 %v896
        %v5029 = vunpack.c.l.bf16 %v897
        %v5030 = vunpack.c.l.bf16 %v898
        %v5031 = vunpack.c.l.bf16 %v899
        %v5032 = vunpack.c.l.bf16 %v900
        %v5033 = vunpack.c.l.bf16 %v901
        %v5034 = vunpack.c.l.bf16 %v902
        %v5035 = vunpack.c.l.bf16 %v903
        %v5036 = vunpack.c.l.bf16 %v904
        %v5037 = vunpack.c.l.bf16 %v905
        %v5038 = vunpack.c.l.bf16 %v906
        %v5039 = vunpack.c.l.bf16 %v907
        %v5040 = vunpack.c.l.bf16 %v908
        %v5041 = vunpack.c.l.bf16 %v909
        %v5042 = vunpack.c.l.bf16 %v910
        %v5043 = vunpack.c.l.bf16 %v911
        %v5044 = vunpack.c.l.bf16 %v912
        %v5045 = vunpack.c.l.bf16 %v913
        %v5046 = vunpack.c.l.bf16 %v914
        %v5047 = vunpack.c.l.bf16 %v915
        %v5048 = vunpack.c.l.bf16 %v916
        %v5049 = vunpack.c.l.bf16 %v917
        %v5050 = vunpack.c.l.bf16 %v918
        %v5051 = vunpack.c.l.bf16 %v919
        %v5052 = vunpack.c.l.bf16 %v920
        %v5053 = vunpack.c.l.bf16 %v921
        %v5054 = vunpack.c.l.bf16 %v922
        %v5055 = vunpack.c.l.bf16 %v923
        %v5056 = vunpack.c.l.bf16 %v924
        %v5057 = vunpack.c.l.bf16 %v925
        %v5058 = vunpack.c.l.bf16 %v926
        %v5059 = vunpack.c.l.bf16 %v927
        %v5060 = vunpack.c.l.bf16 %v928
        %v5061 = vunpack.c.l.bf16 %v929
        %v5062 = vunpack.c.l.bf16 %v930
        %v5063 = vunpack.c.l.bf16 %v931
        %v5064 = vunpack.c.l.bf16 %v932
        %v5065 = vunpack.c.l.bf16 %v933
        %v5066 = vunpack.c.l.bf16 %v934
        %v5067 = vunpack.c.l.bf16 %v935
        %v5068 = vunpack.c.l.bf16 %v936
        %v5069 = vunpack.c.l.bf16 %v937
        %v5070 = vld [vmem:[%s8] sm:$0x1]
        %v5072 = vlaneseq
        %v5073 = vshrl.u32 %v5072, 7
        %v5074 = vsub.s32 0, %v5073
        %v5075 = vrot.slane %v5070, %v5074
        %v5077 = vmul.f32 %v5006, %v5075
        %v5078 = vmul.f32 %v5007, %v5075
        %v5079 = vmul.f32 %v5008, %v5075
        %v5080 = vmul.f32 %v5009, %v5075
        %v5081 = vmul.f32 %v5010, %v5075
        %v5082 = vmul.f32 %v5011, %v5075
        %v5083 = vmul.f32 %v5012, %v5075
        %v5084 = vmul.f32 %v5013, %v5075
        %v5085 = vmul.f32 %v5014, %v5075
        %v5086 = vmul.f32 %v5015, %v5075
        %v5087 = vmul.f32 %v5016, %v5075
        %v5088 = vmul.f32 %v5017, %v5075
        %v5089 = vmul.f32 %v5018, %v5075
        %v5090 = vmul.f32 %v5019, %v5075
        %v5091 = vmul.f32 %v5020, %v5075
        %v5092 = vmul.f32 %v5021, %v5075
        %v5093 = vmul.f32 %v5022, %v5075
        %v5094 = vmul.f32 %v5023, %v5075
        %v5095 = vmul.f32 %v5024, %v5075
        %v5096 = vmul.f32 %v5025, %v5075
        %v5097 = vmul.f32 %v5026, %v5075
        %v5098 = vmul.f32 %v5027, %v5075
        %v5099 = vmul.f32 %v5028, %v5075
        %v5100 = vmul.f32 %v5029, %v5075
        %v5101 = vmul.f32 %v5030, %v5075
        %v5102 = vmul.f32 %v5031, %v5075
        %v5103 = vmul.f32 %v5032, %v5075
        %v5104 = vmul.f32 %v5033, %v5075
        %v5105 = vmul.f32 %v5034, %v5075
        %v5106 = vmul.f32 %v5035, %v5075
        %v5107 = vmul.f32 %v5036, %v5075
        %v5108 = vmul.f32 %v5037, %v5075
        %v5109 = vmul.f32 %v5038, %v5075
        %v5110 = vmul.f32 %v5039, %v5075
        %v5111 = vmul.f32 %v5040, %v5075
        %v5112 = vmul.f32 %v5041, %v5075
        %v5113 = vmul.f32 %v5042, %v5075
        %v5114 = vmul.f32 %v5043, %v5075
        %v5115 = vmul.f32 %v5044, %v5075
        %v5116 = vmul.f32 %v5045, %v5075
        %v5117 = vmul.f32 %v5046, %v5075
        %v5118 = vmul.f32 %v5047, %v5075
        %v5119 = vmul.f32 %v5048, %v5075
        %v5120 = vmul.f32 %v5049, %v5075
        %v5121 = vmul.f32 %v5050, %v5075
        %v5122 = vmul.f32 %v5051, %v5075
        %v5123 = vmul.f32 %v5052, %v5075
        %v5124 = vmul.f32 %v5053, %v5075
        %v5125 = vmul.f32 %v5054, %v5075
        %v5126 = vmul.f32 %v5055, %v5075
        %v5127 = vmul.f32 %v5056, %v5075
        %v5128 = vmul.f32 %v5057, %v5075
        %v5129 = vmul.f32 %v5058, %v5075
        %v5130 = vmul.f32 %v5059, %v5075
        %v5131 = vmul.f32 %v5060, %v5075
        %v5132 = vmul.f32 %v5061, %v5075
        %v5133 = vmul.f32 %v5062, %v5075
        %v5134 = vmul.f32 %v5063, %v5075
        %v5135 = vmul.f32 %v5064, %v5075
        %v5136 = vmul.f32 %v5065, %v5075
        %v5137 = vmul.f32 %v5066, %v5075
        %v5138 = vmul.f32 %v5067, %v5075
        %v5139 = vmul.f32 %v5068, %v5075
        %v5140 = vmul.f32 %v5069, %v5075
        %v5141 = vsel %vm1857, %v5077, 0.0
        %5142 = vadd.xlane.f32.xlu0 %v5141
        %v5143 = vpop.xlane.xlu0 %5142
        %v5144 = vsel %vm1857, %v5078, 0.0
        %5145 = vadd.xlane.f32.xlu0 %v5144
        %v5146 = vpop.xlane.xlu0 %5145
        %v5147 = vsel %vm1857, %v5079, 0.0
        %5148 = vadd.xlane.f32.xlu0 %v5147
        %v5149 = vpop.xlane.xlu0 %5148
        %v5150 = vsel %vm1857, %v5080, 0.0
        %5151 = vadd.xlane.f32.xlu0 %v5150
        %v5152 = vpop.xlane.xlu0 %5151
        %v5153 = vsel %vm1857, %v5081, 0.0
        %5154 = vadd.xlane.f32.xlu0 %v5153
        %v5155 = vpop.xlane.xlu0 %5154
        %v5156 = vsel %vm1857, %v5082, 0.0
        %5157 = vadd.xlane.f32.xlu0 %v5156
        %v5158 = vpop.xlane.xlu0 %5157
        %v5159 = vsel %vm1857, %v5083, 0.0
        %5160 = vadd.xlane.f32.xlu0 %v5159
        %v5161 = vpop.xlane.xlu0 %5160
        %v5162 = vsel %vm1857, %v5084, 0.0
        %5163 = vadd.xlane.f32.xlu0 %v5162
        %v5164 = vpop.xlane.xlu0 %5163
        %v5165 = vsel %vm1857, %v5085, 0.0
        %5166 = vadd.xlane.f32.xlu0 %v5165
        %v5167 = vpop.xlane.xlu0 %5166
        %v5168 = vsel %vm1857, %v5086, 0.0
        %5169 = vadd.xlane.f32.xlu0 %v5168
        %v5170 = vpop.xlane.xlu0 %5169
        %v5171 = vsel %vm1857, %v5087, 0.0
        %5172 = vadd.xlane.f32.xlu0 %v5171
        %v5173 = vpop.xlane.xlu0 %5172
        %v5174 = vsel %vm1857, %v5088, 0.0
        %5175 = vadd.xlane.f32.xlu0 %v5174
        %v5176 = vpop.xlane.xlu0 %5175
        %v5177 = vsel %vm1857, %v5089, 0.0
        %5178 = vadd.xlane.f32.xlu0 %v5177
        %v5179 = vpop.xlane.xlu0 %5178
        %v5180 = vsel %vm1857, %v5090, 0.0
        %5181 = vadd.xlane.f32.xlu0 %v5180
        %v5182 = vpop.xlane.xlu0 %5181
        %v5183 = vsel %vm1857, %v5091, 0.0
        %5184 = vadd.xlane.f32.xlu0 %v5183
        %v5185 = vpop.xlane.xlu0 %5184
        %v5186 = vsel %vm1857, %v5092, 0.0
        %5187 = vadd.xlane.f32.xlu0 %v5186
        %v5188 = vpop.xlane.xlu0 %5187
        %v5189 = vsel %vm1857, %v5093, 0.0
        %5190 = vadd.xlane.f32.xlu0 %v5189
        %v5191 = vpop.xlane.xlu0 %5190
        %v5192 = vsel %vm1857, %v5094, 0.0
        %5193 = vadd.xlane.f32.xlu0 %v5192
        %v5194 = vpop.xlane.xlu0 %5193
        %v5195 = vsel %vm1857, %v5095, 0.0
        %5196 = vadd.xlane.f32.xlu0 %v5195
        %v5197 = vpop.xlane.xlu0 %5196
        %v5198 = vsel %vm1857, %v5096, 0.0
        %5199 = vadd.xlane.f32.xlu0 %v5198
        %v5200 = vpop.xlane.xlu0 %5199
        %v5201 = vsel %vm1857, %v5097, 0.0
        %5202 = vadd.xlane.f32.xlu0 %v5201
        %v5203 = vpop.xlane.xlu0 %5202
        %v5204 = vsel %vm1857, %v5098, 0.0
        %5205 = vadd.xlane.f32.xlu0 %v5204
        %v5206 = vpop.xlane.xlu0 %5205
        %v5207 = vsel %vm1857, %v5099, 0.0
        %5208 = vadd.xlane.f32.xlu0 %v5207
        %v5209 = vpop.xlane.xlu0 %5208
        %v5210 = vsel %vm1857, %v5100, 0.0
        %5211 = vadd.xlane.f32.xlu0 %v5210
        %v5212 = vpop.xlane.xlu0 %5211
        %v5213 = vsel %vm1857, %v5101, 0.0
        %5214 = vadd.xlane.f32.xlu0 %v5213
        %v5215 = vpop.xlane.xlu0 %5214
        %v5216 = vsel %vm1857, %v5102, 0.0
        %5217 = vadd.xlane.f32.xlu0 %v5216
        %v5218 = vpop.xlane.xlu0 %5217
        %v5219 = vsel %vm1857, %v5103, 0.0
        %5220 = vadd.xlane.f32.xlu0 %v5219
        %v5221 = vpop.xlane.xlu0 %5220
        %v5222 = vsel %vm1857, %v5104, 0.0
        %5223 = vadd.xlane.f32.xlu0 %v5222
        %v5224 = vpop.xlane.xlu0 %5223
        %v5225 = vsel %vm1857, %v5105, 0.0
        %5226 = vadd.xlane.f32.xlu0 %v5225
        %v5227 = vpop.xlane.xlu0 %5226
        %v5228 = vsel %vm1857, %v5106, 0.0
        %5229 = vadd.xlane.f32.xlu0 %v5228
        %v5230 = vpop.xlane.xlu0 %5229
        %v5231 = vsel %vm1857, %v5107, 0.0
        %5232 = vadd.xlane.f32.xlu0 %v5231
        %v5233 = vpop.xlane.xlu0 %5232
        %v5234 = vsel %vm1857, %v5108, 0.0
        %5235 = vadd.xlane.f32.xlu0 %v5234
        %v5236 = vpop.xlane.xlu0 %5235
        %v5237 = vsel %vm1857, %v5109, 0.0
        %5238 = vadd.xlane.f32.xlu0 %v5237
        %v5239 = vpop.xlane.xlu0 %5238
        %v5240 = vsel %vm1857, %v5110, 0.0
        %5241 = vadd.xlane.f32.xlu0 %v5240
        %v5242 = vpop.xlane.xlu0 %5241
        %v5243 = vsel %vm1857, %v5111, 0.0
        %5244 = vadd.xlane.f32.xlu0 %v5243
        %v5245 = vpop.xlane.xlu0 %5244
        %v5246 = vsel %vm1857, %v5112, 0.0
        %5247 = vadd.xlane.f32.xlu0 %v5246
        %v5248 = vpop.xlane.xlu0 %5247
        %v5249 = vsel %vm1857, %v5113, 0.0
        %5250 = vadd.xlane.f32.xlu0 %v5249
        %v5251 = vpop.xlane.xlu0 %5250
        %v5252 = vsel %vm1857, %v5114, 0.0
        %5253 = vadd.xlane.f32.xlu0 %v5252
        %v5254 = vpop.xlane.xlu0 %5253
        %v5255 = vsel %vm1857, %v5115, 0.0
        %5256 = vadd.xlane.f32.xlu0 %v5255
        %v5257 = vpop.xlane.xlu0 %5256
        %v5258 = vsel %vm1857, %v5116, 0.0
        %5259 = vadd.xlane.f32.xlu0 %v5258
        %v5260 = vpop.xlane.xlu0 %5259
        %v5261 = vsel %vm1857, %v5117, 0.0
        %5262 = vadd.xlane.f32.xlu0 %v5261
        %v5263 = vpop.xlane.xlu0 %5262
        %v5264 = vsel %vm1857, %v5118, 0.0
        %5265 = vadd.xlane.f32.xlu0 %v5264
        %v5266 = vpop.xlane.xlu0 %5265
        %v5267 = vsel %vm1857, %v5119, 0.0
        %5268 = vadd.xlane.f32.xlu0 %v5267
        %v5269 = vpop.xlane.xlu0 %5268
        %v5270 = vsel %vm1857, %v5120, 0.0
        %5271 = vadd.xlane.f32.xlu0 %v5270
        %v5272 = vpop.xlane.xlu0 %5271
        %v5273 = vsel %vm1857, %v5121, 0.0
        %5274 = vadd.xlane.f32.xlu0 %v5273
        %v5275 = vpop.xlane.xlu0 %5274
        %v5276 = vsel %vm1857, %v5122, 0.0
        %5277 = vadd.xlane.f32.xlu0 %v5276
        %v5278 = vpop.xlane.xlu0 %5277
        %v5279 = vsel %vm1857, %v5123, 0.0
        %5280 = vadd.xlane.f32.xlu0 %v5279
        %v5281 = vpop.xlane.xlu0 %5280
        %v5282 = vsel %vm1857, %v5124, 0.0
        %5283 = vadd.xlane.f32.xlu0 %v5282
        %v5284 = vpop.xlane.xlu0 %5283
        %v5285 = vsel %vm1857, %v5125, 0.0
        %5286 = vadd.xlane.f32.xlu0 %v5285
        %v5287 = vpop.xlane.xlu0 %5286
        %v5288 = vsel %vm1857, %v5126, 0.0
        %5289 = vadd.xlane.f32.xlu0 %v5288
        %v5290 = vpop.xlane.xlu0 %5289
        %v5291 = vsel %vm1857, %v5127, 0.0
        %5292 = vadd.xlane.f32.xlu0 %v5291
        %v5293 = vpop.xlane.xlu0 %5292
        %v5294 = vsel %vm1857, %v5128, 0.0
        %5295 = vadd.xlane.f32.xlu0 %v5294
        %v5296 = vpop.xlane.xlu0 %5295
        %v5297 = vsel %vm1857, %v5129, 0.0
        %5298 = vadd.xlane.f32.xlu0 %v5297
        %v5299 = vpop.xlane.xlu0 %5298
        %v5300 = vsel %vm1857, %v5130, 0.0
        %5301 = vadd.xlane.f32.xlu0 %v5300
        %v5302 = vpop.xlane.xlu0 %5301
        %v5303 = vsel %vm1857, %v5131, 0.0
        %5304 = vadd.xlane.f32.xlu0 %v5303
        %v5305 = vpop.xlane.xlu0 %5304
        %v5306 = vsel %vm1857, %v5132, 0.0
        %5307 = vadd.xlane.f32.xlu0 %v5306
        %v5308 = vpop.xlane.xlu0 %5307
        %v5309 = vsel %vm1857, %v5133, 0.0
        %5310 = vadd.xlane.f32.xlu0 %v5309
        %v5311 = vpop.xlane.xlu0 %5310
        %v5312 = vsel %vm1857, %v5134, 0.0
        %5313 = vadd.xlane.f32.xlu0 %v5312
        %v5314 = vpop.xlane.xlu0 %5313
        %v5315 = vsel %vm1857, %v5135, 0.0
        %5316 = vadd.xlane.f32.xlu0 %v5315
        %v5317 = vpop.xlane.xlu0 %5316
        %v5318 = vsel %vm1857, %v5136, 0.0
        %5319 = vadd.xlane.f32.xlu0 %v5318
        %v5320 = vpop.xlane.xlu0 %5319
        %v5321 = vsel %vm1857, %v5137, 0.0
        %5322 = vadd.xlane.f32.xlu0 %v5321
        %v5323 = vpop.xlane.xlu0 %5322
        %v5324 = vsel %vm1857, %v5138, 0.0
        %5325 = vadd.xlane.f32.xlu0 %v5324
        %v5326 = vpop.xlane.xlu0 %5325
        %v5327 = vsel %vm1857, %v5139, 0.0
        %5328 = vadd.xlane.f32.xlu0 %v5327
        %v5329 = vpop.xlane.xlu0 %5328
        %v5330 = vsel %vm1857, %v5140, 0.0
        %5331 = vadd.xlane.f32.xlu0 %v5330
        %v5332 = vpop.xlane.xlu0 %5331
        %v5333 = vadd.f32 %v4816, %v5143
        %v5334 = vadd.f32 %v4819, %v5146
        %v5335 = vadd.f32 %v4822, %v5149
        %v5336 = vadd.f32 %v4825, %v5152
        %v5337 = vadd.f32 %v4828, %v5155
        %v5338 = vadd.f32 %v4831, %v5158
        %v5339 = vadd.f32 %v4834, %v5161
        %v5340 = vadd.f32 %v4837, %v5164
        %v5341 = vadd.f32 %v4840, %v5167
        %v5342 = vadd.f32 %v4843, %v5170
        %v5343 = vadd.f32 %v4846, %v5173
        %v5344 = vadd.f32 %v4849, %v5176
        %v5345 = vadd.f32 %v4852, %v5179
        %v5346 = vadd.f32 %v4855, %v5182
        %v5347 = vadd.f32 %v4858, %v5185
        %v5348 = vadd.f32 %v4861, %v5188
        %v5349 = vadd.f32 %v4864, %v5191
        %v5350 = vadd.f32 %v4867, %v5194
        %v5351 = vadd.f32 %v4870, %v5197
        %v5352 = vadd.f32 %v4873, %v5200
        %v5353 = vadd.f32 %v4876, %v5203
        %v5354 = vadd.f32 %v4879, %v5206
        %v5355 = vadd.f32 %v4882, %v5209
        %v5356 = vadd.f32 %v4885, %v5212
        %v5357 = vadd.f32 %v4888, %v5215
        %v5358 = vadd.f32 %v4891, %v5218
        %v5359 = vadd.f32 %v4894, %v5221
        %v5360 = vadd.f32 %v4897, %v5224
        %v5361 = vadd.f32 %v4900, %v5227
        %v5362 = vadd.f32 %v4903, %v5230
        %v5363 = vadd.f32 %v4906, %v5233
        %v5364 = vadd.f32 %v4909, %v5236
        %v5365 = vadd.f32 %v4912, %v5239
        %v5366 = vadd.f32 %v4915, %v5242
        %v5367 = vadd.f32 %v4918, %v5245
        %v5368 = vadd.f32 %v4921, %v5248
        %v5369 = vadd.f32 %v4924, %v5251
        %v5370 = vadd.f32 %v4927, %v5254
        %v5371 = vadd.f32 %v4930, %v5257
        %v5372 = vadd.f32 %v4933, %v5260
        %v5373 = vadd.f32 %v4936, %v5263
        %v5374 = vadd.f32 %v4939, %v5266
        %v5375 = vadd.f32 %v4942, %v5269
        %v5376 = vadd.f32 %v4945, %v5272
        %v5377 = vadd.f32 %v4948, %v5275
        %v5378 = vadd.f32 %v4951, %v5278
        %v5379 = vadd.f32 %v4954, %v5281
        %v5380 = vadd.f32 %v4957, %v5284
        %v5381 = vadd.f32 %v4960, %v5287
        %v5382 = vadd.f32 %v4963, %v5290
        %v5383 = vadd.f32 %v4966, %v5293
        %v5384 = vadd.f32 %v4969, %v5296
        %v5385 = vadd.f32 %v4972, %v5299
        %v5386 = vadd.f32 %v4975, %v5302
        %v5387 = vadd.f32 %v4978, %v5305
        %v5388 = vadd.f32 %v4981, %v5308
        %v5389 = vadd.f32 %v4984, %v5311
        %v5390 = vadd.f32 %v4987, %v5314
        %v5391 = vadd.f32 %v4990, %v5317
        %v5392 = vadd.f32 %v4993, %v5320
        %v5393 = vadd.f32 %v4996, %v5323
        %v5394 = vadd.f32 %v4999, %v5326
        %v5395 = vadd.f32 %v5002, %v5329
        %v5396 = vadd.f32 %v5005, %v5332
        %vm5397 = vcmp.ge.f32.partialorder %v5333, 0.0
        %vm5398 = vcmp.ge.f32.partialorder %v5334, 0.0
        %vm5399 = vcmp.ge.f32.partialorder %v5335, 0.0
        %vm5400 = vcmp.ge.f32.partialorder %v5336, 0.0
        %vm5401 = vcmp.ge.f32.partialorder %v5337, 0.0
        %vm5402 = vcmp.ge.f32.partialorder %v5338, 0.0
        %vm5403 = vcmp.ge.f32.partialorder %v5339, 0.0
        %vm5404 = vcmp.ge.f32.partialorder %v5340, 0.0
        %vm5405 = vcmp.ge.f32.partialorder %v5341, 0.0
        %vm5406 = vcmp.ge.f32.partialorder %v5342, 0.0
        %vm5407 = vcmp.ge.f32.partialorder %v5343, 0.0
        %vm5408 = vcmp.ge.f32.partialorder %v5344, 0.0
        %vm5409 = vcmp.ge.f32.partialorder %v5345, 0.0
        %vm5410 = vcmp.ge.f32.partialorder %v5346, 0.0
        %vm5411 = vcmp.ge.f32.partialorder %v5347, 0.0
        %vm5412 = vcmp.ge.f32.partialorder %v5348, 0.0
        %vm5413 = vcmp.ge.f32.partialorder %v5349, 0.0
        %vm5414 = vcmp.ge.f32.partialorder %v5350, 0.0
        %vm5415 = vcmp.ge.f32.partialorder %v5351, 0.0
        %vm5416 = vcmp.ge.f32.partialorder %v5352, 0.0
        %vm5417 = vcmp.ge.f32.partialorder %v5353, 0.0
        %vm5418 = vcmp.ge.f32.partialorder %v5354, 0.0
        %vm5419 = vcmp.ge.f32.partialorder %v5355, 0.0
        %vm5420 = vcmp.ge.f32.partialorder %v5356, 0.0
        %vm5421 = vcmp.ge.f32.partialorder %v5357, 0.0
        %vm5422 = vcmp.ge.f32.partialorder %v5358, 0.0
        %vm5423 = vcmp.ge.f32.partialorder %v5359, 0.0
        %vm5424 = vcmp.ge.f32.partialorder %v5360, 0.0
        %vm5425 = vcmp.ge.f32.partialorder %v5361, 0.0
        %vm5426 = vcmp.ge.f32.partialorder %v5362, 0.0
        %vm5427 = vcmp.ge.f32.partialorder %v5363, 0.0
        %vm5428 = vcmp.ge.f32.partialorder %v5364, 0.0
        %vm5429 = vcmp.ge.f32.partialorder %v5365, 0.0
        %vm5430 = vcmp.ge.f32.partialorder %v5366, 0.0
        %vm5431 = vcmp.ge.f32.partialorder %v5367, 0.0
        %vm5432 = vcmp.ge.f32.partialorder %v5368, 0.0
        %vm5433 = vcmp.ge.f32.partialorder %v5369, 0.0
        %vm5434 = vcmp.ge.f32.partialorder %v5370, 0.0
        %vm5435 = vcmp.ge.f32.partialorder %v5371, 0.0
        %vm5436 = vcmp.ge.f32.partialorder %v5372, 0.0
        %vm5437 = vcmp.ge.f32.partialorder %v5373, 0.0
        %vm5438 = vcmp.ge.f32.partialorder %v5374, 0.0
        %vm5439 = vcmp.ge.f32.partialorder %v5375, 0.0
        %vm5440 = vcmp.ge.f32.partialorder %v5376, 0.0
        %vm5441 = vcmp.ge.f32.partialorder %v5377, 0.0
        %vm5442 = vcmp.ge.f32.partialorder %v5378, 0.0
        %vm5443 = vcmp.ge.f32.partialorder %v5379, 0.0
        %vm5444 = vcmp.ge.f32.partialorder %v5380, 0.0
        %vm5445 = vcmp.ge.f32.partialorder %v5381, 0.0
        %vm5446 = vcmp.ge.f32.partialorder %v5382, 0.0
        %vm5447 = vcmp.ge.f32.partialorder %v5383, 0.0
        %vm5448 = vcmp.ge.f32.partialorder %v5384, 0.0
        %vm5449 = vcmp.ge.f32.partialorder %v5385, 0.0
        %vm5450 = vcmp.ge.f32.partialorder %v5386, 0.0
        %vm5451 = vcmp.ge.f32.partialorder %v5387, 0.0
        %vm5452 = vcmp.ge.f32.partialorder %v5388, 0.0
        %vm5453 = vcmp.ge.f32.partialorder %v5389, 0.0
        %vm5454 = vcmp.ge.f32.partialorder %v5390, 0.0
        %vm5455 = vcmp.ge.f32.partialorder %v5391, 0.0
        %vm5456 = vcmp.ge.f32.partialorder %v5392, 0.0
        %vm5457 = vcmp.ge.f32.partialorder %v5393, 0.0
        %vm5458 = vcmp.ge.f32.partialorder %v5394, 0.0
        %vm5459 = vcmp.ge.f32.partialorder %v5395, 0.0
        %vm5460 = vcmp.ge.f32.partialorder %v5396, 0.0
        %v5461 = vmul.f32 %v5333, 0.01
        %v5462 = vmul.f32 %v5334, 0.01
        %v5463 = vmul.f32 %v5335, 0.01
        %v5464 = vmul.f32 %v5336, 0.01
        %v5465 = vmul.f32 %v5337, 0.01
        %v5466 = vmul.f32 %v5338, 0.01
        %v5467 = vmul.f32 %v5339, 0.01
        %v5468 = vmul.f32 %v5340, 0.01
        %v5469 = vmul.f32 %v5341, 0.01
        %v5470 = vmul.f32 %v5342, 0.01
        %v5471 = vmul.f32 %v5343, 0.01
        %v5472 = vmul.f32 %v5344, 0.01
        %v5473 = vmul.f32 %v5345, 0.01
        %v5474 = vmul.f32 %v5346, 0.01
        %v5475 = vmul.f32 %v5347, 0.01
        %v5476 = vmul.f32 %v5348, 0.01
        %v5477 = vmul.f32 %v5349, 0.01
        %v5478 = vmul.f32 %v5350, 0.01
        %v5479 = vmul.f32 %v5351, 0.01
        %v5480 = vmul.f32 %v5352, 0.01
        %v5481 = vmul.f32 %v5353, 0.01
        %v5482 = vmul.f32 %v5354, 0.01
        %v5483 = vmul.f32 %v5355, 0.01
        %v5484 = vmul.f32 %v5356, 0.01
        %v5485 = vmul.f32 %v5357, 0.01
        %v5486 = vmul.f32 %v5358, 0.01
        %v5487 = vmul.f32 %v5359, 0.01
        %v5488 = vmul.f32 %v5360, 0.01
        %v5489 = vmul.f32 %v5361, 0.01
        %v5490 = vmul.f32 %v5362, 0.01
        %v5491 = vmul.f32 %v5363, 0.01
        %v5492 = vmul.f32 %v5364, 0.01
        %v5493 = vmul.f32 %v5365, 0.01
        %v5494 = vmul.f32 %v5366, 0.01
        %v5495 = vmul.f32 %v5367, 0.01
        %v5496 = vmul.f32 %v5368, 0.01
        %v5497 = vmul.f32 %v5369, 0.01
        %v5498 = vmul.f32 %v5370, 0.01
        %v5499 = vmul.f32 %v5371, 0.01
        %v5500 = vmul.f32 %v5372, 0.01
        %v5501 = vmul.f32 %v5373, 0.01
        %v5502 = vmul.f32 %v5374, 0.01
        %v5503 = vmul.f32 %v5375, 0.01
        %v5504 = vmul.f32 %v5376, 0.01
        %v5505 = vmul.f32 %v5377, 0.01
        %v5506 = vmul.f32 %v5378, 0.01
        %v5507 = vmul.f32 %v5379, 0.01
        %v5508 = vmul.f32 %v5380, 0.01
        %v5509 = vmul.f32 %v5381, 0.01
        %v5510 = vmul.f32 %v5382, 0.01
        %v5511 = vmul.f32 %v5383, 0.01
        %v5512 = vmul.f32 %v5384, 0.01
        %v5513 = vmul.f32 %v5385, 0.01
        %v5514 = vmul.f32 %v5386, 0.01
        %v5515 = vmul.f32 %v5387, 0.01
        %v5516 = vmul.f32 %v5388, 0.01
        %v5517 = vmul.f32 %v5389, 0.01
        %v5518 = vmul.f32 %v5390, 0.01
        %v5519 = vmul.f32 %v5391, 0.01
        %v5520 = vmul.f32 %v5392, 0.01
        %v5521 = vmul.f32 %v5393, 0.01
        %v5522 = vmul.f32 %v5394, 0.01
        %v5523 = vmul.f32 %v5395, 0.01
        %v5524 = vmul.f32 %v5396, 0.01
        %v5525 = vsel %vm5397, %v5333, %v5461
        %v5526 = vsel %vm5398, %v5334, %v5462
        %v5527 = vsel %vm5399, %v5335, %v5463
        %v5528 = vsel %vm5400, %v5336, %v5464
        %v5529 = vsel %vm5401, %v5337, %v5465
        %v5530 = vsel %vm5402, %v5338, %v5466
        %v5531 = vsel %vm5403, %v5339, %v5467
        %v5532 = vsel %vm5404, %v5340, %v5468
        %v5533 = vsel %vm5405, %v5341, %v5469
        %v5534 = vsel %vm5406, %v5342, %v5470
        %v5535 = vsel %vm5407, %v5343, %v5471
        %v5536 = vsel %vm5408, %v5344, %v5472
        %v5537 = vsel %vm5409, %v5345, %v5473
        %v5538 = vsel %vm5410, %v5346, %v5474
        %v5539 = vsel %vm5411, %v5347, %v5475
        %v5540 = vsel %vm5412, %v5348, %v5476
        %v5541 = vsel %vm5413, %v5349, %v5477
        %v5542 = vsel %vm5414, %v5350, %v5478
        %v5543 = vsel %vm5415, %v5351, %v5479
        %v5544 = vsel %vm5416, %v5352, %v5480
        %v5545 = vsel %vm5417, %v5353, %v5481
        %v5546 = vsel %vm5418, %v5354, %v5482
        %v5547 = vsel %vm5419, %v5355, %v5483
        %v5548 = vsel %vm5420, %v5356, %v5484
        %v5549 = vsel %vm5421, %v5357, %v5485
        %v5550 = vsel %vm5422, %v5358, %v5486
        %v5551 = vsel %vm5423, %v5359, %v5487
        %v5552 = vsel %vm5424, %v5360, %v5488
        %v5553 = vsel %vm5425, %v5361, %v5489
        %v5554 = vsel %vm5426, %v5362, %v5490
        %v5555 = vsel %vm5427, %v5363, %v5491
        %v5556 = vsel %vm5428, %v5364, %v5492
        %v5557 = vsel %vm5429, %v5365, %v5493
        %v5558 = vsel %vm5430, %v5366, %v5494
        %v5559 = vsel %vm5431, %v5367, %v5495
        %v5560 = vsel %vm5432, %v5368, %v5496
        %v5561 = vsel %vm5433, %v5369, %v5497
        %v5562 = vsel %vm5434, %v5370, %v5498
        %v5563 = vsel %vm5435, %v5371, %v5499
        %v5564 = vsel %vm5436, %v5372, %v5500
        %v5565 = vsel %vm5437, %v5373, %v5501
        %v5566 = vsel %vm5438, %v5374, %v5502
        %v5567 = vsel %vm5439, %v5375, %v5503
        %v5568 = vsel %vm5440, %v5376, %v5504
        %v5569 = vsel %vm5441, %v5377, %v5505
        %v5570 = vsel %vm5442, %v5378, %v5506
        %v5571 = vsel %vm5443, %v5379, %v5507
        %v5572 = vsel %vm5444, %v5380, %v5508
        %v5573 = vsel %vm5445, %v5381, %v5509
        %v5574 = vsel %vm5446, %v5382, %v5510
        %v5575 = vsel %vm5447, %v5383, %v5511
        %v5576 = vsel %vm5448, %v5384, %v5512
        %v5577 = vsel %vm5449, %v5385, %v5513
        %v5578 = vsel %vm5450, %v5386, %v5514
        %v5579 = vsel %vm5451, %v5387, %v5515
        %v5580 = vsel %vm5452, %v5388, %v5516
        %v5581 = vsel %vm5453, %v5389, %v5517
        %v5582 = vsel %vm5454, %v5390, %v5518
        %v5583 = vsel %vm5455, %v5391, %v5519
        %v5584 = vsel %vm5456, %v5392, %v5520
        %v5585 = vsel %vm5457, %v5393, %v5521
        %v5586 = vsel %vm5458, %v5394, %v5522
        %v5587 = vsel %vm5459, %v5395, %v5523
        %v5588 = vsel %vm5460, %v5396, %v5524
        %v5589 = vxor.u32 %v5525, 2147483648
        %v5590 = vxor.u32 %v5526, 2147483648
        %v5591 = vxor.u32 %v5527, 2147483648
        %v5592 = vxor.u32 %v5528, 2147483648
        %v5593 = vxor.u32 %v5529, 2147483648
        %v5594 = vxor.u32 %v5530, 2147483648
        %v5595 = vxor.u32 %v5531, 2147483648
        %v5596 = vxor.u32 %v5532, 2147483648
        %v5597 = vxor.u32 %v5533, 2147483648
        %v5598 = vxor.u32 %v5534, 2147483648
        %v5599 = vxor.u32 %v5535, 2147483648
        %v5600 = vxor.u32 %v5536, 2147483648
        %v5601 = vxor.u32 %v5537, 2147483648
        %v5602 = vxor.u32 %v5538, 2147483648
        %v5603 = vxor.u32 %v5539, 2147483648
        %v5604 = vxor.u32 %v5540, 2147483648
        %v5605 = vxor.u32 %v5541, 2147483648
        %v5606 = vxor.u32 %v5542, 2147483648
        %v5607 = vxor.u32 %v5543, 2147483648
        %v5608 = vxor.u32 %v5544, 2147483648
        %v5609 = vxor.u32 %v5545, 2147483648
        %v5610 = vxor.u32 %v5546, 2147483648
        %v5611 = vxor.u32 %v5547, 2147483648
        %v5612 = vxor.u32 %v5548, 2147483648
        %v5613 = vxor.u32 %v5549, 2147483648
        %v5614 = vxor.u32 %v5550, 2147483648
        %v5615 = vxor.u32 %v5551, 2147483648
        %v5616 = vxor.u32 %v5552, 2147483648
        %v5617 = vxor.u32 %v5553, 2147483648
        %v5618 = vxor.u32 %v5554, 2147483648
        %v5619 = vxor.u32 %v5555, 2147483648
        %v5620 = vxor.u32 %v5556, 2147483648
        %v5621 = vxor.u32 %v5557, 2147483648
        %v5622 = vxor.u32 %v5558, 2147483648
        %v5623 = vxor.u32 %v5559, 2147483648
        %v5624 = vxor.u32 %v5560, 2147483648
        %v5625 = vxor.u32 %v5561, 2147483648
        %v5626 = vxor.u32 %v5562, 2147483648
        %v5627 = vxor.u32 %v5563, 2147483648
        %v5628 = vxor.u32 %v5564, 2147483648
        %v5629 = vxor.u32 %v5565, 2147483648
        %v5630 = vxor.u32 %v5566, 2147483648
        %v5631 = vxor.u32 %v5567, 2147483648
        %v5632 = vxor.u32 %v5568, 2147483648
        %v5633 = vxor.u32 %v5569, 2147483648
        %v5634 = vxor.u32 %v5570, 2147483648
        %v5635 = vxor.u32 %v5571, 2147483648
        %v5636 = vxor.u32 %v5572, 2147483648
        %v5637 = vxor.u32 %v5573, 2147483648
        %v5638 = vxor.u32 %v5574, 2147483648
        %v5639 = vxor.u32 %v5575, 2147483648
        %v5640 = vxor.u32 %v5576, 2147483648
        %v5641 = vxor.u32 %v5577, 2147483648
        %v5642 = vxor.u32 %v5578, 2147483648
        %v5643 = vxor.u32 %v5579, 2147483648
        %v5644 = vxor.u32 %v5580, 2147483648
        %v5645 = vxor.u32 %v5581, 2147483648
        %v5646 = vxor.u32 %v5582, 2147483648
        %v5647 = vxor.u32 %v5583, 2147483648
        %v5648 = vxor.u32 %v5584, 2147483648
        %v5649 = vxor.u32 %v5585, 2147483648
        %v5650 = vxor.u32 %v5586, 2147483648
        %v5651 = vxor.u32 %v5587, 2147483648
        %v5652 = vxor.u32 %v5588, 2147483648
        %v5653 = vmul.f32 %v5589, 1.442695
        %v5654 = vpow.pop %v5653
        %v5655 = vmul.f32 %v5590, 1.442695
        %v5656 = vpow.pop %v5655
        %v5657 = vmul.f32 %v5591, 1.442695
        %v5658 = vpow.pop %v5657
        %v5659 = vmul.f32 %v5592, 1.442695
        %v5660 = vpow.pop %v5659
        %v5661 = vmul.f32 %v5593, 1.442695
        %v5662 = vpow.pop %v5661
        %v5663 = vmul.f32 %v5594, 1.442695
        %v5664 = vpow.pop %v5663
        %v5665 = vmul.f32 %v5595, 1.442695
        %v5666 = vpow.pop %v5665
        %v5667 = vmul.f32 %v5596, 1.442695
        %v5668 = vpow.pop %v5667
        %v5669 = vmul.f32 %v5597, 1.442695
        %v5670 = vpow.pop %v5669
        %v5671 = vmul.f32 %v5598, 1.442695
        %v5672 = vpow.pop %v5671
        %v5673 = vmul.f32 %v5599, 1.442695
        %v5674 = vpow.pop %v5673
        %v5675 = vmul.f32 %v5600, 1.442695
        %v5676 = vpow.pop %v5675
        %v5677 = vmul.f32 %v5601, 1.442695
        %v5678 = vpow.pop %v5677
        %v5679 = vmul.f32 %v5602, 1.442695
        %v5680 = vpow.pop %v5679
        %v5681 = vmul.f32 %v5603, 1.442695
        %v5682 = vpow.pop %v5681
        %v5683 = vmul.f32 %v5604, 1.442695
        %v5684 = vpow.pop %v5683
        %v5685 = vmul.f32 %v5605, 1.442695
        %v5686 = vpow.pop %v5685
        %v5687 = vmul.f32 %v5606, 1.442695
        %v5688 = vpow.pop %v5687
        %v5689 = vmul.f32 %v5607, 1.442695
        %v5690 = vpow.pop %v5689
        %v5691 = vmul.f32 %v5608, 1.442695
        %v5692 = vpow.pop %v5691
        %v5693 = vmul.f32 %v5609, 1.442695
        %v5694 = vpow.pop %v5693
        %v5695 = vmul.f32 %v5610, 1.442695
        %v5696 = vpow.pop %v5695
        %v5697 = vmul.f32 %v5611, 1.442695
        %v5698 = vpow.pop %v5697
        %v5699 = vmul.f32 %v5612, 1.442695
        %v5700 = vpow.pop %v5699
        %v5701 = vmul.f32 %v5613, 1.442695
        %v5702 = vpow.pop %v5701
        %v5703 = vmul.f32 %v5614, 1.442695
        %v5704 = vpow.pop %v5703
        %v5705 = vmul.f32 %v5615, 1.442695
        %v5706 = vpow.pop %v5705
        %v5707 = vmul.f32 %v5616, 1.442695
        %v5708 = vpow.pop %v5707
        %v5709 = vmul.f32 %v5617, 1.442695
        %v5710 = vpow.pop %v5709
        %v5711 = vmul.f32 %v5618, 1.442695
        %v5712 = vpow.pop %v5711
        %v5713 = vmul.f32 %v5619, 1.442695
        %v5714 = vpow.pop %v5713
        %v5715 = vmul.f32 %v5620, 1.442695
        %v5716 = vpow.pop %v5715
        %v5717 = vmul.f32 %v5621, 1.442695
        %v5718 = vpow.pop %v5717
        %v5719 = vmul.f32 %v5622, 1.442695
        %v5720 = vpow.pop %v5719
        %v5721 = vmul.f32 %v5623, 1.442695
        %v5722 = vpow.pop %v5721
        %v5723 = vmul.f32 %v5624, 1.442695
        %v5724 = vpow.pop %v5723
        %v5725 = vmul.f32 %v5625, 1.442695
        %v5726 = vpow.pop %v5725
        %v5727 = vmul.f32 %v5626, 1.442695
        %v5728 = vpow.pop %v5727
        %v5729 = vmul.f32 %v5627, 1.442695
        %v5730 = vpow.pop %v5729
        %v5731 = vmul.f32 %v5628, 1.442695
        %v5732 = vpow.pop %v5731
        %v5733 = vmul.f32 %v5629, 1.442695
        %v5734 = vpow.pop %v5733
        %v5735 = vmul.f32 %v5630, 1.442695
        %v5736 = vpow.pop %v5735
        %v5737 = vmul.f32 %v5631, 1.442695
        %v5738 = vpow.pop %v5737
        %v5739 = vmul.f32 %v5632, 1.442695
        %v5740 = vpow.pop %v5739
        %v5741 = vmul.f32 %v5633, 1.442695
        %v5742 = vpow.pop %v5741
        %v5743 = vmul.f32 %v5634, 1.442695
        %v5744 = vpow.pop %v5743
        %v5745 = vmul.f32 %v5635, 1.442695
        %v5746 = vpow.pop %v5745
        %v5747 = vmul.f32 %v5636, 1.442695
        %v5748 = vpow.pop %v5747
        %v5749 = vmul.f32 %v5637, 1.442695
        %v5750 = vpow.pop %v5749
        %v5751 = vmul.f32 %v5638, 1.442695
        %v5752 = vpow.pop %v5751
        %v5753 = vmul.f32 %v5639, 1.442695
        %v5754 = vpow.pop %v5753
        %v5755 = vmul.f32 %v5640, 1.442695
        %v5756 = vpow.pop %v5755
        %v5757 = vmul.f32 %v5641, 1.442695
        %v5758 = vpow.pop %v5757
        %v5759 = vmul.f32 %v5642, 1.442695
        %v5760 = vpow.pop %v5759
        %v5761 = vmul.f32 %v5643, 1.442695
        %v5762 = vpow.pop %v5761
        %v5763 = vmul.f32 %v5644, 1.442695
        %v5764 = vpow.pop %v5763
        %v5765 = vmul.f32 %v5645, 1.442695
        %v5766 = vpow.pop %v5765
        %v5767 = vmul.f32 %v5646, 1.442695
        %v5768 = vpow.pop %v5767
        %v5769 = vmul.f32 %v5647, 1.442695
        %v5770 = vpow.pop %v5769
        %v5771 = vmul.f32 %v5648, 1.442695
        %v5772 = vpow.pop %v5771
        %v5773 = vmul.f32 %v5649, 1.442695
        %v5774 = vpow.pop %v5773
        %v5775 = vmul.f32 %v5650, 1.442695
        %v5776 = vpow.pop %v5775
        %v5777 = vmul.f32 %v5651, 1.442695
        %v5778 = vpow.pop %v5777
        %v5779 = vmul.f32 %v5652, 1.442695
        %v5780 = vpow.pop %v5779
        %v5781 = vadd.f32 %v5654, 1.0
        %v5782 = vadd.f32 %v5656, 1.0
        %v5783 = vadd.f32 %v5658, 1.0
        %v5784 = vadd.f32 %v5660, 1.0
        %v5785 = vadd.f32 %v5662, 1.0
        %v5786 = vadd.f32 %v5664, 1.0
        %v5787 = vadd.f32 %v5666, 1.0
        %v5788 = vadd.f32 %v5668, 1.0
        %v5789 = vadd.f32 %v5670, 1.0
        %v5790 = vadd.f32 %v5672, 1.0
        %v5791 = vadd.f32 %v5674, 1.0
        %v5792 = vadd.f32 %v5676, 1.0
        %v5793 = vadd.f32 %v5678, 1.0
        %v5794 = vadd.f32 %v5680, 1.0
        %v5795 = vadd.f32 %v5682, 1.0
        %v5796 = vadd.f32 %v5684, 1.0
        %v5797 = vadd.f32 %v5686, 1.0
        %v5798 = vadd.f32 %v5688, 1.0
        %v5799 = vadd.f32 %v5690, 1.0
        %v5800 = vadd.f32 %v5692, 1.0
        %v5801 = vadd.f32 %v5694, 1.0
        %v5802 = vadd.f32 %v5696, 1.0
        %v5803 = vadd.f32 %v5698, 1.0
        %v5804 = vadd.f32 %v5700, 1.0
        %v5805 = vadd.f32 %v5702, 1.0
        %v5806 = vadd.f32 %v5704, 1.0
        %v5807 = vadd.f32 %v5706, 1.0
        %v5808 = vadd.f32 %v5708, 1.0
        %v5809 = vadd.f32 %v5710, 1.0
        %v5810 = vadd.f32 %v5712, 1.0
        %v5811 = vadd.f32 %v5714, 1.0
        %v5812 = vadd.f32 %v5716, 1.0
        %v5813 = vadd.f32 %v5718, 1.0
        %v5814 = vadd.f32 %v5720, 1.0
        %v5815 = vadd.f32 %v5722, 1.0
        %v5816 = vadd.f32 %v5724, 1.0
        %v5817 = vadd.f32 %v5726, 1.0
        %v5818 = vadd.f32 %v5728, 1.0
        %v5819 = vadd.f32 %v5730, 1.0
        %v5820 = vadd.f32 %v5732, 1.0
        %v5821 = vadd.f32 %v5734, 1.0
        %v5822 = vadd.f32 %v5736, 1.0
        %v5823 = vadd.f32 %v5738, 1.0
        %v5824 = vadd.f32 %v5740, 1.0
        %v5825 = vadd.f32 %v5742, 1.0
        %v5826 = vadd.f32 %v5744, 1.0
        %v5827 = vadd.f32 %v5746, 1.0
        %v5828 = vadd.f32 %v5748, 1.0
        %v5829 = vadd.f32 %v5750, 1.0
        %v5830 = vadd.f32 %v5752, 1.0
        %v5831 = vadd.f32 %v5754, 1.0
        %v5832 = vadd.f32 %v5756, 1.0
        %v5833 = vadd.f32 %v5758, 1.0
        %v5834 = vadd.f32 %v5760, 1.0
        %v5835 = vadd.f32 %v5762, 1.0
        %v5836 = vadd.f32 %v5764, 1.0
        %v5837 = vadd.f32 %v5766, 1.0
        %v5838 = vadd.f32 %v5768, 1.0
        %v5839 = vadd.f32 %v5770, 1.0
        %v5840 = vadd.f32 %v5772, 1.0
        %v5841 = vadd.f32 %v5774, 1.0
        %v5842 = vadd.f32 %v5776, 1.0
        %v5843 = vadd.f32 %v5778, 1.0
        %v5844 = vadd.f32 %v5780, 1.0
        %v5845 = vrcp.pop %v5781
        %v5846 = vmul.f32 1.0, %v5845
        %v5847 = vrcp.pop %v5782
        %v5848 = vmul.f32 1.0, %v5847
        %v5849 = vrcp.pop %v5783
        %v5850 = vmul.f32 1.0, %v5849
        %v5851 = vrcp.pop %v5784
        %v5852 = vmul.f32 1.0, %v5851
        %v5853 = vrcp.pop %v5785
        %v5854 = vmul.f32 1.0, %v5853
        %v5855 = vrcp.pop %v5786
        %v5856 = vmul.f32 1.0, %v5855
        %v5857 = vrcp.pop %v5787
        %v5858 = vmul.f32 1.0, %v5857
        %v5859 = vrcp.pop %v5788
        %v5860 = vmul.f32 1.0, %v5859
        %v5861 = vrcp.pop %v5789
        %v5862 = vmul.f32 1.0, %v5861
        %v5863 = vrcp.pop %v5790
        %v5864 = vmul.f32 1.0, %v5863
        %v5865 = vrcp.pop %v5791
        %v5866 = vmul.f32 1.0, %v5865
        %v5867 = vrcp.pop %v5792
        %v5868 = vmul.f32 1.0, %v5867
        %v5869 = vrcp.pop %v5793
        %v5870 = vmul.f32 1.0, %v5869
        %v5871 = vrcp.pop %v5794
        %v5872 = vmul.f32 1.0, %v5871
        %v5873 = vrcp.pop %v5795
        %v5874 = vmul.f32 1.0, %v5873
        %v5875 = vrcp.pop %v5796
        %v5876 = vmul.f32 1.0, %v5875
        %v5877 = vrcp.pop %v5797
        %v5878 = vmul.f32 1.0, %v5877
        %v5879 = vrcp.pop %v5798
        %v5880 = vmul.f32 1.0, %v5879
        %v5881 = vrcp.pop %v5799
        %v5882 = vmul.f32 1.0, %v5881
        %v5883 = vrcp.pop %v5800
        %v5884 = vmul.f32 1.0, %v5883
        %v5885 = vrcp.pop %v5801
        %v5886 = vmul.f32 1.0, %v5885
        %v5887 = vrcp.pop %v5802
        %v5888 = vmul.f32 1.0, %v5887
        %v5889 = vrcp.pop %v5803
        %v5890 = vmul.f32 1.0, %v5889
        %v5891 = vrcp.pop %v5804
        %v5892 = vmul.f32 1.0, %v5891
        %v5893 = vrcp.pop %v5805
        %v5894 = vmul.f32 1.0, %v5893
        %v5895 = vrcp.pop %v5806
        %v5896 = vmul.f32 1.0, %v5895
        %v5897 = vrcp.pop %v5807
        %v5898 = vmul.f32 1.0, %v5897
        %v5899 = vrcp.pop %v5808
        %v5900 = vmul.f32 1.0, %v5899
        %v5901 = vrcp.pop %v5809
        %v5902 = vmul.f32 1.0, %v5901
        %v5903 = vrcp.pop %v5810
        %v5904 = vmul.f32 1.0, %v5903
        %v5905 = vrcp.pop %v5811
        %v5906 = vmul.f32 1.0, %v5905
        %v5907 = vrcp.pop %v5812
        %v5908 = vmul.f32 1.0, %v5907
        %v5909 = vrcp.pop %v5813
        %v5910 = vmul.f32 1.0, %v5909
        %v5911 = vrcp.pop %v5814
        %v5912 = vmul.f32 1.0, %v5911
        %v5913 = vrcp.pop %v5815
        %v5914 = vmul.f32 1.0, %v5913
        %v5915 = vrcp.pop %v5816
        %v5916 = vmul.f32 1.0, %v5915
        %v5917 = vrcp.pop %v5817
        %v5918 = vmul.f32 1.0, %v5917
        %v5919 = vrcp.pop %v5818
        %v5920 = vmul.f32 1.0, %v5919
        %v5921 = vrcp.pop %v5819
        %v5922 = vmul.f32 1.0, %v5921
        %v5923 = vrcp.pop %v5820
        %v5924 = vmul.f32 1.0, %v5923
        %v5925 = vrcp.pop %v5821
        %v5926 = vmul.f32 1.0, %v5925
        %v5927 = vrcp.pop %v5822
        %v5928 = vmul.f32 1.0, %v5927
        %v5929 = vrcp.pop %v5823
        %v5930 = vmul.f32 1.0, %v5929
        %v5931 = vrcp.pop %v5824
        %v5932 = vmul.f32 1.0, %v5931
        %v5933 = vrcp.pop %v5825
        %v5934 = vmul.f32 1.0, %v5933
        %v5935 = vrcp.pop %v5826
        %v5936 = vmul.f32 1.0, %v5935
        %v5937 = vrcp.pop %v5827
        %v5938 = vmul.f32 1.0, %v5937
        %v5939 = vrcp.pop %v5828
        %v5940 = vmul.f32 1.0, %v5939
        %v5941 = vrcp.pop %v5829
        %v5942 = vmul.f32 1.0, %v5941
        %v5943 = vrcp.pop %v5830
        %v5944 = vmul.f32 1.0, %v5943
        %v5945 = vrcp.pop %v5831
        %v5946 = vmul.f32 1.0, %v5945
        %v5947 = vrcp.pop %v5832
        %v5948 = vmul.f32 1.0, %v5947
        %v5949 = vrcp.pop %v5833
        %v5950 = vmul.f32 1.0, %v5949
        %v5951 = vrcp.pop %v5834
        %v5952 = vmul.f32 1.0, %v5951
        %v5953 = vrcp.pop %v5835
        %v5954 = vmul.f32 1.0, %v5953
        %v5955 = vrcp.pop %v5836
        %v5956 = vmul.f32 1.0, %v5955
        %v5957 = vrcp.pop %v5837
        %v5958 = vmul.f32 1.0, %v5957
        %v5959 = vrcp.pop %v5838
        %v5960 = vmul.f32 1.0, %v5959
        %v5961 = vrcp.pop %v5839
        %v5962 = vmul.f32 1.0, %v5961
        %v5963 = vrcp.pop %v5840
        %v5964 = vmul.f32 1.0, %v5963
        %v5965 = vrcp.pop %v5841
        %v5966 = vmul.f32 1.0, %v5965
        %v5967 = vrcp.pop %v5842
        %v5968 = vmul.f32 1.0, %v5967
        %v5969 = vrcp.pop %v5843
        %v5970 = vmul.f32 1.0, %v5969
        %v5971 = vrcp.pop %v5844
        %v5972 = vmul.f32 1.0, %v5971
        %v5973 = vmul.f32 %v5846, 1.442695
        %v5974 = vpow.pop %v5973
        %v5975 = vmul.f32 %v5848, 1.442695
        %v5976 = vpow.pop %v5975
        %v5977 = vmul.f32 %v5850, 1.442695
        %v5978 = vpow.pop %v5977
        %v5979 = vmul.f32 %v5852, 1.442695
        %v5980 = vpow.pop %v5979
        %v5981 = vmul.f32 %v5854, 1.442695
        %v5982 = vpow.pop %v5981
        %v5983 = vmul.f32 %v5856, 1.442695
        %v5984 = vpow.pop %v5983
        %v5985 = vmul.f32 %v5858, 1.442695
        %v5986 = vpow.pop %v5985
        %v5987 = vmul.f32 %v5860, 1.442695
        %v5988 = vpow.pop %v5987
        %v5989 = vmul.f32 %v5862, 1.442695
        %v5990 = vpow.pop %v5989
        %v5991 = vmul.f32 %v5864, 1.442695
        %v5992 = vpow.pop %v5991
        %v5993 = vmul.f32 %v5866, 1.442695
        %v5994 = vpow.pop %v5993
        %v5995 = vmul.f32 %v5868, 1.442695
        %v5996 = vpow.pop %v5995
        %v5997 = vmul.f32 %v5870, 1.442695
        %v5998 = vpow.pop %v5997
        %v5999 = vmul.f32 %v5872, 1.442695
        %v6000 = vpow.pop %v5999
        %v6001 = vmul.f32 %v5874, 1.442695
        %v6002 = vpow.pop %v6001
        %v6003 = vmul.f32 %v5876, 1.442695
        %v6004 = vpow.pop %v6003
        %v6005 = vmul.f32 %v5878, 1.442695
        %v6006 = vpow.pop %v6005
        %v6007 = vmul.f32 %v5880, 1.442695
        %v6008 = vpow.pop %v6007
        %v6009 = vmul.f32 %v5882, 1.442695
        %v6010 = vpow.pop %v6009
        %v6011 = vmul.f32 %v5884, 1.442695
        %v6012 = vpow.pop %v6011
        %v6013 = vmul.f32 %v5886, 1.442695
        %v6014 = vpow.pop %v6013
        %v6015 = vmul.f32 %v5888, 1.442695
        %v6016 = vpow.pop %v6015
        %v6017 = vmul.f32 %v5890, 1.442695
        %v6018 = vpow.pop %v6017
        %v6019 = vmul.f32 %v5892, 1.442695
        %v6020 = vpow.pop %v6019
        %v6021 = vmul.f32 %v5894, 1.442695
        %v6022 = vpow.pop %v6021
        %v6023 = vmul.f32 %v5896, 1.442695
        %v6024 = vpow.pop %v6023
        %v6025 = vmul.f32 %v5898, 1.442695
        %v6026 = vpow.pop %v6025
        %v6027 = vmul.f32 %v5900, 1.442695
        %v6028 = vpow.pop %v6027
        %v6029 = vmul.f32 %v5902, 1.442695
        %v6030 = vpow.pop %v6029
        %v6031 = vmul.f32 %v5904, 1.442695
        %v6032 = vpow.pop %v6031
        %v6033 = vmul.f32 %v5906, 1.442695
        %v6034 = vpow.pop %v6033
        %v6035 = vmul.f32 %v5908, 1.442695
        %v6036 = vpow.pop %v6035
        %v6037 = vmul.f32 %v5910, 1.442695
        %v6038 = vpow.pop %v6037
        %v6039 = vmul.f32 %v5912, 1.442695
        %v6040 = vpow.pop %v6039
        %v6041 = vmul.f32 %v5914, 1.442695
        %v6042 = vpow.pop %v6041
        %v6043 = vmul.f32 %v5916, 1.442695
        %v6044 = vpow.pop %v6043
        %v6045 = vmul.f32 %v5918, 1.442695
        %v6046 = vpow.pop %v6045
        %v6047 = vmul.f32 %v5920, 1.442695
        %v6048 = vpow.pop %v6047
        %v6049 = vmul.f32 %v5922, 1.442695
        %v6050 = vpow.pop %v6049
        %v6051 = vmul.f32 %v5924, 1.442695
        %v6052 = vpow.pop %v6051
        %v6053 = vmul.f32 %v5926, 1.442695
        %v6054 = vpow.pop %v6053
        %v6055 = vmul.f32 %v5928, 1.442695
        %v6056 = vpow.pop %v6055
        %v6057 = vmul.f32 %v5930, 1.442695
        %v6058 = vpow.pop %v6057
        %v6059 = vmul.f32 %v5932, 1.442695
        %v6060 = vpow.pop %v6059
        %v6061 = vmul.f32 %v5934, 1.442695
        %v6062 = vpow.pop %v6061
        %v6063 = vmul.f32 %v5936, 1.442695
        %v6064 = vpow.pop %v6063
        %v6065 = vmul.f32 %v5938, 1.442695
        %v6066 = vpow.pop %v6065
        %v6067 = vmul.f32 %v5940, 1.442695
        %v6068 = vpow.pop %v6067
        %v6069 = vmul.f32 %v5942, 1.442695
        %v6070 = vpow.pop %v6069
        %v6071 = vmul.f32 %v5944, 1.442695
        %v6072 = vpow.pop %v6071
        %v6073 = vmul.f32 %v5946, 1.442695
        %v6074 = vpow.pop %v6073
        %v6075 = vmul.f32 %v5948, 1.442695
        %v6076 = vpow.pop %v6075
        %v6077 = vmul.f32 %v5950, 1.442695
        %v6078 = vpow.pop %v6077
        %v6079 = vmul.f32 %v5952, 1.442695
        %v6080 = vpow.pop %v6079
        %v6081 = vmul.f32 %v5954, 1.442695
        %v6082 = vpow.pop %v6081
        %v6083 = vmul.f32 %v5956, 1.442695
        %v6084 = vpow.pop %v6083
        %v6085 = vmul.f32 %v5958, 1.442695
        %v6086 = vpow.pop %v6085
        %v6087 = vmul.f32 %v5960, 1.442695
        %v6088 = vpow.pop %v6087
        %v6089 = vmul.f32 %v5962, 1.442695
        %v6090 = vpow.pop %v6089
        %v6091 = vmul.f32 %v5964, 1.442695
        %v6092 = vpow.pop %v6091
        %v6093 = vmul.f32 %v5966, 1.442695
        %v6094 = vpow.pop %v6093
        %v6095 = vmul.f32 %v5968, 1.442695
        %v6096 = vpow.pop %v6095
        %v6097 = vmul.f32 %v5970, 1.442695
        %v6098 = vpow.pop %v6097
        %v6099 = vmul.f32 %v5972, 1.442695
        %v6100 = vpow.pop %v6099
        %v6101 = vld [vmem:[#allocation3] sm:$0x1]
        %vm6102 = vcmask 7168
        %v6103 = vsel %vm6102, %v5974, 0.0
        %v6104 = vsel %vm6102, %v5976, 0.0
        %v6105 = vadd.f32 %v6103, %v6104
        %v6106 = vsel %vm6102, %v5978, 0.0
        %v6107 = vadd.f32 %v6105, %v6106
        %v6108 = vsel %vm6102, %v5980, 0.0
        %v6109 = vadd.f32 %v6107, %v6108
        %v6110 = vsel %vm6102, %v5982, 0.0
        %v6111 = vadd.f32 %v6109, %v6110
        %v6112 = vsel %vm6102, %v5984, 0.0
        %v6113 = vadd.f32 %v6111, %v6112
        %v6114 = vsel %vm6102, %v5986, 0.0
        %v6115 = vadd.f32 %v6113, %v6114
        %v6116 = vsel %vm6102, %v5988, 0.0
        %v6117 = vadd.f32 %v6115, %v6116
        %v6118 = vsel %vm6102, %v5990, 0.0
        %v6119 = vadd.f32 %v6117, %v6118
        %v6120 = vsel %vm6102, %v5992, 0.0
        %v6121 = vadd.f32 %v6119, %v6120
        %v6122 = vsel %vm6102, %v5994, 0.0
        %v6123 = vadd.f32 %v6121, %v6122
        %v6124 = vsel %vm6102, %v5996, 0.0
        %v6125 = vadd.f32 %v6123, %v6124
        %v6126 = vsel %vm6102, %v5998, 0.0
        %v6127 = vadd.f32 %v6125, %v6126
        %v6128 = vsel %vm6102, %v6000, 0.0
        %v6129 = vadd.f32 %v6127, %v6128
        %v6130 = vsel %vm6102, %v6002, 0.0
        %v6131 = vadd.f32 %v6129, %v6130
        %v6132 = vsel %vm6102, %v6004, 0.0
        %v6133 = vadd.f32 %v6131, %v6132
        %v6134 = vsel %vm6102, %v6006, 0.0
        %v6135 = vadd.f32 %v6133, %v6134
        %v6136 = vsel %vm6102, %v6008, 0.0
        %v6137 = vadd.f32 %v6135, %v6136
        %v6138 = vsel %vm6102, %v6010, 0.0
        %v6139 = vadd.f32 %v6137, %v6138
        %v6140 = vsel %vm6102, %v6012, 0.0
        %v6141 = vadd.f32 %v6139, %v6140
        %v6142 = vsel %vm6102, %v6014, 0.0
        %v6143 = vadd.f32 %v6141, %v6142
        %v6144 = vsel %vm6102, %v6016, 0.0
        %v6145 = vadd.f32 %v6143, %v6144
        %v6146 = vsel %vm6102, %v6018, 0.0
        %v6147 = vadd.f32 %v6145, %v6146
        %v6148 = vsel %vm6102, %v6020, 0.0
        %v6149 = vadd.f32 %v6147, %v6148
        %v6150 = vsel %vm6102, %v6022, 0.0
        %v6151 = vadd.f32 %v6149, %v6150
        %v6152 = vsel %vm6102, %v6024, 0.0
        %v6153 = vadd.f32 %v6151, %v6152
        %v6154 = vsel %vm6102, %v6026, 0.0
        %v6155 = vadd.f32 %v6153, %v6154
        %v6156 = vsel %vm6102, %v6028, 0.0
        %v6157 = vadd.f32 %v6155, %v6156
        %v6158 = vsel %vm6102, %v6030, 0.0
        %v6159 = vadd.f32 %v6157, %v6158
        %v6160 = vsel %vm6102, %v6032, 0.0
        %v6161 = vadd.f32 %v6159, %v6160
        %v6162 = vsel %vm6102, %v6034, 0.0
        %v6163 = vadd.f32 %v6161, %v6162
        %v6164 = vsel %vm6102, %v6036, 0.0
        %v6165 = vadd.f32 %v6163, %v6164
        %v6166 = vsel %vm6102, %v6038, 0.0
        %v6167 = vadd.f32 %v6165, %v6166
        %v6168 = vsel %vm6102, %v6040, 0.0
        %v6169 = vadd.f32 %v6167, %v6168
        %v6170 = vsel %vm6102, %v6042, 0.0
        %v6171 = vadd.f32 %v6169, %v6170
        %v6172 = vsel %vm6102, %v6044, 0.0
        %v6173 = vadd.f32 %v6171, %v6172
        %v6174 = vsel %vm6102, %v6046, 0.0
        %v6175 = vadd.f32 %v6173, %v6174
        %v6176 = vsel %vm6102, %v6048, 0.0
        %v6177 = vadd.f32 %v6175, %v6176
        %v6178 = vsel %vm6102, %v6050, 0.0
        %v6179 = vadd.f32 %v6177, %v6178
        %v6180 = vsel %vm6102, %v6052, 0.0
        %v6181 = vadd.f32 %v6179, %v6180
        %v6182 = vsel %vm6102, %v6054, 0.0
        %v6183 = vadd.f32 %v6181, %v6182
        %v6184 = vsel %vm6102, %v6056, 0.0
        %v6185 = vadd.f32 %v6183, %v6184
        %v6186 = vsel %vm6102, %v6058, 0.0
        %v6187 = vadd.f32 %v6185, %v6186
        %v6188 = vsel %vm6102, %v6060, 0.0
        %v6189 = vadd.f32 %v6187, %v6188
        %v6190 = vsel %vm6102, %v6062, 0.0
        %v6191 = vadd.f32 %v6189, %v6190
        %v6192 = vsel %vm6102, %v6064, 0.0
        %v6193 = vadd.f32 %v6191, %v6192
        %v6194 = vsel %vm6102, %v6066, 0.0
        %v6195 = vadd.f32 %v6193, %v6194
        %v6196 = vsel %vm6102, %v6068, 0.0
        %v6197 = vadd.f32 %v6195, %v6196
        %v6198 = vsel %vm6102, %v6070, 0.0
        %v6199 = vadd.f32 %v6197, %v6198
        %v6200 = vsel %vm6102, %v6072, 0.0
        %v6201 = vadd.f32 %v6199, %v6200
        %v6202 = vsel %vm6102, %v6074, 0.0
        %v6203 = vadd.f32 %v6201, %v6202
        %v6204 = vsel %vm6102, %v6076, 0.0
        %v6205 = vadd.f32 %v6203, %v6204
        %v6206 = vsel %vm6102, %v6078, 0.0
        %v6207 = vadd.f32 %v6205, %v6206
        %v6208 = vsel %vm6102, %v6080, 0.0
        %v6209 = vadd.f32 %v6207, %v6208
        %v6210 = vsel %vm6102, %v6082, 0.0
        %v6211 = vadd.f32 %v6209, %v6210
        %v6212 = vsel %vm6102, %v6084, 0.0
        %v6213 = vadd.f32 %v6211, %v6212
        %v6214 = vsel %vm6102, %v6086, 0.0
        %v6215 = vadd.f32 %v6213, %v6214
        %v6216 = vsel %vm6102, %v6088, 0.0
        %v6217 = vadd.f32 %v6215, %v6216
        %v6218 = vsel %vm6102, %v6090, 0.0
        %v6219 = vadd.f32 %v6217, %v6218
        %v6220 = vsel %vm6102, %v6092, 0.0
        %v6221 = vadd.f32 %v6219, %v6220
        %v6222 = vsel %vm6102, %v6094, 0.0
        %v6223 = vadd.f32 %v6221, %v6222
        %v6224 = vsel %vm6102, %v6096, 0.0
        %v6225 = vadd.f32 %v6223, %v6224
        %v6226 = vsel %vm6102, %v6098, 0.0
        %v6227 = vadd.f32 %v6225, %v6226
        %v6228 = vsel %vm6102, %v6100, 0.0
        %v6229 = vadd.f32 %v6227, %v6228
        %6230 = vadd.xlane.f32.xlu0 %v6229
        %v6231 = vpop.xlane.xlu0 %6230
        %v6232 = vrot.slane %v6231, 4
        %v6233 = vadd.f32 %v6231, %v6232
        %v6234 = vrot.slane %v6233, 2
        %v6235 = vadd.f32 %v6233, %v6234
        %v6236 = vrot.slane %v6235, 1
        %v6237 = vadd.f32 %v6235, %v6236
        %s6238 = vtos %v6237
        %v6239 = vstv %s6238
        %v6240 = vadd.f32 %v6101, %v6239
        %vm6241 = vcmask 0
        %6242 = vst.msk [vmem:[#allocation3] sm:$0x1] %vm6241, %v6240
        %v6243 = vmul.f32 %v4489, %v5974
        %v6244 = vmul.f32 %v4492, %v5976
        %v6245 = vmul.f32 %v4497, %v5978
        %v6246 = vmul.f32 %v4500, %v5980
        %v6247 = vmul.f32 %v4505, %v5982
        %v6248 = vmul.f32 %v4508, %v5984
        %v6249 = vmul.f32 %v4513, %v5986
        %v6250 = vmul.f32 %v4516, %v5988
        %v6251 = vmul.f32 %v4521, %v5990
        %v6252 = vmul.f32 %v4524, %v5992
        %v6253 = vmul.f32 %v4529, %v5994
        %v6254 = vmul.f32 %v4532, %v5996
        %v6255 = vmul.f32 %v4537, %v5998
        %v6256 = vmul.f32 %v4540, %v6000
        %v6257 = vmul.f32 %v4545, %v6002
        %v6258 = vmul.f32 %v4548, %v6004
        %v6259 = vmul.f32 %v4553, %v6006
        %v6260 = vmul.f32 %v4556, %v6008
        %v6261 = vmul.f32 %v4561, %v6010
        %v6262 = vmul.f32 %v4564, %v6012
        %v6263 = vmul.f32 %v4569, %v6014
        %v6264 = vmul.f32 %v4572, %v6016
        %v6265 = vmul.f32 %v4577, %v6018
        %v6266 = vmul.f32 %v4580, %v6020
        %v6267 = vmul.f32 %v4585, %v6022
        %v6268 = vmul.f32 %v4588, %v6024
        %v6269 = vmul.f32 %v4593, %v6026
        %v6270 = vmul.f32 %v4596, %v6028
        %v6271 = vmul.f32 %v4601, %v6030
        %v6272 = vmul.f32 %v4604, %v6032
        %v6273 = vmul.f32 %v4609, %v6034
        %v6274 = vmul.f32 %v4612, %v6036
        %v6275 = vmul.f32 %v4617, %v6038
        %v6276 = vmul.f32 %v4620, %v6040
        %v6277 = vmul.f32 %v4625, %v6042
        %v6278 = vmul.f32 %v4628, %v6044
        %v6279 = vmul.f32 %v4633, %v6046
        %v6280 = vmul.f32 %v4636, %v6048
        %v6281 = vmul.f32 %v4641, %v6050
        %v6282 = vmul.f32 %v4644, %v6052
        %v6283 = vmul.f32 %v4649, %v6054
        %v6284 = vmul.f32 %v4652, %v6056
        %v6285 = vmul.f32 %v4657, %v6058
        %v6286 = vmul.f32 %v4660, %v6060
        %v6287 = vmul.f32 %v4665, %v6062
        %v6288 = vmul.f32 %v4668, %v6064
        %v6289 = vmul.f32 %v4673, %v6066
        %v6290 = vmul.f32 %v4676, %v6068
        %v6291 = vmul.f32 %v4681, %v6070
        %v6292 = vmul.f32 %v4684, %v6072
        %v6293 = vmul.f32 %v4689, %v6074
        %v6294 = vmul.f32 %v4692, %v6076
        %v6295 = vmul.f32 %v4697, %v6078
        %v6296 = vmul.f32 %v4700, %v6080
        %v6297 = vmul.f32 %v4705, %v6082
        %v6298 = vmul.f32 %v4708, %v6084
        %v6299 = vmul.f32 %v4713, %v6086
        %v6300 = vmul.f32 %v4716, %v6088
        %v6301 = vmul.f32 %v4721, %v6090
        %v6302 = vmul.f32 %v4724, %v6092
        %v6303 = vmul.f32 %v4729, %v6094
        %v6304 = vmul.f32 %v4732, %v6096
        %v6305 = vmul.f32 %v4737, %v6098
        %v6306 = vmul.f32 %v4740, %v6100
        %v6307 = vpack.c.bf16 %v6244, %v6243
        %v6308 = vpack.c.bf16 %v6246, %v6245
        %v6309 = vpack.c.bf16 %v6248, %v6247
        %v6310 = vpack.c.bf16 %v6250, %v6249
        %v6311 = vpack.c.bf16 %v6252, %v6251
        %v6312 = vpack.c.bf16 %v6254, %v6253
        %v6313 = vpack.c.bf16 %v6256, %v6255
        %v6314 = vpack.c.bf16 %v6258, %v6257
        %v6315 = vpack.c.bf16 %v6260, %v6259
        %v6316 = vpack.c.bf16 %v6262, %v6261
        %v6317 = vpack.c.bf16 %v6264, %v6263
        %v6318 = vpack.c.bf16 %v6266, %v6265
        %v6319 = vpack.c.bf16 %v6268, %v6267
        %v6320 = vpack.c.bf16 %v6270, %v6269
        %v6321 = vpack.c.bf16 %v6272, %v6271
        %v6322 = vpack.c.bf16 %v6274, %v6273
        %v6323 = vpack.c.bf16 %v6276, %v6275
        %v6324 = vpack.c.bf16 %v6278, %v6277
        %v6325 = vpack.c.bf16 %v6280, %v6279
        %v6326 = vpack.c.bf16 %v6282, %v6281
        %v6327 = vpack.c.bf16 %v6284, %v6283
        %v6328 = vpack.c.bf16 %v6286, %v6285
        %v6329 = vpack.c.bf16 %v6288, %v6287
        %v6330 = vpack.c.bf16 %v6290, %v6289
        %v6331 = vpack.c.bf16 %v6292, %v6291
        %v6332 = vpack.c.bf16 %v6294, %v6293
        %v6333 = vpack.c.bf16 %v6296, %v6295
        %v6334 = vpack.c.bf16 %v6298, %v6297
        %v6335 = vpack.c.bf16 %v6300, %v6299
        %v6336 = vpack.c.bf16 %v6302, %v6301
        %v6337 = vpack.c.bf16 %v6304, %v6303
        %v6338 = vpack.c.bf16 %v6306, %v6305
        %v6339 = vlaneseq
        %v6340 = vshrl.u32 %v6339, 7
        %v6341 = vadd.s32 %v6340, 8
        %v6342 = vlaneseq
        %v6343 = vshrl.u32 %v6342, 7
        %v6344 = vsub.s32 0, %v6343
        %v6345 = vrot.slane %v873, %v6344
        %v6346 = vlaneseq
        %v6347 = vshrl.u32 %v6346, 7
        %v6348 = vsub.s32 1, %v6347
        %v6349 = vrot.slane %v873, %v6348
        %v6350 = vlaneseq
        %v6351 = vshrl.u32 %v6350, 7
        %v6352 = vsub.s32 2, %v6351
        %v6353 = vrot.slane %v873, %v6352
        %v6354 = vlaneseq
        %v6355 = vshrl.u32 %v6354, 7
        %v6356 = vsub.s32 3, %v6355
        %v6357 = vrot.slane %v873, %v6356
        %vm6358 = vcmp.eq.s32.totalorder %v6340, %v6345
        %vm6359 = vcmp.eq.s32.totalorder %v6340, %v6349
        %vm6360 = vcmp.eq.s32.totalorder %v6340, %v6353
        %vm6361 = vcmp.eq.s32.totalorder %v6340, %v6357
        %vm6362 = vcmp.eq.s32.totalorder %v6341, %v6345
        %vm6363 = vcmp.eq.s32.totalorder %v6341, %v6349
        %vm6364 = vcmp.eq.s32.totalorder %v6341, %v6353
        %vm6365 = vcmp.eq.s32.totalorder %v6341, %v6357
        %v6366 = vsel %vm6358, 1, 0
        %v6367 = vsel %vm6359, 1, 0
        %v6368 = vsel %vm6360, 1, 0
        %v6369 = vsel %vm6361, 1, 0
        %v6370 = vsel %vm6362, 1, 0
        %v6371 = vsel %vm6363, 1, 0
        %v6372 = vsel %vm6364, 1, 0
        %v6373 = vsel %vm6365, 1, 0
        %v6374 = vcvt.s32.f32 %v6366
        %v6375 = vcvt.s32.f32 %v6367
        %v6376 = vcvt.s32.f32 %v6368
        %v6377 = vcvt.s32.f32 %v6369
        %v6378 = vcvt.s32.f32 %v6370
        %v6379 = vcvt.s32.f32 %v6371
        %v6380 = vcvt.s32.f32 %v6372
        %v6381 = vcvt.s32.f32 %v6373
        %v6382 = vpack.c.bf16 %v6378, %v6374
        %v6383 = vpack.c.bf16 %v6379, %v6375
        %v6384 = vpack.c.bf16 %v6380, %v6376
        %v6385 = vpack.c.bf16 %v6381, %v6377
        %v6386 = vld [vmem:[#allocation2] sm:$0xff]
        %v6387 = vld [vmem:[#allocation2 + $0x8] sm:$0xff]
        %6388 = vmatprep.subr.bf16.mxu0 0
        %6389 = vmatpush1.bf16.msra.mxu0 %v6307
        %6390 = vmatprep.subr.bf16.mxu0 0
        %6391 = vmatpush1.bf16.msra.mxu0 %v6308
        %6392 = vmatprep.subr.bf16.mxu0 0
        %6393 = vmatpush1.bf16.msra.mxu0 %v6309
        %6394 = vmatprep.subr.bf16.mxu0 0
        %6395 = vmatpush1.bf16.msra.mxu0 %v6310
        %6396 = vmatprep.subr.bf16.mxu0 0
        %6397 = vmatpush1.bf16.msra.mxu0 %v6311
        %6398 = vmatprep.subr.bf16.mxu0 0
        %6399 = vmatpush1.bf16.msra.mxu0 %v6312
        %6400 = vmatprep.subr.bf16.mxu0 0
        %6401 = vmatpush1.bf16.msra.mxu0 %v6313
        %6402 = vmatprep.subr.bf16.mxu0 0
        %6403 = vmatpush1.bf16.msra.mxu0 %v6314
        %6404 = vmatprep.subr.bf16.mxu0 0
        %6405 = vmatpush1.bf16.msra.mxu0 %v6315
        %6406 = vmatprep.subr.bf16.mxu0 0
        %6407 = vmatpush1.bf16.msra.mxu0 %v6316
        %6408 = vmatprep.subr.bf16.mxu0 0
        %6409 = vmatpush1.bf16.msra.mxu0 %v6317
        %6410 = vmatprep.subr.bf16.mxu0 0
        %6411 = vmatpush1.bf16.msra.mxu0 %v6318
        %6412 = vmatprep.subr.bf16.mxu0 0
        %6413 = vmatpush1.bf16.msra.mxu0 %v6319
        %6414 = vmatprep.subr.bf16.mxu0 0
        %6415 = vmatpush1.bf16.msra.mxu0 %v6320
        %6416 = vmatprep.subr.bf16.mxu0 0
        %6417 = vmatpush1.bf16.msra.mxu0 %v6321
        %6418 = vmatprep.subr.bf16.mxu0 0
        %6419 = vmatpush1.bf16.msra.mxu0 %v6322
        %6420 = vmatprep.mubr.bf16.mxu0 %v6383
        %6421 = vmatmul.mubr.bf16.gmra.mrb[0].mxu0 %v6382
        %v6422 = vpop.f32.mrb[0].mxu0
        %v6423 = vadd.f32 0.0, %v6422
        %v6424 = vpop.f32.mrb[0].mxu0
        %v6425 = vpop.f32.mrb[0].mxu0
        %v6426 = vadd.f32 0.0, %v6425
        %v6427 = vpop.f32.mrb[0].mxu0
        %6428 = vdwg.mxu0
        %6429 = vmatprep.subr.bf16.mxu0 0
        %6430 = vmatpush1.bf16.msra.mxu0 %v6323
        %6431 = vmatprep.subr.bf16.mxu0 0
        %6432 = vmatpush1.bf16.msra.mxu0 %v6324
        %6433 = vmatprep.subr.bf16.mxu0 0
        %6434 = vmatpush1.bf16.msra.mxu0 %v6325
        %6435 = vmatprep.subr.bf16.mxu0 0
        %6436 = vmatpush1.bf16.msra.mxu0 %v6326
        %6437 = vmatprep.subr.bf16.mxu0 0
        %6438 = vmatpush1.bf16.msra.mxu0 %v6327
        %6439 = vmatprep.subr.bf16.mxu0 0
        %6440 = vmatpush1.bf16.msra.mxu0 %v6328
        %6441 = vmatprep.subr.bf16.mxu0 0
        %6442 = vmatpush1.bf16.msra.mxu0 %v6329
        %6443 = vmatprep.subr.bf16.mxu0 0
        %6444 = vmatpush1.bf16.msra.mxu0 %v6330
        %6445 = vmatprep.subr.bf16.mxu0 0
        %6446 = vmatpush1.bf16.msra.mxu0 %v6331
        %6447 = vmatprep.subr.bf16.mxu0 0
        %6448 = vmatpush1.bf16.msra.mxu0 %v6332
        %6449 = vmatprep.subr.bf16.mxu0 0
        %6450 = vmatpush1.bf16.msra.mxu0 %v6333
        %6451 = vmatprep.subr.bf16.mxu0 0
        %6452 = vmatpush1.bf16.msra.mxu0 %v6334
        %6453 = vmatprep.subr.bf16.mxu0 0
        %6454 = vmatpush1.bf16.msra.mxu0 %v6335
        %6455 = vmatprep.subr.bf16.mxu0 0
        %6456 = vmatpush1.bf16.msra.mxu0 %v6336
        %6457 = vmatprep.subr.bf16.mxu0 0
        %6458 = vmatpush1.bf16.msra.mxu0 %v6337
        %6459 = vmatprep.subr.bf16.mxu0 0
        %6460 = vmatpush1.bf16.msra.mxu0 %v6338
        %6461 = vmatprep.mubr.bf16.mxu0 %v6385
        %6462 = vmatmul.mubr.bf16.gmra.mrb[0].mxu0 %v6384
        %v6463 = vpop.f32.mrb[0].mxu0
        %v6464 = vadd.f32 %v6423, %v6463
        %v6465 = vpop.f32.mrb[0].mxu0
        %v6466 = vpop.f32.mrb[0].mxu0
        %v6467 = vadd.f32 %v6426, %v6466
        %v6468 = vpop.f32.mrb[0].mxu0
        %6469 = vdwg.mxu0
        %v6470 = vadd.f32 %v6386, %v6464
        %v6471 = vadd.f32 %v6387, %v6467
        %6472 = vst.msk [vmem:[#allocation2] sm:$0xff] %vm1857, %v6470
        %6473 = vst.msk [vmem:[#allocation2 + $0x8] sm:$0xff] %vm1857, %v6471
        %p6474 = scmp.eq.s32.totalorder %s34, 2
        // Predicated region
        $region113: #{tpu_custom_call.1} parent=107 // pred_check
          %p6475 = pneg %p6474
        $region114: #{tpu_custom_call.1} parent=107 // pred_check_branch
          %6477 = sbr.rel (%p6475) target = $region116
        $region115: #{tpu_custom_call.1} parent=107 // pred_region
          %v6478 = vld [vmem:[%s4] sm:$0xff]
          %v6479 = vld [vmem:[%s4 + $0x8] sm:$0xff]
          %v6480 = vld [vmem:[#allocation3] sm:$0x1]
          %v6481 = vsub.f32 %v6480, 553.97034
          %v6482 = vld [vmem:[#allocation2] sm:$0xff]
          %v6483 = vld [vmem:[#allocation2 + $0x8] sm:$0xff]
          %v6484 = vmul.f32 %v6481, 30.0
          %v6485 = vrcp.pop %v6484
          %v6486 = vmul.f32 1.0, %v6485
          %v6488 = vlaneseq
          %v6489 = vshrl.u32 %v6488, 7
          %v6490 = vsub.s32 0, %v6489
          %v6491 = vrot.slane %v6486, %v6490
          %6492 = vset.pattern.permute.xlu0 0
          %6493 = vperm.xlu0 %6492, %v6491
          %v6494 = vpop.permute.xlu0 %6493
          %v6496 = vmul.f32 %v6482, %v6494
          %v6497 = vmul.f32 %v6483, %v6494
          %v6498 = vadd.f32 %v6478, %v6496
          %v6499 = vadd.f32 %v6479, %v6497
          %v6500 = vld [vmem:[%s14] sm:$0x1]
          %v6501 = vld [vmem:[%s15] sm:$0x1]
          %v6502 = vsel %vm1857, %v6498, 0.0
          %6503 = vadd.xlane.f32.xlu0 %v6502
          %v6504 = vpop.xlane.xlu0 %6503
          %v6505 = vsel %vm1857, %v6499, 0.0
          %6506 = vadd.xlane.f32.xlu0 %v6505
          %v6507 = vpop.xlane.xlu0 %6506
          %v6508 = vrcp.pop 32.0
          %v6509 = vmul.f32 %v6504, %v6508
          %v6510 = vmul.f32 %v6507, %v6508
          %v6511 = vsub.f32 %v6498, %v6509
          %v6512 = vsub.f32 %v6499, %v6510
          %v6513 = vmul.f32 %v6511, %v6511
          %v6514 = vmul.f32 %v6512, %v6512
          %v6515 = vsel %vm1857, %v6513, 0.0
          %6516 = vadd.xlane.f32.xlu0 %v6515
          %v6517 = vpop.xlane.xlu0 %6516
          %v6518 = vsel %vm1857, %v6514, 0.0
          %6519 = vadd.xlane.f32.xlu0 %v6518
          %v6520 = vpop.xlane.xlu0 %6519
          %v6521 = vmul.f32 %v6517, %v6508
          %v6522 = vmul.f32 %v6520, %v6508
          %v6523 = vadd.f32 %v6521, 1e-05
          %v6524 = vadd.f32 %v6522, 1e-05
          %v6525 = vrsqrt.pop %v6523
          %v6526 = vrsqrt.pop %v6524
          %v6527 = vmul.f32 %v6511, %v6525
          %v6528 = vmul.f32 %v6512, %v6526
          %v6530 = vlaneseq
          %v6531 = vshrl.u32 %v6530, 7
          %v6532 = vsub.s32 0, %v6531
          %v6533 = vrot.slane %v6500, %v6532
          %v6535 = vmul.f32 %v6527, %v6533
          %v6536 = vmul.f32 %v6528, %v6533
          %v6538 = vlaneseq
          %v6539 = vshrl.u32 %v6538, 7
          %v6540 = vsub.s32 0, %v6539
          %v6541 = vrot.slane %v6501, %v6540
          %v6543 = vadd.f32 %v6535, %v6541
          %v6544 = vadd.f32 %v6536, %v6541
          %v6545 = vpack.c.bf16 %v6544, %v6543
          %v6546 = vld [vmem:[%s16] sm:$0xf]
          %v6547 = vld [vmem:[%s16 + $0x4] sm:$0xf]
          %v6548 = vld [vmem:[%s16 + $0x8] sm:$0xf]
          %v6549 = vld [vmem:[%s16 + $0xc] sm:$0xf]
          %v6550 = vld [vmem:[%s17] sm:$0x1]
          %v6552 = vlaneseq
          %v6553 = vshrl.u32 %v6552, 7
          %v6554 = vsub.s32 0, %v6553
          %v6555 = vrot.slane %v6550, %v6554
          %v6561 = vunpack.c.l.b16 %v6546
          %v6562 = vunpack.c.l.b16 %v6547
          %v6563 = vunpack.c.l.b16 %v6548
          %v6564 = vunpack.c.l.b16 %v6549
          %v6565 = vpack.c.b16 %v6562, %v6561
          %v6566 = vpack.c.b16 %v6564, %v6563
          %v6570 = vsel %vm1857, %v6545, 0
          %6572 = vmatprep.subr.bf16.mxu0 0
          %6573 = vmatpush1.bf16.msra.mxu0 %v6565
          %6574 = vmatprep.subr.bf16.mxu0 0
          %6575 = vmatpush1.bf16.msra.mxu0 %v6566
          %6576 = vmatprep.subr.bf16.mxu0 0
          %6577 = vmatpush1.bf16.msra.mxu0 0
          %6578 = vmatprep.subr.bf16.mxu0 0
          %6579 = vmatpush1.bf16.msra.mxu0 0
          %6580 = vmatprep.subr.bf16.mxu0 0
          %6581 = vmatpush1.bf16.msra.mxu0 0
          %6582 = vmatprep.subr.bf16.mxu0 0
          %6583 = vmatpush1.bf16.msra.mxu0 0
          %6584 = vmatprep.subr.bf16.mxu0 0
          %6585 = vmatpush1.bf16.msra.mxu0 0
          %6586 = vmatprep.subr.bf16.mxu0 0
          %6587 = vmatpush1.bf16.msra.mxu0 0
          %6588 = vmatprep.subr.bf16.mxu0 0
          %6589 = vmatpush1.bf16.msra.mxu0 0
          %6590 = vmatprep.subr.bf16.mxu0 0
          %6591 = vmatpush1.bf16.msra.mxu0 0
          %6592 = vmatprep.subr.bf16.mxu0 0
          %6593 = vmatpush1.bf16.msra.mxu0 0
          %6594 = vmatprep.subr.bf16.mxu0 0
          %6595 = vmatpush1.bf16.msra.mxu0 0
          %6596 = vmatprep.subr.bf16.mxu0 0
          %6597 = vmatpush1.bf16.msra.mxu0 0
          %6598 = vmatprep.subr.bf16.mxu0 0
          %6599 = vmatpush1.bf16.msra.mxu0 0
          %6600 = vmatprep.subr.bf16.mxu0 0
          %6601 = vmatpush1.bf16.msra.mxu0 0
          %6602 = vmatprep.subr.bf16.mxu0 0
          %6603 = vmatpush1.bf16.msra.mxu0 0
          %6604 = vmatprep.mubr.bf16.mxu0 0
          %6605 = vmatmul.mubr.bf16.gmra.mrb[0].mxu0 %v6570
          %v6606 = vpop.f32.mrb[0].mxu0
          %v6607 = vadd.f32 %v6555, %v6606
          %v6608 = vpop.f32.mrb[0].mxu0
          %v6609 = vpop.f32.mrb[0].mxu0
          %v6610 = vadd.f32 %v6555, %v6609
          %v6611 = vpop.f32.mrb[0].mxu0
          %6612 = vdwg.mxu0
          %v6613 = vmul.f32 %v6607, 0.5
          %v6614 = vmul.f32 %v6610, 0.5
          %v6615 = vmul.f32 %v6607, 0.044715
          %v6616 = vmul.f32 %v6610, 0.044715
          %v6617 = vmul.f32 %v6615, %v6607
          %v6618 = vmul.f32 %v6616, %v6610
          %v6619 = vmul.f32 %v6617, %v6607
          %v6620 = vmul.f32 %v6618, %v6610
          %v6621 = vadd.f32 %v6607, %v6619
          %v6622 = vadd.f32 %v6610, %v6620
          %v6623 = vmul.f32 %v6621, 0.7978846
          %v6624 = vmul.f32 %v6622, 0.7978846
          %v6625 = vtanh.pop %v6623
          %v6626 = vtanh.pop %v6624
          %v6627 = vadd.f32 %v6625, 1.0
          %v6628 = vadd.f32 %v6626, 1.0
          %v6629 = vmul.f32 %v6613, %v6627
          %v6630 = vmul.f32 %v6614, %v6628
          %v6631 = vpack.c.bf16 %v6630, %v6629
          %v6632 = vld [vmem:[%s18] sm:$0xf]
          %v6633 = vld [vmem:[%s18 + $0x4] sm:$0xf]
          %v6634 = vld [vmem:[%s18 + $0x8] sm:$0xf]
          %v6635 = vld [vmem:[%s18 + $0xc] sm:$0xf]
          %v6636 = vld [vmem:[%s18 + $0x10] sm:$0xf]
          %v6637 = vld [vmem:[%s18 + $0x14] sm:$0xf]
          %v6638 = vld [vmem:[%s18 + $0x18] sm:$0xf]
          %v6639 = vld [vmem:[%s18 + $0x1c] sm:$0xf]
          %v6640 = vld [vmem:[%s18 + $0x20] sm:$0xf]
          %v6641 = vld [vmem:[%s18 + $0x24] sm:$0xf]
          %v6642 = vld [vmem:[%s18 + $0x28] sm:$0xf]
          %v6643 = vld [vmem:[%s18 + $0x2c] sm:$0xf]
          %v6644 = vld [vmem:[%s18 + $0x30] sm:$0xf]
          %v6645 = vld [vmem:[%s18 + $0x34] sm:$0xf]
          %v6646 = vld [vmem:[%s18 + $0x38] sm:$0xf]
          %v6647 = vld [vmem:[%s18 + $0x3c] sm:$0xf]
          %v6648 = vld [vmem:[%s19] sm:$0x1]
          %v6650 = vlaneseq
          %v6651 = vshrl.u32 %v6650, 7
          %v6652 = vsub.s32 0, %v6651
          %v6653 = vrot.slane %v6648, %v6652
          %v6671 = vunpack.c.l.b16 %v6632
          %v6672 = vunpack.c.l.b16 %v6633
          %v6673 = vunpack.c.l.b16 %v6634
          %v6674 = vunpack.c.l.b16 %v6635
          %v6675 = vunpack.c.l.b16 %v6636
          %v6676 = vunpack.c.l.b16 %v6637
          %v6677 = vunpack.c.l.b16 %v6638
          %v6678 = vunpack.c.l.b16 %v6639
          %v6679 = vunpack.c.l.b16 %v6640
          %v6680 = vunpack.c.l.b16 %v6641
          %v6681 = vunpack.c.l.b16 %v6642
          %v6682 = vunpack.c.l.b16 %v6643
          %v6683 = vunpack.c.l.b16 %v6644
          %v6684 = vunpack.c.l.b16 %v6645
          %v6685 = vunpack.c.l.b16 %v6646
          %v6686 = vunpack.c.l.b16 %v6647
          %v6687 = vpack.c.b16 %v6672, %v6671
          %v6688 = vpack.c.b16 %v6674, %v6673
          %v6689 = vpack.c.b16 %v6676, %v6675
          %v6690 = vpack.c.b16 %v6678, %v6677
          %v6691 = vpack.c.b16 %v6680, %v6679
          %v6692 = vpack.c.b16 %v6682, %v6681
          %v6693 = vpack.c.b16 %v6684, %v6683
          %v6694 = vpack.c.b16 %v6686, %v6685
          %6703 = vmatprep.subr.bf16.mxu0 0
          %6704 = vmatpush1.bf16.msra.mxu0 %v6687
          %6705 = vmatprep.subr.bf16.mxu0 0
          %6706 = vmatpush1.bf16.msra.mxu0 %v6688
          %6707 = vmatprep.subr.bf16.mxu0 0
          %6708 = vmatpush1.bf16.msra.mxu0 %v6689
          %6709 = vmatprep.subr.bf16.mxu0 0
          %6710 = vmatpush1.bf16.msra.mxu0 %v6690
          %6711 = vmatprep.subr.bf16.mxu0 0
          %6712 = vmatpush1.bf16.msra.mxu0 %v6691
          %6713 = vmatprep.subr.bf16.mxu0 0
          %6714 = vmatpush1.bf16.msra.mxu0 %v6692
          %6715 = vmatprep.subr.bf16.mxu0 0
          %6716 = vmatpush1.bf16.msra.mxu0 %v6693
          %6717 = vmatprep.subr.bf16.mxu0 0
          %6718 = vmatpush1.bf16.msra.mxu0 %v6694
          %6719 = vmatprep.subr.bf16.mxu0 0
          %6720 = vmatpush1.bf16.msra.mxu0 0
          %6721 = vmatprep.subr.bf16.mxu0 0
          %6722 = vmatpush1.bf16.msra.mxu0 0
          %6723 = vmatprep.subr.bf16.mxu0 0
          %6724 = vmatpush1.bf16.msra.mxu0 0
          %6725 = vmatprep.subr.bf16.mxu0 0
          %6726 = vmatpush1.bf16.msra.mxu0 0
          %6727 = vmatprep.subr.bf16.mxu0 0
          %6728 = vmatpush1.bf16.msra.mxu0 0
          %6729 = vmatprep.subr.bf16.mxu0 0
          %6730 = vmatpush1.bf16.msra.mxu0 0
          %6731 = vmatprep.subr.bf16.mxu0 0
          %6732 = vmatpush1.bf16.msra.mxu0 0
          %6733 = vmatprep.subr.bf16.mxu0 0
          %6734 = vmatpush1.bf16.msra.mxu0 0
          %6735 = vmatprep.mubr.bf16.mxu0 0
          %6736 = vmatmul.mubr.bf16.gmra.mrb[0].mxu0 %v6631
          %v6737 = vpop.f32.mrb[0].mxu0
          %v6738 = vadd.f32 %v6653, %v6737
          %v6739 = vpop.f32.mrb[0].mxu0
          %v6740 = vpop.f32.mrb[0].mxu0
          %v6741 = vadd.f32 %v6653, %v6740
          %v6742 = vpop.f32.mrb[0].mxu0
          %6743 = vdwg.mxu0
          %v6744 = vadd.f32 %v6543, %v6738
          %v6745 = vadd.f32 %v6544, %v6741
          %v6746 = vld [vmem:[%s20] sm:$0x1]
          %v6747 = vld [vmem:[%s21] sm:$0x1]
          %v6748 = vsel %vm1857, %v6744, 0.0
          %6749 = vadd.xlane.f32.xlu0 %v6748
          %v6750 = vpop.xlane.xlu0 %6749
          %v6751 = vsel %vm1857, %v6745, 0.0
          %6752 = vadd.xlane.f32.xlu0 %v6751
          %v6753 = vpop.xlane.xlu0 %6752
          %v6754 = vmul.f32 %v6750, %v6508
          %v6755 = vmul.f32 %v6753, %v6508
          %v6756 = vsub.f32 %v6744, %v6754
          %v6757 = vsub.f32 %v6745, %v6755
          %v6758 = vmul.f32 %v6756, %v6756
          %v6759 = vmul.f32 %v6757, %v6757
          %v6760 = vsel %vm1857, %v6758, 0.0
          %6761 = vadd.xlane.f32.xlu0 %v6760
          %v6762 = vpop.xlane.xlu0 %6761
          %v6763 = vsel %vm1857, %v6759, 0.0
          %6764 = vadd.xlane.f32.xlu0 %v6763
          %v6765 = vpop.xlane.xlu0 %6764
          %v6766 = vmul.f32 %v6762, %v6508
          %v6767 = vmul.f32 %v6765, %v6508
          %v6768 = vadd.f32 %v6766, 1e-05
          %v6769 = vadd.f32 %v6767, 1e-05
          %v6770 = vrsqrt.pop %v6768
          %v6771 = vrsqrt.pop %v6769
          %v6772 = vmul.f32 %v6756, %v6770
          %v6773 = vmul.f32 %v6757, %v6771
          %v6775 = vlaneseq
          %v6776 = vshrl.u32 %v6775, 7
          %v6777 = vsub.s32 0, %v6776
          %v6778 = vrot.slane %v6746, %v6777
          %v6780 = vmul.f32 %v6772, %v6778
          %v6781 = vmul.f32 %v6773, %v6778
          %v6783 = vlaneseq
          %v6784 = vshrl.u32 %v6783, 7
          %v6785 = vsub.s32 0, %v6784
          %v6786 = vrot.slane %v6747, %v6785
          %v6788 = vadd.f32 %v6780, %v6786
          %v6789 = vadd.f32 %v6781, %v6786
          %6790 = vst.msk [vmem:[#allocation4] sm:$0xff] %vm1857, %v6788
          %6791 = vst.msk [vmem:[#allocation4 + $0x8] sm:$0xff] %vm1857, %v6789
        $region116: #{tpu_custom_call.1} parent=107 // pred_fallthru
          _
        // Predicated region
        $region117: #{tpu_custom_call.1} parent=107 // pred_check
          %p6792 = pneg %p529
        $region118: #{tpu_custom_call.1} parent=107 // pred_check_branch
          %6794 = sbr.rel (%p6792) target = $region120
        $region119: #{tpu_custom_call.1} parent=107 // pred_region
          %s6796 = ssub.s32 256, 256
          %6797 = vsyncadd [#allocation5], %s6796
          %s6798 = sshll.u32 [#allocation4], 4
          %s6799 = int_to_ptr.vmem [resolvable:$true] %s6798
          %6804 = dma.vmem_to_hbm [thread:$0]  %s6799, 256, %s22, [#allocation5], 128, 128, 8
        $region120: #{tpu_custom_call.1} parent=107 // pred_fallthru
          _
        // Predicated region
        $region121: #{tpu_custom_call.1} parent=107 // pred_check
          %p6805 = pneg %p529
        $region122: #{tpu_custom_call.1} parent=107 // pred_check_branch
          %6807 = sbr.rel (%p6805) target = $region124
        $region123: #{tpu_custom_call.1} parent=107 // pred_region
          %6808 = dma.done [#allocation5], 256
        $region124: #{tpu_custom_call.1} parent=107 // pred_fallthru
          _
      $region108: #{tpu_custom_call.1} parent=5 // pred_fallthru
        _
      %p6809 = scmp.le.s32.totalorder 2, %s29
      // Predicated region
      $region125: #{tpu_custom_call.1} parent=5 // pred_check
        %p6810 = pneg %p6809
      $region126: #{tpu_custom_call.1} parent=5 // pred_check_branch
        %6812 = sbr.rel (%p6810) target = $region128
      $region127: #{tpu_custom_call.1} parent=5 // pred_region
        %s6813 = ssub.s32 %s29, 2
      $region128: #{tpu_custom_call.1} parent=5 // pred_fallthru
        _
    $region6: #{tpu_custom_call.1} parent=1 // loop_footer
      %s33 = sadd.s32 1, %s29
    $region7: #{tpu_custom_call.1} parent=1 // loop_footer_branch
      %28 = sbr.rel target = $region3
    $region8: #{tpu_custom_call.1} parent=1 // loop_exit
      _
    %6814 = vsyncpa [#allocation5], 1
    %s6815 = scalar_lea.sflag [#allocation5], 1
    %6816 = vsyncpa %s6815, 1

</llo_original>
